<compile_context>
chip_gen: v6e
topology: v6e:2x2x1
jax: 0.10.0
libtpu: 0.0.40
codegen_flags: <defaults>
</compile_context>

<pallas_src>
import functools
import math

import jax
import jax.numpy as jnp
from jax import lax
from jax.experimental import pallas as pl
from jax.experimental.pallas import tpu as pltpu


def _round_up(x, m):
    return ((x + m - 1) // m) * m


def _pick_tile(total, candidates):
    for c in candidates:
        if total % c == 0:
            return c
    return total


# ---------------------------------------------------------------------------
# Kernel 1: all GRU layers + compensation head, gridded over batch tiles.
# ---------------------------------------------------------------------------
def _gru_comp_kernel(*refs, num_layers, L, NB, Hp, T):
    """One batch tile of the full multi-layer GRU.  Gate order: (r, z, n).

    Ref layout (inputs, outputs, scratch):
      emb      : (L, NB, E)   bf16   layer-0 embedded tokens
      comp_in  : (L, NB, C)   f32    layer-0 compensation input
      h0       : (NL, NB, Hp) f32    initial hidden state (zero-padded lanes)
      w_e      : (E, 3Hp)     bf16   layer-0 W_ih^T, embedding rows
      w_c      : (C, 3Hp)     bf16   layer-0 W_ih^T, compensation rows
      per layer l (layer 0 omits wih):
        [wih   : (Hp, 3Hp) bf16]     input weights for layers >= 1
        b      : (1, 3Hp)   f32      b_ih (+ b_hh folded in for r,z gates)
        b_hn   : (1, Hp)    f32      b_hh of the n gate (multiplied by r)
        whh    : (Hp, 3Hp)  bf16
      comp_w   : (Hp, Cp) bf16,  comp_b : (1, Cp) f32
    outputs:
      y        : (L, NB, Hp)  bf16   last layer's per-step hidden states
      hT       : (NL, NB, Hp) f32    (aliased with h0 in HBM)
      comp_out : (NL, NB, Cp) f32
    scratch:
      gi       : (T*NB, 3Hp)  f32    hoisted input projection, one time chunk
    """
    it = iter(refs)
    emb_ref = next(it)
    comp_ref = next(it)
    h0_ref = next(it)
    w_e_ref = next(it)
    w_c_ref = next(it)
    layer_params = [(None, next(it), next(it), next(it))]          # layer 0
    for _ in range(1, num_layers):
        layer_params.append((next(it), next(it), next(it), next(it)))
    comp_w_ref = next(it)
    comp_b_ref = next(it)
    y_ref = next(it)
    hT_ref = next(it)
    comp_out_ref = next(it)
    gi_ref = next(it)

    f32 = jnp.float32
    bf16 = jnp.bfloat16

    for l in range(num_layers):
        wih_ref, b_ref, bhn_ref, whh_ref = layer_params[l]
        b_hn = bhn_ref[...]                       # (1, Hp): one vreg, hoisted
        h = h0_ref[l]                             # (NB, Hp) f32

        for c0 in range(0, L, T):
            clen = min(T, L - c0)

            # Hoisted input projection for this time chunk: one big MXU matmul.
            # (layer 0 avoids the concat by splitting W_ih into E / C parts.)
            if l == 0:
                x_e = emb_ref[pl.ds(c0, clen)]
                x_e = x_e.reshape(clen * NB, x_e.shape[-1])          # bf16
                x_c = comp_ref[pl.ds(c0, clen)]
                x_c = x_c.reshape(clen * NB, x_c.shape[-1]).astype(bf16)
                gi = (jnp.dot(x_e, w_e_ref[...], preferred_element_type=f32)
                      + jnp.dot(x_c, w_c_ref[...], preferred_element_type=f32)
                      + b_ref[...])
            else:
                y_c = y_ref[pl.ds(c0, clen)]                         # bf16
                y_c = y_c.reshape(clen * NB, Hp)
                gi = (jnp.dot(y_c, wih_ref[...], preferred_element_type=f32)
                      + b_ref[...])
            gi_ref[pl.ds(0, clen * NB)] = gi                         # f32

            def step(t, h_prev, c0=c0):
                row0 = pl.multiple_of(t * NB, NB)
                g = gi_ref[pl.ds(row0, NB)]                          # (NB, 3Hp)
                # W_hh stays a ref read inside the loop (no long-lived vregs).
                gh = jnp.dot(h_prev.astype(bf16), whh_ref[...],
                             preferred_element_type=f32)
                # gate slices at lane offsets 0 / Hp / 2Hp are 128-aligned
                r = jax.nn.sigmoid(g[:, 0:Hp] + gh[:, 0:Hp])
                z = jax.nn.sigmoid(g[:, Hp:2 * Hp] + gh[:, Hp:2 * Hp])
                n = jnp.tanh(g[:, 2 * Hp:3 * Hp]
                             + r * (gh[:, 2 * Hp:3 * Hp] + b_hn))
                h_new = (1.0 - z) * n + z * h_prev
                y_ref[c0 + t] = h_new.astype(bf16)
                return h_new

            h = lax.fori_loop(0, clen, step, h, unroll=True)

        hT_ref[l] = h
        # compensation head: relu(hT @ Wc + bc), lane-dense (Cp) store
        comp_out_ref[l] = jnp.maximum(
            jnp.dot(h.astype(bf16), comp_w_ref[...],
                    preferred_element_type=f32) + comp_b_ref[...],
            0.0)


# ---------------------------------------------------------------------------
# Kernel 2: output head, tiled over (vocab tiles, row tiles).
# ---------------------------------------------------------------------------
def _output_head_kernel(y_ref, w_ref, b_ref, o_ref):
    o_ref[...] = (jnp.dot(y_ref[...], w_ref[...],
                          preferred_element_type=jnp.float32) + b_ref[...])


# ---------------------------------------------------------------------------
# Parameter construction (PyTorch layout) and packing for the kernels
# ---------------------------------------------------------------------------
def init_params(key, *, src_vocab_len, src_emb_dim, trg_vocab_len,
                rnn_hid_dim, compensating_dim, num_rnn_layers):
    """Parameters in PyTorch layout: weights (out, in), gate order (r, z, n)."""
    params = {}
    keys = jax.random.split(key, 5 + 4 * num_rnn_layers)
    ki = iter(keys)

    params["emb_vectors"] = jax.random.normal(
        next(ki), (src_vocab_len, src_emb_dim), jnp.float32)

    k = 1.0 / math.sqrt(rnn_hid_dim)
    wih, whh, bih, bhh = [], [], [], []
    for layer in range(num_rnn_layers):
        d_in = (src_emb_dim + compensating_dim) if layer == 0 else rnn_hid_dim
        wih.append(jax.random.uniform(next(ki), (3 * rnn_hid_dim, d_in),
                                      jnp.float32, -k, k))
        whh.append(jax.random.uniform(next(ki), (3 * rnn_hid_dim, rnn_hid_dim),
                                      jnp.float32, -k, k))
        bih.append(jax.random.uniform(next(ki), (3 * rnn_hid_dim,),
                                      jnp.float32, -k, k))
        bhh.append(jax.random.uniform(next(ki), (3 * rnn_hid_dim,),
                                      jnp.float32, -k, k))
    params["gru_wih"], params["gru_whh"] = wih, whh
    params["gru_bih"], params["gru_bhh"] = bih, bhh

    kc = 1.0 / math.sqrt(rnn_hid_dim)
    params["comp_w"] = jax.random.uniform(
        next(ki), (compensating_dim, rnn_hid_dim), jnp.float32, -kc, kc)
    params["comp_b"] = jax.random.uniform(
        next(ki), (compensating_dim,), jnp.float32, -kc, kc)

    out_dim = trg_vocab_len + 3
    params["out_w"] = jax.random.uniform(
        next(ki), (out_dim, rnn_hid_dim), jnp.float32, -kc, kc)
    params["out_b"] = jax.random.uniform(
        next(ki), (out_dim,), jnp.float32, -kc, kc)
    return params


def pack_params(params, *, src_emb_dim, compensating_dim, rnn_hid_dim,
                trg_vocab_len, num_rnn_layers):
    """Transpose / lane-pad / bias-combine / bf16-cast parameters.

    All padding is exact zeros; padded hidden lanes stay identically zero
    through the GRU (z=0.5, n=0 on padded lanes with zero h0), so results are
    unchanged after the final slicing.
    """
    E, C, H = src_emb_dim, compensating_dim, rnn_hid_dim
    Hp = _round_up(H, 128)
    Cp = _round_up(C, 128)
    out_dim = trg_vocab_len + 3
    OutP = _round_up(out_dim, 128)

    def gate_align_cols(w_t, rows_pad):
        # w_t: (rows, 3H) -> (rows_pad, 3Hp); gate g placed at [g*Hp, g*Hp+H)
        rows = w_t.shape[0]
        out = jnp.zeros((rows_pad, 3 * Hp), jnp.float32)
        for g in range(3):
            out = out.at[:rows, g * Hp:g * Hp + H].set(w_t[:, g * H:(g + 1) * H])
        return out

    layers = []
    for l in range(num_rnn_layers):
        w_ih_t = params["gru_wih"][l].T        # (Din, 3H)
        w_hh_t = params["gru_whh"][l].T        # (H, 3H)
        b_ih = params["gru_bih"][l]
        b_hh = params["gru_bhh"][l]

        b_comb = jnp.zeros((1, 3 * Hp), jnp.float32)
        for g in range(3):
            bg = b_ih[g * H:(g + 1) * H]
            if g < 2:                           # r, z gates: fold in b_hh
                bg = bg + b_hh[g * H:(g + 1) * H]
            b_comb = b_comb.at[0, g * Hp:g * Hp + H].set(bg)
        b_hn = jnp.zeros((1, Hp), jnp.float32).at[0, :H].set(b_hh[2 * H:3 * H])
        whh_p = gate_align_cols(w_hh_t, Hp).astype(jnp.bfloat16)

        if l == 0:
            layers.append(dict(
                w_e=gate_align_cols(w_ih_t[:E], E).astype(jnp.bfloat16),
                w_c=gate_align_cols(w_ih_t[E:E + C], C).astype(jnp.bfloat16),
                b=b_comb, b_hn=b_hn, whh=whh_p))
        else:
            layers.append(dict(
                wih=gate_align_cols(w_ih_t, Hp).astype(jnp.bfloat16),
                b=b_comb, b_hn=b_hn, whh=whh_p))

    packed = dict(
        layers=layers,
        emb_vectors=params["emb_vectors"].astype(jnp.bfloat16),
        comp_w=jnp.zeros((Hp, Cp), jnp.float32)
              .at[:H, :C].set(params["comp_w"].T).astype(jnp.bfloat16),
        comp_b=jnp.zeros((1, Cp), jnp.float32).at[0, :C].set(params["comp_b"]),
        out_w=jnp.zeros((Hp, OutP), jnp.float32)
             .at[:H, :out_dim].set(params["out_w"].T).astype(jnp.bfloat16),
        out_b=jnp.zeros((1, OutP), jnp.float32).at[0, :out_dim].set(params["out_b"]),
        dims=dict(E=E, C=C, H=H, Hp=Hp, Cp=Cp, out_dim=out_dim, OutP=OutP,
                  num_layers=num_rnn_layers),
    )
    return packed


# ---------------------------------------------------------------------------
# Forward pass (mirrors RQLCompensating.forward)
# ---------------------------------------------------------------------------
def rql_compensating_forward(packed, src, rnn_state, compensation):
    # src: (L, N) int32; rnn_state: (num_layers, N, H); compensation: (L, N, C)
    d = packed["dims"]
    E, C, H = d["E"], d["C"], d["H"]
    Hp, Cp, OutP, out_dim = d["Hp"], d["Cp"], d["OutP"], d["out_dim"]
    NL = d["num_layers"]
    L, N = src.shape

    # Batch tiling: tiles are multiples of 16 rows (layout-trivial bf16
    # reshapes); 128-row default target (raise on v6e, where VMEM is 128 MiB).
    NB = min(128, _round_up(N, 16))
    Np = _round_up(N, NB)
    pad_b = Np - N
    n_tiles = Np // NB
    T = min(L, 16)               # gi time-chunk length (bounds the gi scratch)

    # Embedding lookup (frozen table, bf16) + zero padding (JAX glue).
    emb = jnp.take(packed["emb_vectors"], src, axis=0)               # (L,N,E)
    emb_p = jnp.pad(emb, ((0, 0), (0, pad_b), (0, 0)))
    comp_p = jnp.pad(compensation, ((0, 0), (0, pad_b), (0, 0)))
    # Zero-padding the extra hidden lanes is a correctness invariant: padded
    # lanes evolve as 0.5*h with zero init, so they stay exactly zero.
    h0_p = jnp.pad(rnn_state, ((0, 0), (0, pad_b), (0, Hp - H)))

    ly0 = packed["layers"][0]
    args = [emb_p, comp_p, h0_p, ly0["w_e"], ly0["w_c"],
            ly0["b"], ly0["b_hn"], ly0["whh"]]
    for l in range(1, NL):
        ly = packed["layers"][l]
        args += [ly["wih"], ly["b"], ly["b_hn"], ly["whh"]]
    args += [packed["comp_w"], packed["comp_b"]]

    def batch_spec(shape):
        return pl.BlockSpec(shape, lambda b: (0, b, 0))

    def resident(a):
        nd = a.ndim
        return pl.BlockSpec(tuple(a.shape), lambda b: (0,) * nd)

    in_specs = [batch_spec((L, NB, E)), batch_spec((L, NB, C)),
                batch_spec((NL, NB, Hp))]
    in_specs += [resident(a) for a in args[3:]]

    out_specs = (batch_spec((L, NB, Hp)),
                 batch_spec((NL, NB, Hp)),
                 batch_spec((NL, NB, Cp)))
    out_shape = (jax.ShapeDtypeStruct((L, Np, Hp), jnp.bfloat16),
                 jax.ShapeDtypeStruct((NL, Np, Hp), jnp.float32),
                 jax.ShapeDtypeStruct((NL, Np, Cp), jnp.float32))

    # VMEM budget: double-buffered activation blocks + resident weights + scratch.
    weight_bytes = sum(int(a.size) * a.dtype.itemsize for a in args[3:])
    block_bytes = (L * NB * E * 2 + L * NB * C * 4 + NL * NB * Hp * 4
                   + L * NB * Hp * 2 + NL * NB * Hp * 4 + NL * NB * Cp * 4)
    scratch_bytes = T * NB * 3 * Hp * 4
    rec_vmem = int(min(max(2 * (block_bytes + weight_bytes) + scratch_bytes
                           + (8 << 20), 32 << 20), 64 << 20))

    rec_flops = (2 * L * Np * (E + C) * 3 * Hp
                 + 2 * (NL - 1) * L * Np * Hp * 3 * Hp
                 + 2 * NL * L * Np * Hp * 3 * Hp
                 + 2 * NL * Np * Hp * Cp)
    rec_bytes = (L * Np * E * 2 + L * Np * C * 4 + NL * Np * Hp * 4
                 + weight_bytes + L * Np * Hp * 2 + NL * Np * Hp * 4
                 + NL * Np * Cp * 4)

    kernel = functools.partial(_gru_comp_kernel, num_layers=NL, L=L, NB=NB,
                               Hp=Hp, T=T)

    y_all, hT_p, comp_out_p = pl.pallas_call(
        kernel,
        grid=(n_tiles,),
        out_shape=out_shape,
        in_specs=in_specs,
        out_specs=out_specs,
        scratch_shapes=[pltpu.VMEM((T * NB, 3 * Hp), jnp.float32)],
        input_output_aliases={2: 1},           # h0  ->  hT (recurrent state)
        compiler_params=pltpu.CompilerParams(
            dimension_semantics=("parallel",),
            vmem_limit_bytes=rec_vmem),
        cost_estimate=pl.CostEstimate(
            flops=int(rec_flops),
            transcendentals=int(3 * NL * L * Np * Hp),
            bytes_accessed=int(rec_bytes)),
    )(*args)

    # ---- output head: (L*Np, Hp) @ (Hp, OutP), tiled over vocab x rows ----
    R = L * Np
    y_flat = y_all.reshape(R, Hp)
    TM = _pick_tile(R, (512, 256, 128, 64, 32, 16, 8))
    TN = _pick_tile(OutP, (1024, 512, 256, 128))
    head_vmem = int(min(max(2 * (TM * Hp * 2 + Hp * TN * 2 + TN * 4
                                 + TM * TN * 4) + (8 << 20), 32 << 20),
                        64 << 20))

    out_p = pl.pallas_call(
        _output_head_kernel,
        grid=(OutP // TN, R // TM),     # weight col-tile resident, rows stream
        out_shape=jax.ShapeDtypeStruct((R, OutP), jnp.float32),
        in_specs=[pl.BlockSpec((TM, Hp), lambda j, i: (i, 0)),
                  pl.BlockSpec((Hp, TN), lambda j, i: (0, j)),
                  pl.BlockSpec((1, TN), lambda j, i: (0, j))],
        out_specs=pl.BlockSpec((TM, TN), lambda j, i: (i, j)),
        compiler_params=pltpu.CompilerParams(
            dimension_semantics=("parallel", "parallel"),
            vmem_limit_bytes=head_vmem),
        cost_estimate=pl.CostEstimate(
            flops=int(2 * R * Hp * OutP),
            transcendentals=0,
            bytes_accessed=int(R * Hp * 2 + Hp * OutP * 2 + OutP * 4
                               + R * OutP * 4)),
    )(y_flat, packed["out_w"], packed["out_b"])

    outputs = out_p.reshape(L, Np, OutP)[:, :N, :out_dim]
    new_rnn_state = hT_p[:, :N, :H]
    new_compensation = comp_out_p[:, :N, :C]
    return outputs, new_rnn_state, new_compensation


# ---------------------------------------------------------------------------
# Pure-JAX reference (PyTorch nn.GRU semantics) for a correctness cross-check
# ---------------------------------------------------------------------------
def _reference_forward(params, src, rnn_state, compensation, *,
                       rnn_hid_dim, num_rnn_layers):
    H = rnn_hid_dim
    hp = lax.Precision.HIGHEST
    emb = jnp.take(params["emb_vectors"], src, axis=0)
    x = jnp.concatenate([emb, compensation], axis=2)
    L = x.shape[0]
    new_states = []
    for l in range(num_rnn_layers):
        w_ih, w_hh = params["gru_wih"][l], params["gru_whh"][l]
        b_ih, b_hh = params["gru_bih"][l], params["gru_bhh"][l]
        h = rnn_state[l]
        ys = []
        for t in range(L):
            gi = jnp.dot(x[t], w_ih.T, precision=hp) + b_ih
            gh = jnp.dot(h, w_hh.T, precision=hp) + b_hh
            r = jax.nn.sigmoid(gi[:, :H] + gh[:, :H])
            z = jax.nn.sigmoid(gi[:, H:2 * H] + gh[:, H:2 * H])
            n = jnp.tanh(gi[:, 2 * H:] + r * gh[:, 2 * H:])
            h = (1.0 - z) * n + z * h
            ys.append(h)
        x = jnp.stack(ys, axis=0)
        new_states.append(h)
    new_state = jnp.stack(new_states, axis=0)
    comp = jax.nn.relu(jnp.dot(new_state, params["comp_w"].T, precision=hp)
                       + params["comp_b"])
    outputs = jnp.dot(x, params["out_w"].T, precision=hp) + params["out_b"]
    return outputs, new_state, comp


# ---------------------------------------------------------------------------
if __name__ == "__main__":
    SRC_VOCAB_LEN = 32
    SRC_EMB_DIM = 16
    TRG_VOCAB_LEN = 16          # -> output dim 19
    RNN_HID_DIM = 32
    COMP_DIM = 8
    NUM_RNN_LAYERS = 2
    L, N = 8, 4                 # seq length, batch

    key = jax.random.PRNGKey(0)
    pkey, k_src, k_state, k_comp = jax.random.split(key, 4)

    params = init_params(
        pkey,
        src_vocab_len=SRC_VOCAB_LEN, src_emb_dim=SRC_EMB_DIM,
        trg_vocab_len=TRG_VOCAB_LEN, rnn_hid_dim=RNN_HID_DIM,
        compensating_dim=COMP_DIM, num_rnn_layers=NUM_RNN_LAYERS)
    packed = pack_params(
        params,
        src_emb_dim=SRC_EMB_DIM, compensating_dim=COMP_DIM,
        rnn_hid_dim=RNN_HID_DIM, trg_vocab_len=TRG_VOCAB_LEN,
        num_rnn_layers=NUM_RNN_LAYERS)

    src = jax.random.randint(k_src, (L, N), 0, SRC_VOCAB_LEN, dtype=jnp.int32)
    rnn_state = jax.random.normal(k_state, (NUM_RNN_LAYERS, N, RNN_HID_DIM),
                                  jnp.float32)
    compensation = jax.random.normal(k_comp, (L, N, COMP_DIM), jnp.float32)

    fwd = jax.jit(functools.partial(rql_compensating_forward, packed))
    outputs, new_state, new_comp = fwd(src, rnn_state, compensation)
    jax.block_until_ready((outputs, new_state, new_comp))

    assert outputs.shape == (L, N, TRG_VOCAB_LEN + 3)
    assert new_state.shape == (NUM_RNN_LAYERS, N, RNN_HID_DIM)
    assert new_comp.shape == (NUM_RNN_LAYERS, N, COMP_DIM)
    assert bool(jnp.all(new_comp >= 0.0))   # ReLU applied

    ref_out, ref_state, ref_comp = _reference_forward(
        params, src, rnn_state, compensation,
        rnn_hid_dim=RNN_HID_DIM, num_rnn_layers=NUM_RNN_LAYERS)
    for got, ref in ((outputs, ref_out), (new_state, ref_state),
                     (new_comp, ref_comp)):
        assert float(jnp.max(jnp.abs(got - ref))) < 5e-2

    print("KERNEL_OK")
</pallas_src>

<mosaic_0001>
module attributes {stable_mosaic.version = 11 : i64} {
  func.func @_output_head_kernel(%arg0: i32, %arg1: i32, %arg2: memref<128x128xbf16, #tpu.memory_space<vmem>>, %arg3: memref<128x128xbf16, #tpu.memory_space<vmem>>, %arg4: memref<1x128xf32, #tpu.memory_space<vmem>>, %arg5: memref<128x128xf32, #tpu.memory_space<vmem>>) attributes {dimension_semantics = [#tpu.dimension_semantics<parallel>, #tpu.dimension_semantics<parallel>], iteration_bounds = array<i64: 1, 1>, scalar_prefetch = 0 : i64, scratch_operands = 0 : i64, tpu.core_type = #tpu.core_type<tc>, window_params = [{transform_indices = @transform_0, window_bounds = array<i64: 128, 128>}, {transform_indices = @transform_1, window_bounds = array<i64: 128, 128>}, {transform_indices = @transform_2, window_bounds = array<i64: 1, 128>}, {transform_indices = @transform_3, window_bounds = array<i64: 128, 128>}]} {
    %c0 = arith.constant 0 : index
    %c0_0 = arith.constant 0 : index
    %0 = vector.load %arg2[%c0, %c0_0] : memref<128x128xbf16, #tpu.memory_space<vmem>>, vector<128x128xbf16>
    %c0_1 = arith.constant 0 : index
    %c0_2 = arith.constant 0 : index
    %1 = vector.load %arg3[%c0_1, %c0_2] : memref<128x128xbf16, #tpu.memory_space<vmem>>, vector<128x128xbf16>
    %cst = arith.constant dense<0.000000e+00> : vector<128x128xf32>
    %2 = tpu.matmul %0, %1, %cst {dimension_numbers = #tpu.dot_dimension_numbers<[1], [0], [0], [1], [0, 0, 1, 1], [], []>} : vector<128x128xbf16>, vector<128x128xbf16>, vector<128x128xf32> -> vector<128x128xf32>
    %c0_3 = arith.constant 0 : index
    %c0_4 = arith.constant 0 : index
    %3 = vector.load %arg4[%c0_3, %c0_4] : memref<1x128xf32, #tpu.memory_space<vmem>>, vector<1x128xf32>
    %4 = vector.broadcast %3 : vector<1x128xf32> to vector<128x128xf32>
    %5 = arith.addf %2, %4 : vector<128x128xf32>
    %c0_5 = arith.constant 0 : index
    %c0_6 = arith.constant 0 : index
    %6 = vector.load %arg5[%c0_5, %c0_6] : memref<128x128xf32, #tpu.memory_space<vmem>>, vector<128x128xf32>
    tpu.vector_store %arg5[%c0_5, %c0_6], %5 {strides = array<i32>} : memref<128x128xf32, #tpu.memory_space<vmem>>, vector<128x128xf32>,
    return
  }
  func.func @transform_0(%arg0: i32, %arg1: i32) -> (i32, i32) {
    %c0_i32 = arith.constant 0 : i32
    %c0_i32_0 = arith.constant 0 : i32
    return %arg1, %c0_i32 : i32, i32
  }
  func.func @transform_1(%arg0: i32, %arg1: i32) -> (i32, i32) {
    %c0_i32 = arith.constant 0 : i32
    %c0_i32_0 = arith.constant 0 : i32
    return %c0_i32, %arg0 : i32, i32
  }
  func.func @transform_2(%arg0: i32, %arg1: i32) -> (i32, i32) {
    %c0_i32 = arith.constant 0 : i32
    %c0_i32_0 = arith.constant 0 : i32
    return %c0_i32, %arg0 : i32, i32
  }
  func.func @transform_3(%arg0: i32, %arg1: i32) -> (i32, i32) {
    %c0_i32 = arith.constant 0 : i32
    return %arg1, %arg0 : i32, i32
  }
}

module attributes {stable_mosaic.version = 11 : i64} {
  func.func @_gru_comp_kernel(%arg0: i32, %arg1: memref<8x16x16xbf16, #tpu.memory_space<vmem>>, %arg2: memref<8x16x8xf32, #tpu.memory_space<vmem>>, %arg3: memref<2x16x128xf32, #tpu.memory_space<vmem>>, %arg4: memref<16x384xbf16, #tpu.memory_space<vmem>>, %arg5: memref<8x384xbf16, #tpu.memory_space<vmem>>, %arg6: memref<1x384xf32, #tpu.memory_space<vmem>>, %arg7: memref<1x128xf32, #tpu.memory_space<vmem>>, %arg8: memref<128x384xbf16, #tpu.memory_space<vmem>>, %arg9: memref<128x384xbf16, #tpu.memory_space<vmem>>, %arg10: memref<1x384xf32, #tpu.memory_space<vmem>>, %arg11: memref<1x128xf32, #tpu.memory_space<vmem>>, %arg12: memref<128x384xbf16, #tpu.memory_space<vmem>>, %arg13: memref<128x128xbf16, #tpu.memory_space<vmem>>, %arg14: memref<1x128xf32, #tpu.memory_space<vmem>>, %arg15: memref<8x16x128xbf16, #tpu.memory_space<vmem>>, %arg16: memref<2x16x128xf32, #tpu.memory_space<vmem>>, %arg17: memref<2x16x128xf32, #tpu.memory_space<vmem>>, %arg18: memref<128x384xf32, #tpu.memory_space<vmem>>) attributes {dimension_semantics = [#tpu.dimension_semantics<parallel>], iteration_bounds = array<i64: 1>, scalar_prefetch = 0 : i64, scratch_operands = 1 : i64, tpu.core_type = #tpu.core_type<tc>, window_params = [{transform_indices = @transform_0, window_bounds = array<i64: 8, 16, 16>}, {transform_indices = @transform_1, window_bounds = array<i64: 8, 16, 8>}, {transform_indices = @transform_2, window_bounds = array<i64: 2, 16, 128>}, {pipeline_mode = #tpu.pipeline_mode<synchronous>, transform_indices = @transform_3, window_bounds = array<i64: 16, 384>}, {pipeline_mode = #tpu.pipeline_mode<synchronous>, transform_indices = @transform_4, window_bounds = array<i64: 8, 384>}, {pipeline_mode = #tpu.pipeline_mode<synchronous>, transform_indices = @transform_5, window_bounds = array<i64: 1, 384>}, {pipeline_mode = #tpu.pipeline_mode<synchronous>, transform_indices = @transform_6, window_bounds = array<i64: 1, 128>}, {pipeline_mode = #tpu.pipeline_mode<synchronous>, transform_indices = @transform_7, window_bounds = array<i64: 128, 384>}, {pipeline_mode = #tpu.pipeline_mode<synchronous>, transform_indices = @transform_8, window_bounds = array<i64: 128, 384>}, {pipeline_mode = #tpu.pipeline_mode<synchronous>, transform_indices = @transform_9, window_bounds = array<i64: 1, 384>}, {pipeline_mode = #tpu.pipeline_mode<synchronous>, transform_indices = @transform_10, window_bounds = array<i64: 1, 128>}, {pipeline_mode = #tpu.pipeline_mode<synchronous>, transform_indices = @transform_11, window_bounds = array<i64: 128, 384>}, {pipeline_mode = #tpu.pipeline_mode<synchronous>, transform_indices = @transform_12, window_bounds = array<i64: 128, 128>}, {pipeline_mode = #tpu.pipeline_mode<synchronous>, transform_indices = @transform_13, window_bounds = array<i64: 1, 128>}, {transform_indices = @transform_14, window_bounds = array<i64: 8, 16, 128>}, {transform_indices = @transform_15, window_bounds = array<i64: 2, 16, 128>}, {transform_indices = @transform_16, window_bounds = array<i64: 2, 16, 128>}]} {
    %c0 = arith.constant 0 : index
    %c0_0 = arith.constant 0 : index
    %0 = vector.load %arg7[%c0, %c0_0] : memref<1x128xf32, #tpu.memory_space<vmem>>, vector<1x128xf32>
    %c0_1 = arith.constant 0 : index
    %c0_2 = arith.constant 0 : index
    %c0_3 = arith.constant 0 : index
    %1 = vector.load %arg3[%c0_1, %c0_2, %c0_3] : memref<2x16x128xf32, #tpu.memory_space<vmem>>, vector<1x16x128xf32>
    %2 = vector.shape_cast %1 : vector<1x16x128xf32> to vector<16x128xf32>
    %c0_4 = arith.constant 0 : index
    %c0_5 = arith.constant 0 : index
    %c0_6 = arith.constant 0 : index
    %3 = vector.load %arg1[%c0_4, %c0_5, %c0_6] : memref<8x16x16xbf16, #tpu.memory_space<vmem>>, vector<8x16x16xbf16>
    %4 = vector.shape_cast %3 : vector<8x16x16xbf16> to vector<128x16xbf16>
    %c0_7 = arith.constant 0 : index
    %c0_8 = arith.constant 0 : index
    %c0_9 = arith.constant 0 : index
    %5 = vector.load %arg2[%c0_7, %c0_8, %c0_9] : memref<8x16x8xf32, #tpu.memory_space<vmem>>, vector<8x16x8xf32>
    %6 = vector.shape_cast %5 : vector<8x16x8xf32> to vector<128x8xf32>
    %7 = arith.truncf %6 : vector<128x8xf32> to vector<128x8xbf16>
    %c0_10 = arith.constant 0 : index
    %c0_11 = arith.constant 0 : index
    %8 = vector.load %arg4[%c0_10, %c0_11] : memref<16x384xbf16, #tpu.memory_space<vmem>>, vector<16x384xbf16>
    %cst = arith.constant dense<0.000000e+00> : vector<128x384xf32>
    %9 = tpu.matmul %4, %8, %cst {dimension_numbers = #tpu.dot_dimension_numbers<[1], [0], [0], [1], [0, 0, 1, 1], [], []>} : vector<128x16xbf16>, vector<16x384xbf16>, vector<128x384xf32> -> vector<128x384xf32>
    %c0_12 = arith.constant 0 : index
    %c0_13 = arith.constant 0 : index
    %10 = vector.load %arg5[%c0_12, %c0_13] : memref<8x384xbf16, #tpu.memory_space<vmem>>, vector<8x384xbf16>
    %cst_14 = arith.constant dense<0.000000e+00> : vector<128x384xf32>
    %11 = tpu.matmul %7, %10, %cst_14 {dimension_numbers = #tpu.dot_dimension_numbers<[1], [0], [0], [1], [0, 0, 1, 1], [], []>} : vector<128x8xbf16>, vector<8x384xbf16>, vector<128x384xf32> -> vector<128x384xf32>
    %12 = arith.addf %9, %11 : vector<128x384xf32>
    %c0_15 = arith.constant 0 : index
    %c0_16 = arith.constant 0 : index
    %13 = vector.load %arg6[%c0_15, %c0_16] : memref<1x384xf32, #tpu.memory_space<vmem>>, vector<1x384xf32>
    %14 = vector.broadcast %13 : vector<1x384xf32> to vector<128x384xf32>
    %15 = arith.addf %12, %14 : vector<128x384xf32>
    %c0_17 = arith.constant 0 : index
    %c0_18 = arith.constant 0 : index
    %16 = vector.load %arg18[%c0_17, %c0_18] : memref<128x384xf32, #tpu.memory_space<vmem>>, vector<128x384xf32>
    tpu.vector_store %arg18[%c0_17, %c0_18], %15 {strides = array<i32>} : memref<128x384xf32, #tpu.memory_space<vmem>>, vector<128x384xf32>,
    %c0_i32 = arith.constant 0 : i32
    %c16_i32 = arith.constant 16 : i32
    %17 = arith.muli %c0_i32, %c16_i32 : i32
    %18 = tpu.assume_multiple %17, 16 : i32
    %19 = arith.index_cast %18 : i32 to index
    %c0_19 = arith.constant 0 : index
    %20 = vector.load %arg18[%19, %c0_19] : memref<128x384xf32, #tpu.memory_space<vmem>>, vector<16x384xf32>
    %21 = arith.truncf %2 : vector<16x128xf32> to vector<16x128xbf16>
    %c0_20 = arith.constant 0 : index
    %c0_21 = arith.constant 0 : index
    %22 = vector.load %arg8[%c0_20, %c0_21] : memref<128x384xbf16, #tpu.memory_space<vmem>>, vector<128x384xbf16>
    %cst_22 = arith.constant dense<0.000000e+00> : vector<16x384xf32>
    %23 = tpu.matmul %21, %22, %cst_22 {dimension_numbers = #tpu.dot_dimension_numbers<[1], [0], [0], [1], [0, 0, 1, 1], [], []>} : vector<16x128xbf16>, vector<128x384xbf16>, vector<16x384xf32> -> vector<16x384xf32>
    %24 = vector.extract_strided_slice %20 {offsets = [0, 0], sizes = [16, 128], strides = [1, 1]} : vector<16x384xf32> to vector<16x128xf32>
    %25 = vector.extract_strided_slice %23 {offsets = [0, 0], sizes = [16, 128], strides = [1, 1]} : vector<16x384xf32> to vector<16x128xf32>
    %26 = arith.addf %24, %25 : vector<16x128xf32>
    %27 = arith.negf %26 : vector<16x128xf32>
    %28 = math.exp %27 : vector<16x128xf32>
    %cst_23 = arith.constant 1.000000e+00 : f32
    %29 = vector.broadcast %cst_23 : f32 to vector<16x128xf32>
    %30 = arith.addf %29, %28 : vector<16x128xf32>
    %31 = arith.divf %29, %30 : vector<16x128xf32>
    %32 = vector.extract_strided_slice %20 {offsets = [0, 128], sizes = [16, 128], strides = [1, 1]} : vector<16x384xf32> to vector<16x128xf32>
    %33 = vector.extract_strided_slice %23 {offsets = [0, 128], sizes = [16, 128], strides = [1, 1]} : vector<16x384xf32> to vector<16x128xf32>
    %34 = arith.addf %32, %33 : vector<16x128xf32>
    %35 = arith.negf %34 : vector<16x128xf32>
    %36 = math.exp %35 : vector<16x128xf32>
    %cst_24 = arith.constant 1.000000e+00 : f32
    %37 = vector.broadcast %cst_24 : f32 to vector<16x128xf32>
    %38 = arith.addf %37, %36 : vector<16x128xf32>
    %39 = arith.divf %37, %38 : vector<16x128xf32>
    %40 = vector.extract_strided_slice %20 {offsets = [0, 256], sizes = [16, 128], strides = [1, 1]} : vector<16x384xf32> to vector<16x128xf32>
    %41 = vector.extract_strided_slice %23 {offsets = [0, 256], sizes = [16, 128], strides = [1, 1]} : vector<16x384xf32> to vector<16x128xf32>
    %42 = vector.broadcast %0 : vector<1x128xf32> to vector<16x128xf32>
    %43 = arith.addf %41, %42 : vector<16x128xf32>
    %44 = arith.mulf %31, %43 : vector<16x128xf32>
    %45 = arith.addf %40, %44 : vector<16x128xf32>
    %46 = math.tanh %45 : vector<16x128xf32>
    %cst_25 = arith.constant 1.000000e+00 : f32
    %47 = vector.broadcast %cst_25 : f32 to vector<16x128xf32>
    %48 = arith.subf %47, %39 : vector<16x128xf32>
    %49 = arith.mulf %48, %46 : vector<16x128xf32>
    %50 = arith.mulf %39, %2 : vector<16x128xf32>
    %51 = arith.addf %49, %50 : vector<16x128xf32>
    %52 = arith.truncf %51 : vector<16x128xf32> to vector<16x128xbf16>
    %c0_i32_26 = arith.constant 0 : i32
    %53 = arith.addi %c0_i32_26, %c0_i32 : i32
    %54 = arith.index_cast %53 : i32 to index
    %c0_27 = arith.constant 0 : index
    %c0_28 = arith.constant 0 : index
    %55 = vector.load %arg15[%54, %c0_27, %c0_28] : memref<8x16x128xbf16, #tpu.memory_space<vmem>>, vector<1x16x128xbf16>
    %56 = vector.shape_cast %55 : vector<1x16x128xbf16> to vector<16x128xbf16>
    %57 = vector.shape_cast %52 : vector<16x128xbf16> to vector<1x16x128xbf16>
    tpu.vector_store %arg15[%54, %c0_27, %c0_28], %57 {strides = array<i32>} : memref<8x16x128xbf16, #tpu.memory_space<vmem>>, vector<1x16x128xbf16>,
    %c1_i32 = arith.constant 1 : i32
    %c16_i32_29 = arith.constant 16 : i32
    %58 = arith.muli %c1_i32, %c16_i32_29 : i32
    %59 = tpu.assume_multiple %58, 16 : i32
    %60 = arith.index_cast %59 : i32 to index
    %c0_30 = arith.constant 0 : index
    %61 = vector.load %arg18[%60, %c0_30] : memref<128x384xf32, #tpu.memory_space<vmem>>, vector<16x384xf32>
    %62 = arith.truncf %51 : vector<16x128xf32> to vector<16x128xbf16>
    %c0_31 = arith.constant 0 : index
    %c0_32 = arith.constant 0 : index
    %63 = vector.load %arg8[%c0_31, %c0_32] : memref<128x384xbf16, #tpu.memory_space<vmem>>, vector<128x384xbf16>
    %cst_33 = arith.constant dense<0.000000e+00> : vector<16x384xf32>
    %64 = tpu.matmul %62, %63, %cst_33 {dimension_numbers = #tpu.dot_dimension_numbers<[1], [0], [0], [1], [0, 0, 1, 1], [], []>} : vector<16x128xbf16>, vector<128x384xbf16>, vector<16x384xf32> -> vector<16x384xf32>
    %65 = vector.extract_strided_slice %61 {offsets = [0, 0], sizes = [16, 128], strides = [1, 1]} : vector<16x384xf32> to vector<16x128xf32>
    %66 = vector.extract_strided_slice %64 {offsets = [0, 0], sizes = [16, 128], strides = [1, 1]} : vector<16x384xf32> to vector<16x128xf32>
    %67 = arith.addf %65, %66 : vector<16x128xf32>
    %68 = arith.negf %67 : vector<16x128xf32>
    %69 = math.exp %68 : vector<16x128xf32>
    %cst_34 = arith.constant 1.000000e+00 : f32
    %70 = vector.broadcast %cst_34 : f32 to vector<16x128xf32>
    %71 = arith.addf %70, %69 : vector<16x128xf32>
    %72 = arith.divf %70, %71 : vector<16x128xf32>
    %73 = vector.extract_strided_slice %61 {offsets = [0, 128], sizes = [16, 128], strides = [1, 1]} : vector<16x384xf32> to vector<16x128xf32>
    %74 = vector.extract_strided_slice %64 {offsets = [0, 128], sizes = [16, 128], strides = [1, 1]} : vector<16x384xf32> to vector<16x128xf32>
    %75 = arith.addf %73, %74 : vector<16x128xf32>
    %76 = arith.negf %75 : vector<16x128xf32>
    %77 = math.exp %76 : vector<16x128xf32>
    %cst_35 = arith.constant 1.000000e+00 : f32
    %78 = vector.broadcast %cst_35 : f32 to vector<16x128xf32>
    %79 = arith.addf %78, %77 : vector<16x128xf32>
    %80 = arith.divf %78, %79 : vector<16x128xf32>
    %81 = vector.extract_strided_slice %61 {offsets = [0, 256], sizes = [16, 128], strides = [1, 1]} : vector<16x384xf32> to vector<16x128xf32>
    %82 = vector.extract_strided_slice %64 {offsets = [0, 256], sizes = [16, 128], strides = [1, 1]} : vector<16x384xf32> to vector<16x128xf32>
    %83 = vector.broadcast %0 : vector<1x128xf32> to vector<16x128xf32>
    %84 = arith.addf %82, %83 : vector<16x128xf32>
    %85 = arith.mulf %72, %84 : vector<16x128xf32>
    %86 = arith.addf %81, %85 : vector<16x128xf32>
    %87 = math.tanh %86 : vector<16x128xf32>
    %cst_36 = arith.constant 1.000000e+00 : f32
    %88 = vector.broadcast %cst_36 : f32 to vector<16x128xf32>
    %89 = arith.subf %88, %80 : vector<16x128xf32>
    %90 = arith.mulf %89, %87 : vector<16x128xf32>
    %91 = arith.mulf %80, %51 : vector<16x128xf32>
    %92 = arith.addf %90, %91 : vector<16x128xf32>
    %93 = arith.truncf %92 : vector<16x128xf32> to vector<16x128xbf16>
    %c0_i32_37 = arith.constant 0 : i32
    %94 = arith.addi %c0_i32_37, %c1_i32 : i32
    %95 = arith.index_cast %94 : i32 to index
    %c0_38 = arith.constant 0 : index
    %c0_39 = arith.constant 0 : index
    %96 = vector.load %arg15[%95, %c0_38, %c0_39] : memref<8x16x128xbf16, #tpu.memory_space<vmem>>, vector<1x16x128xbf16>
    %97 = vector.shape_cast %96 : vector<1x16x128xbf16> to vector<16x128xbf16>
    %98 = vector.shape_cast %93 : vector<16x128xbf16> to vector<1x16x128xbf16>
    tpu.vector_store %arg15[%95, %c0_38, %c0_39], %98 {strides = array<i32>} : memref<8x16x128xbf16, #tpu.memory_space<vmem>>, vector<1x16x128xbf16>,
    %c2_i32 = arith.constant 2 : i32
    %c16_i32_40 = arith.constant 16 : i32
    %99 = arith.muli %c2_i32, %c16_i32_40 : i32
    %100 = tpu.assume_multiple %99, 16 : i32
    %101 = arith.index_cast %100 : i32 to index
    %c0_41 = arith.constant 0 : index
    %102 = vector.load %arg18[%101, %c0_41] : memref<128x384xf32, #tpu.memory_space<vmem>>, vector<16x384xf32>
    %103 = arith.truncf %92 : vector<16x128xf32> to vector<16x128xbf16>
    %c0_42 = arith.constant 0 : index
    %c0_43 = arith.constant 0 : index
    %104 = vector.load %arg8[%c0_42, %c0_43] : memref<128x384xbf16, #tpu.memory_space<vmem>>, vector<128x384xbf16>
    %cst_44 = arith.constant dense<0.000000e+00> : vector<16x384xf32>
    %105 = tpu.matmul %103, %104, %cst_44 {dimension_numbers = #tpu.dot_dimension_numbers<[1], [0], [0], [1], [0, 0, 1, 1], [], []>} : vector<16x128xbf16>, vector<128x384xbf16>, vector<16x384xf32> -> vector<16x384xf32>
    %106 = vector.extract_strided_slice %102 {offsets = [0, 0], sizes = [16, 128], strides = [1, 1]} : vector<16x384xf32> to vector<16x128xf32>
    %107 = vector.extract_strided_slice %105 {offsets = [0, 0], sizes = [16, 128], strides = [1, 1]} : vector<16x384xf32> to vector<16x128xf32>
    %108 = arith.addf %106, %107 : vector<16x128xf32>
    %109 = arith.negf %108 : vector<16x128xf32>
    %110 = math.exp %109 : vector<16x128xf32>
    %cst_45 = arith.constant 1.000000e+00 : f32
    %111 = vector.broadcast %cst_45 : f32 to vector<16x128xf32>
    %112 = arith.addf %111, %110 : vector<16x128xf32>
    %113 = arith.divf %111, %112 : vector<16x128xf32>
    %114 = vector.extract_strided_slice %102 {offsets = [0, 128], sizes = [16, 128], strides = [1, 1]} : vector<16x384xf32> to vector<16x128xf32>
    %115 = vector.extract_strided_slice %105 {offsets = [0, 128], sizes = [16, 128], strides = [1, 1]} : vector<16x384xf32> to vector<16x128xf32>
    %116 = arith.addf %114, %115 : vector<16x128xf32>
    %117 = arith.negf %116 : vector<16x128xf32>
    %118 = math.exp %117 : vector<16x128xf32>
    %cst_46 = arith.constant 1.000000e+00 : f32
    %119 = vector.broadcast %cst_46 : f32 to vector<16x128xf32>
    %120 = arith.addf %119, %118 : vector<16x128xf32>
    %121 = arith.divf %119, %120 : vector<16x128xf32>
    %122 = vector.extract_strided_slice %102 {offsets = [0, 256], sizes = [16, 128], strides = [1, 1]} : vector<16x384xf32> to vector<16x128xf32>
    %123 = vector.extract_strided_slice %105 {offsets = [0, 256], sizes = [16, 128], strides = [1, 1]} : vector<16x384xf32> to vector<16x128xf32>
    %124 = vector.broadcast %0 : vector<1x128xf32> to vector<16x128xf32>
    %125 = arith.addf %123, %124 : vector<16x128xf32>
    %126 = arith.mulf %113, %125 : vector<16x128xf32>
    %127 = arith.addf %122, %126 : vector<16x128xf32>
    %128 = math.tanh %127 : vector<16x128xf32>
    %cst_47 = arith.constant 1.000000e+00 : f32
    %129 = vector.broadcast %cst_47 : f32 to vector<16x128xf32>
    %130 = arith.subf %129, %121 : vector<16x128xf32>
    %131 = arith.mulf %130, %128 : vector<16x128xf32>
    %132 = arith.mulf %121, %92 : vector<16x128xf32>
    %133 = arith.addf %131, %132 : vector<16x128xf32>
    %134 = arith.truncf %133 : vector<16x128xf32> to vector<16x128xbf16>
    %c0_i32_48 = arith.constant 0 : i32
    %135 = arith.addi %c0_i32_48, %c2_i32 : i32
    %136 = arith.index_cast %135 : i32 to index
    %c0_49 = arith.constant 0 : index
    %c0_50 = arith.constant 0 : index
    %137 = vector.load %arg15[%136, %c0_49, %c0_50] : memref<8x16x128xbf16, #tpu.memory_space<vmem>>, vector<1x16x128xbf16>
    %138 = vector.shape_cast %137 : vector<1x16x128xbf16> to vector<16x128xbf16>
    %139 = vector.shape_cast %134 : vector<16x128xbf16> to vector<1x16x128xbf16>
    tpu.vector_store %arg15[%136, %c0_49, %c0_50], %139 {strides = array<i32>} : memref<8x16x128xbf16, #tpu.memory_space<vmem>>, vector<1x16x128xbf16>,
    %c3_i32 = arith.constant 3 : i32
    %c16_i32_51 = arith.constant 16 : i32
    %140 = arith.muli %c3_i32, %c16_i32_51 : i32
    %141 = tpu.assume_multiple %140, 16 : i32
    %142 = arith.index_cast %141 : i32 to index
    %c0_52 = arith.constant 0 : index
    %143 = vector.load %arg18[%142, %c0_52] : memref<128x384xf32, #tpu.memory_space<vmem>>, vector<16x384xf32>
    %144 = arith.truncf %133 : vector<16x128xf32> to vector<16x128xbf16>
    %c0_53 = arith.constant 0 : index
    %c0_54 = arith.constant 0 : index
    %145 = vector.load %arg8[%c0_53, %c0_54] : memref<128x384xbf16, #tpu.memory_space<vmem>>, vector<128x384xbf16>
    %cst_55 = arith.constant dense<0.000000e+00> : vector<16x384xf32>
    %146 = tpu.matmul %144, %145, %cst_55 {dimension_numbers = #tpu.dot_dimension_numbers<[1], [0], [0], [1], [0, 0, 1, 1], [], []>} : vector<16x128xbf16>, vector<128x384xbf16>, vector<16x384xf32> -> vector<16x384xf32>
    %147 = vector.extract_strided_slice %143 {offsets = [0, 0], sizes = [16, 128], strides = [1, 1]} : vector<16x384xf32> to vector<16x128xf32>
    %148 = vector.extract_strided_slice %146 {offsets = [0, 0], sizes = [16, 128], strides = [1, 1]} : vector<16x384xf32> to vector<16x128xf32>
    %149 = arith.addf %147, %148 : vector<16x128xf32>
    %150 = arith.negf %149 : vector<16x128xf32>
    %151 = math.exp %150 : vector<16x128xf32>
    %cst_56 = arith.constant 1.000000e+00 : f32
    %152 = vector.broadcast %cst_56 : f32 to vector<16x128xf32>
    %153 = arith.addf %152, %151 : vector<16x128xf32>
    %154 = arith.divf %152, %153 : vector<16x128xf32>
    %155 = vector.extract_strided_slice %143 {offsets = [0, 128], sizes = [16, 128], strides = [1, 1]} : vector<16x384xf32> to vector<16x128xf32>
    %156 = vector.extract_strided_slice %146 {offsets = [0, 128], sizes = [16, 128], strides = [1, 1]} : vector<16x384xf32> to vector<16x128xf32>
    %157 = arith.addf %155, %156 : vector<16x128xf32>
    %158 = arith.negf %157 : vector<16x128xf32>
    %159 = math.exp %158 : vector<16x128xf32>
    %cst_57 = arith.constant 1.000000e+00 : f32
    %160 = vector.broadcast %cst_57 : f32 to vector<16x128xf32>
    %161 = arith.addf %160, %159 : vector<16x128xf32>
    %162 = arith.divf %160, %161 : vector<16x128xf32>
    %163 = vector.extract_strided_slice %143 {offsets = [0, 256], sizes = [16, 128], strides = [1, 1]} : vector<16x384xf32> to vector<16x128xf32>
    %164 = vector.extract_strided_slice %146 {offsets = [0, 256], sizes = [16, 128], strides = [1, 1]} : vector<16x384xf32> to vector<16x128xf32>
    %165 = vector.broadcast %0 : vector<1x128xf32> to vector<16x128xf32>
    %166 = arith.addf %164, %165 : vector<16x128xf32>
    %167 = arith.mulf %154, %166 : vector<16x128xf32>
    %168 = arith.addf %163, %167 : vector<16x128xf32>
    %169 = math.tanh %168 : vector<16x128xf32>
    %cst_58 = arith.constant 1.000000e+00 : f32
    %170 = vector.broadcast %cst_58 : f32 to vector<16x128xf32>
    %171 = arith.subf %170, %162 : vector<16x128xf32>
    %172 = arith.mulf %171, %169 : vector<16x128xf32>
    %173 = arith.mulf %162, %133 : vector<16x128xf32>
    %174 = arith.addf %172, %173 : vector<16x128xf32>
    %175 = arith.truncf %174 : vector<16x128xf32> to vector<16x128xbf16>
    %c0_i32_59 = arith.constant 0 : i32
    %176 = arith.addi %c0_i32_59, %c3_i32 : i32
    %177 = arith.index_cast %176 : i32 to index
    %c0_60 = arith.constant 0 : index
    %c0_61 = arith.constant 0 : index
    %178 = vector.load %arg15[%177, %c0_60, %c0_61] : memref<8x16x128xbf16, #tpu.memory_space<vmem>>, vector<1x16x128xbf16>
    %179 = vector.shape_cast %178 : vector<1x16x128xbf16> to vector<16x128xbf16>
    %180 = vector.shape_cast %175 : vector<16x128xbf16> to vector<1x16x128xbf16>
    tpu.vector_store %arg15[%177, %c0_60, %c0_61], %180 {strides = array<i32>} : memref<8x16x128xbf16, #tpu.memory_space<vmem>>, vector<1x16x128xbf16>,
    %c4_i32 = arith.constant 4 : i32
    %c16_i32_62 = arith.constant 16 : i32
    %181 = arith.muli %c4_i32, %c16_i32_62 : i32
    %182 = tpu.assume_multiple %181, 16 : i32
    %183 = arith.index_cast %182 : i32 to index
    %c0_63 = arith.constant 0 : index
    %184 = vector.load %arg18[%183, %c0_63] : memref<128x384xf32, #tpu.memory_space<vmem>>, vector<16x384xf32>
    %185 = arith.truncf %174 : vector<16x128xf32> to vector<16x128xbf16>
    %c0_64 = arith.constant 0 : index
    %c0_65 = arith.constant 0 : index
    %186 = vector.load %arg8[%c0_64, %c0_65] : memref<128x384xbf16, #tpu.memory_space<vmem>>, vector<128x384xbf16>
    %cst_66 = arith.constant dense<0.000000e+00> : vector<16x384xf32>
    %187 = tpu.matmul %185, %186, %cst_66 {dimension_numbers = #tpu.dot_dimension_numbers<[1], [0], [0], [1], [0, 0, 1, 1], [], []>} : vector<16x128xbf16>, vector<128x384xbf16>, vector<16x384xf32> -> vector<16x384xf32>
    %188 = vector.extract_strided_slice %184 {offsets = [0, 0], sizes = [16, 128], strides = [1, 1]} : vector<16x384xf32> to vector<16x128xf32>
    %189 = vector.extract_strided_slice %187 {offsets = [0, 0], sizes = [16, 128], strides = [1, 1]} : vector<16x384xf32> to vector<16x128xf32>
    %190 = arith.addf %188, %189 : vector<16x128xf32>
    %191 = arith.negf %190 : vector<16x128xf32>
    %192 = math.exp %191 : vector<16x128xf32>
    %cst_67 = arith.constant 1.000000e+00 : f32
    %193 = vector.broadcast %cst_67 : f32 to vector<16x128xf32>
    %194 = arith.addf %193, %192 : vector<16x128xf32>
    %195 = arith.divf %193, %194 : vector<16x128xf32>
    %196 = vector.extract_strided_slice %184 {offsets = [0, 128], sizes = [16, 128], strides = [1, 1]} : vector<16x384xf32> to vector<16x128xf32>
    %197 = vector.extract_strided_slice %187 {offsets = [0, 128], sizes = [16, 128], strides = [1, 1]} : vector<16x384xf32> to vector<16x128xf32>
    %198 = arith.addf %196, %197 : vector<16x128xf32>
    %199 = arith.negf %198 : vector<16x128xf32>
    %200 = math.exp %199 : vector<16x128xf32>
    %cst_68 = arith.constant 1.000000e+00 : f32
    %201 = vector.broadcast %cst_68 : f32 to vector<16x128xf32>
    %202 = arith.addf %201, %200 : vector<16x128xf32>
    %203 = arith.divf %201, %202 : vector<16x128xf32>
    %204 = vector.extract_strided_slice %184 {offsets = [0, 256], sizes = [16, 128], strides = [1, 1]} : vector<16x384xf32> to vector<16x128xf32>
    %205 = vector.extract_strided_slice %187 {offsets = [0, 256], sizes = [16, 128], strides = [1, 1]} : vector<16x384xf32> to vector<16x128xf32>
    %206 = vector.broadcast %0 : vector<1x128xf32> to vector<16x128xf32>
    %207 = arith.addf %205, %206 : vector<16x128xf32>
    %208 = arith.mulf %195, %207 : vector<16x128xf32>
    %209 = arith.addf %204, %208 : vector<16x128xf32>
    %210 = math.tanh %209 : vector<16x128xf32>
    %cst_69 = arith.constant 1.000000e+00 : f32
    %211 = vector.broadcast %cst_69 : f32 to vector<16x128xf32>
    %212 = arith.subf %211, %203 : vector<16x128xf32>
    %213 = arith.mulf %212, %210 : vector<16x128xf32>
    %214 = arith.mulf %203, %174 : vector<16x128xf32>
    %215 = arith.addf %213, %214 : vector<16x128xf32>
    %216 = arith.truncf %215 : vector<16x128xf32> to vector<16x128xbf16>
    %c0_i32_70 = arith.constant 0 : i32
    %217 = arith.addi %c0_i32_70, %c4_i32 : i32
    %218 = arith.index_cast %217 : i32 to index
    %c0_71 = arith.constant 0 : index
    %c0_72 = arith.constant 0 : index
    %219 = vector.load %arg15[%218, %c0_71, %c0_72] : memref<8x16x128xbf16, #tpu.memory_space<vmem>>, vector<1x16x128xbf16>
    %220 = vector.shape_cast %219 : vector<1x16x128xbf16> to vector<16x128xbf16>
    %221 = vector.shape_cast %216 : vector<16x128xbf16> to vector<1x16x128xbf16>
    tpu.vector_store %arg15[%218, %c0_71, %c0_72], %221 {strides = array<i32>} : memref<8x16x128xbf16, #tpu.memory_space<vmem>>, vector<1x16x128xbf16>,
    %c5_i32 = arith.constant 5 : i32
    %c16_i32_73 = arith.constant 16 : i32
    %222 = arith.muli %c5_i32, %c16_i32_73 : i32
    %223 = tpu.assume_multiple %222, 16 : i32
    %224 = arith.index_cast %223 : i32 to index
    %c0_74 = arith.constant 0 : index
    %225 = vector.load %arg18[%224, %c0_74] : memref<128x384xf32, #tpu.memory_space<vmem>>, vector<16x384xf32>
    %226 = arith.truncf %215 : vector<16x128xf32> to vector<16x128xbf16>
    %c0_75 = arith.constant 0 : index
    %c0_76 = arith.constant 0 : index
    %227 = vector.load %arg8[%c0_75, %c0_76] : memref<128x384xbf16, #tpu.memory_space<vmem>>, vector<128x384xbf16>
    %cst_77 = arith.constant dense<0.000000e+00> : vector<16x384xf32>
    %228 = tpu.matmul %226, %227, %cst_77 {dimension_numbers = #tpu.dot_dimension_numbers<[1], [0], [0], [1], [0, 0, 1, 1], [], []>} : vector<16x128xbf16>, vector<128x384xbf16>, vector<16x384xf32> -> vector<16x384xf32>
    %229 = vector.extract_strided_slice %225 {offsets = [0, 0], sizes = [16, 128], strides = [1, 1]} : vector<16x384xf32> to vector<16x128xf32>
    %230 = vector.extract_strided_slice %228 {offsets = [0, 0], sizes = [16, 128], strides = [1, 1]} : vector<16x384xf32> to vector<16x128xf32>
    %231 = arith.addf %229, %230 : vector<16x128xf32>
    %232 = arith.negf %231 : vector<16x128xf32>
    %233 = math.exp %232 : vector<16x128xf32>
    %cst_78 = arith.constant 1.000000e+00 : f32
    %234 = vector.broadcast %cst_78 : f32 to vector<16x128xf32>
    %235 = arith.addf %234, %233 : vector<16x128xf32>
    %236 = arith.divf %234, %235 : vector<16x128xf32>
    %237 = vector.extract_strided_slice %225 {offsets = [0, 128], sizes = [16, 128], strides = [1, 1]} : vector<16x384xf32> to vector<16x128xf32>
    %238 = vector.extract_strided_slice %228 {offsets = [0, 128], sizes = [16, 128], strides = [1, 1]} : vector<16x384xf32> to vector<16x128xf32>
    %239 = arith.addf %237, %238 : vector<16x128xf32>
    %240 = arith.negf %239 : vector<16x128xf32>
    %241 = math.exp %240 : vector<16x128xf32>
    %cst_79 = arith.constant 1.000000e+00 : f32
    %242 = vector.broadcast %cst_79 : f32 to vector<16x128xf32>
    %243 = arith.addf %242, %241 : vector<16x128xf32>
    %244 = arith.divf %242, %243 : vector<16x128xf32>
    %245 = vector.extract_strided_slice %225 {offsets = [0, 256], sizes = [16, 128], strides = [1, 1]} : vector<16x384xf32> to vector<16x128xf32>
    %246 = vector.extract_strided_slice %228 {offsets = [0, 256], sizes = [16, 128], strides = [1, 1]} : vector<16x384xf32> to vector<16x128xf32>
    %247 = vector.broadcast %0 : vector<1x128xf32> to vector<16x128xf32>
    %248 = arith.addf %246, %247 : vector<16x128xf32>
    %249 = arith.mulf %236, %248 : vector<16x128xf32>
    %250 = arith.addf %245, %249 : vector<16x128xf32>
    %251 = math.tanh %250 : vector<16x128xf32>
    %cst_80 = arith.constant 1.000000e+00 : f32
    %252 = vector.broadcast %cst_80 : f32 to vector<16x128xf32>
    %253 = arith.subf %252, %244 : vector<16x128xf32>
    %254 = arith.mulf %253, %251 : vector<16x128xf32>
    %255 = arith.mulf %244, %215 : vector<16x128xf32>
    %256 = arith.addf %254, %255 : vector<16x128xf32>
    %257 = arith.truncf %256 : vector<16x128xf32> to vector<16x128xbf16>
    %c0_i32_81 = arith.constant 0 : i32
    %258 = arith.addi %c0_i32_81, %c5_i32 : i32
    %259 = arith.index_cast %258 : i32 to index
    %c0_82 = arith.constant 0 : index
    %c0_83 = arith.constant 0 : index
    %260 = vector.load %arg15[%259, %c0_82, %c0_83] : memref<8x16x128xbf16, #tpu.memory_space<vmem>>, vector<1x16x128xbf16>
    %261 = vector.shape_cast %260 : vector<1x16x128xbf16> to vector<16x128xbf16>
    %262 = vector.shape_cast %257 : vector<16x128xbf16> to vector<1x16x128xbf16>
    tpu.vector_store %arg15[%259, %c0_82, %c0_83], %262 {strides = array<i32>} : memref<8x16x128xbf16, #tpu.memory_space<vmem>>, vector<1x16x128xbf16>,
    %c6_i32 = arith.constant 6 : i32
    %c16_i32_84 = arith.constant 16 : i32
    %263 = arith.muli %c6_i32, %c16_i32_84 : i32
    %264 = tpu.assume_multiple %263, 16 : i32
    %265 = arith.index_cast %264 : i32 to index
    %c0_85 = arith.constant 0 : index
    %266 = vector.load %arg18[%265, %c0_85] : memref<128x384xf32, #tpu.memory_space<vmem>>, vector<16x384xf32>
    %267 = arith.truncf %256 : vector<16x128xf32> to vector<16x128xbf16>
    %c0_86 = arith.constant 0 : index
    %c0_87 = arith.constant 0 : index
    %268 = vector.load %arg8[%c0_86, %c0_87] : memref<128x384xbf16, #tpu.memory_space<vmem>>, vector<128x384xbf16>
    %cst_88 = arith.constant dense<0.000000e+00> : vector<16x384xf32>
    %269 = tpu.matmul %267, %268, %cst_88 {dimension_numbers = #tpu.dot_dimension_numbers<[1], [0], [0], [1], [0, 0, 1, 1], [], []>} : vector<16x128xbf16>, vector<128x384xbf16>, vector<16x384xf32> -> vector<16x384xf32>
    %270 = vector.extract_strided_slice %266 {offsets = [0, 0], sizes = [16, 128], strides = [1, 1]} : vector<16x384xf32> to vector<16x128xf32>
    %271 = vector.extract_strided_slice %269 {offsets = [0, 0], sizes = [16, 128], strides = [1, 1]} : vector<16x384xf32> to vector<16x128xf32>
    %272 = arith.addf %270, %271 : vector<16x128xf32>
    %273 = arith.negf %272 : vector<16x128xf32>
    %274 = math.exp %273 : vector<16x128xf32>
    %cst_89 = arith.constant 1.000000e+00 : f32
    %275 = vector.broadcast %cst_89 : f32 to vector<16x128xf32>
    %276 = arith.addf %275, %274 : vector<16x128xf32>
    %277 = arith.divf %275, %276 : vector<16x128xf32>
    %278 = vector.extract_strided_slice %266 {offsets = [0, 128], sizes = [16, 128], strides = [1, 1]} : vector<16x384xf32> to vector<16x128xf32>
    %279 = vector.extract_strided_slice %269 {offsets = [0, 128], sizes = [16, 128], strides = [1, 1]} : vector<16x384xf32> to vector<16x128xf32>
    %280 = arith.addf %278, %279 : vector<16x128xf32>
    %281 = arith.negf %280 : vector<16x128xf32>
    %282 = math.exp %281 : vector<16x128xf32>
    %cst_90 = arith.constant 1.000000e+00 : f32
    %283 = vector.broadcast %cst_90 : f32 to vector<16x128xf32>
    %284 = arith.addf %283, %282 : vector<16x128xf32>
    %285 = arith.divf %283, %284 : vector<16x128xf32>
    %286 = vector.extract_strided_slice %266 {offsets = [0, 256], sizes = [16, 128], strides = [1, 1]} : vector<16x384xf32> to vector<16x128xf32>
    %287 = vector.extract_strided_slice %269 {offsets = [0, 256], sizes = [16, 128], strides = [1, 1]} : vector<16x384xf32> to vector<16x128xf32>
    %288 = vector.broadcast %0 : vector<1x128xf32> to vector<16x128xf32>
    %289 = arith.addf %287, %288 : vector<16x128xf32>
    %290 = arith.mulf %277, %289 : vector<16x128xf32>
    %291 = arith.addf %286, %290 : vector<16x128xf32>
    %292 = math.tanh %291 : vector<16x128xf32>
    %cst_91 = arith.constant 1.000000e+00 : f32
    %293 = vector.broadcast %cst_91 : f32 to vector<16x128xf32>
    %294 = arith.subf %293, %285 : vector<16x128xf32>
    %295 = arith.mulf %294, %292 : vector<16x128xf32>
    %296 = arith.mulf %285, %256 : vector<16x128xf32>
    %297 = arith.addf %295, %296 : vector<16x128xf32>
    %298 = arith.truncf %297 : vector<16x128xf32> to vector<16x128xbf16>
    %c0_i32_92 = arith.constant 0 : i32
    %299 = arith.addi %c0_i32_92, %c6_i32 : i32
    %300 = arith.index_cast %299 : i32 to index
    %c0_93 = arith.constant 0 : index
    %c0_94 = arith.constant 0 : index
    %301 = vector.load %arg15[%300, %c0_93, %c0_94] : memref<8x16x128xbf16, #tpu.memory_space<vmem>>, vector<1x16x128xbf16>
    %302 = vector.shape_cast %301 : vector<1x16x128xbf16> to vector<16x128xbf16>
    %303 = vector.shape_cast %298 : vector<16x128xbf16> to vector<1x16x128xbf16>
    tpu.vector_store %arg15[%300, %c0_93, %c0_94], %303 {strides = array<i32>} : memref<8x16x128xbf16, #tpu.memory_space<vmem>>, vector<1x16x128xbf16>,
    %c7_i32 = arith.constant 7 : i32
    %c16_i32_95 = arith.constant 16 : i32
    %304 = arith.muli %c7_i32, %c16_i32_95 : i32
    %305 = tpu.assume_multiple %304, 16 : i32
    %306 = arith.index_cast %305 : i32 to index
    %c0_96 = arith.constant 0 : index
    %307 = vector.load %arg18[%306, %c0_96] : memref<128x384xf32, #tpu.memory_space<vmem>>, vector<16x384xf32>
    %308 = arith.truncf %297 : vector<16x128xf32> to vector<16x128xbf16>
    %c0_97 = arith.constant 0 : index
    %c0_98 = arith.constant 0 : index
    %309 = vector.load %arg8[%c0_97, %c0_98] : memref<128x384xbf16, #tpu.memory_space<vmem>>, vector<128x384xbf16>
    %cst_99 = arith.constant dense<0.000000e+00> : vector<16x384xf32>
    %310 = tpu.matmul %308, %309, %cst_99 {dimension_numbers = #tpu.dot_dimension_numbers<[1], [0], [0], [1], [0, 0, 1, 1], [], []>} : vector<16x128xbf16>, vector<128x384xbf16>, vector<16x384xf32> -> vector<16x384xf32>
    %311 = vector.extract_strided_slice %307 {offsets = [0, 0], sizes = [16, 128], strides = [1, 1]} : vector<16x384xf32> to vector<16x128xf32>
    %312 = vector.extract_strided_slice %310 {offsets = [0, 0], sizes = [16, 128], strides = [1, 1]} : vector<16x384xf32> to vector<16x128xf32>
    %313 = arith.addf %311, %312 : vector<16x128xf32>
    %314 = arith.negf %313 : vector<16x128xf32>
    %315 = math.exp %314 : vector<16x128xf32>
    %cst_100 = arith.constant 1.000000e+00 : f32
    %316 = vector.broadcast %cst_100 : f32 to vector<16x128xf32>
    %317 = arith.addf %316, %315 : vector<16x128xf32>
    %318 = arith.divf %316, %317 : vector<16x128xf32>
    %319 = vector.extract_strided_slice %307 {offsets = [0, 128], sizes = [16, 128], strides = [1, 1]} : vector<16x384xf32> to vector<16x128xf32>
    %320 = vector.extract_strided_slice %310 {offsets = [0, 128], sizes = [16, 128], strides = [1, 1]} : vector<16x384xf32> to vector<16x128xf32>
    %321 = arith.addf %319, %320 : vector<16x128xf32>
    %322 = arith.negf %321 : vector<16x128xf32>
    %323 = math.exp %322 : vector<16x128xf32>
    %cst_101 = arith.constant 1.000000e+00 : f32
    %324 = vector.broadcast %cst_101 : f32 to vector<16x128xf32>
    %325 = arith.addf %324, %323 : vector<16x128xf32>
    %326 = arith.divf %324, %325 : vector<16x128xf32>
    %327 = vector.extract_strided_slice %307 {offsets = [0, 256], sizes = [16, 128], strides = [1, 1]} : vector<16x384xf32> to vector<16x128xf32>
    %328 = vector.extract_strided_slice %310 {offsets = [0, 256], sizes = [16, 128], strides = [1, 1]} : vector<16x384xf32> to vector<16x128xf32>
    %329 = vector.broadcast %0 : vector<1x128xf32> to vector<16x128xf32>
    %330 = arith.addf %328, %329 : vector<16x128xf32>
    %331 = arith.mulf %318, %330 : vector<16x128xf32>
    %332 = arith.addf %327, %331 : vector<16x128xf32>
    %333 = math.tanh %332 : vector<16x128xf32>
    %cst_102 = arith.constant 1.000000e+00 : f32
    %334 = vector.broadcast %cst_102 : f32 to vector<16x128xf32>
    %335 = arith.subf %334, %326 : vector<16x128xf32>
    %336 = arith.mulf %335, %333 : vector<16x128xf32>
    %337 = arith.mulf %326, %297 : vector<16x128xf32>
    %338 = arith.addf %336, %337 : vector<16x128xf32>
    %339 = arith.truncf %338 : vector<16x128xf32> to vector<16x128xbf16>
    %c0_i32_103 = arith.constant 0 : i32
    %340 = arith.addi %c0_i32_103, %c7_i32 : i32
    %341 = arith.index_cast %340 : i32 to index
    %c0_104 = arith.constant 0 : index
    %c0_105 = arith.constant 0 : index
    %342 = vector.load %arg15[%341, %c0_104, %c0_105] : memref<8x16x128xbf16, #tpu.memory_space<vmem>>, vector<1x16x128xbf16>
    %343 = vector.shape_cast %342 : vector<1x16x128xbf16> to vector<16x128xbf16>
    %344 = vector.shape_cast %339 : vector<16x128xbf16> to vector<1x16x128xbf16>
    tpu.vector_store %arg15[%341, %c0_104, %c0_105], %344 {strides = array<i32>} : memref<8x16x128xbf16, #tpu.memory_space<vmem>>, vector<1x16x128xbf16>,
    %c8_i32 = arith.constant 8 : i32
    %c0_106 = arith.constant 0 : index
    %c0_107 = arith.constant 0 : index
    %c0_108 = arith.constant 0 : index
    %345 = vector.load %arg16[%c0_106, %c0_107, %c0_108] : memref<2x16x128xf32, #tpu.memory_space<vmem>>, vector<1x16x128xf32>
    %346 = vector.shape_cast %345 : vector<1x16x128xf32> to vector<16x128xf32>
    %347 = vector.shape_cast %338 : vector<16x128xf32> to vector<1x16x128xf32>
    tpu.vector_store %arg16[%c0_106, %c0_107, %c0_108], %347 {strides = array<i32>} : memref<2x16x128xf32, #tpu.memory_space<vmem>>, vector<1x16x128xf32>,
    %348 = arith.truncf %338 : vector<16x128xf32> to vector<16x128xbf16>
    %c0_109 = arith.constant 0 : index
    %c0_110 = arith.constant 0 : index
    %349 = vector.load %arg13[%c0_109, %c0_110] : memref<128x128xbf16, #tpu.memory_space<vmem>>, vector<128x128xbf16>
    %cst_111 = arith.constant dense<0.000000e+00> : vector<16x128xf32>
    %350 = tpu.matmul %348, %349, %cst_111 {dimension_numbers = #tpu.dot_dimension_numbers<[1], [0], [0], [1], [0, 0, 1, 1], [], []>} : vector<16x128xbf16>, vector<128x128xbf16>, vector<16x128xf32> -> vector<16x128xf32>
    %c0_112 = arith.constant 0 : index
    %c0_113 = arith.constant 0 : index
    %351 = vector.load %arg14[%c0_112, %c0_113] : memref<1x128xf32, #tpu.memory_space<vmem>>, vector<1x128xf32>
    %352 = vector.broadcast %351 : vector<1x128xf32> to vector<16x128xf32>
    %353 = arith.addf %350, %352 : vector<16x128xf32>
    %cst_114 = arith.constant 0.000000e+00 : f32
    %354 = vector.broadcast %cst_114 : f32 to vector<16x128xf32>
    %355 = arith.maximumf %353, %354 : vector<16x128xf32>
    %c0_115 = arith.constant 0 : index
    %c0_116 = arith.constant 0 : index
    %c0_117 = arith.constant 0 : index
    %356 = vector.load %arg17[%c0_115, %c0_116, %c0_117] : memref<2x16x128xf32, #tpu.memory_space<vmem>>, vector<1x16x128xf32>
    %357 = vector.shape_cast %356 : vector<1x16x128xf32> to vector<16x128xf32>
    %358 = vector.shape_cast %355 : vector<16x128xf32> to vector<1x16x128xf32>
    tpu.vector_store %arg17[%c0_115, %c0_116, %c0_117], %358 {strides = array<i32>} : memref<2x16x128xf32, #tpu.memory_space<vmem>>, vector<1x16x128xf32>,
    %c0_118 = arith.constant 0 : index
    %c0_119 = arith.constant 0 : index
    %359 = vector.load %arg11[%c0_118, %c0_119] : memref<1x128xf32, #tpu.memory_space<vmem>>, vector<1x128xf32>
    %c1 = arith.constant 1 : index
    %c0_120 = arith.constant 0 : index
    %c0_121 = arith.constant 0 : index
    %360 = vector.load %arg3[%c1, %c0_120, %c0_121] : memref<2x16x128xf32, #tpu.memory_space<vmem>>, vector<1x16x128xf32>
    %361 = vector.shape_cast %360 : vector<1x16x128xf32> to vector<16x128xf32>
    %c0_122 = arith.constant 0 : index
    %c0_123 = arith.constant 0 : index
    %c0_124 = arith.constant 0 : index
    %362 = vector.load %arg15[%c0_122, %c0_123, %c0_124] : memref<8x16x128xbf16, #tpu.memory_space<vmem>>, vector<8x16x128xbf16>
    %363 = vector.shape_cast %362 : vector<8x16x128xbf16> to vector<128x128xbf16>
    %c0_125 = arith.constant 0 : index
    %c0_126 = arith.constant 0 : index
    %364 = vector.load %arg9[%c0_125, %c0_126] : memref<128x384xbf16, #tpu.memory_space<vmem>>, vector<128x384xbf16>
    %cst_127 = arith.constant dense<0.000000e+00> : vector<128x384xf32>
    %365 = tpu.matmul %363, %364, %cst_127 {dimension_numbers = #tpu.dot_dimension_numbers<[1], [0], [0], [1], [0, 0, 1, 1], [], []>} : vector<128x128xbf16>, vector<128x384xbf16>, vector<128x384xf32> -> vector<128x384xf32>
    %c0_128 = arith.constant 0 : index
    %c0_129 = arith.constant 0 : index
    %366 = vector.load %arg10[%c0_128, %c0_129] : memref<1x384xf32, #tpu.memory_space<vmem>>, vector<1x384xf32>
    %367 = vector.broadcast %366 : vector<1x384xf32> to vector<128x384xf32>
    %368 = arith.addf %365, %367 : vector<128x384xf32>
    %c0_130 = arith.constant 0 : index
    %c0_131 = arith.constant 0 : index
    %369 = vector.load %arg18[%c0_130, %c0_131] : memref<128x384xf32, #tpu.memory_space<vmem>>, vector<128x384xf32>
    tpu.vector_store %arg18[%c0_130, %c0_131], %368 {strides = array<i32>} : memref<128x384xf32, #tpu.memory_space<vmem>>, vector<128x384xf32>,
    %c0_i32_132 = arith.constant 0 : i32
    %c16_i32_133 = arith.constant 16 : i32
    %370 = arith.muli %c0_i32_132, %c16_i32_133 : i32
    %371 = tpu.assume_multiple %370, 16 : i32
    %372 = arith.index_cast %371 : i32 to index
    %c0_134 = arith.constant 0 : index
    %373 = vector.load %arg18[%372, %c0_134] : memref<128x384xf32, #tpu.memory_space<vmem>>, vector<16x384xf32>
    %374 = arith.truncf %361 : vector<16x128xf32> to vector<16x128xbf16>
    %c0_135 = arith.constant 0 : index
    %c0_136 = arith.constant 0 : index
    %375 = vector.load %arg12[%c0_135, %c0_136] : memref<128x384xbf16, #tpu.memory_space<vmem>>, vector<128x384xbf16>
    %cst_137 = arith.constant dense<0.000000e+00> : vector<16x384xf32>
    %376 = tpu.matmul %374, %375, %cst_137 {dimension_numbers = #tpu.dot_dimension_numbers<[1], [0], [0], [1], [0, 0, 1, 1], [], []>} : vector<16x128xbf16>, vector<128x384xbf16>, vector<16x384xf32> -> vector<16x384xf32>
    %377 = vector.extract_strided_slice %373 {offsets = [0, 0], sizes = [16, 128], strides = [1, 1]} : vector<16x384xf32> to vector<16x128xf32>
    %378 = vector.extract_strided_slice %376 {offsets = [0, 0], sizes = [16, 128], strides = [1, 1]} : vector<16x384xf32> to vector<16x128xf32>
    %379 = arith.addf %377, %378 : vector<16x128xf32>
    %380 = arith.negf %379 : vector<16x128xf32>
    %381 = math.exp %380 : vector<16x128xf32>
    %cst_138 = arith.constant 1.000000e+00 : f32
    %382 = vector.broadcast %cst_138 : f32 to vector<16x128xf32>
    %383 = arith.addf %382, %381 : vector<16x128xf32>
    %384 = arith.divf %382, %383 : vector<16x128xf32>
    %385 = vector.extract_strided_slice %373 {offsets = [0, 128], sizes = [16, 128], strides = [1, 1]} : vector<16x384xf32> to vector<16x128xf32>
    %386 = vector.extract_strided_slice %376 {offsets = [0, 128], sizes = [16, 128], strides = [1, 1]} : vector<16x384xf32> to vector<16x128xf32>
    %387 = arith.addf %385, %386 : vector<16x128xf32>
    %388 = arith.negf %387 : vector<16x128xf32>
    %389 = math.exp %388 : vector<16x128xf32>
    %cst_139 = arith.constant 1.000000e+00 : f32
    %390 = vector.broadcast %cst_139 : f32 to vector<16x128xf32>
    %391 = arith.addf %390, %389 : vector<16x128xf32>
    %392 = arith.divf %390, %391 : vector<16x128xf32>
    %393 = vector.extract_strided_slice %373 {offsets = [0, 256], sizes = [16, 128], strides = [1, 1]} : vector<16x384xf32> to vector<16x128xf32>
    %394 = vector.extract_strided_slice %376 {offsets = [0, 256], sizes = [16, 128], strides = [1, 1]} : vector<16x384xf32> to vector<16x128xf32>
    %395 = vector.broadcast %359 : vector<1x128xf32> to vector<16x128xf32>
    %396 = arith.addf %394, %395 : vector<16x128xf32>
    %397 = arith.mulf %384, %396 : vector<16x128xf32>
    %398 = arith.addf %393, %397 : vector<16x128xf32>
    %399 = math.tanh %398 : vector<16x128xf32>
    %cst_140 = arith.constant 1.000000e+00 : f32
    %400 = vector.broadcast %cst_140 : f32 to vector<16x128xf32>
    %401 = arith.subf %400, %392 : vector<16x128xf32>
    %402 = arith.mulf %401, %399 : vector<16x128xf32>
    %403 = arith.mulf %392, %361 : vector<16x128xf32>
    %404 = arith.addf %402, %403 : vector<16x128xf32>
    %405 = arith.truncf %404 : vector<16x128xf32> to vector<16x128xbf16>
    %c0_i32_141 = arith.constant 0 : i32
    %406 = arith.addi %c0_i32_141, %c0_i32_132 : i32
    %407 = arith.index_cast %406 : i32 to index
    %c0_142 = arith.constant 0 : index
    %c0_143 = arith.constant 0 : index
    %408 = vector.load %arg15[%407, %c0_142, %c0_143] : memref<8x16x128xbf16, #tpu.memory_space<vmem>>, vector<1x16x128xbf16>
    %409 = vector.shape_cast %408 : vector<1x16x128xbf16> to vector<16x128xbf16>
    %410 = vector.shape_cast %405 : vector<16x128xbf16> to vector<1x16x128xbf16>
    tpu.vector_store %arg15[%407, %c0_142, %c0_143], %410 {strides = array<i32>} : memref<8x16x128xbf16, #tpu.memory_space<vmem>>, vector<1x16x128xbf16>,
    %c1_i32_144 = arith.constant 1 : i32
    %c16_i32_145 = arith.constant 16 : i32
    %411 = arith.muli %c1_i32_144, %c16_i32_145 : i32
    %412 = tpu.assume_multiple %411, 16 : i32
    %413 = arith.index_cast %412 : i32 to index
    %c0_146 = arith.constant 0 : index
    %414 = vector.load %arg18[%413, %c0_146] : memref<128x384xf32, #tpu.memory_space<vmem>>, vector<16x384xf32>
    %415 = arith.truncf %404 : vector<16x128xf32> to vector<16x128xbf16>
    %c0_147 = arith.constant 0 : index
    %c0_148 = arith.constant 0 : index
    %416 = vector.load %arg12[%c0_147, %c0_148] : memref<128x384xbf16, #tpu.memory_space<vmem>>, vector<128x384xbf16>
    %cst_149 = arith.constant dense<0.000000e+00> : vector<16x384xf32>
    %417 = tpu.matmul %415, %416, %cst_149 {dimension_numbers = #tpu.dot_dimension_numbers<[1], [0], [0], [1], [0, 0, 1, 1], [], []>} : vector<16x128xbf16>, vector<128x384xbf16>, vector<16x384xf32> -> vector<16x384xf32>
    %418 = vector.extract_strided_slice %414 {offsets = [0, 0], sizes = [16, 128], strides = [1, 1]} : vector<16x384xf32> to vector<16x128xf32>
    %419 = vector.extract_strided_slice %417 {offsets = [0, 0], sizes = [16, 128], strides = [1, 1]} : vector<16x384xf32> to vector<16x128xf32>
    %420 = arith.addf %418, %419 : vector<16x128xf32>
    %421 = arith.negf %420 : vector<16x128xf32>
    %422 = math.exp %421 : vector<16x128xf32>
    %cst_150 = arith.constant 1.000000e+00 : f32
    %423 = vector.broadcast %cst_150 : f32 to vector<16x128xf32>
    %424 = arith.addf %423, %422 : vector<16x128xf32>
    %425 = arith.divf %423, %424 : vector<16x128xf32>
    %426 = vector.extract_strided_slice %414 {offsets = [0, 128], sizes = [16, 128], strides = [1, 1]} : vector<16x384xf32> to vector<16x128xf32>
    %427 = vector.extract_strided_slice %417 {offsets = [0, 128], sizes = [16, 128], strides = [1, 1]} : vector<16x384xf32> to vector<16x128xf32>
    %428 = arith.addf %426, %427 : vector<16x128xf32>
    %429 = arith.negf %428 : vector<16x128xf32>
    %430 = math.exp %429 : vector<16x128xf32>
    %cst_151 = arith.constant 1.000000e+00 : f32
    %431 = vector.broadcast %cst_151 : f32 to vector<16x128xf32>
    %432 = arith.addf %431, %430 : vector<16x128xf32>
    %433 = arith.divf %431, %432 : vector<16x128xf32>
    %434 = vector.extract_strided_slice %414 {offsets = [0, 256], sizes = [16, 128], strides = [1, 1]} : vector<16x384xf32> to vector<16x128xf32>
    %435 = vector.extract_strided_slice %417 {offsets = [0, 256], sizes = [16, 128], strides = [1, 1]} : vector<16x384xf32> to vector<16x128xf32>
    %436 = vector.broadcast %359 : vector<1x128xf32> to vector<16x128xf32>
    %437 = arith.addf %435, %436 : vector<16x128xf32>
    %438 = arith.mulf %425, %437 : vector<16x128xf32>
    %439 = arith.addf %434, %438 : vector<16x128xf32>
    %440 = math.tanh %439 : vector<16x128xf32>
    %cst_152 = arith.constant 1.000000e+00 : f32
    %441 = vector.broadcast %cst_152 : f32 to vector<16x128xf32>
    %442 = arith.subf %441, %433 : vector<16x128xf32>
    %443 = arith.mulf %442, %440 : vector<16x128xf32>
    %444 = arith.mulf %433, %404 : vector<16x128xf32>
    %445 = arith.addf %443, %444 : vector<16x128xf32>
    %446 = arith.truncf %445 : vector<16x128xf32> to vector<16x128xbf16>
    %c0_i32_153 = arith.constant 0 : i32
    %447 = arith.addi %c0_i32_153, %c1_i32_144 : i32
    %448 = arith.index_cast %447 : i32 to index
    %c0_154 = arith.constant 0 : index
    %c0_155 = arith.constant 0 : index
    %449 = vector.load %arg15[%448, %c0_154, %c0_155] : memref<8x16x128xbf16, #tpu.memory_space<vmem>>, vector<1x16x128xbf16>
    %450 = vector.shape_cast %449 : vector<1x16x128xbf16> to vector<16x128xbf16>
    %451 = vector.shape_cast %446 : vector<16x128xbf16> to vector<1x16x128xbf16>
    tpu.vector_store %arg15[%448, %c0_154, %c0_155], %451 {strides = array<i32>} : memref<8x16x128xbf16, #tpu.memory_space<vmem>>, vector<1x16x128xbf16>,
    %c2_i32_156 = arith.constant 2 : i32
    %c16_i32_157 = arith.constant 16 : i32
    %452 = arith.muli %c2_i32_156, %c16_i32_157 : i32
    %453 = tpu.assume_multiple %452, 16 : i32
    %454 = arith.index_cast %453 : i32 to index
    %c0_158 = arith.constant 0 : index
    %455 = vector.load %arg18[%454, %c0_158] : memref<128x384xf32, #tpu.memory_space<vmem>>, vector<16x384xf32>
    %456 = arith.truncf %445 : vector<16x128xf32> to vector<16x128xbf16>
    %c0_159 = arith.constant 0 : index
    %c0_160 = arith.constant 0 : index
    %457 = vector.load %arg12[%c0_159, %c0_160] : memref<128x384xbf16, #tpu.memory_space<vmem>>, vector<128x384xbf16>
    %cst_161 = arith.constant dense<0.000000e+00> : vector<16x384xf32>
    %458 = tpu.matmul %456, %457, %cst_161 {dimension_numbers = #tpu.dot_dimension_numbers<[1], [0], [0], [1], [0, 0, 1, 1], [], []>} : vector<16x128xbf16>, vector<128x384xbf16>, vector<16x384xf32> -> vector<16x384xf32>
    %459 = vector.extract_strided_slice %455 {offsets = [0, 0], sizes = [16, 128], strides = [1, 1]} : vector<16x384xf32> to vector<16x128xf32>
    %460 = vector.extract_strided_slice %458 {offsets = [0, 0], sizes = [16, 128], strides = [1, 1]} : vector<16x384xf32> to vector<16x128xf32>
    %461 = arith.addf %459, %460 : vector<16x128xf32>
    %462 = arith.negf %461 : vector<16x128xf32>
    %463 = math.exp %462 : vector<16x128xf32>
    %cst_162 = arith.constant 1.000000e+00 : f32
    %464 = vector.broadcast %cst_162 : f32 to vector<16x128xf32>
    %465 = arith.addf %464, %463 : vector<16x128xf32>
    %466 = arith.divf %464, %465 : vector<16x128xf32>
    %467 = vector.extract_strided_slice %455 {offsets = [0, 128], sizes = [16, 128], strides = [1, 1]} : vector<16x384xf32> to vector<16x128xf32>
    %468 = vector.extract_strided_slice %458 {offsets = [0, 128], sizes = [16, 128], strides = [1, 1]} : vector<16x384xf32> to vector<16x128xf32>
    %469 = arith.addf %467, %468 : vector<16x128xf32>
    %470 = arith.negf %469 : vector<16x128xf32>
    %471 = math.exp %470 : vector<16x128xf32>
    %cst_163 = arith.constant 1.000000e+00 : f32
    %472 = vector.broadcast %cst_163 : f32 to vector<16x128xf32>
    %473 = arith.addf %472, %471 : vector<16x128xf32>
    %474 = arith.divf %472, %473 : vector<16x128xf32>
    %475 = vector.extract_strided_slice %455 {offsets = [0, 256], sizes = [16, 128], strides = [1, 1]} : vector<16x384xf32> to vector<16x128xf32>
    %476 = vector.extract_strided_slice %458 {offsets = [0, 256], sizes = [16, 128], strides = [1, 1]} : vector<16x384xf32> to vector<16x128xf32>
    %477 = vector.broadcast %359 : vector<1x128xf32> to vector<16x128xf32>
    %478 = arith.addf %476, %477 : vector<16x128xf32>
    %479 = arith.mulf %466, %478 : vector<16x128xf32>
    %480 = arith.addf %475, %479 : vector<16x128xf32>
    %481 = math.tanh %480 : vector<16x128xf32>
    %cst_164 = arith.constant 1.000000e+00 : f32
    %482 = vector.broadcast %cst_164 : f32 to vector<16x128xf32>
    %483 = arith.subf %482, %474 : vector<16x128xf32>
    %484 = arith.mulf %483, %481 : vector<16x128xf32>
    %485 = arith.mulf %474, %445 : vector<16x128xf32>
    %486 = arith.addf %484, %485 : vector<16x128xf32>
    %487 = arith.truncf %486 : vector<16x128xf32> to vector<16x128xbf16>
    %c0_i32_165 = arith.constant 0 : i32
    %488 = arith.addi %c0_i32_165, %c2_i32_156 : i32
    %489 = arith.index_cast %488 : i32 to index
    %c0_166 = arith.constant 0 : index
    %c0_167 = arith.constant 0 : index
    %490 = vector.load %arg15[%489, %c0_166, %c0_167] : memref<8x16x128xbf16, #tpu.memory_space<vmem>>, vector<1x16x128xbf16>
    %491 = vector.shape_cast %490 : vector<1x16x128xbf16> to vector<16x128xbf16>
    %492 = vector.shape_cast %487 : vector<16x128xbf16> to vector<1x16x128xbf16>
    tpu.vector_store %arg15[%489, %c0_166, %c0_167], %492 {strides = array<i32>} : memref<8x16x128xbf16, #tpu.memory_space<vmem>>, vector<1x16x128xbf16>,
    %c3_i32_168 = arith.constant 3 : i32
    %c16_i32_169 = arith.constant 16 : i32
    %493 = arith.muli %c3_i32_168, %c16_i32_169 : i32
    %494 = tpu.assume_multiple %493, 16 : i32
    %495 = arith.index_cast %494 : i32 to index
    %c0_170 = arith.constant 0 : index
    %496 = vector.load %arg18[%495, %c0_170] : memref<128x384xf32, #tpu.memory_space<vmem>>, vector<16x384xf32>
    %497 = arith.truncf %486 : vector<16x128xf32> to vector<16x128xbf16>
    %c0_171 = arith.constant 0 : index
    %c0_172 = arith.constant 0 : index
    %498 = vector.load %arg12[%c0_171, %c0_172] : memref<128x384xbf16, #tpu.memory_space<vmem>>, vector<128x384xbf16>
    %cst_173 = arith.constant dense<0.000000e+00> : vector<16x384xf32>
    %499 = tpu.matmul %497, %498, %cst_173 {dimension_numbers = #tpu.dot_dimension_numbers<[1], [0], [0], [1], [0, 0, 1, 1], [], []>} : vector<16x128xbf16>, vector<128x384xbf16>, vector<16x384xf32> -> vector<16x384xf32>
    %500 = vector.extract_strided_slice %496 {offsets = [0, 0], sizes = [16, 128], strides = [1, 1]} : vector<16x384xf32> to vector<16x128xf32>
    %501 = vector.extract_strided_slice %499 {offsets = [0, 0], sizes = [16, 128], strides = [1, 1]} : vector<16x384xf32> to vector<16x128xf32>
    %502 = arith.addf %500, %501 : vector<16x128xf32>
    %503 = arith.negf %502 : vector<16x128xf32>
    %504 = math.exp %503 : vector<16x128xf32>
    %cst_174 = arith.constant 1.000000e+00 : f32
    %505 = vector.broadcast %cst_174 : f32 to vector<16x128xf32>
    %506 = arith.addf %505, %504 : vector<16x128xf32>
    %507 = arith.divf %505, %506 : vector<16x128xf32>
    %508 = vector.extract_strided_slice %496 {offsets = [0, 128], sizes = [16, 128], strides = [1, 1]} : vector<16x384xf32> to vector<16x128xf32>
    %509 = vector.extract_strided_slice %499 {offsets = [0, 128], sizes = [16, 128], strides = [1, 1]} : vector<16x384xf32> to vector<16x128xf32>
    %510 = arith.addf %508, %509 : vector<16x128xf32>
    %511 = arith.negf %510 : vector<16x128xf32>
    %512 = math.exp %511 : vector<16x128xf32>
    %cst_175 = arith.constant 1.000000e+00 : f32
    %513 = vector.broadcast %cst_175 : f32 to vector<16x128xf32>
    %514 = arith.addf %513, %512 : vector<16x128xf32>
    %515 = arith.divf %513, %514 : vector<16x128xf32>
    %516 = vector.extract_strided_slice %496 {offsets = [0, 256], sizes = [16, 128], strides = [1, 1]} : vector<16x384xf32> to vector<16x128xf32>
    %517 = vector.extract_strided_slice %499 {offsets = [0, 256], sizes = [16, 128], strides = [1, 1]} : vector<16x384xf32> to vector<16x128xf32>
    %518 = vector.broadcast %359 : vector<1x128xf32> to vector<16x128xf32>
    %519 = arith.addf %517, %518 : vector<16x128xf32>
    %520 = arith.mulf %507, %519 : vector<16x128xf32>
    %521 = arith.addf %516, %520 : vector<16x128xf32>
    %522 = math.tanh %521 : vector<16x128xf32>
    %cst_176 = arith.constant 1.000000e+00 : f32
    %523 = vector.broadcast %cst_176 : f32 to vector<16x128xf32>
    %524 = arith.subf %523, %515 : vector<16x128xf32>
    %525 = arith.mulf %524, %522 : vector<16x128xf32>
    %526 = arith.mulf %515, %486 : vector<16x128xf32>
    %527 = arith.addf %525, %526 : vector<16x128xf32>
    %528 = arith.truncf %527 : vector<16x128xf32> to vector<16x128xbf16>
    %c0_i32_177 = arith.constant 0 : i32
    %529 = arith.addi %c0_i32_177, %c3_i32_168 : i32
    %530 = arith.index_cast %529 : i32 to index
    %c0_178 = arith.constant 0 : index
    %c0_179 = arith.constant 0 : index
    %531 = vector.load %arg15[%530, %c0_178, %c0_179] : memref<8x16x128xbf16, #tpu.memory_space<vmem>>, vector<1x16x128xbf16>
    %532 = vector.shape_cast %531 : vector<1x16x128xbf16> to vector<16x128xbf16>
    %533 = vector.shape_cast %528 : vector<16x128xbf16> to vector<1x16x128xbf16>
    tpu.vector_store %arg15[%530, %c0_178, %c0_179], %533 {strides = array<i32>} : memref<8x16x128xbf16, #tpu.memory_space<vmem>>, vector<1x16x128xbf16>,
    %c4_i32_180 = arith.constant 4 : i32
    %c16_i32_181 = arith.constant 16 : i32
    %534 = arith.muli %c4_i32_180, %c16_i32_181 : i32
    %535 = tpu.assume_multiple %534, 16 : i32
    %536 = arith.index_cast %535 : i32 to index
    %c0_182 = arith.constant 0 : index
    %537 = vector.load %arg18[%536, %c0_182] : memref<128x384xf32, #tpu.memory_space<vmem>>, vector<16x384xf32>
    %538 = arith.truncf %527 : vector<16x128xf32> to vector<16x128xbf16>
    %c0_183 = arith.constant 0 : index
    %c0_184 = arith.constant 0 : index
    %539 = vector.load %arg12[%c0_183, %c0_184] : memref<128x384xbf16, #tpu.memory_space<vmem>>, vector<128x384xbf16>
    %cst_185 = arith.constant dense<0.000000e+00> : vector<16x384xf32>
    %540 = tpu.matmul %538, %539, %cst_185 {dimension_numbers = #tpu.dot_dimension_numbers<[1], [0], [0], [1], [0, 0, 1, 1], [], []>} : vector<16x128xbf16>, vector<128x384xbf16>, vector<16x384xf32> -> vector<16x384xf32>
    %541 = vector.extract_strided_slice %537 {offsets = [0, 0], sizes = [16, 128], strides = [1, 1]} : vector<16x384xf32> to vector<16x128xf32>
    %542 = vector.extract_strided_slice %540 {offsets = [0, 0], sizes = [16, 128], strides = [1, 1]} : vector<16x384xf32> to vector<16x128xf32>
    %543 = arith.addf %541, %542 : vector<16x128xf32>
    %544 = arith.negf %543 : vector<16x128xf32>
    %545 = math.exp %544 : vector<16x128xf32>
    %cst_186 = arith.constant 1.000000e+00 : f32
    %546 = vector.broadcast %cst_186 : f32 to vector<16x128xf32>
    %547 = arith.addf %546, %545 : vector<16x128xf32>
    %548 = arith.divf %546, %547 : vector<16x128xf32>
    %549 = vector.extract_strided_slice %537 {offsets = [0, 128], sizes = [16, 128], strides = [1, 1]} : vector<16x384xf32> to vector<16x128xf32>
    %550 = vector.extract_strided_slice %540 {offsets = [0, 128], sizes = [16, 128], strides = [1, 1]} : vector<16x384xf32> to vector<16x128xf32>
    %551 = arith.addf %549, %550 : vector<16x128xf32>
    %552 = arith.negf %551 : vector<16x128xf32>
    %553 = math.exp %552 : vector<16x128xf32>
    %cst_187 = arith.constant 1.000000e+00 : f32
    %554 = vector.broadcast %cst_187 : f32 to vector<16x128xf32>
    %555 = arith.addf %554, %553 : vector<16x128xf32>
    %556 = arith.divf %554, %555 : vector<16x128xf32>
    %557 = vector.extract_strided_slice %537 {offsets = [0, 256], sizes = [16, 128], strides = [1, 1]} : vector<16x384xf32> to vector<16x128xf32>
    %558 = vector.extract_strided_slice %540 {offsets = [0, 256], sizes = [16, 128], strides = [1, 1]} : vector<16x384xf32> to vector<16x128xf32>
    %559 = vector.broadcast %359 : vector<1x128xf32> to vector<16x128xf32>
    %560 = arith.addf %558, %559 : vector<16x128xf32>
    %561 = arith.mulf %548, %560 : vector<16x128xf32>
    %562 = arith.addf %557, %561 : vector<16x128xf32>
    %563 = math.tanh %562 : vector<16x128xf32>
    %cst_188 = arith.constant 1.000000e+00 : f32
    %564 = vector.broadcast %cst_188 : f32 to vector<16x128xf32>
    %565 = arith.subf %564, %556 : vector<16x128xf32>
    %566 = arith.mulf %565, %563 : vector<16x128xf32>
    %567 = arith.mulf %556, %527 : vector<16x128xf32>
    %568 = arith.addf %566, %567 : vector<16x128xf32>
    %569 = arith.truncf %568 : vector<16x128xf32> to vector<16x128xbf16>
    %c0_i32_189 = arith.constant 0 : i32
    %570 = arith.addi %c0_i32_189, %c4_i32_180 : i32
    %571 = arith.index_cast %570 : i32 to index
    %c0_190 = arith.constant 0 : index
    %c0_191 = arith.constant 0 : index
    %572 = vector.load %arg15[%571, %c0_190, %c0_191] : memref<8x16x128xbf16, #tpu.memory_space<vmem>>, vector<1x16x128xbf16>
    %573 = vector.shape_cast %572 : vector<1x16x128xbf16> to vector<16x128xbf16>
    %574 = vector.shape_cast %569 : vector<16x128xbf16> to vector<1x16x128xbf16>
    tpu.vector_store %arg15[%571, %c0_190, %c0_191], %574 {strides = array<i32>} : memref<8x16x128xbf16, #tpu.memory_space<vmem>>, vector<1x16x128xbf16>,
    %c5_i32_192 = arith.constant 5 : i32
    %c16_i32_193 = arith.constant 16 : i32
    %575 = arith.muli %c5_i32_192, %c16_i32_193 : i32
    %576 = tpu.assume_multiple %575, 16 : i32
    %577 = arith.index_cast %576 : i32 to index
    %c0_194 = arith.constant 0 : index
    %578 = vector.load %arg18[%577, %c0_194] : memref<128x384xf32, #tpu.memory_space<vmem>>, vector<16x384xf32>
    %579 = arith.truncf %568 : vector<16x128xf32> to vector<16x128xbf16>
    %c0_195 = arith.constant 0 : index
    %c0_196 = arith.constant 0 : index
    %580 = vector.load %arg12[%c0_195, %c0_196] : memref<128x384xbf16, #tpu.memory_space<vmem>>, vector<128x384xbf16>
    %cst_197 = arith.constant dense<0.000000e+00> : vector<16x384xf32>
    %581 = tpu.matmul %579, %580, %cst_197 {dimension_numbers = #tpu.dot_dimension_numbers<[1], [0], [0], [1], [0, 0, 1, 1], [], []>} : vector<16x128xbf16>, vector<128x384xbf16>, vector<16x384xf32> -> vector<16x384xf32>
    %582 = vector.extract_strided_slice %578 {offsets = [0, 0], sizes = [16, 128], strides = [1, 1]} : vector<16x384xf32> to vector<16x128xf32>
    %583 = vector.extract_strided_slice %581 {offsets = [0, 0], sizes = [16, 128], strides = [1, 1]} : vector<16x384xf32> to vector<16x128xf32>
    %584 = arith.addf %582, %583 : vector<16x128xf32>
    %585 = arith.negf %584 : vector<16x128xf32>
    %586 = math.exp %585 : vector<16x128xf32>
    %cst_198 = arith.constant 1.000000e+00 : f32
    %587 = vector.broadcast %cst_198 : f32 to vector<16x128xf32>
    %588 = arith.addf %587, %586 : vector<16x128xf32>
    %589 = arith.divf %587, %588 : vector<16x128xf32>
    %590 = vector.extract_strided_slice %578 {offsets = [0, 128], sizes = [16, 128], strides = [1, 1]} : vector<16x384xf32> to vector<16x128xf32>
    %591 = vector.extract_strided_slice %581 {offsets = [0, 128], sizes = [16, 128], strides = [1, 1]} : vector<16x384xf32> to vector<16x128xf32>
    %592 = arith.addf %590, %591 : vector<16x128xf32>
    %593 = arith.negf %592 : vector<16x128xf32>
    %594 = math.exp %593 : vector<16x128xf32>
    %cst_199 = arith.constant 1.000000e+00 : f32
    %595 = vector.broadcast %cst_199 : f32 to vector<16x128xf32>
    %596 = arith.addf %595, %594 : vector<16x128xf32>
    %597 = arith.divf %595, %596 : vector<16x128xf32>
    %598 = vector.extract_strided_slice %578 {offsets = [0, 256], sizes = [16, 128], strides = [1, 1]} : vector<16x384xf32> to vector<16x128xf32>
    %599 = vector.extract_strided_slice %581 {offsets = [0, 256], sizes = [16, 128], strides = [1, 1]} : vector<16x384xf32> to vector<16x128xf32>
    %600 = vector.broadcast %359 : vector<1x128xf32> to vector<16x128xf32>
    %601 = arith.addf %599, %600 : vector<16x128xf32>
    %602 = arith.mulf %589, %601 : vector<16x128xf32>
    %603 = arith.addf %598, %602 : vector<16x128xf32>
    %604 = math.tanh %603 : vector<16x128xf32>
    %cst_200 = arith.constant 1.000000e+00 : f32
    %605 = vector.broadcast %cst_200 : f32 to vector<16x128xf32>
    %606 = arith.subf %605, %597 : vector<16x128xf32>
    %607 = arith.mulf %606, %604 : vector<16x128xf32>
    %608 = arith.mulf %597, %568 : vector<16x128xf32>
    %609 = arith.addf %607, %608 : vector<16x128xf32>
    %610 = arith.truncf %609 : vector<16x128xf32> to vector<16x128xbf16>
    %c0_i32_201 = arith.constant 0 : i32
    %611 = arith.addi %c0_i32_201, %c5_i32_192 : i32
    %612 = arith.index_cast %611 : i32 to index
    %c0_202 = arith.constant 0 : index
    %c0_203 = arith.constant 0 : index
    %613 = vector.load %arg15[%612, %c0_202, %c0_203] : memref<8x16x128xbf16, #tpu.memory_space<vmem>>, vector<1x16x128xbf16>
    %614 = vector.shape_cast %613 : vector<1x16x128xbf16> to vector<16x128xbf16>
    %615 = vector.shape_cast %610 : vector<16x128xbf16> to vector<1x16x128xbf16>
    tpu.vector_store %arg15[%612, %c0_202, %c0_203], %615 {strides = array<i32>} : memref<8x16x128xbf16, #tpu.memory_space<vmem>>, vector<1x16x128xbf16>,
    %c6_i32_204 = arith.constant 6 : i32
    %c16_i32_205 = arith.constant 16 : i32
    %616 = arith.muli %c6_i32_204, %c16_i32_205 : i32
    %617 = tpu.assume_multiple %616, 16 : i32
    %618 = arith.index_cast %617 : i32 to index
    %c0_206 = arith.constant 0 : index
    %619 = vector.load %arg18[%618, %c0_206] : memref<128x384xf32, #tpu.memory_space<vmem>>, vector<16x384xf32>
    %620 = arith.truncf %609 : vector<16x128xf32> to vector<16x128xbf16>
    %c0_207 = arith.constant 0 : index
    %c0_208 = arith.constant 0 : index
    %621 = vector.load %arg12[%c0_207, %c0_208] : memref<128x384xbf16, #tpu.memory_space<vmem>>, vector<128x384xbf16>
    %cst_209 = arith.constant dense<0.000000e+00> : vector<16x384xf32>
    %622 = tpu.matmul %620, %621, %cst_209 {dimension_numbers = #tpu.dot_dimension_numbers<[1], [0], [0], [1], [0, 0, 1, 1], [], []>} : vector<16x128xbf16>, vector<128x384xbf16>, vector<16x384xf32> -> vector<16x384xf32>
    %623 = vector.extract_strided_slice %619 {offsets = [0, 0], sizes = [16, 128], strides = [1, 1]} : vector<16x384xf32> to vector<16x128xf32>
    %624 = vector.extract_strided_slice %622 {offsets = [0, 0], sizes = [16, 128], strides = [1, 1]} : vector<16x384xf32> to vector<16x128xf32>
    %625 = arith.addf %623, %624 : vector<16x128xf32>
    %626 = arith.negf %625 : vector<16x128xf32>
    %627 = math.exp %626 : vector<16x128xf32>
    %cst_210 = arith.constant 1.000000e+00 : f32
    %628 = vector.broadcast %cst_210 : f32 to vector<16x128xf32>
    %629 = arith.addf %628, %627 : vector<16x128xf32>
    %630 = arith.divf %628, %629 : vector<16x128xf32>
    %631 = vector.extract_strided_slice %619 {offsets = [0, 128], sizes = [16, 128], strides = [1, 1]} : vector<16x384xf32> to vector<16x128xf32>
    %632 = vector.extract_strided_slice %622 {offsets = [0, 128], sizes = [16, 128], strides = [1, 1]} : vector<16x384xf32> to vector<16x128xf32>
    %633 = arith.addf %631, %632 : vector<16x128xf32>
    %634 = arith.negf %633 : vector<16x128xf32>
    %635 = math.exp %634 : vector<16x128xf32>
    %cst_211 = arith.constant 1.000000e+00 : f32
    %636 = vector.broadcast %cst_211 : f32 to vector<16x128xf32>
    %637 = arith.addf %636, %635 : vector<16x128xf32>
    %638 = arith.divf %636, %637 : vector<16x128xf32>
    %639 = vector.extract_strided_slice %619 {offsets = [0, 256], sizes = [16, 128], strides = [1, 1]} : vector<16x384xf32> to vector<16x128xf32>
    %640 = vector.extract_strided_slice %622 {offsets = [0, 256], sizes = [16, 128], strides = [1, 1]} : vector<16x384xf32> to vector<16x128xf32>
    %641 = vector.broadcast %359 : vector<1x128xf32> to vector<16x128xf32>
    %642 = arith.addf %640, %641 : vector<16x128xf32>
    %643 = arith.mulf %630, %642 : vector<16x128xf32>
    %644 = arith.addf %639, %643 : vector<16x128xf32>
    %645 = math.tanh %644 : vector<16x128xf32>
    %cst_212 = arith.constant 1.000000e+00 : f32
    %646 = vector.broadcast %cst_212 : f32 to vector<16x128xf32>
    %647 = arith.subf %646, %638 : vector<16x128xf32>
    %648 = arith.mulf %647, %645 : vector<16x128xf32>
    %649 = arith.mulf %638, %609 : vector<16x128xf32>
    %650 = arith.addf %648, %649 : vector<16x128xf32>
    %651 = arith.truncf %650 : vector<16x128xf32> to vector<16x128xbf16>
    %c0_i32_213 = arith.constant 0 : i32
    %652 = arith.addi %c0_i32_213, %c6_i32_204 : i32
    %653 = arith.index_cast %652 : i32 to index
    %c0_214 = arith.constant 0 : index
    %c0_215 = arith.constant 0 : index
    %654 = vector.load %arg15[%653, %c0_214, %c0_215] : memref<8x16x128xbf16, #tpu.memory_space<vmem>>, vector<1x16x128xbf16>
    %655 = vector.shape_cast %654 : vector<1x16x128xbf16> to vector<16x128xbf16>
    %656 = vector.shape_cast %651 : vector<16x128xbf16> to vector<1x16x128xbf16>
    tpu.vector_store %arg15[%653, %c0_214, %c0_215], %656 {strides = array<i32>} : memref<8x16x128xbf16, #tpu.memory_space<vmem>>, vector<1x16x128xbf16>,
    %c7_i32_216 = arith.constant 7 : i32
    %c16_i32_217 = arith.constant 16 : i32
    %657 = arith.muli %c7_i32_216, %c16_i32_217 : i32
    %658 = tpu.assume_multiple %657, 16 : i32
    %659 = arith.index_cast %658 : i32 to index
    %c0_218 = arith.constant 0 : index
    %660 = vector.load %arg18[%659, %c0_218] : memref<128x384xf32, #tpu.memory_space<vmem>>, vector<16x384xf32>
    %661 = arith.truncf %650 : vector<16x128xf32> to vector<16x128xbf16>
    %c0_219 = arith.constant 0 : index
    %c0_220 = arith.constant 0 : index
    %662 = vector.load %arg12[%c0_219, %c0_220] : memref<128x384xbf16, #tpu.memory_space<vmem>>, vector<128x384xbf16>
    %cst_221 = arith.constant dense<0.000000e+00> : vector<16x384xf32>
    %663 = tpu.matmul %661, %662, %cst_221 {dimension_numbers = #tpu.dot_dimension_numbers<[1], [0], [0], [1], [0, 0, 1, 1], [], []>} : vector<16x128xbf16>, vector<128x384xbf16>, vector<16x384xf32> -> vector<16x384xf32>
    %664 = vector.extract_strided_slice %660 {offsets = [0, 0], sizes = [16, 128], strides = [1, 1]} : vector<16x384xf32> to vector<16x128xf32>
    %665 = vector.extract_strided_slice %663 {offsets = [0, 0], sizes = [16, 128], strides = [1, 1]} : vector<16x384xf32> to vector<16x128xf32>
    %666 = arith.addf %664, %665 : vector<16x128xf32>
    %667 = arith.negf %666 : vector<16x128xf32>
    %668 = math.exp %667 : vector<16x128xf32>
    %cst_222 = arith.constant 1.000000e+00 : f32
    %669 = vector.broadcast %cst_222 : f32 to vector<16x128xf32>
    %670 = arith.addf %669, %668 : vector<16x128xf32>
    %671 = arith.divf %669, %670 : vector<16x128xf32>
    %672 = vector.extract_strided_slice %660 {offsets = [0, 128], sizes = [16, 128], strides = [1, 1]} : vector<16x384xf32> to vector<16x128xf32>
    %673 = vector.extract_strided_slice %663 {offsets = [0, 128], sizes = [16, 128], strides = [1, 1]} : vector<16x384xf32> to vector<16x128xf32>
    %674 = arith.addf %672, %673 : vector<16x128xf32>
    %675 = arith.negf %674 : vector<16x128xf32>
    %676 = math.exp %675 : vector<16x128xf32>
    %cst_223 = arith.constant 1.000000e+00 : f32
    %677 = vector.broadcast %cst_223 : f32 to vector<16x128xf32>
    %678 = arith.addf %677, %676 : vector<16x128xf32>
    %679 = arith.divf %677, %678 : vector<16x128xf32>
    %680 = vector.extract_strided_slice %660 {offsets = [0, 256], sizes = [16, 128], strides = [1, 1]} : vector<16x384xf32> to vector<16x128xf32>
    %681 = vector.extract_strided_slice %663 {offsets = [0, 256], sizes = [16, 128], strides = [1, 1]} : vector<16x384xf32> to vector<16x128xf32>
    %682 = vector.broadcast %359 : vector<1x128xf32> to vector<16x128xf32>
    %683 = arith.addf %681, %682 : vector<16x128xf32>
    %684 = arith.mulf %671, %683 : vector<16x128xf32>
    %685 = arith.addf %680, %684 : vector<16x128xf32>
    %686 = math.tanh %685 : vector<16x128xf32>
    %cst_224 = arith.constant 1.000000e+00 : f32
    %687 = vector.broadcast %cst_224 : f32 to vector<16x128xf32>
    %688 = arith.subf %687, %679 : vector<16x128xf32>
    %689 = arith.mulf %688, %686 : vector<16x128xf32>
    %690 = arith.mulf %679, %650 : vector<16x128xf32>
    %691 = arith.addf %689, %690 : vector<16x128xf32>
    %692 = arith.truncf %691 : vector<16x128xf32> to vector<16x128xbf16>
    %c0_i32_225 = arith.constant 0 : i32
    %693 = arith.addi %c0_i32_225, %c7_i32_216 : i32
    %694 = arith.index_cast %693 : i32 to index
    %c0_226 = arith.constant 0 : index
    %c0_227 = arith.constant 0 : index
    %695 = vector.load %arg15[%694, %c0_226, %c0_227] : memref<8x16x128xbf16, #tpu.memory_space<vmem>>, vector<1x16x128xbf16>
    %696 = vector.shape_cast %695 : vector<1x16x128xbf16> to vector<16x128xbf16>
    %697 = vector.shape_cast %692 : vector<16x128xbf16> to vector<1x16x128xbf16>
    tpu.vector_store %arg15[%694, %c0_226, %c0_227], %697 {strides = array<i32>} : memref<8x16x128xbf16, #tpu.memory_space<vmem>>, vector<1x16x128xbf16>,
    %c8_i32_228 = arith.constant 8 : i32
    %c1_229 = arith.constant 1 : index
    %c0_230 = arith.constant 0 : index
    %c0_231 = arith.constant 0 : index
    %698 = vector.load %arg16[%c1_229, %c0_230, %c0_231] : memref<2x16x128xf32, #tpu.memory_space<vmem>>, vector<1x16x128xf32>
    %699 = vector.shape_cast %698 : vector<1x16x128xf32> to vector<16x128xf32>
    %700 = vector.shape_cast %691 : vector<16x128xf32> to vector<1x16x128xf32>
    tpu.vector_store %arg16[%c1_229, %c0_230, %c0_231], %700 {strides = array<i32>} : memref<2x16x128xf32, #tpu.memory_space<vmem>>, vector<1x16x128xf32>,
    %701 = arith.truncf %691 : vector<16x128xf32> to vector<16x128xbf16>
    %c0_232 = arith.constant 0 : index
    %c0_233 = arith.constant 0 : index
    %702 = vector.load %arg13[%c0_232, %c0_233] : memref<128x128xbf16, #tpu.memory_space<vmem>>, vector<128x128xbf16>
    %cst_234 = arith.constant dense<0.000000e+00> : vector<16x128xf32>
    %703 = tpu.matmul %701, %702, %cst_234 {dimension_numbers = #tpu.dot_dimension_numbers<[1], [0], [0], [1], [0, 0, 1, 1], [], []>} : vector<16x128xbf16>, vector<128x128xbf16>, vector<16x128xf32> -> vector<16x128xf32>
    %c0_235 = arith.constant 0 : index
    %c0_236 = arith.constant 0 : index
    %704 = vector.load %arg14[%c0_235, %c0_236] : memref<1x128xf32, #tpu.memory_space<vmem>>, vector<1x128xf32>
    %705 = vector.broadcast %704 : vector<1x128xf32> to vector<16x128xf32>
    %706 = arith.addf %703, %705 : vector<16x128xf32>
    %cst_237 = arith.constant 0.000000e+00 : f32
    %707 = vector.broadcast %cst_237 : f32 to vector<16x128xf32>
    %708 = arith.maximumf %706, %707 : vector<16x128xf32>
    %c1_238 = arith.constant 1 : index
    %c0_239 = arith.constant 0 : index
    %c0_240 = arith.constant 0 : index
    %709 = vector.load %arg17[%c1_238, %c0_239, %c0_240] : memref<2x16x128xf32, #tpu.memory_space<vmem>>, vector<1x16x128xf32>
    %710 = vector.shape_cast %709 : vector<1x16x128xf32> to vector<16x128xf32>
    %711 = vector.shape_cast %708 : vector<16x128xf32> to vector<1x16x128xf32>
    tpu.vector_store %arg17[%c1_238, %c0_239, %c0_240], %711 {strides = array<i32>} : memref<2x16x128xf32, #tpu.memory_space<vmem>>, vector<1x16x128xf32>,
    return
  }
  func.func @transform_0(%arg0: i32) -> (i32, i32, i32) {
    %c0_i32 = arith.constant 0 : i32
    %c0_i32_0 = arith.constant 0 : i32
    %c0_i32_1 = arith.constant 0 : i32
    return %c0_i32, %arg0, %c0_i32_0 : i32, i32, i32
  }
  func.func @transform_1(%arg0: i32) -> (i32, i32, i32) {
    %c0_i32 = arith.constant 0 : i32
    %c0_i32_0 = arith.constant 0 : i32
    %c0_i32_1 = arith.constant 0 : i32
    return %c0_i32, %arg0, %c0_i32_0 : i32, i32, i32
  }
  func.func @transform_2(%arg0: i32) -> (i32, i32, i32) {
    %c0_i32 = arith.constant 0 : i32
    %c0_i32_0 = arith.constant 0 : i32
    %c0_i32_1 = arith.constant 0 : i32
    return %c0_i32, %arg0, %c0_i32_0 : i32, i32, i32
  }
  func.func @transform_3(%arg0: i32) -> (i32, i32) {
    %c0_i32 = arith.constant 0 : i32
    %c0_i32_0 = arith.constant 0 : i32
    %c0_i32_1 = arith.constant 0 : i32
    return %c0_i32, %c0_i32_0 : i32, i32
  }
  func.func @transform_4(%arg0: i32) -> (i32, i32) {
    %c0_i32 = arith.constant 0 : i32
    %c0_i32_0 = arith.constant 0 : i32
    %c0_i32_1 = arith.constant 0 : i32
    return %c0_i32, %c0_i32_0 : i32, i32
  }
  func.func @transform_5(%arg0: i32) -> (i32, i32) {
    %c0_i32 = arith.constant 0 : i32
    %c0_i32_0 = arith.constant 0 : i32
    %c0_i32_1 = arith.constant 0 : i32
    return %c0_i32, %c0_i32_0 : i32, i32
  }
  func.func @transform_6(%arg0: i32) -> (i32, i32) {
    %c0_i32 = arith.constant 0 : i32
    %c0_i32_0 = arith.constant 0 : i32
    %c0_i32_1 = arith.constant 0 : i32
    return %c0_i32, %c0_i32_0 : i32, i32
  }
  func.func @transform_7(%arg0: i32) -> (i32, i32) {
    %c0_i32 = arith.constant 0 : i32
    %c0_i32_0 = arith.constant 0 : i32
    %c0_i32_1 = arith.constant 0 : i32
    return %c0_i32, %c0_i32_0 : i32, i32
  }
  func.func @transform_8(%arg0: i32) -> (i32, i32) {
    %c0_i32 = arith.constant 0 : i32
    %c0_i32_0 = arith.constant 0 : i32
    %c0_i32_1 = arith.constant 0 : i32
    return %c0_i32, %c0_i32_0 : i32, i32
  }
  func.func @transform_9(%arg0: i32) -> (i32, i32) {
    %c0_i32 = arith.constant 0 : i32
    %c0_i32_0 = arith.constant 0 : i32
    %c0_i32_1 = arith.constant 0 : i32
    return %c0_i32, %c0_i32_0 : i32, i32
  }
  func.func @transform_10(%arg0: i32) -> (i32, i32) {
    %c0_i32 = arith.constant 0 : i32
    %c0_i32_0 = arith.constant 0 : i32
    %c0_i32_1 = arith.constant 0 : i32
    return %c0_i32, %c0_i32_0 : i32, i32
  }
  func.func @transform_11(%arg0: i32) -> (i32, i32) {
    %c0_i32 = arith.constant 0 : i32
    %c0_i32_0 = arith.constant 0 : i32
    %c0_i32_1 = arith.constant 0 : i32
    return %c0_i32, %c0_i32_0 : i32, i32
  }
  func.func @transform_12(%arg0: i32) -> (i32, i32) {
    %c0_i32 = arith.constant 0 : i32
    %c0_i32_0 = arith.constant 0 : i32
    %c0_i32_1 = arith.constant 0 : i32
    return %c0_i32, %c0_i32_0 : i32, i32
  }
  func.func @transform_13(%arg0: i32) -> (i32, i32) {
    %c0_i32 = arith.constant 0 : i32
    %c0_i32_0 = arith.constant 0 : i32
    %c0_i32_1 = arith.constant 0 : i32
    return %c0_i32, %c0_i32_0 : i32, i32
  }
  func.func @transform_14(%arg0: i32) -> (i32, i32, i32) {
    %c0_i32 = arith.constant 0 : i32
    %c0_i32_0 = arith.constant 0 : i32
    %c0_i32_1 = arith.constant 0 : i32
    return %c0_i32, %arg0, %c0_i32_0 : i32, i32, i32
  }
  func.func @transform_15(%arg0: i32) -> (i32, i32, i32) {
    %c0_i32 = arith.constant 0 : i32
    %c0_i32_0 = arith.constant 0 : i32
    %c0_i32_1 = arith.constant 0 : i32
    return %c0_i32, %arg0, %c0_i32_0 : i32, i32, i32
  }
  func.func @transform_16(%arg0: i32) -> (i32, i32, i32) {
    %c0_i32 = arith.constant 0 : i32
    %c0_i32_0 = arith.constant 0 : i32
    %c0_i32_1 = arith.constant 0 : i32
    return %c0_i32, %arg0, %c0_i32_0 : i32, i32, i32
  }
}

</mosaic_0001>

<llo_original>
// kernel: rql_compensating_forward.3
$region0: #{rql_compensating_forward.3}
  #allocation0 [shape = 'u32[]', space=smem, size = 0x4, offset = 0x4, fixed_abs, tag = 'smem constant byte address 0x4 - core index']
  #allocation1 [shape = 'u32[144,128]{1,0:T(1,128)}', space=vmem, size = 0x12000, scoped, tag = 'internal scratch']
  %s0 = inlined_call_operand.vmem [shape: bf16[128,128], index: 0, kind: input, shape index: {}]
  %s1 = inlined_call_operand.vmem [shape: bf16[128,128], index: 1, kind: input, shape index: {}]
  %s2 = inlined_call_operand.vmem [shape: f32[1,128], index: 2, kind: input, shape index: {}]
  %s3 = inlined_call_operand.vmem [shape: f32[128,128], index: 3, kind: output, shape index: {}]
  %s4 = sld [smem:[#allocation0]]
  $region22: #{rql_compensating_forward.3} parent=0
    _
  %s6 = ssub.s32 1, %s4
  %s7 = scalar_select 0, %s6, %s4
  // Predicated region
  $region2: #{rql_compensating_forward.3} parent=0 // pred_check
    _
  $region3: #{rql_compensating_forward.3} parent=0 // pred_check_branch
    %9 = sbr.rel (0) target = $region5
  $region4: #{rql_compensating_forward.3} parent=0 // pred_region
    _
  $region5: #{rql_compensating_forward.3} parent=0 // pred_fallthru
    _
  // Predicated region
  $region6: #{rql_compensating_forward.3} parent=0 // pred_check
    _
  $region7: #{rql_compensating_forward.3} parent=0 // pred_check_branch
    %11 = sbr.rel (0) target = $region9
  $region8: #{rql_compensating_forward.3} parent=0 // pred_region
    _
  $region9: #{rql_compensating_forward.3} parent=0 // pred_fallthru
    _
  // Predicated region
  $region10: #{rql_compensating_forward.3} parent=0 // pred_check
    _
  $region11: #{rql_compensating_forward.3} parent=0 // pred_check_branch
    %13 = sbr.rel (0) target = $region13
  $region12: #{rql_compensating_forward.3} parent=0 // pred_region
    _
  $region13: #{rql_compensating_forward.3} parent=0 // pred_fallthru
    _
  %v15 = vld [vmem:[%s0] sm:$0xf]
  %v16 = vld [vmem:[%s0 + $0x4] sm:$0xf]
  %v17 = vld [vmem:[%s0 + $0x8] sm:$0xf]
  %v18 = vld [vmem:[%s0 + $0xc] sm:$0xf]
  %v19 = vld [vmem:[%s0 + $0x10] sm:$0xf]
  %v20 = vld [vmem:[%s0 + $0x14] sm:$0xf]
  %v21 = vld [vmem:[%s0 + $0x18] sm:$0xf]
  %v22 = vld [vmem:[%s0 + $0x1c] sm:$0xf]
  %v23 = vld [vmem:[%s0 + $0x20] sm:$0xf]
  %v24 = vld [vmem:[%s0 + $0x24] sm:$0xf]
  %v25 = vld [vmem:[%s0 + $0x28] sm:$0xf]
  %v26 = vld [vmem:[%s0 + $0x2c] sm:$0xf]
  %v27 = vld [vmem:[%s0 + $0x30] sm:$0xf]
  %v28 = vld [vmem:[%s0 + $0x34] sm:$0xf]
  %v29 = vld [vmem:[%s0 + $0x38] sm:$0xf]
  %v30 = vld [vmem:[%s0 + $0x3c] sm:$0xf]
  %v31 = vld [vmem:[%s1] sm:$0xf]
  %v32 = vld [vmem:[%s1 + $0x4] sm:$0xf]
  %v33 = vld [vmem:[%s1 + $0x8] sm:$0xf]
  %v34 = vld [vmem:[%s1 + $0xc] sm:$0xf]
  %v35 = vld [vmem:[%s1 + $0x10] sm:$0xf]
  %v36 = vld [vmem:[%s1 + $0x14] sm:$0xf]
  %v37 = vld [vmem:[%s1 + $0x18] sm:$0xf]
  %v38 = vld [vmem:[%s1 + $0x1c] sm:$0xf]
  %v39 = vld [vmem:[%s1 + $0x20] sm:$0xf]
  %v40 = vld [vmem:[%s1 + $0x24] sm:$0xf]
  %v41 = vld [vmem:[%s1 + $0x28] sm:$0xf]
  %v42 = vld [vmem:[%s1 + $0x2c] sm:$0xf]
  %v43 = vld [vmem:[%s1 + $0x30] sm:$0xf]
  %v44 = vld [vmem:[%s1 + $0x34] sm:$0xf]
  %v45 = vld [vmem:[%s1 + $0x38] sm:$0xf]
  %v46 = vld [vmem:[%s1 + $0x3c] sm:$0xf]
  %v47 = vld [vmem:[%s2] sm:$0x1]
  %v49 = vlaneseq
  %v50 = vshrl.u32 %v49, 7
  %v51 = vsub.s32 0, %v50
  %v52 = vrot.slane %v47, %v51
  %v70 = vunpack.c.l.b16 %v15
  %v71 = vunpack.c.l.b16 %v16
  %v72 = vunpack.c.l.b16 %v17
  %v73 = vunpack.c.l.b16 %v18
  %v74 = vunpack.c.l.b16 %v19
  %v75 = vunpack.c.l.b16 %v20
  %v76 = vunpack.c.l.b16 %v21
  %v77 = vunpack.c.l.b16 %v22
  %v78 = vunpack.c.l.b16 %v23
  %v79 = vunpack.c.l.b16 %v24
  %v80 = vunpack.c.l.b16 %v25
  %v81 = vunpack.c.l.b16 %v26
  %v82 = vunpack.c.l.b16 %v27
  %v83 = vunpack.c.l.b16 %v28
  %v84 = vunpack.c.l.b16 %v29
  %v85 = vunpack.c.l.b16 %v30
  %v86 = vpack.c.b16 %v71, %v70
  %v87 = vpack.c.b16 %v73, %v72
  %v88 = vpack.c.b16 %v75, %v74
  %v89 = vpack.c.b16 %v77, %v76
  %v90 = vpack.c.b16 %v79, %v78
  %v91 = vpack.c.b16 %v81, %v80
  %v92 = vpack.c.b16 %v83, %v82
  %v93 = vpack.c.b16 %v85, %v84
  %v118 = vunpack.c.l.b16 %v31
  %v119 = vunpack.c.l.b16 %v32
  %v120 = vunpack.c.l.b16 %v33
  %v121 = vunpack.c.l.b16 %v34
  %v122 = vunpack.c.l.b16 %v35
  %v123 = vunpack.c.l.b16 %v36
  %v124 = vunpack.c.l.b16 %v37
  %v125 = vunpack.c.l.b16 %v38
  %v126 = vunpack.c.l.b16 %v39
  %v127 = vunpack.c.l.b16 %v40
  %v128 = vunpack.c.l.b16 %v41
  %v129 = vunpack.c.l.b16 %v42
  %v130 = vunpack.c.l.b16 %v43
  %v131 = vunpack.c.l.b16 %v44
  %v132 = vunpack.c.l.b16 %v45
  %v133 = vunpack.c.l.b16 %v46
  %v134 = vpack.c.b16 %v119, %v118
  %v135 = vpack.c.b16 %v121, %v120
  %v136 = vpack.c.b16 %v123, %v122
  %v137 = vpack.c.b16 %v125, %v124
  %v138 = vpack.c.b16 %v127, %v126
  %v139 = vpack.c.b16 %v129, %v128
  %v140 = vpack.c.b16 %v131, %v130
  %v141 = vpack.c.b16 %v133, %v132
  %150 = vmatprep.subr.bf16.mxu0 0
  %151 = vmatpush1.bf16.msra.mxu0 %v141
  %152 = vmatprep.subr.bf16.mxu0 0
  %153 = vmatpush1.bf16.msra.mxu0 %v140
  %154 = vmatprep.subr.bf16.mxu0 0
  %155 = vmatpush1.bf16.msra.mxu0 %v139
  %156 = vmatprep.subr.bf16.mxu0 0
  %157 = vmatpush1.bf16.msra.mxu0 %v138
  %158 = vmatprep.subr.bf16.mxu0 0
  %159 = vmatpush1.bf16.msra.mxu0 %v137
  %160 = vmatprep.subr.bf16.mxu0 0
  %161 = vmatpush1.bf16.msra.mxu0 %v136
  %162 = vmatprep.subr.bf16.mxu0 0
  %163 = vmatpush1.bf16.msra.mxu0 %v135
  %164 = vmatprep.subr.bf16.mxu0 0
  %165 = vmatpush1.bf16.msra.mxu0 %v134
  %166 = vmatprep.subr.bf16.mxu0 0
  %167 = vmatpush2.bf16.msra.mxu0 0
  %168 = vmatprep.subr.bf16.mxu0 0
  %169 = vmatpush2.bf16.msra.mxu0 0
  %170 = vmatprep.subr.bf16.mxu0 0
  %171 = vmatpush2.bf16.msra.mxu0 0
  %172 = vmatprep.subr.bf16.mxu0 0
  %173 = vmatpush2.bf16.msra.mxu0 0
  %174 = vmatprep.subr.bf16.mxu0 0
  %175 = vmatpush2.bf16.msra.mxu0 0
  %176 = vmatprep.subr.bf16.mxu0 0
  %177 = vmatpush2.bf16.msra.mxu0 0
  %178 = vmatprep.subr.bf16.mxu0 0
  %179 = vmatpush2.bf16.msra.mxu0 0
  %180 = vmatprep.subr.bf16.mxu0 0
  %181 = vmatpush2.bf16.msra.mxu0 0
  %182 = vmatprep.mubr.bf16.mxu0 0
  %183 = vmatmul.mubr.bf16.gmra.mxu0 %v86
  %v184 = vpop.f32.mrf.mxu0
  %v185 = vadd.f32 %v52, %v184
  %v186 = vpop.f32.mrf.mxu0
  %v187 = vpop.f32.mrf.mxu0
  %v188 = vadd.f32 %v52, %v187
  %v189 = vpop.f32.mrf.mxu0
  %190 = vmatprep.mubr.bf16.mxu0 0
  %191 = vmatmul.mubr.bf16.gmra.mxu0 %v87
  %v192 = vpop.f32.mrf.mxu0
  %v193 = vadd.f32 %v52, %v192
  %v194 = vpop.f32.mrf.mxu0
  %v195 = vpop.f32.mrf.mxu0
  %v196 = vadd.f32 %v52, %v195
  %v197 = vpop.f32.mrf.mxu0
  %198 = vmatprep.mubr.bf16.mxu0 0
  %199 = vmatmul.mubr.bf16.gmra.mxu0 %v88
  %v200 = vpop.f32.mrf.mxu0
  %v201 = vadd.f32 %v52, %v200
  %v202 = vpop.f32.mrf.mxu0
  %v203 = vpop.f32.mrf.mxu0
  %v204 = vadd.f32 %v52, %v203
  %v205 = vpop.f32.mrf.mxu0
  %206 = vmatprep.mubr.bf16.mxu0 0
  %207 = vmatmul.mubr.bf16.gmra.mxu0 %v89
  %v208 = vpop.f32.mrf.mxu0
  %v209 = vadd.f32 %v52, %v208
  %v210 = vpop.f32.mrf.mxu0
  %v211 = vpop.f32.mrf.mxu0
  %v212 = vadd.f32 %v52, %v211
  %v213 = vpop.f32.mrf.mxu0
  %214 = vmatprep.mubr.bf16.mxu0 0
  %215 = vmatmul.mubr.bf16.gmra.mxu0 %v90
  %v216 = vpop.f32.mrf.mxu0
  %v217 = vadd.f32 %v52, %v216
  %v218 = vpop.f32.mrf.mxu0
  %v219 = vpop.f32.mrf.mxu0
  %v220 = vadd.f32 %v52, %v219
  %v221 = vpop.f32.mrf.mxu0
  %222 = vmatprep.mubr.bf16.mxu0 0
  %223 = vmatmul.mubr.bf16.gmra.mxu0 %v91
  %v224 = vpop.f32.mrf.mxu0
  %v225 = vadd.f32 %v52, %v224
  %v226 = vpop.f32.mrf.mxu0
  %v227 = vpop.f32.mrf.mxu0
  %v228 = vadd.f32 %v52, %v227
  %v229 = vpop.f32.mrf.mxu0
  %230 = vmatprep.mubr.bf16.mxu0 0
  %231 = vmatmul.mubr.bf16.gmra.mxu0 %v92
  %v232 = vpop.f32.mrf.mxu0
  %v233 = vadd.f32 %v52, %v232
  %v234 = vpop.f32.mrf.mxu0
  %v235 = vpop.f32.mrf.mxu0
  %v236 = vadd.f32 %v52, %v235
  %v237 = vpop.f32.mrf.mxu0
  %238 = vmatprep.mubr.bf16.mxu0 0
  %239 = vmatmul.mubr.bf16.gmra.mxu0 %v93
  %v240 = vpop.f32.mrf.mxu0
  %v241 = vadd.f32 %v52, %v240
  %v242 = vpop.f32.mrf.mxu0
  %v243 = vpop.f32.mrf.mxu0
  %v244 = vadd.f32 %v52, %v243
  %v245 = vpop.f32.mrf.mxu0
  %246 = vdwg.mxu0
  %247 = vst [vmem:[%s3] sm:$0xff] %v185
  %248 = vst [vmem:[%s3 + $0x8] sm:$0xff] %v188
  %249 = vst [vmem:[%s3 + $0x10] sm:$0xff] %v193
  %250 = vst [vmem:[%s3 + $0x18] sm:$0xff] %v196
  %251 = vst [vmem:[%s3 + $0x20] sm:$0xff] %v201
  %252 = vst [vmem:[%s3 + $0x28] sm:$0xff] %v204
  %253 = vst [vmem:[%s3 + $0x30] sm:$0xff] %v209
  %254 = vst [vmem:[%s3 + $0x38] sm:$0xff] %v212
  %255 = vst [vmem:[%s3 + $0x40] sm:$0xff] %v217
  %256 = vst [vmem:[%s3 + $0x48] sm:$0xff] %v220
  %257 = vst [vmem:[%s3 + $0x50] sm:$0xff] %v225
  %258 = vst [vmem:[%s3 + $0x58] sm:$0xff] %v228
  %259 = vst [vmem:[%s3 + $0x60] sm:$0xff] %v233
  %260 = vst [vmem:[%s3 + $0x68] sm:$0xff] %v236
  %261 = vst [vmem:[%s3 + $0x70] sm:$0xff] %v241
  %262 = vst [vmem:[%s3 + $0x78] sm:$0xff] %v244
  // Predicated region
  $region14: #{rql_compensating_forward.3} parent=0 // pred_check
    _
  $region15: #{rql_compensating_forward.3} parent=0 // pred_check_branch
    %264 = sbr.rel (0) target = $region17
  $region16: #{rql_compensating_forward.3} parent=0 // pred_region
    _
  $region17: #{rql_compensating_forward.3} parent=0 // pred_fallthru
    _
  // Predicated region
  $region18: #{rql_compensating_forward.3} parent=0 // pred_check
    _
  $region19: #{rql_compensating_forward.3} parent=0 // pred_check_branch
    %266 = sbr.rel (0) target = $region21
  $region20: #{rql_compensating_forward.3} parent=0 // pred_region
    _
  $region21: #{rql_compensating_forward.3} parent=0 // pred_fallthru
    _

// kernel: rql_compensating_forward.2
$region0: #{rql_compensating_forward.2}
  #allocation0 [shape = 'u32[]', space=smem, size = 0x4, offset = 0x4, fixed_abs, tag = 'smem constant byte address 0x4 - core index']
  #allocation1 [shape = 'u32[144,128]{1,0:T(1,128)}', space=vmem, size = 0x12000, scoped, tag = 'internal scratch']
  #allocation2 [shape = 'f32[128,384]{1,0:T(8,128)}', space=vmem, size = 0x30000, scoped, tag = 'scratch operand']
  %s0 = inlined_call_operand.vmem [shape: bf16[8,16,16], index: 0, kind: input, shape index: {}]
  %s1 = inlined_call_operand.vmem [shape: f32[8,16,8], index: 1, kind: input, shape index: {}]
  %s2 = inlined_call_operand.vmem [shape: f32[2,16,128], index: 2, kind: input, shape index: {}, may-alias: {2,15}]
  %s3 = inlined_call_operand.vmem [shape: bf16[16,384], index: 3, kind: input, shape index: {}]
  %s4 = inlined_call_operand.hbm [shape: bf16[8,384], index: 4, kind: input, shape index: {}]
  %s5 = inlined_call_operand.vmem [shape: f32[1,384], index: 5, kind: input, shape index: {}]
  %s6 = inlined_call_operand.hbm [shape: f32[1,128], index: 6, kind: input, shape index: {}]
  %s7 = inlined_call_operand.hbm [shape: bf16[128,384], index: 7, kind: input, shape index: {}]
  %s8 = inlined_call_operand.vmem [shape: bf16[128,384], index: 8, kind: input, shape index: {}]
  %s9 = inlined_call_operand.vmem [shape: f32[1,384], index: 9, kind: input, shape index: {}]
  %s10 = inlined_call_operand.vmem [shape: f32[1,128], index: 10, kind: input, shape index: {}]
  %s11 = inlined_call_operand.vmem [shape: bf16[128,384], index: 11, kind: input, shape index: {}]
  %s12 = inlined_call_operand.vmem [shape: bf16[128,128], index: 12, kind: input, shape index: {}]
  %s13 = inlined_call_operand.vmem [shape: f32[1,128], index: 13, kind: input, shape index: {}]
  %s14 = inlined_call_operand.vmem [shape: bf16[8,16,128], index: 14, kind: output, shape index: {0}]
  %s15 = inlined_call_operand.vmem [shape: f32[2,16,128], index: 15, kind: output, shape index: {1}, may-alias: {2,15}]
  %s16 = inlined_call_operand.vmem [shape: f32[2,16,128], index: 16, kind: output, shape index: {2}]
  %17 = xla_tuple %s14, %s15, %s16
  %s18 = sld [smem:[#allocation0]]
  $region94: #{rql_compensating_forward.2} parent=0
    _
  %s20 = ssub.s32 1, %s18
  %s21 = scalar_select 0, %s20, %s18
  $region1: #{rql_compensating_forward.2} parent=0
    #allocation3 [shape = 'u8[6144]{0}', space=vmem, size = 0x1800, scoped, tag = 'input window, operand 4, single buffered']
    #allocation4 [shape = 's32[1]{0}', space=sflag, size = 0x4, scoped, tag = 'scoped memory for rql_compensating_forward.2']
    #allocation5 [shape = 'u8[512]{0}', space=vmem, size = 0x400, scoped, tag = 'input window, operand 6, single buffered']
    #allocation6 [shape = 's32[1]{0}', space=sflag, size = 0x4, scoped, tag = 'scoped memory for rql_compensating_forward.2']
    #allocation7 [shape = 'u8[98304]{0}', space=vmem, size = 0x18000, scoped, tag = 'input window, operand 7, single buffered']
    %22 = vsyncpa [#allocation4], 0
    %23 = vsyncpa [#allocation6], 0
    // Predicated region
    $region2: #{rql_compensating_forward.2} parent=1 // pred_check
      _
    $region3: #{rql_compensating_forward.2} parent=1 // pred_check_branch
      %25 = sbr.rel (0) target = $region5
    $region4: #{rql_compensating_forward.2} parent=1 // pred_region
      _
    $region5: #{rql_compensating_forward.2} parent=1 // pred_fallthru
      _
    // Predicated region
    $region6: #{rql_compensating_forward.2} parent=1 // pred_check
      _
    $region7: #{rql_compensating_forward.2} parent=1 // pred_check_branch
      %27 = sbr.rel (0) target = $region9
    $region8: #{rql_compensating_forward.2} parent=1 // pred_region
      _
    $region9: #{rql_compensating_forward.2} parent=1 // pred_fallthru
      _
    // Predicated region
    $region10: #{rql_compensating_forward.2} parent=1 // pred_check
      _
    $region11: #{rql_compensating_forward.2} parent=1 // pred_check_branch
      %29 = sbr.rel (0) target = $region13
    $region12: #{rql_compensating_forward.2} parent=1 // pred_region
      _
    $region13: #{rql_compensating_forward.2} parent=1 // pred_fallthru
      _
    // Predicated region
    $region14: #{rql_compensating_forward.2} parent=1 // pred_check
      _
    $region15: #{rql_compensating_forward.2} parent=1 // pred_check_branch
      %31 = sbr.rel (0) target = $region17
    $region16: #{rql_compensating_forward.2} parent=1 // pred_region
      _
    $region17: #{rql_compensating_forward.2} parent=1 // pred_fallthru
      _
    // Predicated region
    $region18: #{rql_compensating_forward.2} parent=1 // pred_check
      _
    $region19: #{rql_compensating_forward.2} parent=1 // pred_check_branch
      %33 = sbr.rel (0) target = $region21
    $region20: #{rql_compensating_forward.2} parent=1 // pred_region
      %s35 = ssub.s32 192, 192
      %36 = vsyncadd [#allocation4], %s35
      %s38 = sshll.u32 [#allocation3], 4
      %s39 = int_to_ptr.vmem [resolvable:$true] %s38
      %41 = dma.hbm_to_vmem [thread:$0]  %s4, 192, %s39, [#allocation4]
    $region21: #{rql_compensating_forward.2} parent=1 // pred_fallthru
      _
    // Predicated region
    $region22: #{rql_compensating_forward.2} parent=1 // pred_check
      _
    $region23: #{rql_compensating_forward.2} parent=1 // pred_check_branch
      %43 = sbr.rel (0) target = $region25
    $region24: #{rql_compensating_forward.2} parent=1 // pred_region
      _
    $region25: #{rql_compensating_forward.2} parent=1 // pred_fallthru
      _
    // Predicated region
    $region26: #{rql_compensating_forward.2} parent=1 // pred_check
      _
    $region27: #{rql_compensating_forward.2} parent=1 // pred_check_branch
      %45 = sbr.rel (0) target = $region29
    $region28: #{rql_compensating_forward.2} parent=1 // pred_region
      %s47 = ssub.s32 16, 16
      %48 = vsyncadd [#allocation6], %s47
      %s50 = sshll.u32 [#allocation5], 4
      %s51 = int_to_ptr.vmem [resolvable:$true] %s50
      %53 = dma.hbm_to_vmem [thread:$0]  %s6, 16, %s51, [#allocation6]
    $region29: #{rql_compensating_forward.2} parent=1 // pred_fallthru
      _
    // Predicated region
    $region30: #{rql_compensating_forward.2} parent=1 // pred_check
      _
    $region31: #{rql_compensating_forward.2} parent=1 // pred_check_branch
      %55 = sbr.rel (0) target = $region33
    $region32: #{rql_compensating_forward.2} parent=1 // pred_region
      %s57 = ssub.s32 3072, 3072
      %58 = vsyncadd [#allocation6], %s57
      %s59 = sshll.u32 [#allocation7], 4
      %s60 = int_to_ptr.vmem [resolvable:$true] %s59
      %65 = dma.hbm_to_vmem [thread:$0]  %s7, 3072, %s60, [#allocation6], 192, 192, 12
    $region33: #{rql_compensating_forward.2} parent=1 // pred_fallthru
      _
    // Predicated region
    $region34: #{rql_compensating_forward.2} parent=1 // pred_check
      _
    $region35: #{rql_compensating_forward.2} parent=1 // pred_check_branch
      %67 = sbr.rel (0) target = $region37
    $region36: #{rql_compensating_forward.2} parent=1 // pred_region
      _
    $region37: #{rql_compensating_forward.2} parent=1 // pred_fallthru
      _
    // Predicated region
    $region38: #{rql_compensating_forward.2} parent=1 // pred_check
      _
    $region39: #{rql_compensating_forward.2} parent=1 // pred_check_branch
      %69 = sbr.rel (0) target = $region41
    $region40: #{rql_compensating_forward.2} parent=1 // pred_region
      _
    $region41: #{rql_compensating_forward.2} parent=1 // pred_fallthru
      _
    // Predicated region
    $region42: #{rql_compensating_forward.2} parent=1 // pred_check
      _
    $region43: #{rql_compensating_forward.2} parent=1 // pred_check_branch
      %71 = sbr.rel (0) target = $region45
    $region44: #{rql_compensating_forward.2} parent=1 // pred_region
      _
    $region45: #{rql_compensating_forward.2} parent=1 // pred_fallthru
      _
    // Predicated region
    $region46: #{rql_compensating_forward.2} parent=1 // pred_check
      _
    $region47: #{rql_compensating_forward.2} parent=1 // pred_check_branch
      %73 = sbr.rel (0) target = $region49
    $region48: #{rql_compensating_forward.2} parent=1 // pred_region
      _
    $region49: #{rql_compensating_forward.2} parent=1 // pred_fallthru
      _
    // Predicated region
    $region50: #{rql_compensating_forward.2} parent=1 // pred_check
      _
    $region51: #{rql_compensating_forward.2} parent=1 // pred_check_branch
      %75 = sbr.rel (0) target = $region53
    $region52: #{rql_compensating_forward.2} parent=1 // pred_region
      _
    $region53: #{rql_compensating_forward.2} parent=1 // pred_fallthru
      _
    // Predicated region
    $region54: #{rql_compensating_forward.2} parent=1 // pred_check
      _
    $region55: #{rql_compensating_forward.2} parent=1 // pred_check_branch
      %77 = sbr.rel (0) target = $region57
    $region56: #{rql_compensating_forward.2} parent=1 // pred_region
      _
    $region57: #{rql_compensating_forward.2} parent=1 // pred_fallthru
      _
    // Predicated region
    $region58: #{rql_compensating_forward.2} parent=1 // pred_check
      _
    $region59: #{rql_compensating_forward.2} parent=1 // pred_check_branch
      %79 = sbr.rel (0) target = $region61
    $region60: #{rql_compensating_forward.2} parent=1 // pred_region
      %80 = dma.done [#allocation4], 192
    $region61: #{rql_compensating_forward.2} parent=1 // pred_fallthru
      _
    // Predicated region
    $region62: #{rql_compensating_forward.2} parent=1 // pred_check
      _
    $region63: #{rql_compensating_forward.2} parent=1 // pred_check_branch
      %82 = sbr.rel (0) target = $region65
    $region64: #{rql_compensating_forward.2} parent=1 // pred_region
      %83 = dma.done [#allocation6], 16
    $region65: #{rql_compensating_forward.2} parent=1 // pred_fallthru
      _
    // Predicated region
    $region66: #{rql_compensating_forward.2} parent=1 // pred_check
      _
    $region67: #{rql_compensating_forward.2} parent=1 // pred_check_branch
      %85 = sbr.rel (0) target = $region69
    $region68: #{rql_compensating_forward.2} parent=1 // pred_region
      %86 = dma.done [#allocation6], 3072
    $region69: #{rql_compensating_forward.2} parent=1 // pred_fallthru
      _
    %v88 = vld [vmem:[#allocation5] sm:$0x1]
    %v89 = vld [vmem:[%s2] sm:$0xff]
    %v90 = vld [vmem:[%s2 + $0x8] sm:$0xff]
    %v91 = vld [vmem:[%s0] sm:$0xf]
    %v92 = vld [vmem:[%s0 + $0x4] sm:$0xf]
    %v93 = vld [vmem:[%s0 + $0x8] sm:$0xf]
    %v94 = vld [vmem:[%s0 + $0xc] sm:$0xf]
    %v95 = vld [vmem:[%s0 + $0x10] sm:$0xf]
    %v96 = vld [vmem:[%s0 + $0x14] sm:$0xf]
    %v97 = vld [vmem:[%s0 + $0x18] sm:$0xf]
    %v98 = vld [vmem:[%s0 + $0x1c] sm:$0xf]
    %v99 = vld [vmem:[%s0 + $0x20] sm:$0xf]
    %v100 = vld [vmem:[%s0 + $0x24] sm:$0xf]
    %v101 = vld [vmem:[%s0 + $0x28] sm:$0xf]
    %v102 = vld [vmem:[%s0 + $0x2c] sm:$0xf]
    %v103 = vld [vmem:[%s0 + $0x30] sm:$0xf]
    %v104 = vld [vmem:[%s0 + $0x34] sm:$0xf]
    %v105 = vld [vmem:[%s0 + $0x38] sm:$0xf]
    %v106 = vld [vmem:[%s0 + $0x3c] sm:$0xf]
    %v107 = vld [vmem:[%s1] sm:$0xff]
    %v108 = vld [vmem:[%s1 + $0x8] sm:$0xff]
    %v109 = vld [vmem:[%s1 + $0x10] sm:$0xff]
    %v110 = vld [vmem:[%s1 + $0x18] sm:$0xff]
    %v111 = vld [vmem:[%s1 + $0x20] sm:$0xff]
    %v112 = vld [vmem:[%s1 + $0x28] sm:$0xff]
    %v113 = vld [vmem:[%s1 + $0x30] sm:$0xff]
    %v114 = vld [vmem:[%s1 + $0x38] sm:$0xff]
    %v115 = vld [vmem:[%s1 + $0x40] sm:$0xff]
    %v116 = vld [vmem:[%s1 + $0x48] sm:$0xff]
    %v117 = vld [vmem:[%s1 + $0x50] sm:$0xff]
    %v118 = vld [vmem:[%s1 + $0x58] sm:$0xff]
    %v119 = vld [vmem:[%s1 + $0x60] sm:$0xff]
    %v120 = vld [vmem:[%s1 + $0x68] sm:$0xff]
    %v121 = vld [vmem:[%s1 + $0x70] sm:$0xff]
    %v122 = vld [vmem:[%s1 + $0x78] sm:$0xff]
    %v123 = vpack.c.bf16 %v108, %v107
    %v124 = vpack.c.bf16 %v110, %v109
    %v125 = vpack.c.bf16 %v112, %v111
    %v126 = vpack.c.bf16 %v114, %v113
    %v127 = vpack.c.bf16 %v116, %v115
    %v128 = vpack.c.bf16 %v118, %v117
    %v129 = vpack.c.bf16 %v120, %v119
    %v130 = vpack.c.bf16 %v122, %v121
    %v131 = vld [vmem:[%s3] sm:$0xff]
    %v132 = vld [vmem:[%s3 + $0x8] sm:$0xf]
    %v133 = vld [vmem:[%s3 + $0xc] sm:$0xff]
    %v134 = vld [vmem:[%s3 + $0x14] sm:$0xf]
    %v135 = vld [vmem:[#allocation3] sm:$0xff]
    %v136 = vld [vmem:[#allocation3 + $0x8] sm:$0xf]
    %v139 = vunpack.c.l.b16 %v135
    %v140 = vunpack.c.h.b16 %v135
    %v141 = vunpack.c.l.b16 %v136
    %v142 = vpack.c.b16 %v139, %v139
    %v143 = vpack.c.b16 %v140, %v140
    %v144 = vpack.c.b16 %v141, %v141
    %vm145 = vcmask 64512
    %v147 = vsel %vm145, %v123, 0
    %v150 = vsel %vm145, %v124, 0
    %v153 = vsel %vm145, %v125, 0
    %v156 = vsel %vm145, %v126, 0
    %v159 = vsel %vm145, %v127, 0
    %v162 = vsel %vm145, %v128, 0
    %v165 = vsel %vm145, %v129, 0
    %v168 = vsel %vm145, %v130, 0
    %vm170 = vcmask 1043456
    %v172 = vsel %vm170, %v142, 0
    %v175 = vsel %vm170, %v143, 0
    %v178 = vsel %vm170, %v144, 0
    %180 = vmatprep.subr.bf16.mxu0 0
    %181 = vmatpush1.bf16.msra.mxu0 0
    %182 = vmatprep.subr.bf16.mxu0 0
    %183 = vmatpush1.bf16.msra.mxu0 0
    %184 = vmatprep.subr.bf16.mxu0 0
    %185 = vmatpush1.bf16.msra.mxu0 0
    %186 = vmatprep.subr.bf16.mxu0 0
    %187 = vmatpush1.bf16.msra.mxu0 0
    %188 = vmatprep.subr.bf16.mxu0 0
    %189 = vmatpush1.bf16.msra.mxu0 0
    %190 = vmatprep.subr.bf16.mxu0 0
    %191 = vmatpush1.bf16.msra.mxu0 0
    %192 = vmatprep.subr.bf16.mxu0 0
    %193 = vmatpush1.bf16.msra.mxu0 0
    %194 = vmatprep.subr.bf16.mxu0 %v175
    %195 = vmatpush1.bf16.msra.mxu0 %v172
    %196 = vmatprep.subr.bf16.mxu0 0
    %197 = vmatpush2.bf16.msra.mxu0 0
    %198 = vmatprep.subr.bf16.mxu0 0
    %199 = vmatpush2.bf16.msra.mxu0 0
    %200 = vmatprep.subr.bf16.mxu0 0
    %201 = vmatpush2.bf16.msra.mxu0 0
    %202 = vmatprep.subr.bf16.mxu0 0
    %203 = vmatpush2.bf16.msra.mxu0 0
    %204 = vmatprep.subr.bf16.mxu0 0
    %205 = vmatpush2.bf16.msra.mxu0 0
    %206 = vmatprep.subr.bf16.mxu0 0
    %207 = vmatpush2.bf16.msra.mxu0 0
    %208 = vmatprep.subr.bf16.mxu0 0
    %209 = vmatpush2.bf16.msra.mxu0 0
    %210 = vmatprep.subr.bf16.mxu0 0
    %211 = vmatpush2.bf16.msra.mxu0 0
    %212 = vmatprep.mubr.bf16.mxu0 0
    %213 = vmatmul.mubr.bf16.gmra.mxu0 %v147
    %v214 = vpop.f32.mrf.mxu0
    %v215 = vadd.f32 0.0, %v214
    %v216 = vpop.f32.mrf.mxu0
    %v217 = vadd.f32 0.0, %v216
    %v218 = vpop.f32.mrf.mxu0
    %v219 = vadd.f32 0.0, %v218
    %v220 = vpop.f32.mrf.mxu0
    %v221 = vadd.f32 0.0, %v220
    %222 = vmatprep.mubr.bf16.mxu0 0
    %223 = vmatmul.mubr.bf16.gmra.mxu0 %v150
    %v224 = vpop.f32.mrf.mxu0
    %v225 = vadd.f32 0.0, %v224
    %v226 = vpop.f32.mrf.mxu0
    %v227 = vadd.f32 0.0, %v226
    %v228 = vpop.f32.mrf.mxu0
    %v229 = vadd.f32 0.0, %v228
    %v230 = vpop.f32.mrf.mxu0
    %v231 = vadd.f32 0.0, %v230
    %232 = vmatprep.mubr.bf16.mxu0 0
    %233 = vmatmul.mubr.bf16.gmra.mxu0 %v153
    %v234 = vpop.f32.mrf.mxu0
    %v235 = vadd.f32 0.0, %v234
    %v236 = vpop.f32.mrf.mxu0
    %v237 = vadd.f32 0.0, %v236
    %v238 = vpop.f32.mrf.mxu0
    %v239 = vadd.f32 0.0, %v238
    %v240 = vpop.f32.mrf.mxu0
    %v241 = vadd.f32 0.0, %v240
    %242 = vmatprep.mubr.bf16.mxu0 0
    %243 = vmatmul.mubr.bf16.gmra.mxu0 %v156
    %v244 = vpop.f32.mrf.mxu0
    %v245 = vadd.f32 0.0, %v244
    %v246 = vpop.f32.mrf.mxu0
    %v247 = vadd.f32 0.0, %v246
    %v248 = vpop.f32.mrf.mxu0
    %v249 = vadd.f32 0.0, %v248
    %v250 = vpop.f32.mrf.mxu0
    %v251 = vadd.f32 0.0, %v250
    %252 = vmatprep.mubr.bf16.mxu0 0
    %253 = vmatmul.mubr.bf16.gmra.mxu0 %v159
    %v254 = vpop.f32.mrf.mxu0
    %v255 = vadd.f32 0.0, %v254
    %v256 = vpop.f32.mrf.mxu0
    %v257 = vadd.f32 0.0, %v256
    %v258 = vpop.f32.mrf.mxu0
    %v259 = vadd.f32 0.0, %v258
    %v260 = vpop.f32.mrf.mxu0
    %v261 = vadd.f32 0.0, %v260
    %262 = vmatprep.mubr.bf16.mxu0 0
    %263 = vmatmul.mubr.bf16.gmra.mxu0 %v162
    %v264 = vpop.f32.mrf.mxu0
    %v265 = vadd.f32 0.0, %v264
    %v266 = vpop.f32.mrf.mxu0
    %v267 = vadd.f32 0.0, %v266
    %v268 = vpop.f32.mrf.mxu0
    %v269 = vadd.f32 0.0, %v268
    %v270 = vpop.f32.mrf.mxu0
    %v271 = vadd.f32 0.0, %v270
    %272 = vmatprep.mubr.bf16.mxu0 0
    %273 = vmatmul.mubr.bf16.gmra.mxu0 %v165
    %v274 = vpop.f32.mrf.mxu0
    %v275 = vadd.f32 0.0, %v274
    %v276 = vpop.f32.mrf.mxu0
    %v277 = vadd.f32 0.0, %v276
    %v278 = vpop.f32.mrf.mxu0
    %v279 = vadd.f32 0.0, %v278
    %v280 = vpop.f32.mrf.mxu0
    %v281 = vadd.f32 0.0, %v280
    %282 = vmatprep.mubr.bf16.mxu0 0
    %283 = vmatmul.mubr.bf16.gmra.mxu0 %v168
    %v284 = vpop.f32.mrf.mxu0
    %v285 = vadd.f32 0.0, %v284
    %v286 = vpop.f32.mrf.mxu0
    %v287 = vadd.f32 0.0, %v286
    %v288 = vpop.f32.mrf.mxu0
    %v289 = vadd.f32 0.0, %v288
    %v290 = vpop.f32.mrf.mxu0
    %v291 = vadd.f32 0.0, %v290
    %292 = vdwg.mxu0
    %293 = vmatprep.subr.bf16.mxu0 0
    %294 = vmatpush1.bf16.msra.mxu0 0
    %295 = vmatprep.subr.bf16.mxu0 0
    %296 = vmatpush1.bf16.msra.mxu0 0
    %297 = vmatprep.subr.bf16.mxu0 0
    %298 = vmatpush1.bf16.msra.mxu0 0
    %299 = vmatprep.subr.bf16.mxu0 0
    %300 = vmatpush1.bf16.msra.mxu0 0
    %301 = vmatprep.subr.bf16.mxu0 0
    %302 = vmatpush1.bf16.msra.mxu0 0
    %303 = vmatprep.subr.bf16.mxu0 0
    %304 = vmatpush1.bf16.msra.mxu0 0
    %305 = vmatprep.subr.bf16.mxu0 0
    %306 = vmatpush1.bf16.msra.mxu0 0
    %307 = vmatprep.subr.bf16.mxu0 0
    %308 = vmatpush1.bf16.msra.mxu0 %v178
    %309 = vmatprep.subr.bf16.mxu0 0
    %310 = vmatpush2.bf16.msra.mxu0 0
    %311 = vmatprep.subr.bf16.mxu0 0
    %312 = vmatpush2.bf16.msra.mxu0 0
    %313 = vmatprep.subr.bf16.mxu0 0
    %314 = vmatpush2.bf16.msra.mxu0 0
    %315 = vmatprep.subr.bf16.mxu0 0
    %316 = vmatpush2.bf16.msra.mxu0 0
    %317 = vmatprep.subr.bf16.mxu0 0
    %318 = vmatpush2.bf16.msra.mxu0 0
    %319 = vmatprep.subr.bf16.mxu0 0
    %320 = vmatpush2.bf16.msra.mxu0 0
    %321 = vmatprep.subr.bf16.mxu0 0
    %322 = vmatpush2.bf16.msra.mxu0 0
    %323 = vmatprep.subr.bf16.mxu0 0
    %324 = vmatpush2.bf16.msra.mxu0 0
    %325 = vmatprep.mubr.bf16.mxu0 0
    %326 = vmatmul.mubr.bf16.gmra.mxu0 %v147
    %v327 = vpop.f32.mrf.mxu0
    %v328 = vadd.f32 0.0, %v327
    %v329 = vpop.f32.mrf.mxu0
    %v330 = vpop.f32.mrf.mxu0
    %v331 = vadd.f32 0.0, %v330
    %v332 = vpop.f32.mrf.mxu0
    %333 = vmatprep.mubr.bf16.mxu0 0
    %334 = vmatmul.mubr.bf16.gmra.mxu0 %v150
    %v335 = vpop.f32.mrf.mxu0
    %v336 = vadd.f32 0.0, %v335
    %v337 = vpop.f32.mrf.mxu0
    %v338 = vpop.f32.mrf.mxu0
    %v339 = vadd.f32 0.0, %v338
    %v340 = vpop.f32.mrf.mxu0
    %341 = vmatprep.mubr.bf16.mxu0 0
    %342 = vmatmul.mubr.bf16.gmra.mxu0 %v153
    %v343 = vpop.f32.mrf.mxu0
    %v344 = vadd.f32 0.0, %v343
    %v345 = vpop.f32.mrf.mxu0
    %v346 = vpop.f32.mrf.mxu0
    %v347 = vadd.f32 0.0, %v346
    %v348 = vpop.f32.mrf.mxu0
    %349 = vmatprep.mubr.bf16.mxu0 0
    %350 = vmatmul.mubr.bf16.gmra.mxu0 %v156
    %v351 = vpop.f32.mrf.mxu0
    %v352 = vadd.f32 0.0, %v351
    %v353 = vpop.f32.mrf.mxu0
    %v354 = vpop.f32.mrf.mxu0
    %v355 = vadd.f32 0.0, %v354
    %v356 = vpop.f32.mrf.mxu0
    %357 = vmatprep.mubr.bf16.mxu0 0
    %358 = vmatmul.mubr.bf16.gmra.mxu0 %v159
    %v359 = vpop.f32.mrf.mxu0
    %v360 = vadd.f32 0.0, %v359
    %v361 = vpop.f32.mrf.mxu0
    %v362 = vpop.f32.mrf.mxu0
    %v363 = vadd.f32 0.0, %v362
    %v364 = vpop.f32.mrf.mxu0
    %365 = vmatprep.mubr.bf16.mxu0 0
    %366 = vmatmul.mubr.bf16.gmra.mxu0 %v162
    %v367 = vpop.f32.mrf.mxu0
    %v368 = vadd.f32 0.0, %v367
    %v369 = vpop.f32.mrf.mxu0
    %v370 = vpop.f32.mrf.mxu0
    %v371 = vadd.f32 0.0, %v370
    %v372 = vpop.f32.mrf.mxu0
    %373 = vmatprep.mubr.bf16.mxu0 0
    %374 = vmatmul.mubr.bf16.gmra.mxu0 %v165
    %v375 = vpop.f32.mrf.mxu0
    %v376 = vadd.f32 0.0, %v375
    %v377 = vpop.f32.mrf.mxu0
    %v378 = vpop.f32.mrf.mxu0
    %v379 = vadd.f32 0.0, %v378
    %v380 = vpop.f32.mrf.mxu0
    %381 = vmatprep.mubr.bf16.mxu0 0
    %382 = vmatmul.mubr.bf16.gmra.mxu0 %v168
    %v383 = vpop.f32.mrf.mxu0
    %v384 = vadd.f32 0.0, %v383
    %v385 = vpop.f32.mrf.mxu0
    %v386 = vpop.f32.mrf.mxu0
    %v387 = vadd.f32 0.0, %v386
    %v388 = vpop.f32.mrf.mxu0
    %389 = vdwg.mxu0
    %v406 = vunpack.c.l.b16 %v91
    %v407 = vunpack.c.l.b16 %v92
    %v408 = vunpack.c.l.b16 %v93
    %v409 = vunpack.c.l.b16 %v94
    %v410 = vunpack.c.l.b16 %v95
    %v411 = vunpack.c.l.b16 %v96
    %v412 = vunpack.c.l.b16 %v97
    %v413 = vunpack.c.l.b16 %v98
    %v414 = vunpack.c.l.b16 %v99
    %v415 = vunpack.c.l.b16 %v100
    %v416 = vunpack.c.l.b16 %v101
    %v417 = vunpack.c.l.b16 %v102
    %v418 = vunpack.c.l.b16 %v103
    %v419 = vunpack.c.l.b16 %v104
    %v420 = vunpack.c.l.b16 %v105
    %v421 = vunpack.c.l.b16 %v106
    %v422 = vpack.c.b16 %v407, %v406
    %v423 = vpack.c.b16 %v409, %v408
    %v424 = vpack.c.b16 %v411, %v410
    %v425 = vpack.c.b16 %v413, %v412
    %v426 = vpack.c.b16 %v415, %v414
    %v427 = vpack.c.b16 %v417, %v416
    %v428 = vpack.c.b16 %v419, %v418
    %v429 = vpack.c.b16 %v421, %v420
    %v434 = vunpack.c.l.b16 %v131
    %v435 = vunpack.c.h.b16 %v131
    %v436 = vunpack.c.l.b16 %v132
    %v437 = vunpack.c.l.b16 %v133
    %v438 = vunpack.c.h.b16 %v133
    %v439 = vunpack.c.l.b16 %v134
    %v440 = vpack.c.b16 %v437, %v434
    %v441 = vpack.c.b16 %v438, %v435
    %v442 = vpack.c.b16 %v439, %v436
    %vm446 = vcmask 130048
    %v448 = vsel %vm446, %v422, 0
    %v451 = vsel %vm446, %v423, 0
    %v454 = vsel %vm446, %v424, 0
    %v457 = vsel %vm446, %v425, 0
    %v460 = vsel %vm446, %v426, 0
    %v463 = vsel %vm446, %v427, 0
    %v466 = vsel %vm446, %v428, 0
    %v469 = vsel %vm446, %v429, 0
    %471 = vmatprep.subr.bf16.mxu0 0
    %472 = vmatpush1.bf16.msra.mxu0 0
    %473 = vmatprep.subr.bf16.mxu0 0
    %474 = vmatpush1.bf16.msra.mxu0 0
    %475 = vmatprep.subr.bf16.mxu0 0
    %476 = vmatpush1.bf16.msra.mxu0 0
    %477 = vmatprep.subr.bf16.mxu0 0
    %478 = vmatpush1.bf16.msra.mxu0 0
    %479 = vmatprep.subr.bf16.mxu0 0
    %480 = vmatpush1.bf16.msra.mxu0 0
    %481 = vmatprep.subr.bf16.mxu0 0
    %482 = vmatpush1.bf16.msra.mxu0 0
    %483 = vmatprep.subr.bf16.mxu0 0
    %484 = vmatpush1.bf16.msra.mxu0 0
    %485 = vmatprep.subr.bf16.mxu0 %v441
    %486 = vmatpush1.bf16.msra.mxu0 %v440
    %487 = vmatprep.subr.bf16.mxu0 0
    %488 = vmatpush2.bf16.msra.mxu0 0
    %489 = vmatprep.subr.bf16.mxu0 0
    %490 = vmatpush2.bf16.msra.mxu0 0
    %491 = vmatprep.subr.bf16.mxu0 0
    %492 = vmatpush2.bf16.msra.mxu0 0
    %493 = vmatprep.subr.bf16.mxu0 0
    %494 = vmatpush2.bf16.msra.mxu0 0
    %495 = vmatprep.subr.bf16.mxu0 0
    %496 = vmatpush2.bf16.msra.mxu0 0
    %497 = vmatprep.subr.bf16.mxu0 0
    %498 = vmatpush2.bf16.msra.mxu0 0
    %499 = vmatprep.subr.bf16.mxu0 0
    %500 = vmatpush2.bf16.msra.mxu0 0
    %501 = vmatprep.subr.bf16.mxu0 0
    %502 = vmatpush2.bf16.msra.mxu0 0
    %503 = vmatprep.mubr.bf16.mxu0 0
    %504 = vmatmul.mubr.bf16.gmra.mxu0 %v448
    %v505 = vpop.f32.mrf.mxu0
    %v506 = vadd.f32 %v215, %v505
    %v507 = vpop.f32.mrf.mxu0
    %v508 = vadd.f32 %v217, %v507
    %v509 = vpop.f32.mrf.mxu0
    %v510 = vadd.f32 %v219, %v509
    %v511 = vpop.f32.mrf.mxu0
    %v512 = vadd.f32 %v221, %v511
    %513 = vmatprep.mubr.bf16.mxu0 0
    %514 = vmatmul.mubr.bf16.gmra.mxu0 %v451
    %v515 = vpop.f32.mrf.mxu0
    %v516 = vadd.f32 %v225, %v515
    %v517 = vpop.f32.mrf.mxu0
    %v518 = vadd.f32 %v227, %v517
    %v519 = vpop.f32.mrf.mxu0
    %v520 = vadd.f32 %v229, %v519
    %v521 = vpop.f32.mrf.mxu0
    %v522 = vadd.f32 %v231, %v521
    %523 = vmatprep.mubr.bf16.mxu0 0
    %524 = vmatmul.mubr.bf16.gmra.mxu0 %v454
    %v525 = vpop.f32.mrf.mxu0
    %v526 = vadd.f32 %v235, %v525
    %v527 = vpop.f32.mrf.mxu0
    %v528 = vadd.f32 %v237, %v527
    %v529 = vpop.f32.mrf.mxu0
    %v530 = vadd.f32 %v239, %v529
    %v531 = vpop.f32.mrf.mxu0
    %v532 = vadd.f32 %v241, %v531
    %533 = vmatprep.mubr.bf16.mxu0 0
    %534 = vmatmul.mubr.bf16.gmra.mxu0 %v457
    %v535 = vpop.f32.mrf.mxu0
    %v536 = vadd.f32 %v245, %v535
    %v537 = vpop.f32.mrf.mxu0
    %v538 = vadd.f32 %v247, %v537
    %v539 = vpop.f32.mrf.mxu0
    %v540 = vadd.f32 %v249, %v539
    %v541 = vpop.f32.mrf.mxu0
    %v542 = vadd.f32 %v251, %v541
    %543 = vmatprep.mubr.bf16.mxu0 0
    %544 = vmatmul.mubr.bf16.gmra.mxu0 %v460
    %v545 = vpop.f32.mrf.mxu0
    %v546 = vadd.f32 %v255, %v545
    %v547 = vpop.f32.mrf.mxu0
    %v548 = vadd.f32 %v257, %v547
    %v549 = vpop.f32.mrf.mxu0
    %v550 = vadd.f32 %v259, %v549
    %v551 = vpop.f32.mrf.mxu0
    %v552 = vadd.f32 %v261, %v551
    %553 = vmatprep.mubr.bf16.mxu0 0
    %554 = vmatmul.mubr.bf16.gmra.mxu0 %v463
    %v555 = vpop.f32.mrf.mxu0
    %v556 = vadd.f32 %v265, %v555
    %v557 = vpop.f32.mrf.mxu0
    %v558 = vadd.f32 %v267, %v557
    %v559 = vpop.f32.mrf.mxu0
    %v560 = vadd.f32 %v269, %v559
    %v561 = vpop.f32.mrf.mxu0
    %v562 = vadd.f32 %v271, %v561
    %563 = vmatprep.mubr.bf16.mxu0 0
    %564 = vmatmul.mubr.bf16.gmra.mxu0 %v466
    %v565 = vpop.f32.mrf.mxu0
    %v566 = vadd.f32 %v275, %v565
    %v567 = vpop.f32.mrf.mxu0
    %v568 = vadd.f32 %v277, %v567
    %v569 = vpop.f32.mrf.mxu0
    %v570 = vadd.f32 %v279, %v569
    %v571 = vpop.f32.mrf.mxu0
    %v572 = vadd.f32 %v281, %v571
    %573 = vmatprep.mubr.bf16.mxu0 0
    %574 = vmatmul.mubr.bf16.gmra.mxu0 %v469
    %v575 = vpop.f32.mrf.mxu0
    %v576 = vadd.f32 %v285, %v575
    %v577 = vpop.f32.mrf.mxu0
    %v578 = vadd.f32 %v287, %v577
    %v579 = vpop.f32.mrf.mxu0
    %v580 = vadd.f32 %v289, %v579
    %v581 = vpop.f32.mrf.mxu0
    %v582 = vadd.f32 %v291, %v581
    %583 = vdwg.mxu0
    %584 = vmatprep.subr.bf16.mxu0 0
    %585 = vmatpush1.bf16.msra.mxu0 0
    %586 = vmatprep.subr.bf16.mxu0 0
    %587 = vmatpush1.bf16.msra.mxu0 0
    %588 = vmatprep.subr.bf16.mxu0 0
    %589 = vmatpush1.bf16.msra.mxu0 0
    %590 = vmatprep.subr.bf16.mxu0 0
    %591 = vmatpush1.bf16.msra.mxu0 0
    %592 = vmatprep.subr.bf16.mxu0 0
    %593 = vmatpush1.bf16.msra.mxu0 0
    %594 = vmatprep.subr.bf16.mxu0 0
    %595 = vmatpush1.bf16.msra.mxu0 0
    %596 = vmatprep.subr.bf16.mxu0 0
    %597 = vmatpush1.bf16.msra.mxu0 0
    %598 = vmatprep.subr.bf16.mxu0 0
    %599 = vmatpush1.bf16.msra.mxu0 %v442
    %600 = vmatprep.subr.bf16.mxu0 0
    %601 = vmatpush2.bf16.msra.mxu0 0
    %602 = vmatprep.subr.bf16.mxu0 0
    %603 = vmatpush2.bf16.msra.mxu0 0
    %604 = vmatprep.subr.bf16.mxu0 0
    %605 = vmatpush2.bf16.msra.mxu0 0
    %606 = vmatprep.subr.bf16.mxu0 0
    %607 = vmatpush2.bf16.msra.mxu0 0
    %608 = vmatprep.subr.bf16.mxu0 0
    %609 = vmatpush2.bf16.msra.mxu0 0
    %610 = vmatprep.subr.bf16.mxu0 0
    %611 = vmatpush2.bf16.msra.mxu0 0
    %612 = vmatprep.subr.bf16.mxu0 0
    %613 = vmatpush2.bf16.msra.mxu0 0
    %614 = vmatprep.subr.bf16.mxu0 0
    %615 = vmatpush2.bf16.msra.mxu0 0
    %616 = vmatprep.mubr.bf16.mxu0 0
    %617 = vmatmul.mubr.bf16.gmra.mxu0 %v448
    %v618 = vpop.f32.mrf.mxu0
    %v619 = vadd.f32 %v328, %v618
    %v620 = vpop.f32.mrf.mxu0
    %v621 = vpop.f32.mrf.mxu0
    %v622 = vadd.f32 %v331, %v621
    %v623 = vpop.f32.mrf.mxu0
    %624 = vmatprep.mubr.bf16.mxu0 0
    %625 = vmatmul.mubr.bf16.gmra.mxu0 %v451
    %v626 = vpop.f32.mrf.mxu0
    %v627 = vadd.f32 %v336, %v626
    %v628 = vpop.f32.mrf.mxu0
    %v629 = vpop.f32.mrf.mxu0
    %v630 = vadd.f32 %v339, %v629
    %v631 = vpop.f32.mrf.mxu0
    %632 = vmatprep.mubr.bf16.mxu0 0
    %633 = vmatmul.mubr.bf16.gmra.mxu0 %v454
    %v634 = vpop.f32.mrf.mxu0
    %v635 = vadd.f32 %v344, %v634
    %v636 = vpop.f32.mrf.mxu0
    %v637 = vpop.f32.mrf.mxu0
    %v638 = vadd.f32 %v347, %v637
    %v639 = vpop.f32.mrf.mxu0
    %640 = vmatprep.mubr.bf16.mxu0 0
    %641 = vmatmul.mubr.bf16.gmra.mxu0 %v457
    %v642 = vpop.f32.mrf.mxu0
    %v643 = vadd.f32 %v352, %v642
    %v644 = vpop.f32.mrf.mxu0
    %v645 = vpop.f32.mrf.mxu0
    %v646 = vadd.f32 %v355, %v645
    %v647 = vpop.f32.mrf.mxu0
    %648 = vmatprep.mubr.bf16.mxu0 0
    %649 = vmatmul.mubr.bf16.gmra.mxu0 %v460
    %v650 = vpop.f32.mrf.mxu0
    %v651 = vadd.f32 %v360, %v650
    %v652 = vpop.f32.mrf.mxu0
    %v653 = vpop.f32.mrf.mxu0
    %v654 = vadd.f32 %v363, %v653
    %v655 = vpop.f32.mrf.mxu0
    %656 = vmatprep.mubr.bf16.mxu0 0
    %657 = vmatmul.mubr.bf16.gmra.mxu0 %v463
    %v658 = vpop.f32.mrf.mxu0
    %v659 = vadd.f32 %v368, %v658
    %v660 = vpop.f32.mrf.mxu0
    %v661 = vpop.f32.mrf.mxu0
    %v662 = vadd.f32 %v371, %v661
    %v663 = vpop.f32.mrf.mxu0
    %664 = vmatprep.mubr.bf16.mxu0 0
    %665 = vmatmul.mubr.bf16.gmra.mxu0 %v466
    %v666 = vpop.f32.mrf.mxu0
    %v667 = vadd.f32 %v376, %v666
    %v668 = vpop.f32.mrf.mxu0
    %v669 = vpop.f32.mrf.mxu0
    %v670 = vadd.f32 %v379, %v669
    %v671 = vpop.f32.mrf.mxu0
    %672 = vmatprep.mubr.bf16.mxu0 0
    %673 = vmatmul.mubr.bf16.gmra.mxu0 %v469
    %v674 = vpop.f32.mrf.mxu0
    %v675 = vadd.f32 %v384, %v674
    %v676 = vpop.f32.mrf.mxu0
    %v677 = vpop.f32.mrf.mxu0
    %v678 = vadd.f32 %v387, %v677
    %v679 = vpop.f32.mrf.mxu0
    %680 = vdwg.mxu0
    %v681 = vld [vmem:[%s5] sm:$0x7]
    %v683 = vlaneseq
    %v684 = vshrl.u32 %v683, 7
    %v685 = vsub.s32 0, %v684
    %v686 = vrot.slane %v681, %v685
    %v687 = vlaneseq
    %v688 = vshrl.u32 %v687, 7
    %v689 = vsub.s32 1, %v688
    %v690 = vrot.slane %v681, %v689
    %v691 = vlaneseq
    %v692 = vshrl.u32 %v691, 7
    %v693 = vsub.s32 2, %v692
    %v694 = vrot.slane %v681, %v693
    %v698 = vadd.f32 %v506, %v686
    %v699 = vadd.f32 %v508, %v690
    %v700 = vadd.f32 %v619, %v694
    %v701 = vadd.f32 %v510, %v686
    %v702 = vadd.f32 %v512, %v690
    %v703 = vadd.f32 %v622, %v694
    %v704 = vadd.f32 %v516, %v686
    %v705 = vadd.f32 %v518, %v690
    %v706 = vadd.f32 %v627, %v694
    %v707 = vadd.f32 %v520, %v686
    %v708 = vadd.f32 %v522, %v690
    %v709 = vadd.f32 %v630, %v694
    %v710 = vadd.f32 %v526, %v686
    %v711 = vadd.f32 %v528, %v690
    %v712 = vadd.f32 %v635, %v694
    %v713 = vadd.f32 %v530, %v686
    %v714 = vadd.f32 %v532, %v690
    %v715 = vadd.f32 %v638, %v694
    %v716 = vadd.f32 %v536, %v686
    %v717 = vadd.f32 %v538, %v690
    %v718 = vadd.f32 %v643, %v694
    %v719 = vadd.f32 %v540, %v686
    %v720 = vadd.f32 %v542, %v690
    %v721 = vadd.f32 %v646, %v694
    %v722 = vadd.f32 %v546, %v686
    %v723 = vadd.f32 %v548, %v690
    %v724 = vadd.f32 %v651, %v694
    %v725 = vadd.f32 %v550, %v686
    %v726 = vadd.f32 %v552, %v690
    %v727 = vadd.f32 %v654, %v694
    %v728 = vadd.f32 %v556, %v686
    %v729 = vadd.f32 %v558, %v690
    %v730 = vadd.f32 %v659, %v694
    %v731 = vadd.f32 %v560, %v686
    %v732 = vadd.f32 %v562, %v690
    %v733 = vadd.f32 %v662, %v694
    %v734 = vadd.f32 %v566, %v686
    %v735 = vadd.f32 %v568, %v690
    %v736 = vadd.f32 %v667, %v694
    %v737 = vadd.f32 %v570, %v686
    %v738 = vadd.f32 %v572, %v690
    %v739 = vadd.f32 %v670, %v694
    %v740 = vadd.f32 %v576, %v686
    %v741 = vadd.f32 %v578, %v690
    %v742 = vadd.f32 %v675, %v694
    %v743 = vadd.f32 %v580, %v686
    %v744 = vadd.f32 %v582, %v690
    %v745 = vadd.f32 %v678, %v694
    %746 = vst [vmem:[#allocation2] sm:$0xff] %v698
    %747 = vst [vmem:[#allocation2 + $0x8] sm:$0xff] %v699
    %748 = vst [vmem:[#allocation2 + $0x10] sm:$0xff] %v700
    %749 = vst [vmem:[#allocation2 + $0x18] sm:$0xff] %v701
    %750 = vst [vmem:[#allocation2 + $0x20] sm:$0xff] %v702
    %751 = vst [vmem:[#allocation2 + $0x28] sm:$0xff] %v703
    %752 = vst [vmem:[#allocation2 + $0x30] sm:$0xff] %v704
    %753 = vst [vmem:[#allocation2 + $0x38] sm:$0xff] %v705
    %754 = vst [vmem:[#allocation2 + $0x40] sm:$0xff] %v706
    %755 = vst [vmem:[#allocation2 + $0x48] sm:$0xff] %v707
    %756 = vst [vmem:[#allocation2 + $0x50] sm:$0xff] %v708
    %757 = vst [vmem:[#allocation2 + $0x58] sm:$0xff] %v709
    %758 = vst [vmem:[#allocation2 + $0x60] sm:$0xff] %v710
    %759 = vst [vmem:[#allocation2 + $0x68] sm:$0xff] %v711
    %760 = vst [vmem:[#allocation2 + $0x70] sm:$0xff] %v712
    %761 = vst [vmem:[#allocation2 + $0x78] sm:$0xff] %v713
    %762 = vst [vmem:[#allocation2 + $0x80] sm:$0xff] %v714
    %763 = vst [vmem:[#allocation2 + $0x88] sm:$0xff] %v715
    %764 = vst [vmem:[#allocation2 + $0x90] sm:$0xff] %v716
    %765 = vst [vmem:[#allocation2 + $0x98] sm:$0xff] %v717
    %766 = vst [vmem:[#allocation2 + $0xa0] sm:$0xff] %v718
    %767 = vst [vmem:[#allocation2 + $0xa8] sm:$0xff] %v719
    %768 = vst [vmem:[#allocation2 + $0xb0] sm:$0xff] %v720
    %769 = vst [vmem:[#allocation2 + $0xb8] sm:$0xff] %v721
    %770 = vst [vmem:[#allocation2 + $0xc0] sm:$0xff] %v722
    %771 = vst [vmem:[#allocation2 + $0xc8] sm:$0xff] %v723
    %772 = vst [vmem:[#allocation2 + $0xd0] sm:$0xff] %v724
    %773 = vst [vmem:[#allocation2 + $0xd8] sm:$0xff] %v725
    %774 = vst [vmem:[#allocation2 + $0xe0] sm:$0xff] %v726
    %775 = vst [vmem:[#allocation2 + $0xe8] sm:$0xff] %v727
    %776 = vst [vmem:[#allocation2 + $0xf0] sm:$0xff] %v728
    %777 = vst [vmem:[#allocation2 + $0xf8] sm:$0xff] %v729
    %778 = vst [vmem:[#allocation2 + $0x100] sm:$0xff] %v730
    %779 = vst [vmem:[#allocation2 + $0x108] sm:$0xff] %v731
    %780 = vst [vmem:[#allocation2 + $0x110] sm:$0xff] %v732
    %781 = vst [vmem:[#allocation2 + $0x118] sm:$0xff] %v733
    %782 = vst [vmem:[#allocation2 + $0x120] sm:$0xff] %v734
    %783 = vst [vmem:[#allocation2 + $0x128] sm:$0xff] %v735
    %784 = vst [vmem:[#allocation2 + $0x130] sm:$0xff] %v736
    %785 = vst [vmem:[#allocation2 + $0x138] sm:$0xff] %v737
    %786 = vst [vmem:[#allocation2 + $0x140] sm:$0xff] %v738
    %787 = vst [vmem:[#allocation2 + $0x148] sm:$0xff] %v739
    %788 = vst [vmem:[#allocation2 + $0x150] sm:$0xff] %v740
    %789 = vst [vmem:[#allocation2 + $0x158] sm:$0xff] %v741
    %790 = vst [vmem:[#allocation2 + $0x160] sm:$0xff] %v742
    %791 = vst [vmem:[#allocation2 + $0x168] sm:$0xff] %v743
    %792 = vst [vmem:[#allocation2 + $0x170] sm:$0xff] %v744
    %793 = vst [vmem:[#allocation2 + $0x178] sm:$0xff] %v745
    %s794 = smul.u32 0, 3
    %s795 = smul.addr %s794, 8
    %s796 = scalar_lea.vmem [#allocation2], %s795
    %v797 = vld [vmem:[%s796] sm:$0xff]
    %v798 = vld [vmem:[%s796 + $0x8] sm:$0xff]
    %v799 = vld [vmem:[%s796 + $0x10] sm:$0xff]
    %v800 = vld [vmem:[%s796 + $0x18] sm:$0xff]
    %v801 = vld [vmem:[%s796 + $0x20] sm:$0xff]
    %v802 = vld [vmem:[%s796 + $0x28] sm:$0xff]
    %v803 = vpack.c.bf16 %v90, %v89
    %v804 = vld [vmem:[#allocation7] sm:$0xff]
    %v805 = vld [vmem:[#allocation7 + $0x8] sm:$0xf]
    %v806 = vld [vmem:[#allocation7 + $0xc] sm:$0xff]
    %v807 = vld [vmem:[#allocation7 + $0x14] sm:$0xf]
    %v808 = vld [vmem:[#allocation7 + $0x18] sm:$0xff]
    %v809 = vld [vmem:[#allocation7 + $0x20] sm:$0xf]
    %v810 = vld [vmem:[#allocation7 + $0x24] sm:$0xff]
    %v811 = vld [vmem:[#allocation7 + $0x2c] sm:$0xf]
    %v812 = vld [vmem:[#allocation7 + $0x30] sm:$0xff]
    %v813 = vld [vmem:[#allocation7 + $0x38] sm:$0xf]
    %v814 = vld [vmem:[#allocation7 + $0x3c] sm:$0xff]
    %v815 = vld [vmem:[#allocation7 + $0x44] sm:$0xf]
    %v816 = vld [vmem:[#allocation7 + $0x48] sm:$0xff]
    %v817 = vld [vmem:[#allocation7 + $0x50] sm:$0xf]
    %v818 = vld [vmem:[#allocation7 + $0x54] sm:$0xff]
    %v819 = vld [vmem:[#allocation7 + $0x5c] sm:$0xf]
    %v820 = vld [vmem:[#allocation7 + $0x60] sm:$0xff]
    %v821 = vld [vmem:[#allocation7 + $0x68] sm:$0xf]
    %v822 = vld [vmem:[#allocation7 + $0x6c] sm:$0xff]
    %v823 = vld [vmem:[#allocation7 + $0x74] sm:$0xf]
    %v824 = vld [vmem:[#allocation7 + $0x78] sm:$0xff]
    %v825 = vld [vmem:[#allocation7 + $0x80] sm:$0xf]
    %v826 = vld [vmem:[#allocation7 + $0x84] sm:$0xff]
    %v827 = vld [vmem:[#allocation7 + $0x8c] sm:$0xf]
    %v828 = vld [vmem:[#allocation7 + $0x90] sm:$0xff]
    %v829 = vld [vmem:[#allocation7 + $0x98] sm:$0xf]
    %v830 = vld [vmem:[#allocation7 + $0x9c] sm:$0xff]
    %v831 = vld [vmem:[#allocation7 + $0xa4] sm:$0xf]
    %v832 = vld [vmem:[#allocation7 + $0xa8] sm:$0xff]
    %v833 = vld [vmem:[#allocation7 + $0xb0] sm:$0xf]
    %v834 = vld [vmem:[#allocation7 + $0xb4] sm:$0xff]
    %v835 = vld [vmem:[#allocation7 + $0xbc] sm:$0xf]
    %v868 = vunpack.c.l.b16 %v804
    %v869 = vunpack.c.h.b16 %v804
    %v870 = vunpack.c.l.b16 %v805
    %v871 = vunpack.c.l.b16 %v806
    %v872 = vunpack.c.h.b16 %v806
    %v873 = vunpack.c.l.b16 %v807
    %v874 = vunpack.c.l.b16 %v808
    %v875 = vunpack.c.h.b16 %v808
    %v876 = vunpack.c.l.b16 %v809
    %v877 = vunpack.c.l.b16 %v810
    %v878 = vunpack.c.h.b16 %v810
    %v879 = vunpack.c.l.b16 %v811
    %v880 = vunpack.c.l.b16 %v812
    %v881 = vunpack.c.h.b16 %v812
    %v882 = vunpack.c.l.b16 %v813
    %v883 = vunpack.c.l.b16 %v814
    %v884 = vunpack.c.h.b16 %v814
    %v885 = vunpack.c.l.b16 %v815
    %v886 = vunpack.c.l.b16 %v816
    %v887 = vunpack.c.h.b16 %v816
    %v888 = vunpack.c.l.b16 %v817
    %v889 = vunpack.c.l.b16 %v818
    %v890 = vunpack.c.h.b16 %v818
    %v891 = vunpack.c.l.b16 %v819
    %v892 = vunpack.c.l.b16 %v820
    %v893 = vunpack.c.h.b16 %v820
    %v894 = vunpack.c.l.b16 %v821
    %v895 = vunpack.c.l.b16 %v822
    %v896 = vunpack.c.h.b16 %v822
    %v897 = vunpack.c.l.b16 %v823
    %v898 = vunpack.c.l.b16 %v824
    %v899 = vunpack.c.h.b16 %v824
    %v900 = vunpack.c.l.b16 %v825
    %v901 = vunpack.c.l.b16 %v826
    %v902 = vunpack.c.h.b16 %v826
    %v903 = vunpack.c.l.b16 %v827
    %v904 = vunpack.c.l.b16 %v828
    %v905 = vunpack.c.h.b16 %v828
    %v906 = vunpack.c.l.b16 %v829
    %v907 = vunpack.c.l.b16 %v830
    %v908 = vunpack.c.h.b16 %v830
    %v909 = vunpack.c.l.b16 %v831
    %v910 = vunpack.c.l.b16 %v832
    %v911 = vunpack.c.h.b16 %v832
    %v912 = vunpack.c.l.b16 %v833
    %v913 = vunpack.c.l.b16 %v834
    %v914 = vunpack.c.h.b16 %v834
    %v915 = vunpack.c.l.b16 %v835
    %v916 = vpack.c.b16 %v871, %v868
    %v917 = vpack.c.b16 %v872, %v869
    %v918 = vpack.c.b16 %v873, %v870
    %v919 = vpack.c.b16 %v877, %v874
    %v920 = vpack.c.b16 %v878, %v875
    %v921 = vpack.c.b16 %v879, %v876
    %v922 = vpack.c.b16 %v883, %v880
    %v923 = vpack.c.b16 %v884, %v881
    %v924 = vpack.c.b16 %v885, %v882
    %v925 = vpack.c.b16 %v889, %v886
    %v926 = vpack.c.b16 %v890, %v887
    %v927 = vpack.c.b16 %v891, %v888
    %v928 = vpack.c.b16 %v895, %v892
    %v929 = vpack.c.b16 %v896, %v893
    %v930 = vpack.c.b16 %v897, %v894
    %v931 = vpack.c.b16 %v901, %v898
    %v932 = vpack.c.b16 %v902, %v899
    %v933 = vpack.c.b16 %v903, %v900
    %v934 = vpack.c.b16 %v907, %v904
    %v935 = vpack.c.b16 %v908, %v905
    %v936 = vpack.c.b16 %v909, %v906
    %v937 = vpack.c.b16 %v913, %v910
    %v938 = vpack.c.b16 %v914, %v911
    %v939 = vpack.c.b16 %v915, %v912
    %964 = vmatprep.subr.bf16.mxu0 %v938
    %965 = vmatpush1.bf16.msra.mxu0 %v937
    %966 = vmatprep.subr.bf16.mxu0 %v935
    %967 = vmatpush1.bf16.msra.mxu0 %v934
    %968 = vmatprep.subr.bf16.mxu0 %v932
    %969 = vmatpush1.bf16.msra.mxu0 %v931
    %970 = vmatprep.subr.bf16.mxu0 %v929
    %971 = vmatpush1.bf16.msra.mxu0 %v928
    %972 = vmatprep.subr.bf16.mxu0 %v926
    %973 = vmatpush1.bf16.msra.mxu0 %v925
    %974 = vmatprep.subr.bf16.mxu0 %v923
    %975 = vmatpush1.bf16.msra.mxu0 %v922
    %976 = vmatprep.subr.bf16.mxu0 %v920
    %977 = vmatpush1.bf16.msra.mxu0 %v919
    %978 = vmatprep.subr.bf16.mxu0 %v917
    %979 = vmatpush1.bf16.msra.mxu0 %v916
    %980 = vmatprep.subr.bf16.mxu0 0
    %981 = vmatpush2.bf16.msra.mxu0 0
    %982 = vmatprep.subr.bf16.mxu0 0
    %983 = vmatpush2.bf16.msra.mxu0 0
    %984 = vmatprep.subr.bf16.mxu0 0
    %985 = vmatpush2.bf16.msra.mxu0 0
    %986 = vmatprep.subr.bf16.mxu0 0
    %987 = vmatpush2.bf16.msra.mxu0 0
    %988 = vmatprep.subr.bf16.mxu0 0
    %989 = vmatpush2.bf16.msra.mxu0 0
    %990 = vmatprep.subr.bf16.mxu0 0
    %991 = vmatpush2.bf16.msra.mxu0 0
    %992 = vmatprep.subr.bf16.mxu0 0
    %993 = vmatpush2.bf16.msra.mxu0 0
    %994 = vmatprep.subr.bf16.mxu0 0
    %995 = vmatpush2.bf16.msra.mxu0 0
    %996 = vmatprep.mubr.bf16.mxu0 0
    %997 = vmatmul.mubr.bf16.gmra.mxu0 %v803
    %v998 = vpop.f32.mrf.mxu0
    %v999 = vadd.f32 0.0, %v998
    %v1000 = vpop.f32.mrf.mxu0
    %v1001 = vadd.f32 0.0, %v1000
    %v1002 = vpop.f32.mrf.mxu0
    %v1003 = vadd.f32 0.0, %v1002
    %v1004 = vpop.f32.mrf.mxu0
    %v1005 = vadd.f32 0.0, %v1004
    %1006 = vdwg.mxu0
    %1007 = vmatprep.subr.bf16.mxu0 0
    %1008 = vmatpush1.bf16.msra.mxu0 %v939
    %1009 = vmatprep.subr.bf16.mxu0 0
    %1010 = vmatpush1.bf16.msra.mxu0 %v936
    %1011 = vmatprep.subr.bf16.mxu0 0
    %1012 = vmatpush1.bf16.msra.mxu0 %v933
    %1013 = vmatprep.subr.bf16.mxu0 0
    %1014 = vmatpush1.bf16.msra.mxu0 %v930
    %1015 = vmatprep.subr.bf16.mxu0 0
    %1016 = vmatpush1.bf16.msra.mxu0 %v927
    %1017 = vmatprep.subr.bf16.mxu0 0
    %1018 = vmatpush1.bf16.msra.mxu0 %v924
    %1019 = vmatprep.subr.bf16.mxu0 0
    %1020 = vmatpush1.bf16.msra.mxu0 %v921
    %1021 = vmatprep.subr.bf16.mxu0 0
    %1022 = vmatpush1.bf16.msra.mxu0 %v918
    %1023 = vmatprep.subr.bf16.mxu0 0
    %1024 = vmatpush2.bf16.msra.mxu0 0
    %1025 = vmatprep.subr.bf16.mxu0 0
    %1026 = vmatpush2.bf16.msra.mxu0 0
    %1027 = vmatprep.subr.bf16.mxu0 0
    %1028 = vmatpush2.bf16.msra.mxu0 0
    %1029 = vmatprep.subr.bf16.mxu0 0
    %1030 = vmatpush2.bf16.msra.mxu0 0
    %1031 = vmatprep.subr.bf16.mxu0 0
    %1032 = vmatpush2.bf16.msra.mxu0 0
    %1033 = vmatprep.subr.bf16.mxu0 0
    %1034 = vmatpush2.bf16.msra.mxu0 0
    %1035 = vmatprep.subr.bf16.mxu0 0
    %1036 = vmatpush2.bf16.msra.mxu0 0
    %1037 = vmatprep.subr.bf16.mxu0 0
    %1038 = vmatpush2.bf16.msra.mxu0 0
    %1039 = vmatprep.mubr.bf16.mxu0 0
    %1040 = vmatmul.mubr.bf16.gmra.mxu0 %v803
    %v1041 = vpop.f32.mrf.mxu0
    %v1042 = vadd.f32 0.0, %v1041
    %v1043 = vpop.f32.mrf.mxu0
    %v1044 = vpop.f32.mrf.mxu0
    %v1045 = vadd.f32 0.0, %v1044
    %v1046 = vpop.f32.mrf.mxu0
    %1047 = vdwg.mxu0
    %v1048 = vadd.f32 %v797, %v999
    %v1049 = vadd.f32 %v800, %v1003
    %v1050 = vxor.u32 %v1048, 2147483648
    %v1051 = vxor.u32 %v1049, 2147483648
    %v1052 = vmul.f32 %v1050, 1.442695
    %v1053 = vpow.pop %v1052
    %v1054 = vmul.f32 %v1051, 1.442695
    %v1055 = vpow.pop %v1054
    %v1056 = vadd.f32 %v1053, 1.0
    %v1057 = vadd.f32 %v1055, 1.0
    %v1058 = vrcp.pop %v1056
    %v1059 = vmul.f32 1.0, %v1058
    %v1060 = vrcp.pop %v1057
    %v1061 = vmul.f32 1.0, %v1060
    %v1062 = vadd.f32 %v798, %v1001
    %v1063 = vadd.f32 %v801, %v1005
    %v1064 = vxor.u32 %v1062, 2147483648
    %v1065 = vxor.u32 %v1063, 2147483648
    %v1066 = vmul.f32 %v1064, 1.442695
    %v1067 = vpow.pop %v1066
    %v1068 = vmul.f32 %v1065, 1.442695
    %v1069 = vpow.pop %v1068
    %v1070 = vadd.f32 %v1067, 1.0
    %v1071 = vadd.f32 %v1069, 1.0
    %v1072 = vrcp.pop %v1070
    %v1073 = vmul.f32 1.0, %v1072
    %v1074 = vrcp.pop %v1071
    %v1075 = vmul.f32 1.0, %v1074
    %v1077 = vlaneseq
    %v1078 = vshrl.u32 %v1077, 7
    %v1079 = vsub.s32 0, %v1078
    %v1080 = vrot.slane %v88, %v1079
    %v1082 = vadd.f32 %v1042, %v1080
    %v1083 = vadd.f32 %v1045, %v1080
    %v1084 = vmul.f32 %v1059, %v1082
    %v1085 = vmul.f32 %v1061, %v1083
    %v1086 = vadd.f32 %v799, %v1084
    %v1087 = vadd.f32 %v802, %v1085
    %v1088 = vtanh.pop %v1086
    %v1089 = vtanh.pop %v1087
    %v1090 = vsub.f32 1.0, %v1073
    %v1091 = vsub.f32 1.0, %v1075
    %v1092 = vmul.f32 %v1090, %v1088
    %v1093 = vmul.f32 %v1091, %v1089
    %v1094 = vmul.f32 %v1073, %v89
    %v1095 = vmul.f32 %v1075, %v90
    %v1096 = vadd.f32 %v1092, %v1094
    %v1097 = vadd.f32 %v1093, %v1095
    %v1098 = vpack.c.bf16 %v1097, %v1096
    %v1100 = vunpack.c.l.b16 %v1098
    %v1101 = vunpack.c.h.b16 %v1098
    %v1102 = vpack.c.b16 %v1100, %v1100
    %v1103 = vpack.c.b16 %v1101, %v1101
    %1106 = vst [vmem:[%s14] sm:$0xf] %v1102
    %1107 = vst [vmem:[%s14 + $0x4] sm:$0xf] %v1103
    %s1108 = smul.u32 2, 3
    %s1109 = smul.addr %s1108, 8
    %s1110 = scalar_lea.vmem [#allocation2], %s1109
    %v1111 = vld [vmem:[%s1110] sm:$0xff]
    %v1112 = vld [vmem:[%s1110 + $0x8] sm:$0xff]
    %v1113 = vld [vmem:[%s1110 + $0x10] sm:$0xff]
    %v1114 = vld [vmem:[%s1110 + $0x18] sm:$0xff]
    %v1115 = vld [vmem:[%s1110 + $0x20] sm:$0xff]
    %v1116 = vld [vmem:[%s1110 + $0x28] sm:$0xff]
    %v1117 = vld [vmem:[#allocation7] sm:$0xff]
    %v1118 = vld [vmem:[#allocation7 + $0x8] sm:$0xf]
    %v1119 = vld [vmem:[#allocation7 + $0xc] sm:$0xff]
    %v1120 = vld [vmem:[#allocation7 + $0x14] sm:$0xf]
    %v1121 = vld [vmem:[#allocation7 + $0x18] sm:$0xff]
    %v1122 = vld [vmem:[#allocation7 + $0x20] sm:$0xf]
    %v1123 = vld [vmem:[#allocation7 + $0x24] sm:$0xff]
    %v1124 = vld [vmem:[#allocation7 + $0x2c] sm:$0xf]
    %v1125 = vld [vmem:[#allocation7 + $0x30] sm:$0xff]
    %v1126 = vld [vmem:[#allocation7 + $0x38] sm:$0xf]
    %v1127 = vld [vmem:[#allocation7 + $0x3c] sm:$0xff]
    %v1128 = vld [vmem:[#allocation7 + $0x44] sm:$0xf]
    %v1129 = vld [vmem:[#allocation7 + $0x48] sm:$0xff]
    %v1130 = vld [vmem:[#allocation7 + $0x50] sm:$0xf]
    %v1131 = vld [vmem:[#allocation7 + $0x54] sm:$0xff]
    %v1132 = vld [vmem:[#allocation7 + $0x5c] sm:$0xf]
    %v1133 = vld [vmem:[#allocation7 + $0x60] sm:$0xff]
    %v1134 = vld [vmem:[#allocation7 + $0x68] sm:$0xf]
    %v1135 = vld [vmem:[#allocation7 + $0x6c] sm:$0xff]
    %v1136 = vld [vmem:[#allocation7 + $0x74] sm:$0xf]
    %v1137 = vld [vmem:[#allocation7 + $0x78] sm:$0xff]
    %v1138 = vld [vmem:[#allocation7 + $0x80] sm:$0xf]
    %v1139 = vld [vmem:[#allocation7 + $0x84] sm:$0xff]
    %v1140 = vld [vmem:[#allocation7 + $0x8c] sm:$0xf]
    %v1141 = vld [vmem:[#allocation7 + $0x90] sm:$0xff]
    %v1142 = vld [vmem:[#allocation7 + $0x98] sm:$0xf]
    %v1143 = vld [vmem:[#allocation7 + $0x9c] sm:$0xff]
    %v1144 = vld [vmem:[#allocation7 + $0xa4] sm:$0xf]
    %v1145 = vld [vmem:[#allocation7 + $0xa8] sm:$0xff]
    %v1146 = vld [vmem:[#allocation7 + $0xb0] sm:$0xf]
    %v1147 = vld [vmem:[#allocation7 + $0xb4] sm:$0xff]
    %v1148 = vld [vmem:[#allocation7 + $0xbc] sm:$0xf]
    %v1181 = vunpack.c.l.b16 %v1117
    %v1182 = vunpack.c.h.b16 %v1117
    %v1183 = vunpack.c.l.b16 %v1118
    %v1184 = vunpack.c.l.b16 %v1119
    %v1185 = vunpack.c.h.b16 %v1119
    %v1186 = vunpack.c.l.b16 %v1120
    %v1187 = vunpack.c.l.b16 %v1121
    %v1188 = vunpack.c.h.b16 %v1121
    %v1189 = vunpack.c.l.b16 %v1122
    %v1190 = vunpack.c.l.b16 %v1123
    %v1191 = vunpack.c.h.b16 %v1123
    %v1192 = vunpack.c.l.b16 %v1124
    %v1193 = vunpack.c.l.b16 %v1125
    %v1194 = vunpack.c.h.b16 %v1125
    %v1195 = vunpack.c.l.b16 %v1126
    %v1196 = vunpack.c.l.b16 %v1127
    %v1197 = vunpack.c.h.b16 %v1127
    %v1198 = vunpack.c.l.b16 %v1128
    %v1199 = vunpack.c.l.b16 %v1129
    %v1200 = vunpack.c.h.b16 %v1129
    %v1201 = vunpack.c.l.b16 %v1130
    %v1202 = vunpack.c.l.b16 %v1131
    %v1203 = vunpack.c.h.b16 %v1131
    %v1204 = vunpack.c.l.b16 %v1132
    %v1205 = vunpack.c.l.b16 %v1133
    %v1206 = vunpack.c.h.b16 %v1133
    %v1207 = vunpack.c.l.b16 %v1134
    %v1208 = vunpack.c.l.b16 %v1135
    %v1209 = vunpack.c.h.b16 %v1135
    %v1210 = vunpack.c.l.b16 %v1136
    %v1211 = vunpack.c.l.b16 %v1137
    %v1212 = vunpack.c.h.b16 %v1137
    %v1213 = vunpack.c.l.b16 %v1138
    %v1214 = vunpack.c.l.b16 %v1139
    %v1215 = vunpack.c.h.b16 %v1139
    %v1216 = vunpack.c.l.b16 %v1140
    %v1217 = vunpack.c.l.b16 %v1141
    %v1218 = vunpack.c.h.b16 %v1141
    %v1219 = vunpack.c.l.b16 %v1142
    %v1220 = vunpack.c.l.b16 %v1143
    %v1221 = vunpack.c.h.b16 %v1143
    %v1222 = vunpack.c.l.b16 %v1144
    %v1223 = vunpack.c.l.b16 %v1145
    %v1224 = vunpack.c.h.b16 %v1145
    %v1225 = vunpack.c.l.b16 %v1146
    %v1226 = vunpack.c.l.b16 %v1147
    %v1227 = vunpack.c.h.b16 %v1147
    %v1228 = vunpack.c.l.b16 %v1148
    %v1229 = vpack.c.b16 %v1184, %v1181
    %v1230 = vpack.c.b16 %v1185, %v1182
    %v1231 = vpack.c.b16 %v1186, %v1183
    %v1232 = vpack.c.b16 %v1190, %v1187
    %v1233 = vpack.c.b16 %v1191, %v1188
    %v1234 = vpack.c.b16 %v1192, %v1189
    %v1235 = vpack.c.b16 %v1196, %v1193
    %v1236 = vpack.c.b16 %v1197, %v1194
    %v1237 = vpack.c.b16 %v1198, %v1195
    %v1238 = vpack.c.b16 %v1202, %v1199
    %v1239 = vpack.c.b16 %v1203, %v1200
    %v1240 = vpack.c.b16 %v1204, %v1201
    %v1241 = vpack.c.b16 %v1208, %v1205
    %v1242 = vpack.c.b16 %v1209, %v1206
    %v1243 = vpack.c.b16 %v1210, %v1207
    %v1244 = vpack.c.b16 %v1214, %v1211
    %v1245 = vpack.c.b16 %v1215, %v1212
    %v1246 = vpack.c.b16 %v1216, %v1213
    %v1247 = vpack.c.b16 %v1220, %v1217
    %v1248 = vpack.c.b16 %v1221, %v1218
    %v1249 = vpack.c.b16 %v1222, %v1219
    %v1250 = vpack.c.b16 %v1226, %v1223
    %v1251 = vpack.c.b16 %v1227, %v1224
    %v1252 = vpack.c.b16 %v1228, %v1225
    %1277 = vmatprep.subr.bf16.mxu0 %v1251
    %1278 = vmatpush1.bf16.msra.mxu0 %v1250
    %1279 = vmatprep.subr.bf16.mxu0 %v1248
    %1280 = vmatpush1.bf16.msra.mxu0 %v1247
    %1281 = vmatprep.subr.bf16.mxu0 %v1245
    %1282 = vmatpush1.bf16.msra.mxu0 %v1244
    %1283 = vmatprep.subr.bf16.mxu0 %v1242
    %1284 = vmatpush1.bf16.msra.mxu0 %v1241
    %1285 = vmatprep.subr.bf16.mxu0 %v1239
    %1286 = vmatpush1.bf16.msra.mxu0 %v1238
    %1287 = vmatprep.subr.bf16.mxu0 %v1236
    %1288 = vmatpush1.bf16.msra.mxu0 %v1235
    %1289 = vmatprep.subr.bf16.mxu0 %v1233
    %1290 = vmatpush1.bf16.msra.mxu0 %v1232
    %1291 = vmatprep.subr.bf16.mxu0 %v1230
    %1292 = vmatpush1.bf16.msra.mxu0 %v1229
    %1293 = vmatprep.subr.bf16.mxu0 0
    %1294 = vmatpush2.bf16.msra.mxu0 0
    %1295 = vmatprep.subr.bf16.mxu0 0
    %1296 = vmatpush2.bf16.msra.mxu0 0
    %1297 = vmatprep.subr.bf16.mxu0 0
    %1298 = vmatpush2.bf16.msra.mxu0 0
    %1299 = vmatprep.subr.bf16.mxu0 0
    %1300 = vmatpush2.bf16.msra.mxu0 0
    %1301 = vmatprep.subr.bf16.mxu0 0
    %1302 = vmatpush2.bf16.msra.mxu0 0
    %1303 = vmatprep.subr.bf16.mxu0 0
    %1304 = vmatpush2.bf16.msra.mxu0 0
    %1305 = vmatprep.subr.bf16.mxu0 0
    %1306 = vmatpush2.bf16.msra.mxu0 0
    %1307 = vmatprep.subr.bf16.mxu0 0
    %1308 = vmatpush2.bf16.msra.mxu0 0
    %1309 = vmatprep.mubr.bf16.mxu0 0
    %1310 = vmatmul.mubr.bf16.gmra.mxu0 %v1098
    %v1311 = vpop.f32.mrf.mxu0
    %v1312 = vadd.f32 0.0, %v1311
    %v1313 = vpop.f32.mrf.mxu0
    %v1314 = vadd.f32 0.0, %v1313
    %v1315 = vpop.f32.mrf.mxu0
    %v1316 = vadd.f32 0.0, %v1315
    %v1317 = vpop.f32.mrf.mxu0
    %v1318 = vadd.f32 0.0, %v1317
    %1319 = vdwg.mxu0
    %1320 = vmatprep.subr.bf16.mxu0 0
    %1321 = vmatpush1.bf16.msra.mxu0 %v1252
    %1322 = vmatprep.subr.bf16.mxu0 0
    %1323 = vmatpush1.bf16.msra.mxu0 %v1249
    %1324 = vmatprep.subr.bf16.mxu0 0
    %1325 = vmatpush1.bf16.msra.mxu0 %v1246
    %1326 = vmatprep.subr.bf16.mxu0 0
    %1327 = vmatpush1.bf16.msra.mxu0 %v1243
    %1328 = vmatprep.subr.bf16.mxu0 0
    %1329 = vmatpush1.bf16.msra.mxu0 %v1240
    %1330 = vmatprep.subr.bf16.mxu0 0
    %1331 = vmatpush1.bf16.msra.mxu0 %v1237
    %1332 = vmatprep.subr.bf16.mxu0 0
    %1333 = vmatpush1.bf16.msra.mxu0 %v1234
    %1334 = vmatprep.subr.bf16.mxu0 0
    %1335 = vmatpush1.bf16.msra.mxu0 %v1231
    %1336 = vmatprep.subr.bf16.mxu0 0
    %1337 = vmatpush2.bf16.msra.mxu0 0
    %1338 = vmatprep.subr.bf16.mxu0 0
    %1339 = vmatpush2.bf16.msra.mxu0 0
    %1340 = vmatprep.subr.bf16.mxu0 0
    %1341 = vmatpush2.bf16.msra.mxu0 0
    %1342 = vmatprep.subr.bf16.mxu0 0
    %1343 = vmatpush2.bf16.msra.mxu0 0
    %1344 = vmatprep.subr.bf16.mxu0 0
    %1345 = vmatpush2.bf16.msra.mxu0 0
    %1346 = vmatprep.subr.bf16.mxu0 0
    %1347 = vmatpush2.bf16.msra.mxu0 0
    %1348 = vmatprep.subr.bf16.mxu0 0
    %1349 = vmatpush2.bf16.msra.mxu0 0
    %1350 = vmatprep.subr.bf16.mxu0 0
    %1351 = vmatpush2.bf16.msra.mxu0 0
    %1352 = vmatprep.mubr.bf16.mxu0 0
    %1353 = vmatmul.mubr.bf16.gmra.mxu0 %v1098
    %v1354 = vpop.f32.mrf.mxu0
    %v1355 = vadd.f32 0.0, %v1354
    %v1356 = vpop.f32.mrf.mxu0
    %v1357 = vpop.f32.mrf.mxu0
    %v1358 = vadd.f32 0.0, %v1357
    %v1359 = vpop.f32.mrf.mxu0
    %1360 = vdwg.mxu0
    %v1361 = vadd.f32 %v1111, %v1312
    %v1362 = vadd.f32 %v1114, %v1316
    %v1363 = vxor.u32 %v1361, 2147483648
    %v1364 = vxor.u32 %v1362, 2147483648
    %v1365 = vmul.f32 %v1363, 1.442695
    %v1366 = vpow.pop %v1365
    %v1367 = vmul.f32 %v1364, 1.442695
    %v1368 = vpow.pop %v1367
    %v1369 = vadd.f32 %v1366, 1.0
    %v1370 = vadd.f32 %v1368, 1.0
    %v1371 = vrcp.pop %v1369
    %v1372 = vmul.f32 1.0, %v1371
    %v1373 = vrcp.pop %v1370
    %v1374 = vmul.f32 1.0, %v1373
    %v1375 = vadd.f32 %v1112, %v1314
    %v1376 = vadd.f32 %v1115, %v1318
    %v1377 = vxor.u32 %v1375, 2147483648
    %v1378 = vxor.u32 %v1376, 2147483648
    %v1379 = vmul.f32 %v1377, 1.442695
    %v1380 = vpow.pop %v1379
    %v1381 = vmul.f32 %v1378, 1.442695
    %v1382 = vpow.pop %v1381
    %v1383 = vadd.f32 %v1380, 1.0
    %v1384 = vadd.f32 %v1382, 1.0
    %v1385 = vrcp.pop %v1383
    %v1386 = vmul.f32 1.0, %v1385
    %v1387 = vrcp.pop %v1384
    %v1388 = vmul.f32 1.0, %v1387
    %v1389 = vadd.f32 %v1355, %v1080
    %v1390 = vadd.f32 %v1358, %v1080
    %v1391 = vmul.f32 %v1372, %v1389
    %v1392 = vmul.f32 %v1374, %v1390
    %v1393 = vadd.f32 %v1113, %v1391
    %v1394 = vadd.f32 %v1116, %v1392
    %v1395 = vtanh.pop %v1393
    %v1396 = vtanh.pop %v1394
    %v1397 = vsub.f32 1.0, %v1386
    %v1398 = vsub.f32 1.0, %v1388
    %v1399 = vmul.f32 %v1397, %v1395
    %v1400 = vmul.f32 %v1398, %v1396
    %v1401 = vmul.f32 %v1386, %v1096
    %v1402 = vmul.f32 %v1388, %v1097
    %v1403 = vadd.f32 %v1399, %v1401
    %v1404 = vadd.f32 %v1400, %v1402
    %v1405 = vpack.c.bf16 %v1404, %v1403
    %v1407 = vunpack.c.l.b16 %v1405
    %v1408 = vunpack.c.h.b16 %v1405
    %v1409 = vpack.c.b16 %v1407, %v1407
    %v1410 = vpack.c.b16 %v1408, %v1408
    %s1413 = scalar_lea.vmem %s14, 8
    %1414 = vst [vmem:[%s1413] sm:$0xf] %v1409
    %1415 = vst [vmem:[%s1413 + $0x4] sm:$0xf] %v1410
    %s1416 = smul.u32 4, 3
    %s1417 = smul.addr %s1416, 8
    %s1418 = scalar_lea.vmem [#allocation2], %s1417
    %v1419 = vld [vmem:[%s1418] sm:$0xff]
    %v1420 = vld [vmem:[%s1418 + $0x8] sm:$0xff]
    %v1421 = vld [vmem:[%s1418 + $0x10] sm:$0xff]
    %v1422 = vld [vmem:[%s1418 + $0x18] sm:$0xff]
    %v1423 = vld [vmem:[%s1418 + $0x20] sm:$0xff]
    %v1424 = vld [vmem:[%s1418 + $0x28] sm:$0xff]
    %v1425 = vld [vmem:[#allocation7] sm:$0xff]
    %v1426 = vld [vmem:[#allocation7 + $0x8] sm:$0xf]
    %v1427 = vld [vmem:[#allocation7 + $0xc] sm:$0xff]
    %v1428 = vld [vmem:[#allocation7 + $0x14] sm:$0xf]
    %v1429 = vld [vmem:[#allocation7 + $0x18] sm:$0xff]
    %v1430 = vld [vmem:[#allocation7 + $0x20] sm:$0xf]
    %v1431 = vld [vmem:[#allocation7 + $0x24] sm:$0xff]
    %v1432 = vld [vmem:[#allocation7 + $0x2c] sm:$0xf]
    %v1433 = vld [vmem:[#allocation7 + $0x30] sm:$0xff]
    %v1434 = vld [vmem:[#allocation7 + $0x38] sm:$0xf]
    %v1435 = vld [vmem:[#allocation7 + $0x3c] sm:$0xff]
    %v1436 = vld [vmem:[#allocation7 + $0x44] sm:$0xf]
    %v1437 = vld [vmem:[#allocation7 + $0x48] sm:$0xff]
    %v1438 = vld [vmem:[#allocation7 + $0x50] sm:$0xf]
    %v1439 = vld [vmem:[#allocation7 + $0x54] sm:$0xff]
    %v1440 = vld [vmem:[#allocation7 + $0x5c] sm:$0xf]
    %v1441 = vld [vmem:[#allocation7 + $0x60] sm:$0xff]
    %v1442 = vld [vmem:[#allocation7 + $0x68] sm:$0xf]
    %v1443 = vld [vmem:[#allocation7 + $0x6c] sm:$0xff]
    %v1444 = vld [vmem:[#allocation7 + $0x74] sm:$0xf]
    %v1445 = vld [vmem:[#allocation7 + $0x78] sm:$0xff]
    %v1446 = vld [vmem:[#allocation7 + $0x80] sm:$0xf]
    %v1447 = vld [vmem:[#allocation7 + $0x84] sm:$0xff]
    %v1448 = vld [vmem:[#allocation7 + $0x8c] sm:$0xf]
    %v1449 = vld [vmem:[#allocation7 + $0x90] sm:$0xff]
    %v1450 = vld [vmem:[#allocation7 + $0x98] sm:$0xf]
    %v1451 = vld [vmem:[#allocation7 + $0x9c] sm:$0xff]
    %v1452 = vld [vmem:[#allocation7 + $0xa4] sm:$0xf]
    %v1453 = vld [vmem:[#allocation7 + $0xa8] sm:$0xff]
    %v1454 = vld [vmem:[#allocation7 + $0xb0] sm:$0xf]
    %v1455 = vld [vmem:[#allocation7 + $0xb4] sm:$0xff]
    %v1456 = vld [vmem:[#allocation7 + $0xbc] sm:$0xf]
    %v1489 = vunpack.c.l.b16 %v1425
    %v1490 = vunpack.c.h.b16 %v1425
    %v1491 = vunpack.c.l.b16 %v1426
    %v1492 = vunpack.c.l.b16 %v1427
    %v1493 = vunpack.c.h.b16 %v1427
    %v1494 = vunpack.c.l.b16 %v1428
    %v1495 = vunpack.c.l.b16 %v1429
    %v1496 = vunpack.c.h.b16 %v1429
    %v1497 = vunpack.c.l.b16 %v1430
    %v1498 = vunpack.c.l.b16 %v1431
    %v1499 = vunpack.c.h.b16 %v1431
    %v1500 = vunpack.c.l.b16 %v1432
    %v1501 = vunpack.c.l.b16 %v1433
    %v1502 = vunpack.c.h.b16 %v1433
    %v1503 = vunpack.c.l.b16 %v1434
    %v1504 = vunpack.c.l.b16 %v1435
    %v1505 = vunpack.c.h.b16 %v1435
    %v1506 = vunpack.c.l.b16 %v1436
    %v1507 = vunpack.c.l.b16 %v1437
    %v1508 = vunpack.c.h.b16 %v1437
    %v1509 = vunpack.c.l.b16 %v1438
    %v1510 = vunpack.c.l.b16 %v1439
    %v1511 = vunpack.c.h.b16 %v1439
    %v1512 = vunpack.c.l.b16 %v1440
    %v1513 = vunpack.c.l.b16 %v1441
    %v1514 = vunpack.c.h.b16 %v1441
    %v1515 = vunpack.c.l.b16 %v1442
    %v1516 = vunpack.c.l.b16 %v1443
    %v1517 = vunpack.c.h.b16 %v1443
    %v1518 = vunpack.c.l.b16 %v1444
    %v1519 = vunpack.c.l.b16 %v1445
    %v1520 = vunpack.c.h.b16 %v1445
    %v1521 = vunpack.c.l.b16 %v1446
    %v1522 = vunpack.c.l.b16 %v1447
    %v1523 = vunpack.c.h.b16 %v1447
    %v1524 = vunpack.c.l.b16 %v1448
    %v1525 = vunpack.c.l.b16 %v1449
    %v1526 = vunpack.c.h.b16 %v1449
    %v1527 = vunpack.c.l.b16 %v1450
    %v1528 = vunpack.c.l.b16 %v1451
    %v1529 = vunpack.c.h.b16 %v1451
    %v1530 = vunpack.c.l.b16 %v1452
    %v1531 = vunpack.c.l.b16 %v1453
    %v1532 = vunpack.c.h.b16 %v1453
    %v1533 = vunpack.c.l.b16 %v1454
    %v1534 = vunpack.c.l.b16 %v1455
    %v1535 = vunpack.c.h.b16 %v1455
    %v1536 = vunpack.c.l.b16 %v1456
    %v1537 = vpack.c.b16 %v1492, %v1489
    %v1538 = vpack.c.b16 %v1493, %v1490
    %v1539 = vpack.c.b16 %v1494, %v1491
    %v1540 = vpack.c.b16 %v1498, %v1495
    %v1541 = vpack.c.b16 %v1499, %v1496
    %v1542 = vpack.c.b16 %v1500, %v1497
    %v1543 = vpack.c.b16 %v1504, %v1501
    %v1544 = vpack.c.b16 %v1505, %v1502
    %v1545 = vpack.c.b16 %v1506, %v1503
    %v1546 = vpack.c.b16 %v1510, %v1507
    %v1547 = vpack.c.b16 %v1511, %v1508
    %v1548 = vpack.c.b16 %v1512, %v1509
    %v1549 = vpack.c.b16 %v1516, %v1513
    %v1550 = vpack.c.b16 %v1517, %v1514
    %v1551 = vpack.c.b16 %v1518, %v1515
    %v1552 = vpack.c.b16 %v1522, %v1519
    %v1553 = vpack.c.b16 %v1523, %v1520
    %v1554 = vpack.c.b16 %v1524, %v1521
    %v1555 = vpack.c.b16 %v1528, %v1525
    %v1556 = vpack.c.b16 %v1529, %v1526
    %v1557 = vpack.c.b16 %v1530, %v1527
    %v1558 = vpack.c.b16 %v1534, %v1531
    %v1559 = vpack.c.b16 %v1535, %v1532
    %v1560 = vpack.c.b16 %v1536, %v1533
    %1585 = vmatprep.subr.bf16.mxu0 %v1559
    %1586 = vmatpush1.bf16.msra.mxu0 %v1558
    %1587 = vmatprep.subr.bf16.mxu0 %v1556
    %1588 = vmatpush1.bf16.msra.mxu0 %v1555
    %1589 = vmatprep.subr.bf16.mxu0 %v1553
    %1590 = vmatpush1.bf16.msra.mxu0 %v1552
    %1591 = vmatprep.subr.bf16.mxu0 %v1550
    %1592 = vmatpush1.bf16.msra.mxu0 %v1549
    %1593 = vmatprep.subr.bf16.mxu0 %v1547
    %1594 = vmatpush1.bf16.msra.mxu0 %v1546
    %1595 = vmatprep.subr.bf16.mxu0 %v1544
    %1596 = vmatpush1.bf16.msra.mxu0 %v1543
    %1597 = vmatprep.subr.bf16.mxu0 %v1541
    %1598 = vmatpush1.bf16.msra.mxu0 %v1540
    %1599 = vmatprep.subr.bf16.mxu0 %v1538
    %1600 = vmatpush1.bf16.msra.mxu0 %v1537
    %1601 = vmatprep.subr.bf16.mxu0 0
    %1602 = vmatpush2.bf16.msra.mxu0 0
    %1603 = vmatprep.subr.bf16.mxu0 0
    %1604 = vmatpush2.bf16.msra.mxu0 0
    %1605 = vmatprep.subr.bf16.mxu0 0
    %1606 = vmatpush2.bf16.msra.mxu0 0
    %1607 = vmatprep.subr.bf16.mxu0 0
    %1608 = vmatpush2.bf16.msra.mxu0 0
    %1609 = vmatprep.subr.bf16.mxu0 0
    %1610 = vmatpush2.bf16.msra.mxu0 0
    %1611 = vmatprep.subr.bf16.mxu0 0
    %1612 = vmatpush2.bf16.msra.mxu0 0
    %1613 = vmatprep.subr.bf16.mxu0 0
    %1614 = vmatpush2.bf16.msra.mxu0 0
    %1615 = vmatprep.subr.bf16.mxu0 0
    %1616 = vmatpush2.bf16.msra.mxu0 0
    %1617 = vmatprep.mubr.bf16.mxu0 0
    %1618 = vmatmul.mubr.bf16.gmra.mxu0 %v1405
    %v1619 = vpop.f32.mrf.mxu0
    %v1620 = vadd.f32 0.0, %v1619
    %v1621 = vpop.f32.mrf.mxu0
    %v1622 = vadd.f32 0.0, %v1621
    %v1623 = vpop.f32.mrf.mxu0
    %v1624 = vadd.f32 0.0, %v1623
    %v1625 = vpop.f32.mrf.mxu0
    %v1626 = vadd.f32 0.0, %v1625
    %1627 = vdwg.mxu0
    %1628 = vmatprep.subr.bf16.mxu0 0
    %1629 = vmatpush1.bf16.msra.mxu0 %v1560
    %1630 = vmatprep.subr.bf16.mxu0 0
    %1631 = vmatpush1.bf16.msra.mxu0 %v1557
    %1632 = vmatprep.subr.bf16.mxu0 0
    %1633 = vmatpush1.bf16.msra.mxu0 %v1554
    %1634 = vmatprep.subr.bf16.mxu0 0
    %1635 = vmatpush1.bf16.msra.mxu0 %v1551
    %1636 = vmatprep.subr.bf16.mxu0 0
    %1637 = vmatpush1.bf16.msra.mxu0 %v1548
    %1638 = vmatprep.subr.bf16.mxu0 0
    %1639 = vmatpush1.bf16.msra.mxu0 %v1545
    %1640 = vmatprep.subr.bf16.mxu0 0
    %1641 = vmatpush1.bf16.msra.mxu0 %v1542
    %1642 = vmatprep.subr.bf16.mxu0 0
    %1643 = vmatpush1.bf16.msra.mxu0 %v1539
    %1644 = vmatprep.subr.bf16.mxu0 0
    %1645 = vmatpush2.bf16.msra.mxu0 0
    %1646 = vmatprep.subr.bf16.mxu0 0
    %1647 = vmatpush2.bf16.msra.mxu0 0
    %1648 = vmatprep.subr.bf16.mxu0 0
    %1649 = vmatpush2.bf16.msra.mxu0 0
    %1650 = vmatprep.subr.bf16.mxu0 0
    %1651 = vmatpush2.bf16.msra.mxu0 0
    %1652 = vmatprep.subr.bf16.mxu0 0
    %1653 = vmatpush2.bf16.msra.mxu0 0
    %1654 = vmatprep.subr.bf16.mxu0 0
    %1655 = vmatpush2.bf16.msra.mxu0 0
    %1656 = vmatprep.subr.bf16.mxu0 0
    %1657 = vmatpush2.bf16.msra.mxu0 0
    %1658 = vmatprep.subr.bf16.mxu0 0
    %1659 = vmatpush2.bf16.msra.mxu0 0
    %1660 = vmatprep.mubr.bf16.mxu0 0
    %1661 = vmatmul.mubr.bf16.gmra.mxu0 %v1405
    %v1662 = vpop.f32.mrf.mxu0
    %v1663 = vadd.f32 0.0, %v1662
    %v1664 = vpop.f32.mrf.mxu0
    %v1665 = vpop.f32.mrf.mxu0
    %v1666 = vadd.f32 0.0, %v1665
    %v1667 = vpop.f32.mrf.mxu0
    %1668 = vdwg.mxu0
    %v1669 = vadd.f32 %v1419, %v1620
    %v1670 = vadd.f32 %v1422, %v1624
    %v1671 = vxor.u32 %v1669, 2147483648
    %v1672 = vxor.u32 %v1670, 2147483648
    %v1673 = vmul.f32 %v1671, 1.442695
    %v1674 = vpow.pop %v1673
    %v1675 = vmul.f32 %v1672, 1.442695
    %v1676 = vpow.pop %v1675
    %v1677 = vadd.f32 %v1674, 1.0
    %v1678 = vadd.f32 %v1676, 1.0
    %v1679 = vrcp.pop %v1677
    %v1680 = vmul.f32 1.0, %v1679
    %v1681 = vrcp.pop %v1678
    %v1682 = vmul.f32 1.0, %v1681
    %v1683 = vadd.f32 %v1420, %v1622
    %v1684 = vadd.f32 %v1423, %v1626
    %v1685 = vxor.u32 %v1683, 2147483648
    %v1686 = vxor.u32 %v1684, 2147483648
    %v1687 = vmul.f32 %v1685, 1.442695
    %v1688 = vpow.pop %v1687
    %v1689 = vmul.f32 %v1686, 1.442695
    %v1690 = vpow.pop %v1689
    %v1691 = vadd.f32 %v1688, 1.0
    %v1692 = vadd.f32 %v1690, 1.0
    %v1693 = vrcp.pop %v1691
    %v1694 = vmul.f32 1.0, %v1693
    %v1695 = vrcp.pop %v1692
    %v1696 = vmul.f32 1.0, %v1695
    %v1697 = vadd.f32 %v1663, %v1080
    %v1698 = vadd.f32 %v1666, %v1080
    %v1699 = vmul.f32 %v1680, %v1697
    %v1700 = vmul.f32 %v1682, %v1698
    %v1701 = vadd.f32 %v1421, %v1699
    %v1702 = vadd.f32 %v1424, %v1700
    %v1703 = vtanh.pop %v1701
    %v1704 = vtanh.pop %v1702
    %v1705 = vsub.f32 1.0, %v1694
    %v1706 = vsub.f32 1.0, %v1696
    %v1707 = vmul.f32 %v1705, %v1703
    %v1708 = vmul.f32 %v1706, %v1704
    %v1709 = vmul.f32 %v1694, %v1403
    %v1710 = vmul.f32 %v1696, %v1404
    %v1711 = vadd.f32 %v1707, %v1709
    %v1712 = vadd.f32 %v1708, %v1710
    %v1713 = vpack.c.bf16 %v1712, %v1711
    %v1715 = vunpack.c.l.b16 %v1713
    %v1716 = vunpack.c.h.b16 %v1713
    %v1717 = vpack.c.b16 %v1715, %v1715
    %v1718 = vpack.c.b16 %v1716, %v1716
    %s1721 = scalar_lea.vmem %s14, 16
    %1722 = vst [vmem:[%s1721] sm:$0xf] %v1717
    %1723 = vst [vmem:[%s1721 + $0x4] sm:$0xf] %v1718
    %s1724 = smul.u32 6, 3
    %s1725 = smul.addr %s1724, 8
    %s1726 = scalar_lea.vmem [#allocation2], %s1725
    %v1727 = vld [vmem:[%s1726] sm:$0xff]
    %v1728 = vld [vmem:[%s1726 + $0x8] sm:$0xff]
    %v1729 = vld [vmem:[%s1726 + $0x10] sm:$0xff]
    %v1730 = vld [vmem:[%s1726 + $0x18] sm:$0xff]
    %v1731 = vld [vmem:[%s1726 + $0x20] sm:$0xff]
    %v1732 = vld [vmem:[%s1726 + $0x28] sm:$0xff]
    %v1733 = vld [vmem:[#allocation7] sm:$0xff]
    %v1734 = vld [vmem:[#allocation7 + $0x8] sm:$0xf]
    %v1735 = vld [vmem:[#allocation7 + $0xc] sm:$0xff]
    %v1736 = vld [vmem:[#allocation7 + $0x14] sm:$0xf]
    %v1737 = vld [vmem:[#allocation7 + $0x18] sm:$0xff]
    %v1738 = vld [vmem:[#allocation7 + $0x20] sm:$0xf]
    %v1739 = vld [vmem:[#allocation7 + $0x24] sm:$0xff]
    %v1740 = vld [vmem:[#allocation7 + $0x2c] sm:$0xf]
    %v1741 = vld [vmem:[#allocation7 + $0x30] sm:$0xff]
    %v1742 = vld [vmem:[#allocation7 + $0x38] sm:$0xf]
    %v1743 = vld [vmem:[#allocation7 + $0x3c] sm:$0xff]
    %v1744 = vld [vmem:[#allocation7 + $0x44] sm:$0xf]
    %v1745 = vld [vmem:[#allocation7 + $0x48] sm:$0xff]
    %v1746 = vld [vmem:[#allocation7 + $0x50] sm:$0xf]
    %v1747 = vld [vmem:[#allocation7 + $0x54] sm:$0xff]
    %v1748 = vld [vmem:[#allocation7 + $0x5c] sm:$0xf]
    %v1749 = vld [vmem:[#allocation7 + $0x60] sm:$0xff]
    %v1750 = vld [vmem:[#allocation7 + $0x68] sm:$0xf]
    %v1751 = vld [vmem:[#allocation7 + $0x6c] sm:$0xff]
    %v1752 = vld [vmem:[#allocation7 + $0x74] sm:$0xf]
    %v1753 = vld [vmem:[#allocation7 + $0x78] sm:$0xff]
    %v1754 = vld [vmem:[#allocation7 + $0x80] sm:$0xf]
    %v1755 = vld [vmem:[#allocation7 + $0x84] sm:$0xff]
    %v1756 = vld [vmem:[#allocation7 + $0x8c] sm:$0xf]
    %v1757 = vld [vmem:[#allocation7 + $0x90] sm:$0xff]
    %v1758 = vld [vmem:[#allocation7 + $0x98] sm:$0xf]
    %v1759 = vld [vmem:[#allocation7 + $0x9c] sm:$0xff]
    %v1760 = vld [vmem:[#allocation7 + $0xa4] sm:$0xf]
    %v1761 = vld [vmem:[#allocation7 + $0xa8] sm:$0xff]
    %v1762 = vld [vmem:[#allocation7 + $0xb0] sm:$0xf]
    %v1763 = vld [vmem:[#allocation7 + $0xb4] sm:$0xff]
    %v1764 = vld [vmem:[#allocation7 + $0xbc] sm:$0xf]
    %v1797 = vunpack.c.l.b16 %v1733
    %v1798 = vunpack.c.h.b16 %v1733
    %v1799 = vunpack.c.l.b16 %v1734
    %v1800 = vunpack.c.l.b16 %v1735
    %v1801 = vunpack.c.h.b16 %v1735
    %v1802 = vunpack.c.l.b16 %v1736
    %v1803 = vunpack.c.l.b16 %v1737
    %v1804 = vunpack.c.h.b16 %v1737
    %v1805 = vunpack.c.l.b16 %v1738
    %v1806 = vunpack.c.l.b16 %v1739
    %v1807 = vunpack.c.h.b16 %v1739
    %v1808 = vunpack.c.l.b16 %v1740
    %v1809 = vunpack.c.l.b16 %v1741
    %v1810 = vunpack.c.h.b16 %v1741
    %v1811 = vunpack.c.l.b16 %v1742
    %v1812 = vunpack.c.l.b16 %v1743
    %v1813 = vunpack.c.h.b16 %v1743
    %v1814 = vunpack.c.l.b16 %v1744
    %v1815 = vunpack.c.l.b16 %v1745
    %v1816 = vunpack.c.h.b16 %v1745
    %v1817 = vunpack.c.l.b16 %v1746
    %v1818 = vunpack.c.l.b16 %v1747
    %v1819 = vunpack.c.h.b16 %v1747
    %v1820 = vunpack.c.l.b16 %v1748
    %v1821 = vunpack.c.l.b16 %v1749
    %v1822 = vunpack.c.h.b16 %v1749
    %v1823 = vunpack.c.l.b16 %v1750
    %v1824 = vunpack.c.l.b16 %v1751
    %v1825 = vunpack.c.h.b16 %v1751
    %v1826 = vunpack.c.l.b16 %v1752
    %v1827 = vunpack.c.l.b16 %v1753
    %v1828 = vunpack.c.h.b16 %v1753
    %v1829 = vunpack.c.l.b16 %v1754
    %v1830 = vunpack.c.l.b16 %v1755
    %v1831 = vunpack.c.h.b16 %v1755
    %v1832 = vunpack.c.l.b16 %v1756
    %v1833 = vunpack.c.l.b16 %v1757
    %v1834 = vunpack.c.h.b16 %v1757
    %v1835 = vunpack.c.l.b16 %v1758
    %v1836 = vunpack.c.l.b16 %v1759
    %v1837 = vunpack.c.h.b16 %v1759
    %v1838 = vunpack.c.l.b16 %v1760
    %v1839 = vunpack.c.l.b16 %v1761
    %v1840 = vunpack.c.h.b16 %v1761
    %v1841 = vunpack.c.l.b16 %v1762
    %v1842 = vunpack.c.l.b16 %v1763
    %v1843 = vunpack.c.h.b16 %v1763
    %v1844 = vunpack.c.l.b16 %v1764
    %v1845 = vpack.c.b16 %v1800, %v1797
    %v1846 = vpack.c.b16 %v1801, %v1798
    %v1847 = vpack.c.b16 %v1802, %v1799
    %v1848 = vpack.c.b16 %v1806, %v1803
    %v1849 = vpack.c.b16 %v1807, %v1804
    %v1850 = vpack.c.b16 %v1808, %v1805
    %v1851 = vpack.c.b16 %v1812, %v1809
    %v1852 = vpack.c.b16 %v1813, %v1810
    %v1853 = vpack.c.b16 %v1814, %v1811
    %v1854 = vpack.c.b16 %v1818, %v1815
    %v1855 = vpack.c.b16 %v1819, %v1816
    %v1856 = vpack.c.b16 %v1820, %v1817
    %v1857 = vpack.c.b16 %v1824, %v1821
    %v1858 = vpack.c.b16 %v1825, %v1822
    %v1859 = vpack.c.b16 %v1826, %v1823
    %v1860 = vpack.c.b16 %v1830, %v1827
    %v1861 = vpack.c.b16 %v1831, %v1828
    %v1862 = vpack.c.b16 %v1832, %v1829
    %v1863 = vpack.c.b16 %v1836, %v1833
    %v1864 = vpack.c.b16 %v1837, %v1834
    %v1865 = vpack.c.b16 %v1838, %v1835
    %v1866 = vpack.c.b16 %v1842, %v1839
    %v1867 = vpack.c.b16 %v1843, %v1840
    %v1868 = vpack.c.b16 %v1844, %v1841
    %1893 = vmatprep.subr.bf16.mxu0 %v1867
    %1894 = vmatpush1.bf16.msra.mxu0 %v1866
    %1895 = vmatprep.subr.bf16.mxu0 %v1864
    %1896 = vmatpush1.bf16.msra.mxu0 %v1863
    %1897 = vmatprep.subr.bf16.mxu0 %v1861
    %1898 = vmatpush1.bf16.msra.mxu0 %v1860
    %1899 = vmatprep.subr.bf16.mxu0 %v1858
    %1900 = vmatpush1.bf16.msra.mxu0 %v1857
    %1901 = vmatprep.subr.bf16.mxu0 %v1855
    %1902 = vmatpush1.bf16.msra.mxu0 %v1854
    %1903 = vmatprep.subr.bf16.mxu0 %v1852
    %1904 = vmatpush1.bf16.msra.mxu0 %v1851
    %1905 = vmatprep.subr.bf16.mxu0 %v1849
    %1906 = vmatpush1.bf16.msra.mxu0 %v1848
    %1907 = vmatprep.subr.bf16.mxu0 %v1846
    %1908 = vmatpush1.bf16.msra.mxu0 %v1845
    %1909 = vmatprep.subr.bf16.mxu0 0
    %1910 = vmatpush2.bf16.msra.mxu0 0
    %1911 = vmatprep.subr.bf16.mxu0 0
    %1912 = vmatpush2.bf16.msra.mxu0 0
    %1913 = vmatprep.subr.bf16.mxu0 0
    %1914 = vmatpush2.bf16.msra.mxu0 0
    %1915 = vmatprep.subr.bf16.mxu0 0
    %1916 = vmatpush2.bf16.msra.mxu0 0
    %1917 = vmatprep.subr.bf16.mxu0 0
    %1918 = vmatpush2.bf16.msra.mxu0 0
    %1919 = vmatprep.subr.bf16.mxu0 0
    %1920 = vmatpush2.bf16.msra.mxu0 0
    %1921 = vmatprep.subr.bf16.mxu0 0
    %1922 = vmatpush2.bf16.msra.mxu0 0
    %1923 = vmatprep.subr.bf16.mxu0 0
    %1924 = vmatpush2.bf16.msra.mxu0 0
    %1925 = vmatprep.mubr.bf16.mxu0 0
    %1926 = vmatmul.mubr.bf16.gmra.mxu0 %v1713
    %v1927 = vpop.f32.mrf.mxu0
    %v1928 = vadd.f32 0.0, %v1927
    %v1929 = vpop.f32.mrf.mxu0
    %v1930 = vadd.f32 0.0, %v1929
    %v1931 = vpop.f32.mrf.mxu0
    %v1932 = vadd.f32 0.0, %v1931
    %v1933 = vpop.f32.mrf.mxu0
    %v1934 = vadd.f32 0.0, %v1933
    %1935 = vdwg.mxu0
    %1936 = vmatprep.subr.bf16.mxu0 0
    %1937 = vmatpush1.bf16.msra.mxu0 %v1868
    %1938 = vmatprep.subr.bf16.mxu0 0
    %1939 = vmatpush1.bf16.msra.mxu0 %v1865
    %1940 = vmatprep.subr.bf16.mxu0 0
    %1941 = vmatpush1.bf16.msra.mxu0 %v1862
    %1942 = vmatprep.subr.bf16.mxu0 0
    %1943 = vmatpush1.bf16.msra.mxu0 %v1859
    %1944 = vmatprep.subr.bf16.mxu0 0
    %1945 = vmatpush1.bf16.msra.mxu0 %v1856
    %1946 = vmatprep.subr.bf16.mxu0 0
    %1947 = vmatpush1.bf16.msra.mxu0 %v1853
    %1948 = vmatprep.subr.bf16.mxu0 0
    %1949 = vmatpush1.bf16.msra.mxu0 %v1850
    %1950 = vmatprep.subr.bf16.mxu0 0
    %1951 = vmatpush1.bf16.msra.mxu0 %v1847
    %1952 = vmatprep.subr.bf16.mxu0 0
    %1953 = vmatpush2.bf16.msra.mxu0 0
    %1954 = vmatprep.subr.bf16.mxu0 0
    %1955 = vmatpush2.bf16.msra.mxu0 0
    %1956 = vmatprep.subr.bf16.mxu0 0
    %1957 = vmatpush2.bf16.msra.mxu0 0
    %1958 = vmatprep.subr.bf16.mxu0 0
    %1959 = vmatpush2.bf16.msra.mxu0 0
    %1960 = vmatprep.subr.bf16.mxu0 0
    %1961 = vmatpush2.bf16.msra.mxu0 0
    %1962 = vmatprep.subr.bf16.mxu0 0
    %1963 = vmatpush2.bf16.msra.mxu0 0
    %1964 = vmatprep.subr.bf16.mxu0 0
    %1965 = vmatpush2.bf16.msra.mxu0 0
    %1966 = vmatprep.subr.bf16.mxu0 0
    %1967 = vmatpush2.bf16.msra.mxu0 0
    %1968 = vmatprep.mubr.bf16.mxu0 0
    %1969 = vmatmul.mubr.bf16.gmra.mxu0 %v1713
    %v1970 = vpop.f32.mrf.mxu0
    %v1971 = vadd.f32 0.0, %v1970
    %v1972 = vpop.f32.mrf.mxu0
    %v1973 = vpop.f32.mrf.mxu0
    %v1974 = vadd.f32 0.0, %v1973
    %v1975 = vpop.f32.mrf.mxu0
    %1976 = vdwg.mxu0
    %v1977 = vadd.f32 %v1727, %v1928
    %v1978 = vadd.f32 %v1730, %v1932
    %v1979 = vxor.u32 %v1977, 2147483648
    %v1980 = vxor.u32 %v1978, 2147483648
    %v1981 = vmul.f32 %v1979, 1.442695
    %v1982 = vpow.pop %v1981
    %v1983 = vmul.f32 %v1980, 1.442695
    %v1984 = vpow.pop %v1983
    %v1985 = vadd.f32 %v1982, 1.0
    %v1986 = vadd.f32 %v1984, 1.0
    %v1987 = vrcp.pop %v1985
    %v1988 = vmul.f32 1.0, %v1987
    %v1989 = vrcp.pop %v1986
    %v1990 = vmul.f32 1.0, %v1989
    %v1991 = vadd.f32 %v1728, %v1930
    %v1992 = vadd.f32 %v1731, %v1934
    %v1993 = vxor.u32 %v1991, 2147483648
    %v1994 = vxor.u32 %v1992, 2147483648
    %v1995 = vmul.f32 %v1993, 1.442695
    %v1996 = vpow.pop %v1995
    %v1997 = vmul.f32 %v1994, 1.442695
    %v1998 = vpow.pop %v1997
    %v1999 = vadd.f32 %v1996, 1.0
    %v2000 = vadd.f32 %v1998, 1.0
    %v2001 = vrcp.pop %v1999
    %v2002 = vmul.f32 1.0, %v2001
    %v2003 = vrcp.pop %v2000
    %v2004 = vmul.f32 1.0, %v2003
    %v2005 = vadd.f32 %v1971, %v1080
    %v2006 = vadd.f32 %v1974, %v1080
    %v2007 = vmul.f32 %v1988, %v2005
    %v2008 = vmul.f32 %v1990, %v2006
    %v2009 = vadd.f32 %v1729, %v2007
    %v2010 = vadd.f32 %v1732, %v2008
    %v2011 = vtanh.pop %v2009
    %v2012 = vtanh.pop %v2010
    %v2013 = vsub.f32 1.0, %v2002
    %v2014 = vsub.f32 1.0, %v2004
    %v2015 = vmul.f32 %v2013, %v2011
    %v2016 = vmul.f32 %v2014, %v2012
    %v2017 = vmul.f32 %v2002, %v1711
    %v2018 = vmul.f32 %v2004, %v1712
    %v2019 = vadd.f32 %v2015, %v2017
    %v2020 = vadd.f32 %v2016, %v2018
    %v2021 = vpack.c.bf16 %v2020, %v2019
    %v2023 = vunpack.c.l.b16 %v2021
    %v2024 = vunpack.c.h.b16 %v2021
    %v2025 = vpack.c.b16 %v2023, %v2023
    %v2026 = vpack.c.b16 %v2024, %v2024
    %s2029 = scalar_lea.vmem %s14, 24
    %2030 = vst [vmem:[%s2029] sm:$0xf] %v2025
    %2031 = vst [vmem:[%s2029 + $0x4] sm:$0xf] %v2026
    %s2032 = smul.u32 8, 3
    %s2033 = smul.addr %s2032, 8
    %s2034 = scalar_lea.vmem [#allocation2], %s2033
    %v2035 = vld [vmem:[%s2034] sm:$0xff]
    %v2036 = vld [vmem:[%s2034 + $0x8] sm:$0xff]
    %v2037 = vld [vmem:[%s2034 + $0x10] sm:$0xff]
    %v2038 = vld [vmem:[%s2034 + $0x18] sm:$0xff]
    %v2039 = vld [vmem:[%s2034 + $0x20] sm:$0xff]
    %v2040 = vld [vmem:[%s2034 + $0x28] sm:$0xff]
    %v2041 = vld [vmem:[#allocation7] sm:$0xff]
    %v2042 = vld [vmem:[#allocation7 + $0x8] sm:$0xf]
    %v2043 = vld [vmem:[#allocation7 + $0xc] sm:$0xff]
    %v2044 = vld [vmem:[#allocation7 + $0x14] sm:$0xf]
    %v2045 = vld [vmem:[#allocation7 + $0x18] sm:$0xff]
    %v2046 = vld [vmem:[#allocation7 + $0x20] sm:$0xf]
    %v2047 = vld [vmem:[#allocation7 + $0x24] sm:$0xff]
    %v2048 = vld [vmem:[#allocation7 + $0x2c] sm:$0xf]
    %v2049 = vld [vmem:[#allocation7 + $0x30] sm:$0xff]
    %v2050 = vld [vmem:[#allocation7 + $0x38] sm:$0xf]
    %v2051 = vld [vmem:[#allocation7 + $0x3c] sm:$0xff]
    %v2052 = vld [vmem:[#allocation7 + $0x44] sm:$0xf]
    %v2053 = vld [vmem:[#allocation7 + $0x48] sm:$0xff]
    %v2054 = vld [vmem:[#allocation7 + $0x50] sm:$0xf]
    %v2055 = vld [vmem:[#allocation7 + $0x54] sm:$0xff]
    %v2056 = vld [vmem:[#allocation7 + $0x5c] sm:$0xf]
    %v2057 = vld [vmem:[#allocation7 + $0x60] sm:$0xff]
    %v2058 = vld [vmem:[#allocation7 + $0x68] sm:$0xf]
    %v2059 = vld [vmem:[#allocation7 + $0x6c] sm:$0xff]
    %v2060 = vld [vmem:[#allocation7 + $0x74] sm:$0xf]
    %v2061 = vld [vmem:[#allocation7 + $0x78] sm:$0xff]
    %v2062 = vld [vmem:[#allocation7 + $0x80] sm:$0xf]
    %v2063 = vld [vmem:[#allocation7 + $0x84] sm:$0xff]
    %v2064 = vld [vmem:[#allocation7 + $0x8c] sm:$0xf]
    %v2065 = vld [vmem:[#allocation7 + $0x90] sm:$0xff]
    %v2066 = vld [vmem:[#allocation7 + $0x98] sm:$0xf]
    %v2067 = vld [vmem:[#allocation7 + $0x9c] sm:$0xff]
    %v2068 = vld [vmem:[#allocation7 + $0xa4] sm:$0xf]
    %v2069 = vld [vmem:[#allocation7 + $0xa8] sm:$0xff]
    %v2070 = vld [vmem:[#allocation7 + $0xb0] sm:$0xf]
    %v2071 = vld [vmem:[#allocation7 + $0xb4] sm:$0xff]
    %v2072 = vld [vmem:[#allocation7 + $0xbc] sm:$0xf]
    %v2105 = vunpack.c.l.b16 %v2041
    %v2106 = vunpack.c.h.b16 %v2041
    %v2107 = vunpack.c.l.b16 %v2042
    %v2108 = vunpack.c.l.b16 %v2043
    %v2109 = vunpack.c.h.b16 %v2043
    %v2110 = vunpack.c.l.b16 %v2044
    %v2111 = vunpack.c.l.b16 %v2045
    %v2112 = vunpack.c.h.b16 %v2045
    %v2113 = vunpack.c.l.b16 %v2046
    %v2114 = vunpack.c.l.b16 %v2047
    %v2115 = vunpack.c.h.b16 %v2047
    %v2116 = vunpack.c.l.b16 %v2048
    %v2117 = vunpack.c.l.b16 %v2049
    %v2118 = vunpack.c.h.b16 %v2049
    %v2119 = vunpack.c.l.b16 %v2050
    %v2120 = vunpack.c.l.b16 %v2051
    %v2121 = vunpack.c.h.b16 %v2051
    %v2122 = vunpack.c.l.b16 %v2052
    %v2123 = vunpack.c.l.b16 %v2053
    %v2124 = vunpack.c.h.b16 %v2053
    %v2125 = vunpack.c.l.b16 %v2054
    %v2126 = vunpack.c.l.b16 %v2055
    %v2127 = vunpack.c.h.b16 %v2055
    %v2128 = vunpack.c.l.b16 %v2056
    %v2129 = vunpack.c.l.b16 %v2057
    %v2130 = vunpack.c.h.b16 %v2057
    %v2131 = vunpack.c.l.b16 %v2058
    %v2132 = vunpack.c.l.b16 %v2059
    %v2133 = vunpack.c.h.b16 %v2059
    %v2134 = vunpack.c.l.b16 %v2060
    %v2135 = vunpack.c.l.b16 %v2061
    %v2136 = vunpack.c.h.b16 %v2061
    %v2137 = vunpack.c.l.b16 %v2062
    %v2138 = vunpack.c.l.b16 %v2063
    %v2139 = vunpack.c.h.b16 %v2063
    %v2140 = vunpack.c.l.b16 %v2064
    %v2141 = vunpack.c.l.b16 %v2065
    %v2142 = vunpack.c.h.b16 %v2065
    %v2143 = vunpack.c.l.b16 %v2066
    %v2144 = vunpack.c.l.b16 %v2067
    %v2145 = vunpack.c.h.b16 %v2067
    %v2146 = vunpack.c.l.b16 %v2068
    %v2147 = vunpack.c.l.b16 %v2069
    %v2148 = vunpack.c.h.b16 %v2069
    %v2149 = vunpack.c.l.b16 %v2070
    %v2150 = vunpack.c.l.b16 %v2071
    %v2151 = vunpack.c.h.b16 %v2071
    %v2152 = vunpack.c.l.b16 %v2072
    %v2153 = vpack.c.b16 %v2108, %v2105
    %v2154 = vpack.c.b16 %v2109, %v2106
    %v2155 = vpack.c.b16 %v2110, %v2107
    %v2156 = vpack.c.b16 %v2114, %v2111
    %v2157 = vpack.c.b16 %v2115, %v2112
    %v2158 = vpack.c.b16 %v2116, %v2113
    %v2159 = vpack.c.b16 %v2120, %v2117
    %v2160 = vpack.c.b16 %v2121, %v2118
    %v2161 = vpack.c.b16 %v2122, %v2119
    %v2162 = vpack.c.b16 %v2126, %v2123
    %v2163 = vpack.c.b16 %v2127, %v2124
    %v2164 = vpack.c.b16 %v2128, %v2125
    %v2165 = vpack.c.b16 %v2132, %v2129
    %v2166 = vpack.c.b16 %v2133, %v2130
    %v2167 = vpack.c.b16 %v2134, %v2131
    %v2168 = vpack.c.b16 %v2138, %v2135
    %v2169 = vpack.c.b16 %v2139, %v2136
    %v2170 = vpack.c.b16 %v2140, %v2137
    %v2171 = vpack.c.b16 %v2144, %v2141
    %v2172 = vpack.c.b16 %v2145, %v2142
    %v2173 = vpack.c.b16 %v2146, %v2143
    %v2174 = vpack.c.b16 %v2150, %v2147
    %v2175 = vpack.c.b16 %v2151, %v2148
    %v2176 = vpack.c.b16 %v2152, %v2149
    %2201 = vmatprep.subr.bf16.mxu0 %v2175
    %2202 = vmatpush1.bf16.msra.mxu0 %v2174
    %2203 = vmatprep.subr.bf16.mxu0 %v2172
    %2204 = vmatpush1.bf16.msra.mxu0 %v2171
    %2205 = vmatprep.subr.bf16.mxu0 %v2169
    %2206 = vmatpush1.bf16.msra.mxu0 %v2168
    %2207 = vmatprep.subr.bf16.mxu0 %v2166
    %2208 = vmatpush1.bf16.msra.mxu0 %v2165
    %2209 = vmatprep.subr.bf16.mxu0 %v2163
    %2210 = vmatpush1.bf16.msra.mxu0 %v2162
    %2211 = vmatprep.subr.bf16.mxu0 %v2160
    %2212 = vmatpush1.bf16.msra.mxu0 %v2159
    %2213 = vmatprep.subr.bf16.mxu0 %v2157
    %2214 = vmatpush1.bf16.msra.mxu0 %v2156
    %2215 = vmatprep.subr.bf16.mxu0 %v2154
    %2216 = vmatpush1.bf16.msra.mxu0 %v2153
    %2217 = vmatprep.subr.bf16.mxu0 0
    %2218 = vmatpush2.bf16.msra.mxu0 0
    %2219 = vmatprep.subr.bf16.mxu0 0
    %2220 = vmatpush2.bf16.msra.mxu0 0
    %2221 = vmatprep.subr.bf16.mxu0 0
    %2222 = vmatpush2.bf16.msra.mxu0 0
    %2223 = vmatprep.subr.bf16.mxu0 0
    %2224 = vmatpush2.bf16.msra.mxu0 0
    %2225 = vmatprep.subr.bf16.mxu0 0
    %2226 = vmatpush2.bf16.msra.mxu0 0
    %2227 = vmatprep.subr.bf16.mxu0 0
    %2228 = vmatpush2.bf16.msra.mxu0 0
    %2229 = vmatprep.subr.bf16.mxu0 0
    %2230 = vmatpush2.bf16.msra.mxu0 0
    %2231 = vmatprep.subr.bf16.mxu0 0
    %2232 = vmatpush2.bf16.msra.mxu0 0
    %2233 = vmatprep.mubr.bf16.mxu0 0
    %2234 = vmatmul.mubr.bf16.gmra.mxu0 %v2021
    %v2235 = vpop.f32.mrf.mxu0
    %v2236 = vadd.f32 0.0, %v2235
    %v2237 = vpop.f32.mrf.mxu0
    %v2238 = vadd.f32 0.0, %v2237
    %v2239 = vpop.f32.mrf.mxu0
    %v2240 = vadd.f32 0.0, %v2239
    %v2241 = vpop.f32.mrf.mxu0
    %v2242 = vadd.f32 0.0, %v2241
    %2243 = vdwg.mxu0
    %2244 = vmatprep.subr.bf16.mxu0 0
    %2245 = vmatpush1.bf16.msra.mxu0 %v2176
    %2246 = vmatprep.subr.bf16.mxu0 0
    %2247 = vmatpush1.bf16.msra.mxu0 %v2173
    %2248 = vmatprep.subr.bf16.mxu0 0
    %2249 = vmatpush1.bf16.msra.mxu0 %v2170
    %2250 = vmatprep.subr.bf16.mxu0 0
    %2251 = vmatpush1.bf16.msra.mxu0 %v2167
    %2252 = vmatprep.subr.bf16.mxu0 0
    %2253 = vmatpush1.bf16.msra.mxu0 %v2164
    %2254 = vmatprep.subr.bf16.mxu0 0
    %2255 = vmatpush1.bf16.msra.mxu0 %v2161
    %2256 = vmatprep.subr.bf16.mxu0 0
    %2257 = vmatpush1.bf16.msra.mxu0 %v2158
    %2258 = vmatprep.subr.bf16.mxu0 0
    %2259 = vmatpush1.bf16.msra.mxu0 %v2155
    %2260 = vmatprep.subr.bf16.mxu0 0
    %2261 = vmatpush2.bf16.msra.mxu0 0
    %2262 = vmatprep.subr.bf16.mxu0 0
    %2263 = vmatpush2.bf16.msra.mxu0 0
    %2264 = vmatprep.subr.bf16.mxu0 0
    %2265 = vmatpush2.bf16.msra.mxu0 0
    %2266 = vmatprep.subr.bf16.mxu0 0
    %2267 = vmatpush2.bf16.msra.mxu0 0
    %2268 = vmatprep.subr.bf16.mxu0 0
    %2269 = vmatpush2.bf16.msra.mxu0 0
    %2270 = vmatprep.subr.bf16.mxu0 0
    %2271 = vmatpush2.bf16.msra.mxu0 0
    %2272 = vmatprep.subr.bf16.mxu0 0
    %2273 = vmatpush2.bf16.msra.mxu0 0
    %2274 = vmatprep.subr.bf16.mxu0 0
    %2275 = vmatpush2.bf16.msra.mxu0 0
    %2276 = vmatprep.mubr.bf16.mxu0 0
    %2277 = vmatmul.mubr.bf16.gmra.mxu0 %v2021
    %v2278 = vpop.f32.mrf.mxu0
    %v2279 = vadd.f32 0.0, %v2278
    %v2280 = vpop.f32.mrf.mxu0
    %v2281 = vpop.f32.mrf.mxu0
    %v2282 = vadd.f32 0.0, %v2281
    %v2283 = vpop.f32.mrf.mxu0
    %2284 = vdwg.mxu0
    %v2285 = vadd.f32 %v2035, %v2236
    %v2286 = vadd.f32 %v2038, %v2240
    %v2287 = vxor.u32 %v2285, 2147483648
    %v2288 = vxor.u32 %v2286, 2147483648
    %v2289 = vmul.f32 %v2287, 1.442695
    %v2290 = vpow.pop %v2289
    %v2291 = vmul.f32 %v2288, 1.442695
    %v2292 = vpow.pop %v2291
    %v2293 = vadd.f32 %v2290, 1.0
    %v2294 = vadd.f32 %v2292, 1.0
    %v2295 = vrcp.pop %v2293
    %v2296 = vmul.f32 1.0, %v2295
    %v2297 = vrcp.pop %v2294
    %v2298 = vmul.f32 1.0, %v2297
    %v2299 = vadd.f32 %v2036, %v2238
    %v2300 = vadd.f32 %v2039, %v2242
    %v2301 = vxor.u32 %v2299, 2147483648
    %v2302 = vxor.u32 %v2300, 2147483648
    %v2303 = vmul.f32 %v2301, 1.442695
    %v2304 = vpow.pop %v2303
    %v2305 = vmul.f32 %v2302, 1.442695
    %v2306 = vpow.pop %v2305
    %v2307 = vadd.f32 %v2304, 1.0
    %v2308 = vadd.f32 %v2306, 1.0
    %v2309 = vrcp.pop %v2307
    %v2310 = vmul.f32 1.0, %v2309
    %v2311 = vrcp.pop %v2308
    %v2312 = vmul.f32 1.0, %v2311
    %v2313 = vadd.f32 %v2279, %v1080
    %v2314 = vadd.f32 %v2282, %v1080
    %v2315 = vmul.f32 %v2296, %v2313
    %v2316 = vmul.f32 %v2298, %v2314
    %v2317 = vadd.f32 %v2037, %v2315
    %v2318 = vadd.f32 %v2040, %v2316
    %v2319 = vtanh.pop %v2317
    %v2320 = vtanh.pop %v2318
    %v2321 = vsub.f32 1.0, %v2310
    %v2322 = vsub.f32 1.0, %v2312
    %v2323 = vmul.f32 %v2321, %v2319
    %v2324 = vmul.f32 %v2322, %v2320
    %v2325 = vmul.f32 %v2310, %v2019
    %v2326 = vmul.f32 %v2312, %v2020
    %v2327 = vadd.f32 %v2323, %v2325
    %v2328 = vadd.f32 %v2324, %v2326
    %v2329 = vpack.c.bf16 %v2328, %v2327
    %v2331 = vunpack.c.l.b16 %v2329
    %v2332 = vunpack.c.h.b16 %v2329
    %v2333 = vpack.c.b16 %v2331, %v2331
    %v2334 = vpack.c.b16 %v2332, %v2332
    %s2337 = scalar_lea.vmem %s14, 32
    %2338 = vst [vmem:[%s2337] sm:$0xf] %v2333
    %2339 = vst [vmem:[%s2337 + $0x4] sm:$0xf] %v2334
    %s2340 = smul.u32 10, 3
    %s2341 = smul.addr %s2340, 8
    %s2342 = scalar_lea.vmem [#allocation2], %s2341
    %v2343 = vld [vmem:[%s2342] sm:$0xff]
    %v2344 = vld [vmem:[%s2342 + $0x8] sm:$0xff]
    %v2345 = vld [vmem:[%s2342 + $0x10] sm:$0xff]
    %v2346 = vld [vmem:[%s2342 + $0x18] sm:$0xff]
    %v2347 = vld [vmem:[%s2342 + $0x20] sm:$0xff]
    %v2348 = vld [vmem:[%s2342 + $0x28] sm:$0xff]
    %v2349 = vld [vmem:[#allocation7] sm:$0xff]
    %v2350 = vld [vmem:[#allocation7 + $0x8] sm:$0xf]
    %v2351 = vld [vmem:[#allocation7 + $0xc] sm:$0xff]
    %v2352 = vld [vmem:[#allocation7 + $0x14] sm:$0xf]
    %v2353 = vld [vmem:[#allocation7 + $0x18] sm:$0xff]
    %v2354 = vld [vmem:[#allocation7 + $0x20] sm:$0xf]
    %v2355 = vld [vmem:[#allocation7 + $0x24] sm:$0xff]
    %v2356 = vld [vmem:[#allocation7 + $0x2c] sm:$0xf]
    %v2357 = vld [vmem:[#allocation7 + $0x30] sm:$0xff]
    %v2358 = vld [vmem:[#allocation7 + $0x38] sm:$0xf]
    %v2359 = vld [vmem:[#allocation7 + $0x3c] sm:$0xff]
    %v2360 = vld [vmem:[#allocation7 + $0x44] sm:$0xf]
    %v2361 = vld [vmem:[#allocation7 + $0x48] sm:$0xff]
    %v2362 = vld [vmem:[#allocation7 + $0x50] sm:$0xf]
    %v2363 = vld [vmem:[#allocation7 + $0x54] sm:$0xff]
    %v2364 = vld [vmem:[#allocation7 + $0x5c] sm:$0xf]
    %v2365 = vld [vmem:[#allocation7 + $0x60] sm:$0xff]
    %v2366 = vld [vmem:[#allocation7 + $0x68] sm:$0xf]
    %v2367 = vld [vmem:[#allocation7 + $0x6c] sm:$0xff]
    %v2368 = vld [vmem:[#allocation7 + $0x74] sm:$0xf]
    %v2369 = vld [vmem:[#allocation7 + $0x78] sm:$0xff]
    %v2370 = vld [vmem:[#allocation7 + $0x80] sm:$0xf]
    %v2371 = vld [vmem:[#allocation7 + $0x84] sm:$0xff]
    %v2372 = vld [vmem:[#allocation7 + $0x8c] sm:$0xf]
    %v2373 = vld [vmem:[#allocation7 + $0x90] sm:$0xff]
    %v2374 = vld [vmem:[#allocation7 + $0x98] sm:$0xf]
    %v2375 = vld [vmem:[#allocation7 + $0x9c] sm:$0xff]
    %v2376 = vld [vmem:[#allocation7 + $0xa4] sm:$0xf]
    %v2377 = vld [vmem:[#allocation7 + $0xa8] sm:$0xff]
    %v2378 = vld [vmem:[#allocation7 + $0xb0] sm:$0xf]
    %v2379 = vld [vmem:[#allocation7 + $0xb4] sm:$0xff]
    %v2380 = vld [vmem:[#allocation7 + $0xbc] sm:$0xf]
    %v2413 = vunpack.c.l.b16 %v2349
    %v2414 = vunpack.c.h.b16 %v2349
    %v2415 = vunpack.c.l.b16 %v2350
    %v2416 = vunpack.c.l.b16 %v2351
    %v2417 = vunpack.c.h.b16 %v2351
    %v2418 = vunpack.c.l.b16 %v2352
    %v2419 = vunpack.c.l.b16 %v2353
    %v2420 = vunpack.c.h.b16 %v2353
    %v2421 = vunpack.c.l.b16 %v2354
    %v2422 = vunpack.c.l.b16 %v2355
    %v2423 = vunpack.c.h.b16 %v2355
    %v2424 = vunpack.c.l.b16 %v2356
    %v2425 = vunpack.c.l.b16 %v2357
    %v2426 = vunpack.c.h.b16 %v2357
    %v2427 = vunpack.c.l.b16 %v2358
    %v2428 = vunpack.c.l.b16 %v2359
    %v2429 = vunpack.c.h.b16 %v2359
    %v2430 = vunpack.c.l.b16 %v2360
    %v2431 = vunpack.c.l.b16 %v2361
    %v2432 = vunpack.c.h.b16 %v2361
    %v2433 = vunpack.c.l.b16 %v2362
    %v2434 = vunpack.c.l.b16 %v2363
    %v2435 = vunpack.c.h.b16 %v2363
    %v2436 = vunpack.c.l.b16 %v2364
    %v2437 = vunpack.c.l.b16 %v2365
    %v2438 = vunpack.c.h.b16 %v2365
    %v2439 = vunpack.c.l.b16 %v2366
    %v2440 = vunpack.c.l.b16 %v2367
    %v2441 = vunpack.c.h.b16 %v2367
    %v2442 = vunpack.c.l.b16 %v2368
    %v2443 = vunpack.c.l.b16 %v2369
    %v2444 = vunpack.c.h.b16 %v2369
    %v2445 = vunpack.c.l.b16 %v2370
    %v2446 = vunpack.c.l.b16 %v2371
    %v2447 = vunpack.c.h.b16 %v2371
    %v2448 = vunpack.c.l.b16 %v2372
    %v2449 = vunpack.c.l.b16 %v2373
    %v2450 = vunpack.c.h.b16 %v2373
    %v2451 = vunpack.c.l.b16 %v2374
    %v2452 = vunpack.c.l.b16 %v2375
    %v2453 = vunpack.c.h.b16 %v2375
    %v2454 = vunpack.c.l.b16 %v2376
    %v2455 = vunpack.c.l.b16 %v2377
    %v2456 = vunpack.c.h.b16 %v2377
    %v2457 = vunpack.c.l.b16 %v2378
    %v2458 = vunpack.c.l.b16 %v2379
    %v2459 = vunpack.c.h.b16 %v2379
    %v2460 = vunpack.c.l.b16 %v2380
    %v2461 = vpack.c.b16 %v2416, %v2413
    %v2462 = vpack.c.b16 %v2417, %v2414
    %v2463 = vpack.c.b16 %v2418, %v2415
    %v2464 = vpack.c.b16 %v2422, %v2419
    %v2465 = vpack.c.b16 %v2423, %v2420
    %v2466 = vpack.c.b16 %v2424, %v2421
    %v2467 = vpack.c.b16 %v2428, %v2425
    %v2468 = vpack.c.b16 %v2429, %v2426
    %v2469 = vpack.c.b16 %v2430, %v2427
    %v2470 = vpack.c.b16 %v2434, %v2431
    %v2471 = vpack.c.b16 %v2435, %v2432
    %v2472 = vpack.c.b16 %v2436, %v2433
    %v2473 = vpack.c.b16 %v2440, %v2437
    %v2474 = vpack.c.b16 %v2441, %v2438
    %v2475 = vpack.c.b16 %v2442, %v2439
    %v2476 = vpack.c.b16 %v2446, %v2443
    %v2477 = vpack.c.b16 %v2447, %v2444
    %v2478 = vpack.c.b16 %v2448, %v2445
    %v2479 = vpack.c.b16 %v2452, %v2449
    %v2480 = vpack.c.b16 %v2453, %v2450
    %v2481 = vpack.c.b16 %v2454, %v2451
    %v2482 = vpack.c.b16 %v2458, %v2455
    %v2483 = vpack.c.b16 %v2459, %v2456
    %v2484 = vpack.c.b16 %v2460, %v2457
    %2509 = vmatprep.subr.bf16.mxu0 %v2483
    %2510 = vmatpush1.bf16.msra.mxu0 %v2482
    %2511 = vmatprep.subr.bf16.mxu0 %v2480
    %2512 = vmatpush1.bf16.msra.mxu0 %v2479
    %2513 = vmatprep.subr.bf16.mxu0 %v2477
    %2514 = vmatpush1.bf16.msra.mxu0 %v2476
    %2515 = vmatprep.subr.bf16.mxu0 %v2474
    %2516 = vmatpush1.bf16.msra.mxu0 %v2473
    %2517 = vmatprep.subr.bf16.mxu0 %v2471
    %2518 = vmatpush1.bf16.msra.mxu0 %v2470
    %2519 = vmatprep.subr.bf16.mxu0 %v2468
    %2520 = vmatpush1.bf16.msra.mxu0 %v2467
    %2521 = vmatprep.subr.bf16.mxu0 %v2465
    %2522 = vmatpush1.bf16.msra.mxu0 %v2464
    %2523 = vmatprep.subr.bf16.mxu0 %v2462
    %2524 = vmatpush1.bf16.msra.mxu0 %v2461
    %2525 = vmatprep.subr.bf16.mxu0 0
    %2526 = vmatpush2.bf16.msra.mxu0 0
    %2527 = vmatprep.subr.bf16.mxu0 0
    %2528 = vmatpush2.bf16.msra.mxu0 0
    %2529 = vmatprep.subr.bf16.mxu0 0
    %2530 = vmatpush2.bf16.msra.mxu0 0
    %2531 = vmatprep.subr.bf16.mxu0 0
    %2532 = vmatpush2.bf16.msra.mxu0 0
    %2533 = vmatprep.subr.bf16.mxu0 0
    %2534 = vmatpush2.bf16.msra.mxu0 0
    %2535 = vmatprep.subr.bf16.mxu0 0
    %2536 = vmatpush2.bf16.msra.mxu0 0
    %2537 = vmatprep.subr.bf16.mxu0 0
    %2538 = vmatpush2.bf16.msra.mxu0 0
    %2539 = vmatprep.subr.bf16.mxu0 0
    %2540 = vmatpush2.bf16.msra.mxu0 0
    %2541 = vmatprep.mubr.bf16.mxu0 0
    %2542 = vmatmul.mubr.bf16.gmra.mxu0 %v2329
    %v2543 = vpop.f32.mrf.mxu0
    %v2544 = vadd.f32 0.0, %v2543
    %v2545 = vpop.f32.mrf.mxu0
    %v2546 = vadd.f32 0.0, %v2545
    %v2547 = vpop.f32.mrf.mxu0
    %v2548 = vadd.f32 0.0, %v2547
    %v2549 = vpop.f32.mrf.mxu0
    %v2550 = vadd.f32 0.0, %v2549
    %2551 = vdwg.mxu0
    %2552 = vmatprep.subr.bf16.mxu0 0
    %2553 = vmatpush1.bf16.msra.mxu0 %v2484
    %2554 = vmatprep.subr.bf16.mxu0 0
    %2555 = vmatpush1.bf16.msra.mxu0 %v2481
    %2556 = vmatprep.subr.bf16.mxu0 0
    %2557 = vmatpush1.bf16.msra.mxu0 %v2478
    %2558 = vmatprep.subr.bf16.mxu0 0
    %2559 = vmatpush1.bf16.msra.mxu0 %v2475
    %2560 = vmatprep.subr.bf16.mxu0 0
    %2561 = vmatpush1.bf16.msra.mxu0 %v2472
    %2562 = vmatprep.subr.bf16.mxu0 0
    %2563 = vmatpush1.bf16.msra.mxu0 %v2469
    %2564 = vmatprep.subr.bf16.mxu0 0
    %2565 = vmatpush1.bf16.msra.mxu0 %v2466
    %2566 = vmatprep.subr.bf16.mxu0 0
    %2567 = vmatpush1.bf16.msra.mxu0 %v2463
    %2568 = vmatprep.subr.bf16.mxu0 0
    %2569 = vmatpush2.bf16.msra.mxu0 0
    %2570 = vmatprep.subr.bf16.mxu0 0
    %2571 = vmatpush2.bf16.msra.mxu0 0
    %2572 = vmatprep.subr.bf16.mxu0 0
    %2573 = vmatpush2.bf16.msra.mxu0 0
    %2574 = vmatprep.subr.bf16.mxu0 0
    %2575 = vmatpush2.bf16.msra.mxu0 0
    %2576 = vmatprep.subr.bf16.mxu0 0
    %2577 = vmatpush2.bf16.msra.mxu0 0
    %2578 = vmatprep.subr.bf16.mxu0 0
    %2579 = vmatpush2.bf16.msra.mxu0 0
    %2580 = vmatprep.subr.bf16.mxu0 0
    %2581 = vmatpush2.bf16.msra.mxu0 0
    %2582 = vmatprep.subr.bf16.mxu0 0
    %2583 = vmatpush2.bf16.msra.mxu0 0
    %2584 = vmatprep.mubr.bf16.mxu0 0
    %2585 = vmatmul.mubr.bf16.gmra.mxu0 %v2329
    %v2586 = vpop.f32.mrf.mxu0
    %v2587 = vadd.f32 0.0, %v2586
    %v2588 = vpop.f32.mrf.mxu0
    %v2589 = vpop.f32.mrf.mxu0
    %v2590 = vadd.f32 0.0, %v2589
    %v2591 = vpop.f32.mrf.mxu0
    %2592 = vdwg.mxu0
    %v2593 = vadd.f32 %v2343, %v2544
    %v2594 = vadd.f32 %v2346, %v2548
    %v2595 = vxor.u32 %v2593, 2147483648
    %v2596 = vxor.u32 %v2594, 2147483648
    %v2597 = vmul.f32 %v2595, 1.442695
    %v2598 = vpow.pop %v2597
    %v2599 = vmul.f32 %v2596, 1.442695
    %v2600 = vpow.pop %v2599
    %v2601 = vadd.f32 %v2598, 1.0
    %v2602 = vadd.f32 %v2600, 1.0
    %v2603 = vrcp.pop %v2601
    %v2604 = vmul.f32 1.0, %v2603
    %v2605 = vrcp.pop %v2602
    %v2606 = vmul.f32 1.0, %v2605
    %v2607 = vadd.f32 %v2344, %v2546
    %v2608 = vadd.f32 %v2347, %v2550
    %v2609 = vxor.u32 %v2607, 2147483648
    %v2610 = vxor.u32 %v2608, 2147483648
    %v2611 = vmul.f32 %v2609, 1.442695
    %v2612 = vpow.pop %v2611
    %v2613 = vmul.f32 %v2610, 1.442695
    %v2614 = vpow.pop %v2613
    %v2615 = vadd.f32 %v2612, 1.0
    %v2616 = vadd.f32 %v2614, 1.0
    %v2617 = vrcp.pop %v2615
    %v2618 = vmul.f32 1.0, %v2617
    %v2619 = vrcp.pop %v2616
    %v2620 = vmul.f32 1.0, %v2619
    %v2621 = vadd.f32 %v2587, %v1080
    %v2622 = vadd.f32 %v2590, %v1080
    %v2623 = vmul.f32 %v2604, %v2621
    %v2624 = vmul.f32 %v2606, %v2622
    %v2625 = vadd.f32 %v2345, %v2623
    %v2626 = vadd.f32 %v2348, %v2624
    %v2627 = vtanh.pop %v2625
    %v2628 = vtanh.pop %v2626
    %v2629 = vsub.f32 1.0, %v2618
    %v2630 = vsub.f32 1.0, %v2620
    %v2631 = vmul.f32 %v2629, %v2627
    %v2632 = vmul.f32 %v2630, %v2628
    %v2633 = vmul.f32 %v2618, %v2327
    %v2634 = vmul.f32 %v2620, %v2328
    %v2635 = vadd.f32 %v2631, %v2633
    %v2636 = vadd.f32 %v2632, %v2634
    %v2637 = vpack.c.bf16 %v2636, %v2635
    %v2639 = vunpack.c.l.b16 %v2637
    %v2640 = vunpack.c.h.b16 %v2637
    %v2641 = vpack.c.b16 %v2639, %v2639
    %v2642 = vpack.c.b16 %v2640, %v2640
    %s2645 = scalar_lea.vmem %s14, 40
    %2646 = vst [vmem:[%s2645] sm:$0xf] %v2641
    %2647 = vst [vmem:[%s2645 + $0x4] sm:$0xf] %v2642
    %s2648 = smul.u32 12, 3
    %s2649 = smul.addr %s2648, 8
    %s2650 = scalar_lea.vmem [#allocation2], %s2649
    %v2651 = vld [vmem:[%s2650] sm:$0xff]
    %v2652 = vld [vmem:[%s2650 + $0x8] sm:$0xff]
    %v2653 = vld [vmem:[%s2650 + $0x10] sm:$0xff]
    %v2654 = vld [vmem:[%s2650 + $0x18] sm:$0xff]
    %v2655 = vld [vmem:[%s2650 + $0x20] sm:$0xff]
    %v2656 = vld [vmem:[%s2650 + $0x28] sm:$0xff]
    %v2657 = vld [vmem:[#allocation7] sm:$0xff]
    %v2658 = vld [vmem:[#allocation7 + $0x8] sm:$0xf]
    %v2659 = vld [vmem:[#allocation7 + $0xc] sm:$0xff]
    %v2660 = vld [vmem:[#allocation7 + $0x14] sm:$0xf]
    %v2661 = vld [vmem:[#allocation7 + $0x18] sm:$0xff]
    %v2662 = vld [vmem:[#allocation7 + $0x20] sm:$0xf]
    %v2663 = vld [vmem:[#allocation7 + $0x24] sm:$0xff]
    %v2664 = vld [vmem:[#allocation7 + $0x2c] sm:$0xf]
    %v2665 = vld [vmem:[#allocation7 + $0x30] sm:$0xff]
    %v2666 = vld [vmem:[#allocation7 + $0x38] sm:$0xf]
    %v2667 = vld [vmem:[#allocation7 + $0x3c] sm:$0xff]
    %v2668 = vld [vmem:[#allocation7 + $0x44] sm:$0xf]
    %v2669 = vld [vmem:[#allocation7 + $0x48] sm:$0xff]
    %v2670 = vld [vmem:[#allocation7 + $0x50] sm:$0xf]
    %v2671 = vld [vmem:[#allocation7 + $0x54] sm:$0xff]
    %v2672 = vld [vmem:[#allocation7 + $0x5c] sm:$0xf]
    %v2673 = vld [vmem:[#allocation7 + $0x60] sm:$0xff]
    %v2674 = vld [vmem:[#allocation7 + $0x68] sm:$0xf]
    %v2675 = vld [vmem:[#allocation7 + $0x6c] sm:$0xff]
    %v2676 = vld [vmem:[#allocation7 + $0x74] sm:$0xf]
    %v2677 = vld [vmem:[#allocation7 + $0x78] sm:$0xff]
    %v2678 = vld [vmem:[#allocation7 + $0x80] sm:$0xf]
    %v2679 = vld [vmem:[#allocation7 + $0x84] sm:$0xff]
    %v2680 = vld [vmem:[#allocation7 + $0x8c] sm:$0xf]
    %v2681 = vld [vmem:[#allocation7 + $0x90] sm:$0xff]
    %v2682 = vld [vmem:[#allocation7 + $0x98] sm:$0xf]
    %v2683 = vld [vmem:[#allocation7 + $0x9c] sm:$0xff]
    %v2684 = vld [vmem:[#allocation7 + $0xa4] sm:$0xf]
    %v2685 = vld [vmem:[#allocation7 + $0xa8] sm:$0xff]
    %v2686 = vld [vmem:[#allocation7 + $0xb0] sm:$0xf]
    %v2687 = vld [vmem:[#allocation7 + $0xb4] sm:$0xff]
    %v2688 = vld [vmem:[#allocation7 + $0xbc] sm:$0xf]
    %v2721 = vunpack.c.l.b16 %v2657
    %v2722 = vunpack.c.h.b16 %v2657
    %v2723 = vunpack.c.l.b16 %v2658
    %v2724 = vunpack.c.l.b16 %v2659
    %v2725 = vunpack.c.h.b16 %v2659
    %v2726 = vunpack.c.l.b16 %v2660
    %v2727 = vunpack.c.l.b16 %v2661
    %v2728 = vunpack.c.h.b16 %v2661
    %v2729 = vunpack.c.l.b16 %v2662
    %v2730 = vunpack.c.l.b16 %v2663
    %v2731 = vunpack.c.h.b16 %v2663
    %v2732 = vunpack.c.l.b16 %v2664
    %v2733 = vunpack.c.l.b16 %v2665
    %v2734 = vunpack.c.h.b16 %v2665
    %v2735 = vunpack.c.l.b16 %v2666
    %v2736 = vunpack.c.l.b16 %v2667
    %v2737 = vunpack.c.h.b16 %v2667
    %v2738 = vunpack.c.l.b16 %v2668
    %v2739 = vunpack.c.l.b16 %v2669
    %v2740 = vunpack.c.h.b16 %v2669
    %v2741 = vunpack.c.l.b16 %v2670
    %v2742 = vunpack.c.l.b16 %v2671
    %v2743 = vunpack.c.h.b16 %v2671
    %v2744 = vunpack.c.l.b16 %v2672
    %v2745 = vunpack.c.l.b16 %v2673
    %v2746 = vunpack.c.h.b16 %v2673
    %v2747 = vunpack.c.l.b16 %v2674
    %v2748 = vunpack.c.l.b16 %v2675
    %v2749 = vunpack.c.h.b16 %v2675
    %v2750 = vunpack.c.l.b16 %v2676
    %v2751 = vunpack.c.l.b16 %v2677
    %v2752 = vunpack.c.h.b16 %v2677
    %v2753 = vunpack.c.l.b16 %v2678
    %v2754 = vunpack.c.l.b16 %v2679
    %v2755 = vunpack.c.h.b16 %v2679
    %v2756 = vunpack.c.l.b16 %v2680
    %v2757 = vunpack.c.l.b16 %v2681
    %v2758 = vunpack.c.h.b16 %v2681
    %v2759 = vunpack.c.l.b16 %v2682
    %v2760 = vunpack.c.l.b16 %v2683
    %v2761 = vunpack.c.h.b16 %v2683
    %v2762 = vunpack.c.l.b16 %v2684
    %v2763 = vunpack.c.l.b16 %v2685
    %v2764 = vunpack.c.h.b16 %v2685
    %v2765 = vunpack.c.l.b16 %v2686
    %v2766 = vunpack.c.l.b16 %v2687
    %v2767 = vunpack.c.h.b16 %v2687
    %v2768 = vunpack.c.l.b16 %v2688
    %v2769 = vpack.c.b16 %v2724, %v2721
    %v2770 = vpack.c.b16 %v2725, %v2722
    %v2771 = vpack.c.b16 %v2726, %v2723
    %v2772 = vpack.c.b16 %v2730, %v2727
    %v2773 = vpack.c.b16 %v2731, %v2728
    %v2774 = vpack.c.b16 %v2732, %v2729
    %v2775 = vpack.c.b16 %v2736, %v2733
    %v2776 = vpack.c.b16 %v2737, %v2734
    %v2777 = vpack.c.b16 %v2738, %v2735
    %v2778 = vpack.c.b16 %v2742, %v2739
    %v2779 = vpack.c.b16 %v2743, %v2740
    %v2780 = vpack.c.b16 %v2744, %v2741
    %v2781 = vpack.c.b16 %v2748, %v2745
    %v2782 = vpack.c.b16 %v2749, %v2746
    %v2783 = vpack.c.b16 %v2750, %v2747
    %v2784 = vpack.c.b16 %v2754, %v2751
    %v2785 = vpack.c.b16 %v2755, %v2752
    %v2786 = vpack.c.b16 %v2756, %v2753
    %v2787 = vpack.c.b16 %v2760, %v2757
    %v2788 = vpack.c.b16 %v2761, %v2758
    %v2789 = vpack.c.b16 %v2762, %v2759
    %v2790 = vpack.c.b16 %v2766, %v2763
    %v2791 = vpack.c.b16 %v2767, %v2764
    %v2792 = vpack.c.b16 %v2768, %v2765
    %2817 = vmatprep.subr.bf16.mxu0 %v2791
    %2818 = vmatpush1.bf16.msra.mxu0 %v2790
    %2819 = vmatprep.subr.bf16.mxu0 %v2788
    %2820 = vmatpush1.bf16.msra.mxu0 %v2787
    %2821 = vmatprep.subr.bf16.mxu0 %v2785
    %2822 = vmatpush1.bf16.msra.mxu0 %v2784
    %2823 = vmatprep.subr.bf16.mxu0 %v2782
    %2824 = vmatpush1.bf16.msra.mxu0 %v2781
    %2825 = vmatprep.subr.bf16.mxu0 %v2779
    %2826 = vmatpush1.bf16.msra.mxu0 %v2778
    %2827 = vmatprep.subr.bf16.mxu0 %v2776
    %2828 = vmatpush1.bf16.msra.mxu0 %v2775
    %2829 = vmatprep.subr.bf16.mxu0 %v2773
    %2830 = vmatpush1.bf16.msra.mxu0 %v2772
    %2831 = vmatprep.subr.bf16.mxu0 %v2770
    %2832 = vmatpush1.bf16.msra.mxu0 %v2769
    %2833 = vmatprep.subr.bf16.mxu0 0
    %2834 = vmatpush2.bf16.msra.mxu0 0
    %2835 = vmatprep.subr.bf16.mxu0 0
    %2836 = vmatpush2.bf16.msra.mxu0 0
    %2837 = vmatprep.subr.bf16.mxu0 0
    %2838 = vmatpush2.bf16.msra.mxu0 0
    %2839 = vmatprep.subr.bf16.mxu0 0
    %2840 = vmatpush2.bf16.msra.mxu0 0
    %2841 = vmatprep.subr.bf16.mxu0 0
    %2842 = vmatpush2.bf16.msra.mxu0 0
    %2843 = vmatprep.subr.bf16.mxu0 0
    %2844 = vmatpush2.bf16.msra.mxu0 0
    %2845 = vmatprep.subr.bf16.mxu0 0
    %2846 = vmatpush2.bf16.msra.mxu0 0
    %2847 = vmatprep.subr.bf16.mxu0 0
    %2848 = vmatpush2.bf16.msra.mxu0 0
    %2849 = vmatprep.mubr.bf16.mxu0 0
    %2850 = vmatmul.mubr.bf16.gmra.mxu0 %v2637
    %v2851 = vpop.f32.mrf.mxu0
    %v2852 = vadd.f32 0.0, %v2851
    %v2853 = vpop.f32.mrf.mxu0
    %v2854 = vadd.f32 0.0, %v2853
    %v2855 = vpop.f32.mrf.mxu0
    %v2856 = vadd.f32 0.0, %v2855
    %v2857 = vpop.f32.mrf.mxu0
    %v2858 = vadd.f32 0.0, %v2857
    %2859 = vdwg.mxu0
    %2860 = vmatprep.subr.bf16.mxu0 0
    %2861 = vmatpush1.bf16.msra.mxu0 %v2792
    %2862 = vmatprep.subr.bf16.mxu0 0
    %2863 = vmatpush1.bf16.msra.mxu0 %v2789
    %2864 = vmatprep.subr.bf16.mxu0 0
    %2865 = vmatpush1.bf16.msra.mxu0 %v2786
    %2866 = vmatprep.subr.bf16.mxu0 0
    %2867 = vmatpush1.bf16.msra.mxu0 %v2783
    %2868 = vmatprep.subr.bf16.mxu0 0
    %2869 = vmatpush1.bf16.msra.mxu0 %v2780
    %2870 = vmatprep.subr.bf16.mxu0 0
    %2871 = vmatpush1.bf16.msra.mxu0 %v2777
    %2872 = vmatprep.subr.bf16.mxu0 0
    %2873 = vmatpush1.bf16.msra.mxu0 %v2774
    %2874 = vmatprep.subr.bf16.mxu0 0
    %2875 = vmatpush1.bf16.msra.mxu0 %v2771
    %2876 = vmatprep.subr.bf16.mxu0 0
    %2877 = vmatpush2.bf16.msra.mxu0 0
    %2878 = vmatprep.subr.bf16.mxu0 0
    %2879 = vmatpush2.bf16.msra.mxu0 0
    %2880 = vmatprep.subr.bf16.mxu0 0
    %2881 = vmatpush2.bf16.msra.mxu0 0
    %2882 = vmatprep.subr.bf16.mxu0 0
    %2883 = vmatpush2.bf16.msra.mxu0 0
    %2884 = vmatprep.subr.bf16.mxu0 0
    %2885 = vmatpush2.bf16.msra.mxu0 0
    %2886 = vmatprep.subr.bf16.mxu0 0
    %2887 = vmatpush2.bf16.msra.mxu0 0
    %2888 = vmatprep.subr.bf16.mxu0 0
    %2889 = vmatpush2.bf16.msra.mxu0 0
    %2890 = vmatprep.subr.bf16.mxu0 0
    %2891 = vmatpush2.bf16.msra.mxu0 0
    %2892 = vmatprep.mubr.bf16.mxu0 0
    %2893 = vmatmul.mubr.bf16.gmra.mxu0 %v2637
    %v2894 = vpop.f32.mrf.mxu0
    %v2895 = vadd.f32 0.0, %v2894
    %v2896 = vpop.f32.mrf.mxu0
    %v2897 = vpop.f32.mrf.mxu0
    %v2898 = vadd.f32 0.0, %v2897
    %v2899 = vpop.f32.mrf.mxu0
    %2900 = vdwg.mxu0
    %v2901 = vadd.f32 %v2651, %v2852
    %v2902 = vadd.f32 %v2654, %v2856
    %v2903 = vxor.u32 %v2901, 2147483648
    %v2904 = vxor.u32 %v2902, 2147483648
    %v2905 = vmul.f32 %v2903, 1.442695
    %v2906 = vpow.pop %v2905
    %v2907 = vmul.f32 %v2904, 1.442695
    %v2908 = vpow.pop %v2907
    %v2909 = vadd.f32 %v2906, 1.0
    %v2910 = vadd.f32 %v2908, 1.0
    %v2911 = vrcp.pop %v2909
    %v2912 = vmul.f32 1.0, %v2911
    %v2913 = vrcp.pop %v2910
    %v2914 = vmul.f32 1.0, %v2913
    %v2915 = vadd.f32 %v2652, %v2854
    %v2916 = vadd.f32 %v2655, %v2858
    %v2917 = vxor.u32 %v2915, 2147483648
    %v2918 = vxor.u32 %v2916, 2147483648
    %v2919 = vmul.f32 %v2917, 1.442695
    %v2920 = vpow.pop %v2919
    %v2921 = vmul.f32 %v2918, 1.442695
    %v2922 = vpow.pop %v2921
    %v2923 = vadd.f32 %v2920, 1.0
    %v2924 = vadd.f32 %v2922, 1.0
    %v2925 = vrcp.pop %v2923
    %v2926 = vmul.f32 1.0, %v2925
    %v2927 = vrcp.pop %v2924
    %v2928 = vmul.f32 1.0, %v2927
    %v2929 = vadd.f32 %v2895, %v1080
    %v2930 = vadd.f32 %v2898, %v1080
    %v2931 = vmul.f32 %v2912, %v2929
    %v2932 = vmul.f32 %v2914, %v2930
    %v2933 = vadd.f32 %v2653, %v2931
    %v2934 = vadd.f32 %v2656, %v2932
    %v2935 = vtanh.pop %v2933
    %v2936 = vtanh.pop %v2934
    %v2937 = vsub.f32 1.0, %v2926
    %v2938 = vsub.f32 1.0, %v2928
    %v2939 = vmul.f32 %v2937, %v2935
    %v2940 = vmul.f32 %v2938, %v2936
    %v2941 = vmul.f32 %v2926, %v2635
    %v2942 = vmul.f32 %v2928, %v2636
    %v2943 = vadd.f32 %v2939, %v2941
    %v2944 = vadd.f32 %v2940, %v2942
    %v2945 = vpack.c.bf16 %v2944, %v2943
    %v2947 = vunpack.c.l.b16 %v2945
    %v2948 = vunpack.c.h.b16 %v2945
    %v2949 = vpack.c.b16 %v2947, %v2947
    %v2950 = vpack.c.b16 %v2948, %v2948
    %s2953 = scalar_lea.vmem %s14, 48
    %2954 = vst [vmem:[%s2953] sm:$0xf] %v2949
    %2955 = vst [vmem:[%s2953 + $0x4] sm:$0xf] %v2950
    %s2956 = smul.u32 14, 3
    %s2957 = smul.addr %s2956, 8
    %s2958 = scalar_lea.vmem [#allocation2], %s2957
    %v2959 = vld [vmem:[%s2958] sm:$0xff]
    %v2960 = vld [vmem:[%s2958 + $0x8] sm:$0xff]
    %v2961 = vld [vmem:[%s2958 + $0x10] sm:$0xff]
    %v2962 = vld [vmem:[%s2958 + $0x18] sm:$0xff]
    %v2963 = vld [vmem:[%s2958 + $0x20] sm:$0xff]
    %v2964 = vld [vmem:[%s2958 + $0x28] sm:$0xff]
    %v2965 = vld [vmem:[#allocation7] sm:$0xff]
    %v2966 = vld [vmem:[#allocation7 + $0x8] sm:$0xf]
    %v2967 = vld [vmem:[#allocation7 + $0xc] sm:$0xff]
    %v2968 = vld [vmem:[#allocation7 + $0x14] sm:$0xf]
    %v2969 = vld [vmem:[#allocation7 + $0x18] sm:$0xff]
    %v2970 = vld [vmem:[#allocation7 + $0x20] sm:$0xf]
    %v2971 = vld [vmem:[#allocation7 + $0x24] sm:$0xff]
    %v2972 = vld [vmem:[#allocation7 + $0x2c] sm:$0xf]
    %v2973 = vld [vmem:[#allocation7 + $0x30] sm:$0xff]
    %v2974 = vld [vmem:[#allocation7 + $0x38] sm:$0xf]
    %v2975 = vld [vmem:[#allocation7 + $0x3c] sm:$0xff]
    %v2976 = vld [vmem:[#allocation7 + $0x44] sm:$0xf]
    %v2977 = vld [vmem:[#allocation7 + $0x48] sm:$0xff]
    %v2978 = vld [vmem:[#allocation7 + $0x50] sm:$0xf]
    %v2979 = vld [vmem:[#allocation7 + $0x54] sm:$0xff]
    %v2980 = vld [vmem:[#allocation7 + $0x5c] sm:$0xf]
    %v2981 = vld [vmem:[#allocation7 + $0x60] sm:$0xff]
    %v2982 = vld [vmem:[#allocation7 + $0x68] sm:$0xf]
    %v2983 = vld [vmem:[#allocation7 + $0x6c] sm:$0xff]
    %v2984 = vld [vmem:[#allocation7 + $0x74] sm:$0xf]
    %v2985 = vld [vmem:[#allocation7 + $0x78] sm:$0xff]
    %v2986 = vld [vmem:[#allocation7 + $0x80] sm:$0xf]
    %v2987 = vld [vmem:[#allocation7 + $0x84] sm:$0xff]
    %v2988 = vld [vmem:[#allocation7 + $0x8c] sm:$0xf]
    %v2989 = vld [vmem:[#allocation7 + $0x90] sm:$0xff]
    %v2990 = vld [vmem:[#allocation7 + $0x98] sm:$0xf]
    %v2991 = vld [vmem:[#allocation7 + $0x9c] sm:$0xff]
    %v2992 = vld [vmem:[#allocation7 + $0xa4] sm:$0xf]
    %v2993 = vld [vmem:[#allocation7 + $0xa8] sm:$0xff]
    %v2994 = vld [vmem:[#allocation7 + $0xb0] sm:$0xf]
    %v2995 = vld [vmem:[#allocation7 + $0xb4] sm:$0xff]
    %v2996 = vld [vmem:[#allocation7 + $0xbc] sm:$0xf]
    %v3029 = vunpack.c.l.b16 %v2965
    %v3030 = vunpack.c.h.b16 %v2965
    %v3031 = vunpack.c.l.b16 %v2966
    %v3032 = vunpack.c.l.b16 %v2967
    %v3033 = vunpack.c.h.b16 %v2967
    %v3034 = vunpack.c.l.b16 %v2968
    %v3035 = vunpack.c.l.b16 %v2969
    %v3036 = vunpack.c.h.b16 %v2969
    %v3037 = vunpack.c.l.b16 %v2970
    %v3038 = vunpack.c.l.b16 %v2971
    %v3039 = vunpack.c.h.b16 %v2971
    %v3040 = vunpack.c.l.b16 %v2972
    %v3041 = vunpack.c.l.b16 %v2973
    %v3042 = vunpack.c.h.b16 %v2973
    %v3043 = vunpack.c.l.b16 %v2974
    %v3044 = vunpack.c.l.b16 %v2975
    %v3045 = vunpack.c.h.b16 %v2975
    %v3046 = vunpack.c.l.b16 %v2976
    %v3047 = vunpack.c.l.b16 %v2977
    %v3048 = vunpack.c.h.b16 %v2977
    %v3049 = vunpack.c.l.b16 %v2978
    %v3050 = vunpack.c.l.b16 %v2979
    %v3051 = vunpack.c.h.b16 %v2979
    %v3052 = vunpack.c.l.b16 %v2980
    %v3053 = vunpack.c.l.b16 %v2981
    %v3054 = vunpack.c.h.b16 %v2981
    %v3055 = vunpack.c.l.b16 %v2982
    %v3056 = vunpack.c.l.b16 %v2983
    %v3057 = vunpack.c.h.b16 %v2983
    %v3058 = vunpack.c.l.b16 %v2984
    %v3059 = vunpack.c.l.b16 %v2985
    %v3060 = vunpack.c.h.b16 %v2985
    %v3061 = vunpack.c.l.b16 %v2986
    %v3062 = vunpack.c.l.b16 %v2987
    %v3063 = vunpack.c.h.b16 %v2987
    %v3064 = vunpack.c.l.b16 %v2988
    %v3065 = vunpack.c.l.b16 %v2989
    %v3066 = vunpack.c.h.b16 %v2989
    %v3067 = vunpack.c.l.b16 %v2990
    %v3068 = vunpack.c.l.b16 %v2991
    %v3069 = vunpack.c.h.b16 %v2991
    %v3070 = vunpack.c.l.b16 %v2992
    %v3071 = vunpack.c.l.b16 %v2993
    %v3072 = vunpack.c.h.b16 %v2993
    %v3073 = vunpack.c.l.b16 %v2994
    %v3074 = vunpack.c.l.b16 %v2995
    %v3075 = vunpack.c.h.b16 %v2995
    %v3076 = vunpack.c.l.b16 %v2996
    %v3077 = vpack.c.b16 %v3032, %v3029
    %v3078 = vpack.c.b16 %v3033, %v3030
    %v3079 = vpack.c.b16 %v3034, %v3031
    %v3080 = vpack.c.b16 %v3038, %v3035
    %v3081 = vpack.c.b16 %v3039, %v3036
    %v3082 = vpack.c.b16 %v3040, %v3037
    %v3083 = vpack.c.b16 %v3044, %v3041
    %v3084 = vpack.c.b16 %v3045, %v3042
    %v3085 = vpack.c.b16 %v3046, %v3043
    %v3086 = vpack.c.b16 %v3050, %v3047
    %v3087 = vpack.c.b16 %v3051, %v3048
    %v3088 = vpack.c.b16 %v3052, %v3049
    %v3089 = vpack.c.b16 %v3056, %v3053
    %v3090 = vpack.c.b16 %v3057, %v3054
    %v3091 = vpack.c.b16 %v3058, %v3055
    %v3092 = vpack.c.b16 %v3062, %v3059
    %v3093 = vpack.c.b16 %v3063, %v3060
    %v3094 = vpack.c.b16 %v3064, %v3061
    %v3095 = vpack.c.b16 %v3068, %v3065
    %v3096 = vpack.c.b16 %v3069, %v3066
    %v3097 = vpack.c.b16 %v3070, %v3067
    %v3098 = vpack.c.b16 %v3074, %v3071
    %v3099 = vpack.c.b16 %v3075, %v3072
    %v3100 = vpack.c.b16 %v3076, %v3073
    %3125 = vmatprep.subr.bf16.mxu0 %v3099
    %3126 = vmatpush1.bf16.msra.mxu0 %v3098
    %3127 = vmatprep.subr.bf16.mxu0 %v3096
    %3128 = vmatpush1.bf16.msra.mxu0 %v3095
    %3129 = vmatprep.subr.bf16.mxu0 %v3093
    %3130 = vmatpush1.bf16.msra.mxu0 %v3092
    %3131 = vmatprep.subr.bf16.mxu0 %v3090
    %3132 = vmatpush1.bf16.msra.mxu0 %v3089
    %3133 = vmatprep.subr.bf16.mxu0 %v3087
    %3134 = vmatpush1.bf16.msra.mxu0 %v3086
    %3135 = vmatprep.subr.bf16.mxu0 %v3084
    %3136 = vmatpush1.bf16.msra.mxu0 %v3083
    %3137 = vmatprep.subr.bf16.mxu0 %v3081
    %3138 = vmatpush1.bf16.msra.mxu0 %v3080
    %3139 = vmatprep.subr.bf16.mxu0 %v3078
    %3140 = vmatpush1.bf16.msra.mxu0 %v3077
    %3141 = vmatprep.subr.bf16.mxu0 0
    %3142 = vmatpush2.bf16.msra.mxu0 0
    %3143 = vmatprep.subr.bf16.mxu0 0
    %3144 = vmatpush2.bf16.msra.mxu0 0
    %3145 = vmatprep.subr.bf16.mxu0 0
    %3146 = vmatpush2.bf16.msra.mxu0 0
    %3147 = vmatprep.subr.bf16.mxu0 0
    %3148 = vmatpush2.bf16.msra.mxu0 0
    %3149 = vmatprep.subr.bf16.mxu0 0
    %3150 = vmatpush2.bf16.msra.mxu0 0
    %3151 = vmatprep.subr.bf16.mxu0 0
    %3152 = vmatpush2.bf16.msra.mxu0 0
    %3153 = vmatprep.subr.bf16.mxu0 0
    %3154 = vmatpush2.bf16.msra.mxu0 0
    %3155 = vmatprep.subr.bf16.mxu0 0
    %3156 = vmatpush2.bf16.msra.mxu0 0
    %3157 = vmatprep.mubr.bf16.mxu0 0
    %3158 = vmatmul.mubr.bf16.gmra.mxu0 %v2945
    %v3159 = vpop.f32.mrf.mxu0
    %v3160 = vadd.f32 0.0, %v3159
    %v3161 = vpop.f32.mrf.mxu0
    %v3162 = vadd.f32 0.0, %v3161
    %v3163 = vpop.f32.mrf.mxu0
    %v3164 = vadd.f32 0.0, %v3163
    %v3165 = vpop.f32.mrf.mxu0
    %v3166 = vadd.f32 0.0, %v3165
    %3167 = vdwg.mxu0
    %3168 = vmatprep.subr.bf16.mxu0 0
    %3169 = vmatpush1.bf16.msra.mxu0 %v3100
    %3170 = vmatprep.subr.bf16.mxu0 0
    %3171 = vmatpush1.bf16.msra.mxu0 %v3097
    %3172 = vmatprep.subr.bf16.mxu0 0
    %3173 = vmatpush1.bf16.msra.mxu0 %v3094
    %3174 = vmatprep.subr.bf16.mxu0 0
    %3175 = vmatpush1.bf16.msra.mxu0 %v3091
    %3176 = vmatprep.subr.bf16.mxu0 0
    %3177 = vmatpush1.bf16.msra.mxu0 %v3088
    %3178 = vmatprep.subr.bf16.mxu0 0
    %3179 = vmatpush1.bf16.msra.mxu0 %v3085
    %3180 = vmatprep.subr.bf16.mxu0 0
    %3181 = vmatpush1.bf16.msra.mxu0 %v3082
    %3182 = vmatprep.subr.bf16.mxu0 0
    %3183 = vmatpush1.bf16.msra.mxu0 %v3079
    %3184 = vmatprep.subr.bf16.mxu0 0
    %3185 = vmatpush2.bf16.msra.mxu0 0
    %3186 = vmatprep.subr.bf16.mxu0 0
    %3187 = vmatpush2.bf16.msra.mxu0 0
    %3188 = vmatprep.subr.bf16.mxu0 0
    %3189 = vmatpush2.bf16.msra.mxu0 0
    %3190 = vmatprep.subr.bf16.mxu0 0
    %3191 = vmatpush2.bf16.msra.mxu0 0
    %3192 = vmatprep.subr.bf16.mxu0 0
    %3193 = vmatpush2.bf16.msra.mxu0 0
    %3194 = vmatprep.subr.bf16.mxu0 0
    %3195 = vmatpush2.bf16.msra.mxu0 0
    %3196 = vmatprep.subr.bf16.mxu0 0
    %3197 = vmatpush2.bf16.msra.mxu0 0
    %3198 = vmatprep.subr.bf16.mxu0 0
    %3199 = vmatpush2.bf16.msra.mxu0 0
    %3200 = vmatprep.mubr.bf16.mxu0 0
    %3201 = vmatmul.mubr.bf16.gmra.mxu0 %v2945
    %v3202 = vpop.f32.mrf.mxu0
    %v3203 = vadd.f32 0.0, %v3202
    %v3204 = vpop.f32.mrf.mxu0
    %v3205 = vpop.f32.mrf.mxu0
    %v3206 = vadd.f32 0.0, %v3205
    %v3207 = vpop.f32.mrf.mxu0
    %3208 = vdwg.mxu0
    %v3209 = vadd.f32 %v2959, %v3160
    %v3210 = vadd.f32 %v2962, %v3164
    %v3211 = vxor.u32 %v3209, 2147483648
    %v3212 = vxor.u32 %v3210, 2147483648
    %v3213 = vmul.f32 %v3211, 1.442695
    %v3214 = vpow.pop %v3213
    %v3215 = vmul.f32 %v3212, 1.442695
    %v3216 = vpow.pop %v3215
    %v3217 = vadd.f32 %v3214, 1.0
    %v3218 = vadd.f32 %v3216, 1.0
    %v3219 = vrcp.pop %v3217
    %v3220 = vmul.f32 1.0, %v3219
    %v3221 = vrcp.pop %v3218
    %v3222 = vmul.f32 1.0, %v3221
    %v3223 = vadd.f32 %v2960, %v3162
    %v3224 = vadd.f32 %v2963, %v3166
    %v3225 = vxor.u32 %v3223, 2147483648
    %v3226 = vxor.u32 %v3224, 2147483648
    %v3227 = vmul.f32 %v3225, 1.442695
    %v3228 = vpow.pop %v3227
    %v3229 = vmul.f32 %v3226, 1.442695
    %v3230 = vpow.pop %v3229
    %v3231 = vadd.f32 %v3228, 1.0
    %v3232 = vadd.f32 %v3230, 1.0
    %v3233 = vrcp.pop %v3231
    %v3234 = vmul.f32 1.0, %v3233
    %v3235 = vrcp.pop %v3232
    %v3236 = vmul.f32 1.0, %v3235
    %v3237 = vadd.f32 %v3203, %v1080
    %v3238 = vadd.f32 %v3206, %v1080
    %v3239 = vmul.f32 %v3220, %v3237
    %v3240 = vmul.f32 %v3222, %v3238
    %v3241 = vadd.f32 %v2961, %v3239
    %v3242 = vadd.f32 %v2964, %v3240
    %v3243 = vtanh.pop %v3241
    %v3244 = vtanh.pop %v3242
    %v3245 = vsub.f32 1.0, %v3234
    %v3246 = vsub.f32 1.0, %v3236
    %v3247 = vmul.f32 %v3245, %v3243
    %v3248 = vmul.f32 %v3246, %v3244
    %v3249 = vmul.f32 %v3234, %v2943
    %v3250 = vmul.f32 %v3236, %v2944
    %v3251 = vadd.f32 %v3247, %v3249
    %v3252 = vadd.f32 %v3248, %v3250
    %v3253 = vpack.c.bf16 %v3252, %v3251
    %v3255 = vunpack.c.l.b16 %v3253
    %v3256 = vunpack.c.h.b16 %v3253
    %v3257 = vpack.c.b16 %v3255, %v3255
    %v3258 = vpack.c.b16 %v3256, %v3256
    %s3261 = scalar_lea.vmem %s14, 56
    %3262 = vst [vmem:[%s3261] sm:$0xf] %v3257
    %3263 = vst [vmem:[%s3261 + $0x4] sm:$0xf] %v3258
    %3264 = vst [vmem:[%s15] sm:$0xff] %v3251
    %3265 = vst [vmem:[%s15 + $0x8] sm:$0xff] %v3252
    %v3266 = vld [vmem:[%s12] sm:$0xf]
    %v3267 = vld [vmem:[%s12 + $0x4] sm:$0xf]
    %v3268 = vld [vmem:[%s12 + $0x8] sm:$0xf]
    %v3269 = vld [vmem:[%s12 + $0xc] sm:$0xf]
    %v3270 = vld [vmem:[%s12 + $0x10] sm:$0xf]
    %v3271 = vld [vmem:[%s12 + $0x14] sm:$0xf]
    %v3272 = vld [vmem:[%s12 + $0x18] sm:$0xf]
    %v3273 = vld [vmem:[%s12 + $0x1c] sm:$0xf]
    %v3274 = vld [vmem:[%s12 + $0x20] sm:$0xf]
    %v3275 = vld [vmem:[%s12 + $0x24] sm:$0xf]
    %v3276 = vld [vmem:[%s12 + $0x28] sm:$0xf]
    %v3277 = vld [vmem:[%s12 + $0x2c] sm:$0xf]
    %v3278 = vld [vmem:[%s12 + $0x30] sm:$0xf]
    %v3279 = vld [vmem:[%s12 + $0x34] sm:$0xf]
    %v3280 = vld [vmem:[%s12 + $0x38] sm:$0xf]
    %v3281 = vld [vmem:[%s12 + $0x3c] sm:$0xf]
    %v3282 = vld [vmem:[%s13] sm:$0x1]
    %v3284 = vlaneseq
    %v3285 = vshrl.u32 %v3284, 7
    %v3286 = vsub.s32 0, %v3285
    %v3287 = vrot.slane %v3282, %v3286
    %v3305 = vunpack.c.l.b16 %v3266
    %v3306 = vunpack.c.l.b16 %v3267
    %v3307 = vunpack.c.l.b16 %v3268
    %v3308 = vunpack.c.l.b16 %v3269
    %v3309 = vunpack.c.l.b16 %v3270
    %v3310 = vunpack.c.l.b16 %v3271
    %v3311 = vunpack.c.l.b16 %v3272
    %v3312 = vunpack.c.l.b16 %v3273
    %v3313 = vunpack.c.l.b16 %v3274
    %v3314 = vunpack.c.l.b16 %v3275
    %v3315 = vunpack.c.l.b16 %v3276
    %v3316 = vunpack.c.l.b16 %v3277
    %v3317 = vunpack.c.l.b16 %v3278
    %v3318 = vunpack.c.l.b16 %v3279
    %v3319 = vunpack.c.l.b16 %v3280
    %v3320 = vunpack.c.l.b16 %v3281
    %v3321 = vpack.c.b16 %v3306, %v3305
    %v3322 = vpack.c.b16 %v3308, %v3307
    %v3323 = vpack.c.b16 %v3310, %v3309
    %v3324 = vpack.c.b16 %v3312, %v3311
    %v3325 = vpack.c.b16 %v3314, %v3313
    %v3326 = vpack.c.b16 %v3316, %v3315
    %v3327 = vpack.c.b16 %v3318, %v3317
    %v3328 = vpack.c.b16 %v3320, %v3319
    %3337 = vmatprep.subr.bf16.mxu0 0
    %3338 = vmatpush1.bf16.msra.mxu0 %v3328
    %3339 = vmatprep.subr.bf16.mxu0 0
    %3340 = vmatpush1.bf16.msra.mxu0 %v3327
    %3341 = vmatprep.subr.bf16.mxu0 0
    %3342 = vmatpush1.bf16.msra.mxu0 %v3326
    %3343 = vmatprep.subr.bf16.mxu0 0
    %3344 = vmatpush1.bf16.msra.mxu0 %v3325
    %3345 = vmatprep.subr.bf16.mxu0 0
    %3346 = vmatpush1.bf16.msra.mxu0 %v3324
    %3347 = vmatprep.subr.bf16.mxu0 0
    %3348 = vmatpush1.bf16.msra.mxu0 %v3323
    %3349 = vmatprep.subr.bf16.mxu0 0
    %3350 = vmatpush1.bf16.msra.mxu0 %v3322
    %3351 = vmatprep.subr.bf16.mxu0 0
    %3352 = vmatpush1.bf16.msra.mxu0 %v3321
    %3353 = vmatprep.subr.bf16.mxu0 0
    %3354 = vmatpush2.bf16.msra.mxu0 0
    %3355 = vmatprep.subr.bf16.mxu0 0
    %3356 = vmatpush2.bf16.msra.mxu0 0
    %3357 = vmatprep.subr.bf16.mxu0 0
    %3358 = vmatpush2.bf16.msra.mxu0 0
    %3359 = vmatprep.subr.bf16.mxu0 0
    %3360 = vmatpush2.bf16.msra.mxu0 0
    %3361 = vmatprep.subr.bf16.mxu0 0
    %3362 = vmatpush2.bf16.msra.mxu0 0
    %3363 = vmatprep.subr.bf16.mxu0 0
    %3364 = vmatpush2.bf16.msra.mxu0 0
    %3365 = vmatprep.subr.bf16.mxu0 0
    %3366 = vmatpush2.bf16.msra.mxu0 0
    %3367 = vmatprep.subr.bf16.mxu0 0
    %3368 = vmatpush2.bf16.msra.mxu0 0
    %3369 = vmatprep.mubr.bf16.mxu0 0
    %3370 = vmatmul.mubr.bf16.gmra.mxu0 %v3253
    %v3371 = vpop.f32.mrf.mxu0
    %v3372 = vadd.f32 %v3287, %v3371
    %v3373 = vpop.f32.mrf.mxu0
    %v3374 = vpop.f32.mrf.mxu0
    %v3375 = vadd.f32 %v3287, %v3374
    %v3376 = vpop.f32.mrf.mxu0
    %3377 = vdwg.mxu0
    %v3378 = vmax.f32 %v3372, 0.0
    %v3379 = vmax.f32 %v3375, 0.0
    %3380 = vst [vmem:[%s16] sm:$0xff] %v3378
    %3381 = vst [vmem:[%s16 + $0x8] sm:$0xff] %v3379
    %v3382 = vld [vmem:[%s10] sm:$0x1]
    %s3383 = scalar_lea.vmem %s2, 16
    %v3384 = vld [vmem:[%s3383] sm:$0xff]
    %v3385 = vld [vmem:[%s3383 + $0x8] sm:$0xff]
    %v3386 = vld [vmem:[%s14] sm:$0xf]
    %v3387 = vld [vmem:[%s14 + $0x4] sm:$0xf]
    %v3388 = vld [vmem:[%s14 + $0x8] sm:$0xf]
    %v3389 = vld [vmem:[%s14 + $0xc] sm:$0xf]
    %v3390 = vld [vmem:[%s14 + $0x10] sm:$0xf]
    %v3391 = vld [vmem:[%s14 + $0x14] sm:$0xf]
    %v3392 = vld [vmem:[%s14 + $0x18] sm:$0xf]
    %v3393 = vld [vmem:[%s14 + $0x1c] sm:$0xf]
    %v3394 = vld [vmem:[%s14 + $0x20] sm:$0xf]
    %v3395 = vld [vmem:[%s14 + $0x24] sm:$0xf]
    %v3396 = vld [vmem:[%s14 + $0x28] sm:$0xf]
    %v3397 = vld [vmem:[%s14 + $0x2c] sm:$0xf]
    %v3398 = vld [vmem:[%s14 + $0x30] sm:$0xf]
    %v3399 = vld [vmem:[%s14 + $0x34] sm:$0xf]
    %v3400 = vld [vmem:[%s14 + $0x38] sm:$0xf]
    %v3401 = vld [vmem:[%s14 + $0x3c] sm:$0xf]
    %v3402 = vld [vmem:[%s8] sm:$0xff]
    %v3403 = vld [vmem:[%s8 + $0x8] sm:$0xf]
    %v3404 = vld [vmem:[%s8 + $0xc] sm:$0xff]
    %v3405 = vld [vmem:[%s8 + $0x14] sm:$0xf]
    %v3406 = vld [vmem:[%s8 + $0x18] sm:$0xff]
    %v3407 = vld [vmem:[%s8 + $0x20] sm:$0xf]
    %v3408 = vld [vmem:[%s8 + $0x24] sm:$0xff]
    %v3409 = vld [vmem:[%s8 + $0x2c] sm:$0xf]
    %v3410 = vld [vmem:[%s8 + $0x30] sm:$0xff]
    %v3411 = vld [vmem:[%s8 + $0x38] sm:$0xf]
    %v3412 = vld [vmem:[%s8 + $0x3c] sm:$0xff]
    %v3413 = vld [vmem:[%s8 + $0x44] sm:$0xf]
    %v3414 = vld [vmem:[%s8 + $0x48] sm:$0xff]
    %v3415 = vld [vmem:[%s8 + $0x50] sm:$0xf]
    %v3416 = vld [vmem:[%s8 + $0x54] sm:$0xff]
    %v3417 = vld [vmem:[%s8 + $0x5c] sm:$0xf]
    %v3418 = vld [vmem:[%s8 + $0x60] sm:$0xff]
    %v3419 = vld [vmem:[%s8 + $0x68] sm:$0xf]
    %v3420 = vld [vmem:[%s8 + $0x6c] sm:$0xff]
    %v3421 = vld [vmem:[%s8 + $0x74] sm:$0xf]
    %v3422 = vld [vmem:[%s8 + $0x78] sm:$0xff]
    %v3423 = vld [vmem:[%s8 + $0x80] sm:$0xf]
    %v3424 = vld [vmem:[%s8 + $0x84] sm:$0xff]
    %v3425 = vld [vmem:[%s8 + $0x8c] sm:$0xf]
    %v3426 = vld [vmem:[%s8 + $0x90] sm:$0xff]
    %v3427 = vld [vmem:[%s8 + $0x98] sm:$0xf]
    %v3428 = vld [vmem:[%s8 + $0x9c] sm:$0xff]
    %v3429 = vld [vmem:[%s8 + $0xa4] sm:$0xf]
    %v3430 = vld [vmem:[%s8 + $0xa8] sm:$0xff]
    %v3431 = vld [vmem:[%s8 + $0xb0] sm:$0xf]
    %v3432 = vld [vmem:[%s8 + $0xb4] sm:$0xff]
    %v3433 = vld [vmem:[%s8 + $0xbc] sm:$0xf]
    %v3434 = vld [vmem:[%s9] sm:$0x7]
    %v3436 = vlaneseq
    %v3437 = vshrl.u32 %v3436, 7
    %v3438 = vsub.s32 0, %v3437
    %v3439 = vrot.slane %v3434, %v3438
    %v3440 = vlaneseq
    %v3441 = vshrl.u32 %v3440, 7
    %v3442 = vsub.s32 1, %v3441
    %v3443 = vrot.slane %v3434, %v3442
    %v3444 = vlaneseq
    %v3445 = vshrl.u32 %v3444, 7
    %v3446 = vsub.s32 2, %v3445
    %v3447 = vrot.slane %v3434, %v3446
    %v3467 = vunpack.c.l.b16 %v3386
    %v3468 = vunpack.c.l.b16 %v3387
    %v3469 = vunpack.c.l.b16 %v3388
    %v3470 = vunpack.c.l.b16 %v3389
    %v3471 = vunpack.c.l.b16 %v3390
    %v3472 = vunpack.c.l.b16 %v3391
    %v3473 = vunpack.c.l.b16 %v3392
    %v3474 = vunpack.c.l.b16 %v3393
    %v3475 = vunpack.c.l.b16 %v3394
    %v3476 = vunpack.c.l.b16 %v3395
    %v3477 = vunpack.c.l.b16 %v3396
    %v3478 = vunpack.c.l.b16 %v3397
    %v3479 = vunpack.c.l.b16 %v3398
    %v3480 = vunpack.c.l.b16 %v3399
    %v3481 = vunpack.c.l.b16 %v3400
    %v3482 = vunpack.c.l.b16 %v3401
    %v3483 = vpack.c.b16 %v3468, %v3467
    %v3484 = vpack.c.b16 %v3470, %v3469
    %v3485 = vpack.c.b16 %v3472, %v3471
    %v3486 = vpack.c.b16 %v3474, %v3473
    %v3487 = vpack.c.b16 %v3476, %v3475
    %v3488 = vpack.c.b16 %v3478, %v3477
    %v3489 = vpack.c.b16 %v3480, %v3479
    %v3490 = vpack.c.b16 %v3482, %v3481
    %v3531 = vunpack.c.l.b16 %v3402
    %v3532 = vunpack.c.h.b16 %v3402
    %v3533 = vunpack.c.l.b16 %v3403
    %v3534 = vunpack.c.l.b16 %v3404
    %v3535 = vunpack.c.h.b16 %v3404
    %v3536 = vunpack.c.l.b16 %v3405
    %v3537 = vunpack.c.l.b16 %v3406
    %v3538 = vunpack.c.h.b16 %v3406
    %v3539 = vunpack.c.l.b16 %v3407
    %v3540 = vunpack.c.l.b16 %v3408
    %v3541 = vunpack.c.h.b16 %v3408
    %v3542 = vunpack.c.l.b16 %v3409
    %v3543 = vunpack.c.l.b16 %v3410
    %v3544 = vunpack.c.h.b16 %v3410
    %v3545 = vunpack.c.l.b16 %v3411
    %v3546 = vunpack.c.l.b16 %v3412
    %v3547 = vunpack.c.h.b16 %v3412
    %v3548 = vunpack.c.l.b16 %v3413
    %v3549 = vunpack.c.l.b16 %v3414
    %v3550 = vunpack.c.h.b16 %v3414
    %v3551 = vunpack.c.l.b16 %v3415
    %v3552 = vunpack.c.l.b16 %v3416
    %v3553 = vunpack.c.h.b16 %v3416
    %v3554 = vunpack.c.l.b16 %v3417
    %v3555 = vunpack.c.l.b16 %v3418
    %v3556 = vunpack.c.h.b16 %v3418
    %v3557 = vunpack.c.l.b16 %v3419
    %v3558 = vunpack.c.l.b16 %v3420
    %v3559 = vunpack.c.h.b16 %v3420
    %v3560 = vunpack.c.l.b16 %v3421
    %v3561 = vunpack.c.l.b16 %v3422
    %v3562 = vunpack.c.h.b16 %v3422
    %v3563 = vunpack.c.l.b16 %v3423
    %v3564 = vunpack.c.l.b16 %v3424
    %v3565 = vunpack.c.h.b16 %v3424
    %v3566 = vunpack.c.l.b16 %v3425
    %v3567 = vunpack.c.l.b16 %v3426
    %v3568 = vunpack.c.h.b16 %v3426
    %v3569 = vunpack.c.l.b16 %v3427
    %v3570 = vunpack.c.l.b16 %v3428
    %v3571 = vunpack.c.h.b16 %v3428
    %v3572 = vunpack.c.l.b16 %v3429
    %v3573 = vunpack.c.l.b16 %v3430
    %v3574 = vunpack.c.h.b16 %v3430
    %v3575 = vunpack.c.l.b16 %v3431
    %v3576 = vunpack.c.l.b16 %v3432
    %v3577 = vunpack.c.h.b16 %v3432
    %v3578 = vunpack.c.l.b16 %v3433
    %v3579 = vpack.c.b16 %v3534, %v3531
    %v3580 = vpack.c.b16 %v3535, %v3532
    %v3581 = vpack.c.b16 %v3536, %v3533
    %v3582 = vpack.c.b16 %v3540, %v3537
    %v3583 = vpack.c.b16 %v3541, %v3538
    %v3584 = vpack.c.b16 %v3542, %v3539
    %v3585 = vpack.c.b16 %v3546, %v3543
    %v3586 = vpack.c.b16 %v3547, %v3544
    %v3587 = vpack.c.b16 %v3548, %v3545
    %v3588 = vpack.c.b16 %v3552, %v3549
    %v3589 = vpack.c.b16 %v3553, %v3550
    %v3590 = vpack.c.b16 %v3554, %v3551
    %v3591 = vpack.c.b16 %v3558, %v3555
    %v3592 = vpack.c.b16 %v3559, %v3556
    %v3593 = vpack.c.b16 %v3560, %v3557
    %v3594 = vpack.c.b16 %v3564, %v3561
    %v3595 = vpack.c.b16 %v3565, %v3562
    %v3596 = vpack.c.b16 %v3566, %v3563
    %v3597 = vpack.c.b16 %v3570, %v3567
    %v3598 = vpack.c.b16 %v3571, %v3568
    %v3599 = vpack.c.b16 %v3572, %v3569
    %v3600 = vpack.c.b16 %v3576, %v3573
    %v3601 = vpack.c.b16 %v3577, %v3574
    %v3602 = vpack.c.b16 %v3578, %v3575
    %3627 = vmatprep.subr.bf16.mxu0 %v3601
    %3628 = vmatpush1.bf16.msra.mxu0 %v3600
    %3629 = vmatprep.subr.bf16.mxu0 %v3598
    %3630 = vmatpush1.bf16.msra.mxu0 %v3597
    %3631 = vmatprep.subr.bf16.mxu0 %v3595
    %3632 = vmatpush1.bf16.msra.mxu0 %v3594
    %3633 = vmatprep.subr.bf16.mxu0 %v3592
    %3634 = vmatpush1.bf16.msra.mxu0 %v3591
    %3635 = vmatprep.subr.bf16.mxu0 %v3589
    %3636 = vmatpush1.bf16.msra.mxu0 %v3588
    %3637 = vmatprep.subr.bf16.mxu0 %v3586
    %3638 = vmatpush1.bf16.msra.mxu0 %v3585
    %3639 = vmatprep.subr.bf16.mxu0 %v3583
    %3640 = vmatpush1.bf16.msra.mxu0 %v3582
    %3641 = vmatprep.subr.bf16.mxu0 %v3580
    %3642 = vmatpush1.bf16.msra.mxu0 %v3579
    %3643 = vmatprep.subr.bf16.mxu0 0
    %3644 = vmatpush2.bf16.msra.mxu0 0
    %3645 = vmatprep.subr.bf16.mxu0 0
    %3646 = vmatpush2.bf16.msra.mxu0 0
    %3647 = vmatprep.subr.bf16.mxu0 0
    %3648 = vmatpush2.bf16.msra.mxu0 0
    %3649 = vmatprep.subr.bf16.mxu0 0
    %3650 = vmatpush2.bf16.msra.mxu0 0
    %3651 = vmatprep.subr.bf16.mxu0 0
    %3652 = vmatpush2.bf16.msra.mxu0 0
    %3653 = vmatprep.subr.bf16.mxu0 0
    %3654 = vmatpush2.bf16.msra.mxu0 0
    %3655 = vmatprep.subr.bf16.mxu0 0
    %3656 = vmatpush2.bf16.msra.mxu0 0
    %3657 = vmatprep.subr.bf16.mxu0 0
    %3658 = vmatpush2.bf16.msra.mxu0 0
    %3659 = vmatprep.mubr.bf16.mxu0 0
    %3660 = vmatmul.mubr.bf16.gmra.mxu0 %v3483
    %v3661 = vpop.f32.mrf.mxu0
    %v3662 = vadd.f32 %v3439, %v3661
    %v3663 = vpop.f32.mrf.mxu0
    %v3664 = vadd.f32 %v3443, %v3663
    %v3665 = vpop.f32.mrf.mxu0
    %v3666 = vadd.f32 %v3439, %v3665
    %v3667 = vpop.f32.mrf.mxu0
    %v3668 = vadd.f32 %v3443, %v3667
    %3669 = vmatprep.mubr.bf16.mxu0 0
    %3670 = vmatmul.mubr.bf16.gmra.mxu0 %v3484
    %v3671 = vpop.f32.mrf.mxu0
    %v3672 = vadd.f32 %v3439, %v3671
    %v3673 = vpop.f32.mrf.mxu0
    %v3674 = vadd.f32 %v3443, %v3673
    %v3675 = vpop.f32.mrf.mxu0
    %v3676 = vadd.f32 %v3439, %v3675
    %v3677 = vpop.f32.mrf.mxu0
    %v3678 = vadd.f32 %v3443, %v3677
    %3679 = vmatprep.mubr.bf16.mxu0 0
    %3680 = vmatmul.mubr.bf16.gmra.mxu0 %v3485
    %v3681 = vpop.f32.mrf.mxu0
    %v3682 = vadd.f32 %v3439, %v3681
    %v3683 = vpop.f32.mrf.mxu0
    %v3684 = vadd.f32 %v3443, %v3683
    %v3685 = vpop.f32.mrf.mxu0
    %v3686 = vadd.f32 %v3439, %v3685
    %v3687 = vpop.f32.mrf.mxu0
    %v3688 = vadd.f32 %v3443, %v3687
    %3689 = vmatprep.mubr.bf16.mxu0 0
    %3690 = vmatmul.mubr.bf16.gmra.mxu0 %v3486
    %v3691 = vpop.f32.mrf.mxu0
    %v3692 = vadd.f32 %v3439, %v3691
    %v3693 = vpop.f32.mrf.mxu0
    %v3694 = vadd.f32 %v3443, %v3693
    %v3695 = vpop.f32.mrf.mxu0
    %v3696 = vadd.f32 %v3439, %v3695
    %v3697 = vpop.f32.mrf.mxu0
    %v3698 = vadd.f32 %v3443, %v3697
    %3699 = vmatprep.mubr.bf16.mxu0 0
    %3700 = vmatmul.mubr.bf16.gmra.mxu0 %v3487
    %v3701 = vpop.f32.mrf.mxu0
    %v3702 = vadd.f32 %v3439, %v3701
    %v3703 = vpop.f32.mrf.mxu0
    %v3704 = vadd.f32 %v3443, %v3703
    %v3705 = vpop.f32.mrf.mxu0
    %v3706 = vadd.f32 %v3439, %v3705
    %v3707 = vpop.f32.mrf.mxu0
    %v3708 = vadd.f32 %v3443, %v3707
    %3709 = vmatprep.mubr.bf16.mxu0 0
    %3710 = vmatmul.mubr.bf16.gmra.mxu0 %v3488
    %v3711 = vpop.f32.mrf.mxu0
    %v3712 = vadd.f32 %v3439, %v3711
    %v3713 = vpop.f32.mrf.mxu0
    %v3714 = vadd.f32 %v3443, %v3713
    %v3715 = vpop.f32.mrf.mxu0
    %v3716 = vadd.f32 %v3439, %v3715
    %v3717 = vpop.f32.mrf.mxu0
    %v3718 = vadd.f32 %v3443, %v3717
    %3719 = vmatprep.mubr.bf16.mxu0 0
    %3720 = vmatmul.mubr.bf16.gmra.mxu0 %v3489
    %v3721 = vpop.f32.mrf.mxu0
    %v3722 = vadd.f32 %v3439, %v3721
    %v3723 = vpop.f32.mrf.mxu0
    %v3724 = vadd.f32 %v3443, %v3723
    %v3725 = vpop.f32.mrf.mxu0
    %v3726 = vadd.f32 %v3439, %v3725
    %v3727 = vpop.f32.mrf.mxu0
    %v3728 = vadd.f32 %v3443, %v3727
    %3729 = vmatprep.mubr.bf16.mxu0 0
    %3730 = vmatmul.mubr.bf16.gmra.mxu0 %v3490
    %v3731 = vpop.f32.mrf.mxu0
    %v3732 = vadd.f32 %v3439, %v3731
    %v3733 = vpop.f32.mrf.mxu0
    %v3734 = vadd.f32 %v3443, %v3733
    %v3735 = vpop.f32.mrf.mxu0
    %v3736 = vadd.f32 %v3439, %v3735
    %v3737 = vpop.f32.mrf.mxu0
    %v3738 = vadd.f32 %v3443, %v3737
    %3739 = vdwg.mxu0
    %3740 = vmatprep.subr.bf16.mxu0 0
    %3741 = vmatpush1.bf16.msra.mxu0 %v3602
    %3742 = vmatprep.subr.bf16.mxu0 0
    %3743 = vmatpush1.bf16.msra.mxu0 %v3599
    %3744 = vmatprep.subr.bf16.mxu0 0
    %3745 = vmatpush1.bf16.msra.mxu0 %v3596
    %3746 = vmatprep.subr.bf16.mxu0 0
    %3747 = vmatpush1.bf16.msra.mxu0 %v3593
    %3748 = vmatprep.subr.bf16.mxu0 0
    %3749 = vmatpush1.bf16.msra.mxu0 %v3590
    %3750 = vmatprep.subr.bf16.mxu0 0
    %3751 = vmatpush1.bf16.msra.mxu0 %v3587
    %3752 = vmatprep.subr.bf16.mxu0 0
    %3753 = vmatpush1.bf16.msra.mxu0 %v3584
    %3754 = vmatprep.subr.bf16.mxu0 0
    %3755 = vmatpush1.bf16.msra.mxu0 %v3581
    %3756 = vmatprep.subr.bf16.mxu0 0
    %3757 = vmatpush2.bf16.msra.mxu0 0
    %3758 = vmatprep.subr.bf16.mxu0 0
    %3759 = vmatpush2.bf16.msra.mxu0 0
    %3760 = vmatprep.subr.bf16.mxu0 0
    %3761 = vmatpush2.bf16.msra.mxu0 0
    %3762 = vmatprep.subr.bf16.mxu0 0
    %3763 = vmatpush2.bf16.msra.mxu0 0
    %3764 = vmatprep.subr.bf16.mxu0 0
    %3765 = vmatpush2.bf16.msra.mxu0 0
    %3766 = vmatprep.subr.bf16.mxu0 0
    %3767 = vmatpush2.bf16.msra.mxu0 0
    %3768 = vmatprep.subr.bf16.mxu0 0
    %3769 = vmatpush2.bf16.msra.mxu0 0
    %3770 = vmatprep.subr.bf16.mxu0 0
    %3771 = vmatpush2.bf16.msra.mxu0 0
    %3772 = vmatprep.mubr.bf16.mxu0 0
    %3773 = vmatmul.mubr.bf16.gmra.mxu0 %v3483
    %v3774 = vpop.f32.mrf.mxu0
    %v3775 = vadd.f32 %v3447, %v3774
    %v3776 = vpop.f32.mrf.mxu0
    %v3777 = vpop.f32.mrf.mxu0
    %v3778 = vadd.f32 %v3447, %v3777
    %v3779 = vpop.f32.mrf.mxu0
    %3780 = vmatprep.mubr.bf16.mxu0 0
    %3781 = vmatmul.mubr.bf16.gmra.mxu0 %v3484
    %v3782 = vpop.f32.mrf.mxu0
    %v3783 = vadd.f32 %v3447, %v3782
    %v3784 = vpop.f32.mrf.mxu0
    %v3785 = vpop.f32.mrf.mxu0
    %v3786 = vadd.f32 %v3447, %v3785
    %v3787 = vpop.f32.mrf.mxu0
    %3788 = vmatprep.mubr.bf16.mxu0 0
    %3789 = vmatmul.mubr.bf16.gmra.mxu0 %v3485
    %v3790 = vpop.f32.mrf.mxu0
    %v3791 = vadd.f32 %v3447, %v3790
    %v3792 = vpop.f32.mrf.mxu0
    %v3793 = vpop.f32.mrf.mxu0
    %v3794 = vadd.f32 %v3447, %v3793
    %v3795 = vpop.f32.mrf.mxu0
    %3796 = vmatprep.mubr.bf16.mxu0 0
    %3797 = vmatmul.mubr.bf16.gmra.mxu0 %v3486
    %v3798 = vpop.f32.mrf.mxu0
    %v3799 = vadd.f32 %v3447, %v3798
    %v3800 = vpop.f32.mrf.mxu0
    %v3801 = vpop.f32.mrf.mxu0
    %v3802 = vadd.f32 %v3447, %v3801
    %v3803 = vpop.f32.mrf.mxu0
    %3804 = vmatprep.mubr.bf16.mxu0 0
    %3805 = vmatmul.mubr.bf16.gmra.mxu0 %v3487
    %v3806 = vpop.f32.mrf.mxu0
    %v3807 = vadd.f32 %v3447, %v3806
    %v3808 = vpop.f32.mrf.mxu0
    %v3809 = vpop.f32.mrf.mxu0
    %v3810 = vadd.f32 %v3447, %v3809
    %v3811 = vpop.f32.mrf.mxu0
    %3812 = vmatprep.mubr.bf16.mxu0 0
    %3813 = vmatmul.mubr.bf16.gmra.mxu0 %v3488
    %v3814 = vpop.f32.mrf.mxu0
    %v3815 = vadd.f32 %v3447, %v3814
    %v3816 = vpop.f32.mrf.mxu0
    %v3817 = vpop.f32.mrf.mxu0
    %v3818 = vadd.f32 %v3447, %v3817
    %v3819 = vpop.f32.mrf.mxu0
    %3820 = vmatprep.mubr.bf16.mxu0 0
    %3821 = vmatmul.mubr.bf16.gmra.mxu0 %v3489
    %v3822 = vpop.f32.mrf.mxu0
    %v3823 = vadd.f32 %v3447, %v3822
    %v3824 = vpop.f32.mrf.mxu0
    %v3825 = vpop.f32.mrf.mxu0
    %v3826 = vadd.f32 %v3447, %v3825
    %v3827 = vpop.f32.mrf.mxu0
    %3828 = vmatprep.mubr.bf16.mxu0 0
    %3829 = vmatmul.mubr.bf16.gmra.mxu0 %v3490
    %v3830 = vpop.f32.mrf.mxu0
    %v3831 = vadd.f32 %v3447, %v3830
    %v3832 = vpop.f32.mrf.mxu0
    %v3833 = vpop.f32.mrf.mxu0
    %v3834 = vadd.f32 %v3447, %v3833
    %v3835 = vpop.f32.mrf.mxu0
    %3836 = vdwg.mxu0
    %3837 = vst [vmem:[#allocation2] sm:$0xff] %v3662
    %3838 = vst [vmem:[#allocation2 + $0x8] sm:$0xff] %v3664
    %3839 = vst [vmem:[#allocation2 + $0x10] sm:$0xff] %v3775
    %3840 = vst [vmem:[#allocation2 + $0x18] sm:$0xff] %v3666
    %3841 = vst [vmem:[#allocation2 + $0x20] sm:$0xff] %v3668
    %3842 = vst [vmem:[#allocation2 + $0x28] sm:$0xff] %v3778
    %3843 = vst [vmem:[#allocation2 + $0x30] sm:$0xff] %v3672
    %3844 = vst [vmem:[#allocation2 + $0x38] sm:$0xff] %v3674
    %3845 = vst [vmem:[#allocation2 + $0x40] sm:$0xff] %v3783
    %3846 = vst [vmem:[#allocation2 + $0x48] sm:$0xff] %v3676
    %3847 = vst [vmem:[#allocation2 + $0x50] sm:$0xff] %v3678
    %3848 = vst [vmem:[#allocation2 + $0x58] sm:$0xff] %v3786
    %3849 = vst [vmem:[#allocation2 + $0x60] sm:$0xff] %v3682
    %3850 = vst [vmem:[#allocation2 + $0x68] sm:$0xff] %v3684
    %3851 = vst [vmem:[#allocation2 + $0x70] sm:$0xff] %v3791
    %3852 = vst [vmem:[#allocation2 + $0x78] sm:$0xff] %v3686
    %3853 = vst [vmem:[#allocation2 + $0x80] sm:$0xff] %v3688
    %3854 = vst [vmem:[#allocation2 + $0x88] sm:$0xff] %v3794
    %3855 = vst [vmem:[#allocation2 + $0x90] sm:$0xff] %v3692
    %3856 = vst [vmem:[#allocation2 + $0x98] sm:$0xff] %v3694
    %3857 = vst [vmem:[#allocation2 + $0xa0] sm:$0xff] %v3799
    %3858 = vst [vmem:[#allocation2 + $0xa8] sm:$0xff] %v3696
    %3859 = vst [vmem:[#allocation2 + $0xb0] sm:$0xff] %v3698
    %3860 = vst [vmem:[#allocation2 + $0xb8] sm:$0xff] %v3802
    %3861 = vst [vmem:[#allocation2 + $0xc0] sm:$0xff] %v3702
    %3862 = vst [vmem:[#allocation2 + $0xc8] sm:$0xff] %v3704
    %3863 = vst [vmem:[#allocation2 + $0xd0] sm:$0xff] %v3807
    %3864 = vst [vmem:[#allocation2 + $0xd8] sm:$0xff] %v3706
    %3865 = vst [vmem:[#allocation2 + $0xe0] sm:$0xff] %v3708
    %3866 = vst [vmem:[#allocation2 + $0xe8] sm:$0xff] %v3810
    %3867 = vst [vmem:[#allocation2 + $0xf0] sm:$0xff] %v3712
    %3868 = vst [vmem:[#allocation2 + $0xf8] sm:$0xff] %v3714
    %3869 = vst [vmem:[#allocation2 + $0x100] sm:$0xff] %v3815
    %3870 = vst [vmem:[#allocation2 + $0x108] sm:$0xff] %v3716
    %3871 = vst [vmem:[#allocation2 + $0x110] sm:$0xff] %v3718
    %3872 = vst [vmem:[#allocation2 + $0x118] sm:$0xff] %v3818
    %3873 = vst [vmem:[#allocation2 + $0x120] sm:$0xff] %v3722
    %3874 = vst [vmem:[#allocation2 + $0x128] sm:$0xff] %v3724
    %3875 = vst [vmem:[#allocation2 + $0x130] sm:$0xff] %v3823
    %3876 = vst [vmem:[#allocation2 + $0x138] sm:$0xff] %v3726
    %3877 = vst [vmem:[#allocation2 + $0x140] sm:$0xff] %v3728
    %3878 = vst [vmem:[#allocation2 + $0x148] sm:$0xff] %v3826
    %3879 = vst [vmem:[#allocation2 + $0x150] sm:$0xff] %v3732
    %3880 = vst [vmem:[#allocation2 + $0x158] sm:$0xff] %v3734
    %3881 = vst [vmem:[#allocation2 + $0x160] sm:$0xff] %v3831
    %3882 = vst [vmem:[#allocation2 + $0x168] sm:$0xff] %v3736
    %3883 = vst [vmem:[#allocation2 + $0x170] sm:$0xff] %v3738
    %3884 = vst [vmem:[#allocation2 + $0x178] sm:$0xff] %v3834
    %v3885 = vld [vmem:[%s796] sm:$0xff]
    %v3886 = vld [vmem:[%s796 + $0x8] sm:$0xff]
    %v3887 = vld [vmem:[%s796 + $0x10] sm:$0xff]
    %v3888 = vld [vmem:[%s796 + $0x18] sm:$0xff]
    %v3889 = vld [vmem:[%s796 + $0x20] sm:$0xff]
    %v3890 = vld [vmem:[%s796 + $0x28] sm:$0xff]
    %v3891 = vpack.c.bf16 %v3385, %v3384
    %v3892 = vld [vmem:[%s11] sm:$0xff]
    %v3893 = vld [vmem:[%s11 + $0x8] sm:$0xf]
    %v3894 = vld [vmem:[%s11 + $0xc] sm:$0xff]
    %v3895 = vld [vmem:[%s11 + $0x14] sm:$0xf]
    %v3896 = vld [vmem:[%s11 + $0x18] sm:$0xff]
    %v3897 = vld [vmem:[%s11 + $0x20] sm:$0xf]
    %v3898 = vld [vmem:[%s11 + $0x24] sm:$0xff]
    %v3899 = vld [vmem:[%s11 + $0x2c] sm:$0xf]
    %v3900 = vld [vmem:[%s11 + $0x30] sm:$0xff]
    %v3901 = vld [vmem:[%s11 + $0x38] sm:$0xf]
    %v3902 = vld [vmem:[%s11 + $0x3c] sm:$0xff]
    %v3903 = vld [vmem:[%s11 + $0x44] sm:$0xf]
    %v3904 = vld [vmem:[%s11 + $0x48] sm:$0xff]
    %v3905 = vld [vmem:[%s11 + $0x50] sm:$0xf]
    %v3906 = vld [vmem:[%s11 + $0x54] sm:$0xff]
    %v3907 = vld [vmem:[%s11 + $0x5c] sm:$0xf]
    %v3908 = vld [vmem:[%s11 + $0x60] sm:$0xff]
    %v3909 = vld [vmem:[%s11 + $0x68] sm:$0xf]
    %v3910 = vld [vmem:[%s11 + $0x6c] sm:$0xff]
    %v3911 = vld [vmem:[%s11 + $0x74] sm:$0xf]
    %v3912 = vld [vmem:[%s11 + $0x78] sm:$0xff]
    %v3913 = vld [vmem:[%s11 + $0x80] sm:$0xf]
    %v3914 = vld [vmem:[%s11 + $0x84] sm:$0xff]
    %v3915 = vld [vmem:[%s11 + $0x8c] sm:$0xf]
    %v3916 = vld [vmem:[%s11 + $0x90] sm:$0xff]
    %v3917 = vld [vmem:[%s11 + $0x98] sm:$0xf]
    %v3918 = vld [vmem:[%s11 + $0x9c] sm:$0xff]
    %v3919 = vld [vmem:[%s11 + $0xa4] sm:$0xf]
    %v3920 = vld [vmem:[%s11 + $0xa8] sm:$0xff]
    %v3921 = vld [vmem:[%s11 + $0xb0] sm:$0xf]
    %v3922 = vld [vmem:[%s11 + $0xb4] sm:$0xff]
    %v3923 = vld [vmem:[%s11 + $0xbc] sm:$0xf]
    %v3956 = vunpack.c.l.b16 %v3892
    %v3957 = vunpack.c.h.b16 %v3892
    %v3958 = vunpack.c.l.b16 %v3893
    %v3959 = vunpack.c.l.b16 %v3894
    %v3960 = vunpack.c.h.b16 %v3894
    %v3961 = vunpack.c.l.b16 %v3895
    %v3962 = vunpack.c.l.b16 %v3896
    %v3963 = vunpack.c.h.b16 %v3896
    %v3964 = vunpack.c.l.b16 %v3897
    %v3965 = vunpack.c.l.b16 %v3898
    %v3966 = vunpack.c.h.b16 %v3898
    %v3967 = vunpack.c.l.b16 %v3899
    %v3968 = vunpack.c.l.b16 %v3900
    %v3969 = vunpack.c.h.b16 %v3900
    %v3970 = vunpack.c.l.b16 %v3901
    %v3971 = vunpack.c.l.b16 %v3902
    %v3972 = vunpack.c.h.b16 %v3902
    %v3973 = vunpack.c.l.b16 %v3903
    %v3974 = vunpack.c.l.b16 %v3904
    %v3975 = vunpack.c.h.b16 %v3904
    %v3976 = vunpack.c.l.b16 %v3905
    %v3977 = vunpack.c.l.b16 %v3906
    %v3978 = vunpack.c.h.b16 %v3906
    %v3979 = vunpack.c.l.b16 %v3907
    %v3980 = vunpack.c.l.b16 %v3908
    %v3981 = vunpack.c.h.b16 %v3908
    %v3982 = vunpack.c.l.b16 %v3909
    %v3983 = vunpack.c.l.b16 %v3910
    %v3984 = vunpack.c.h.b16 %v3910
    %v3985 = vunpack.c.l.b16 %v3911
    %v3986 = vunpack.c.l.b16 %v3912
    %v3987 = vunpack.c.h.b16 %v3912
    %v3988 = vunpack.c.l.b16 %v3913
    %v3989 = vunpack.c.l.b16 %v3914
    %v3990 = vunpack.c.h.b16 %v3914
    %v3991 = vunpack.c.l.b16 %v3915
    %v3992 = vunpack.c.l.b16 %v3916
    %v3993 = vunpack.c.h.b16 %v3916
    %v3994 = vunpack.c.l.b16 %v3917
    %v3995 = vunpack.c.l.b16 %v3918
    %v3996 = vunpack.c.h.b16 %v3918
    %v3997 = vunpack.c.l.b16 %v3919
    %v3998 = vunpack.c.l.b16 %v3920
    %v3999 = vunpack.c.h.b16 %v3920
    %v4000 = vunpack.c.l.b16 %v3921
    %v4001 = vunpack.c.l.b16 %v3922
    %v4002 = vunpack.c.h.b16 %v3922
    %v4003 = vunpack.c.l.b16 %v3923
    %v4004 = vpack.c.b16 %v3959, %v3956
    %v4005 = vpack.c.b16 %v3960, %v3957
    %v4006 = vpack.c.b16 %v3961, %v3958
    %v4007 = vpack.c.b16 %v3965, %v3962
    %v4008 = vpack.c.b16 %v3966, %v3963
    %v4009 = vpack.c.b16 %v3967, %v3964
    %v4010 = vpack.c.b16 %v3971, %v3968
    %v4011 = vpack.c.b16 %v3972, %v3969
    %v4012 = vpack.c.b16 %v3973, %v3970
    %v4013 = vpack.c.b16 %v3977, %v3974
    %v4014 = vpack.c.b16 %v3978, %v3975
    %v4015 = vpack.c.b16 %v3979, %v3976
    %v4016 = vpack.c.b16 %v3983, %v3980
    %v4017 = vpack.c.b16 %v3984, %v3981
    %v4018 = vpack.c.b16 %v3985, %v3982
    %v4019 = vpack.c.b16 %v3989, %v3986
    %v4020 = vpack.c.b16 %v3990, %v3987
    %v4021 = vpack.c.b16 %v3991, %v3988
    %v4022 = vpack.c.b16 %v3995, %v3992
    %v4023 = vpack.c.b16 %v3996, %v3993
    %v4024 = vpack.c.b16 %v3997, %v3994
    %v4025 = vpack.c.b16 %v4001, %v3998
    %v4026 = vpack.c.b16 %v4002, %v3999
    %v4027 = vpack.c.b16 %v4003, %v4000
    %4052 = vmatprep.subr.bf16.mxu0 %v4026
    %4053 = vmatpush1.bf16.msra.mxu0 %v4025
    %4054 = vmatprep.subr.bf16.mxu0 %v4023
    %4055 = vmatpush1.bf16.msra.mxu0 %v4022
    %4056 = vmatprep.subr.bf16.mxu0 %v4020
    %4057 = vmatpush1.bf16.msra.mxu0 %v4019
    %4058 = vmatprep.subr.bf16.mxu0 %v4017
    %4059 = vmatpush1.bf16.msra.mxu0 %v4016
    %4060 = vmatprep.subr.bf16.mxu0 %v4014
    %4061 = vmatpush1.bf16.msra.mxu0 %v4013
    %4062 = vmatprep.subr.bf16.mxu0 %v4011
    %4063 = vmatpush1.bf16.msra.mxu0 %v4010
    %4064 = vmatprep.subr.bf16.mxu0 %v4008
    %4065 = vmatpush1.bf16.msra.mxu0 %v4007
    %4066 = vmatprep.subr.bf16.mxu0 %v4005
    %4067 = vmatpush1.bf16.msra.mxu0 %v4004
    %4068 = vmatprep.subr.bf16.mxu0 0
    %4069 = vmatpush2.bf16.msra.mxu0 0
    %4070 = vmatprep.subr.bf16.mxu0 0
    %4071 = vmatpush2.bf16.msra.mxu0 0
    %4072 = vmatprep.subr.bf16.mxu0 0
    %4073 = vmatpush2.bf16.msra.mxu0 0
    %4074 = vmatprep.subr.bf16.mxu0 0
    %4075 = vmatpush2.bf16.msra.mxu0 0
    %4076 = vmatprep.subr.bf16.mxu0 0
    %4077 = vmatpush2.bf16.msra.mxu0 0
    %4078 = vmatprep.subr.bf16.mxu0 0
    %4079 = vmatpush2.bf16.msra.mxu0 0
    %4080 = vmatprep.subr.bf16.mxu0 0
    %4081 = vmatpush2.bf16.msra.mxu0 0
    %4082 = vmatprep.subr.bf16.mxu0 0
    %4083 = vmatpush2.bf16.msra.mxu0 0
    %4084 = vmatprep.mubr.bf16.mxu0 0
    %4085 = vmatmul.mubr.bf16.gmra.mxu0 %v3891
    %v4086 = vpop.f32.mrf.mxu0
    %v4087 = vadd.f32 0.0, %v4086
    %v4088 = vpop.f32.mrf.mxu0
    %v4089 = vadd.f32 0.0, %v4088
    %v4090 = vpop.f32.mrf.mxu0
    %v4091 = vadd.f32 0.0, %v4090
    %v4092 = vpop.f32.mrf.mxu0
    %v4093 = vadd.f32 0.0, %v4092
    %4094 = vdwg.mxu0
    %4095 = vmatprep.subr.bf16.mxu0 0
    %4096 = vmatpush1.bf16.msra.mxu0 %v4027
    %4097 = vmatprep.subr.bf16.mxu0 0
    %4098 = vmatpush1.bf16.msra.mxu0 %v4024
    %4099 = vmatprep.subr.bf16.mxu0 0
    %4100 = vmatpush1.bf16.msra.mxu0 %v4021
    %4101 = vmatprep.subr.bf16.mxu0 0
    %4102 = vmatpush1.bf16.msra.mxu0 %v4018
    %4103 = vmatprep.subr.bf16.mxu0 0
    %4104 = vmatpush1.bf16.msra.mxu0 %v4015
    %4105 = vmatprep.subr.bf16.mxu0 0
    %4106 = vmatpush1.bf16.msra.mxu0 %v4012
    %4107 = vmatprep.subr.bf16.mxu0 0
    %4108 = vmatpush1.bf16.msra.mxu0 %v4009
    %4109 = vmatprep.subr.bf16.mxu0 0
    %4110 = vmatpush1.bf16.msra.mxu0 %v4006
    %4111 = vmatprep.subr.bf16.mxu0 0
    %4112 = vmatpush2.bf16.msra.mxu0 0
    %4113 = vmatprep.subr.bf16.mxu0 0
    %4114 = vmatpush2.bf16.msra.mxu0 0
    %4115 = vmatprep.subr.bf16.mxu0 0
    %4116 = vmatpush2.bf16.msra.mxu0 0
    %4117 = vmatprep.subr.bf16.mxu0 0
    %4118 = vmatpush2.bf16.msra.mxu0 0
    %4119 = vmatprep.subr.bf16.mxu0 0
    %4120 = vmatpush2.bf16.msra.mxu0 0
    %4121 = vmatprep.subr.bf16.mxu0 0
    %4122 = vmatpush2.bf16.msra.mxu0 0
    %4123 = vmatprep.subr.bf16.mxu0 0
    %4124 = vmatpush2.bf16.msra.mxu0 0
    %4125 = vmatprep.subr.bf16.mxu0 0
    %4126 = vmatpush2.bf16.msra.mxu0 0
    %4127 = vmatprep.mubr.bf16.mxu0 0
    %4128 = vmatmul.mubr.bf16.gmra.mxu0 %v3891
    %v4129 = vpop.f32.mrf.mxu0
    %v4130 = vadd.f32 0.0, %v4129
    %v4131 = vpop.f32.mrf.mxu0
    %v4132 = vpop.f32.mrf.mxu0
    %v4133 = vadd.f32 0.0, %v4132
    %v4134 = vpop.f32.mrf.mxu0
    %4135 = vdwg.mxu0
    %v4136 = vadd.f32 %v3885, %v4087
    %v4137 = vadd.f32 %v3888, %v4091
    %v4138 = vxor.u32 %v4136, 2147483648
    %v4139 = vxor.u32 %v4137, 2147483648
    %v4140 = vmul.f32 %v4138, 1.442695
    %v4141 = vpow.pop %v4140
    %v4142 = vmul.f32 %v4139, 1.442695
    %v4143 = vpow.pop %v4142
    %v4144 = vadd.f32 %v4141, 1.0
    %v4145 = vadd.f32 %v4143, 1.0
    %v4146 = vrcp.pop %v4144
    %v4147 = vmul.f32 1.0, %v4146
    %v4148 = vrcp.pop %v4145
    %v4149 = vmul.f32 1.0, %v4148
    %v4150 = vadd.f32 %v3886, %v4089
    %v4151 = vadd.f32 %v3889, %v4093
    %v4152 = vxor.u32 %v4150, 2147483648
    %v4153 = vxor.u32 %v4151, 2147483648
    %v4154 = vmul.f32 %v4152, 1.442695
    %v4155 = vpow.pop %v4154
    %v4156 = vmul.f32 %v4153, 1.442695
    %v4157 = vpow.pop %v4156
    %v4158 = vadd.f32 %v4155, 1.0
    %v4159 = vadd.f32 %v4157, 1.0
    %v4160 = vrcp.pop %v4158
    %v4161 = vmul.f32 1.0, %v4160
    %v4162 = vrcp.pop %v4159
    %v4163 = vmul.f32 1.0, %v4162
    %v4165 = vlaneseq
    %v4166 = vshrl.u32 %v4165, 7
    %v4167 = vsub.s32 0, %v4166
    %v4168 = vrot.slane %v3382, %v4167
    %v4170 = vadd.f32 %v4130, %v4168
    %v4171 = vadd.f32 %v4133, %v4168
    %v4172 = vmul.f32 %v4147, %v4170
    %v4173 = vmul.f32 %v4149, %v4171
    %v4174 = vadd.f32 %v3887, %v4172
    %v4175 = vadd.f32 %v3890, %v4173
    %v4176 = vtanh.pop %v4174
    %v4177 = vtanh.pop %v4175
    %v4178 = vsub.f32 1.0, %v4161
    %v4179 = vsub.f32 1.0, %v4163
    %v4180 = vmul.f32 %v4178, %v4176
    %v4181 = vmul.f32 %v4179, %v4177
    %v4182 = vmul.f32 %v4161, %v3384
    %v4183 = vmul.f32 %v4163, %v3385
    %v4184 = vadd.f32 %v4180, %v4182
    %v4185 = vadd.f32 %v4181, %v4183
    %v4186 = vpack.c.bf16 %v4185, %v4184
    %v4188 = vunpack.c.l.b16 %v4186
    %v4189 = vunpack.c.h.b16 %v4186
    %v4190 = vpack.c.b16 %v4188, %v4188
    %v4191 = vpack.c.b16 %v4189, %v4189
    %4194 = vst [vmem:[%s14] sm:$0xf] %v4190
    %4195 = vst [vmem:[%s14 + $0x4] sm:$0xf] %v4191
    %v4196 = vld [vmem:[%s1110] sm:$0xff]
    %v4197 = vld [vmem:[%s1110 + $0x8] sm:$0xff]
    %v4198 = vld [vmem:[%s1110 + $0x10] sm:$0xff]
    %v4199 = vld [vmem:[%s1110 + $0x18] sm:$0xff]
    %v4200 = vld [vmem:[%s1110 + $0x20] sm:$0xff]
    %v4201 = vld [vmem:[%s1110 + $0x28] sm:$0xff]
    %v4202 = vld [vmem:[%s11] sm:$0xff]
    %v4203 = vld [vmem:[%s11 + $0x8] sm:$0xf]
    %v4204 = vld [vmem:[%s11 + $0xc] sm:$0xff]
    %v4205 = vld [vmem:[%s11 + $0x14] sm:$0xf]
    %v4206 = vld [vmem:[%s11 + $0x18] sm:$0xff]
    %v4207 = vld [vmem:[%s11 + $0x20] sm:$0xf]
    %v4208 = vld [vmem:[%s11 + $0x24] sm:$0xff]
    %v4209 = vld [vmem:[%s11 + $0x2c] sm:$0xf]
    %v4210 = vld [vmem:[%s11 + $0x30] sm:$0xff]
    %v4211 = vld [vmem:[%s11 + $0x38] sm:$0xf]
    %v4212 = vld [vmem:[%s11 + $0x3c] sm:$0xff]
    %v4213 = vld [vmem:[%s11 + $0x44] sm:$0xf]
    %v4214 = vld [vmem:[%s11 + $0x48] sm:$0xff]
    %v4215 = vld [vmem:[%s11 + $0x50] sm:$0xf]
    %v4216 = vld [vmem:[%s11 + $0x54] sm:$0xff]
    %v4217 = vld [vmem:[%s11 + $0x5c] sm:$0xf]
    %v4218 = vld [vmem:[%s11 + $0x60] sm:$0xff]
    %v4219 = vld [vmem:[%s11 + $0x68] sm:$0xf]
    %v4220 = vld [vmem:[%s11 + $0x6c] sm:$0xff]
    %v4221 = vld [vmem:[%s11 + $0x74] sm:$0xf]
    %v4222 = vld [vmem:[%s11 + $0x78] sm:$0xff]
    %v4223 = vld [vmem:[%s11 + $0x80] sm:$0xf]
    %v4224 = vld [vmem:[%s11 + $0x84] sm:$0xff]
    %v4225 = vld [vmem:[%s11 + $0x8c] sm:$0xf]
    %v4226 = vld [vmem:[%s11 + $0x90] sm:$0xff]
    %v4227 = vld [vmem:[%s11 + $0x98] sm:$0xf]
    %v4228 = vld [vmem:[%s11 + $0x9c] sm:$0xff]
    %v4229 = vld [vmem:[%s11 + $0xa4] sm:$0xf]
    %v4230 = vld [vmem:[%s11 + $0xa8] sm:$0xff]
    %v4231 = vld [vmem:[%s11 + $0xb0] sm:$0xf]
    %v4232 = vld [vmem:[%s11 + $0xb4] sm:$0xff]
    %v4233 = vld [vmem:[%s11 + $0xbc] sm:$0xf]
    %v4266 = vunpack.c.l.b16 %v4202
    %v4267 = vunpack.c.h.b16 %v4202
    %v4268 = vunpack.c.l.b16 %v4203
    %v4269 = vunpack.c.l.b16 %v4204
    %v4270 = vunpack.c.h.b16 %v4204
    %v4271 = vunpack.c.l.b16 %v4205
    %v4272 = vunpack.c.l.b16 %v4206
    %v4273 = vunpack.c.h.b16 %v4206
    %v4274 = vunpack.c.l.b16 %v4207
    %v4275 = vunpack.c.l.b16 %v4208
    %v4276 = vunpack.c.h.b16 %v4208
    %v4277 = vunpack.c.l.b16 %v4209
    %v4278 = vunpack.c.l.b16 %v4210
    %v4279 = vunpack.c.h.b16 %v4210
    %v4280 = vunpack.c.l.b16 %v4211
    %v4281 = vunpack.c.l.b16 %v4212
    %v4282 = vunpack.c.h.b16 %v4212
    %v4283 = vunpack.c.l.b16 %v4213
    %v4284 = vunpack.c.l.b16 %v4214
    %v4285 = vunpack.c.h.b16 %v4214
    %v4286 = vunpack.c.l.b16 %v4215
    %v4287 = vunpack.c.l.b16 %v4216
    %v4288 = vunpack.c.h.b16 %v4216
    %v4289 = vunpack.c.l.b16 %v4217
    %v4290 = vunpack.c.l.b16 %v4218
    %v4291 = vunpack.c.h.b16 %v4218
    %v4292 = vunpack.c.l.b16 %v4219
    %v4293 = vunpack.c.l.b16 %v4220
    %v4294 = vunpack.c.h.b16 %v4220
    %v4295 = vunpack.c.l.b16 %v4221
    %v4296 = vunpack.c.l.b16 %v4222
    %v4297 = vunpack.c.h.b16 %v4222
    %v4298 = vunpack.c.l.b16 %v4223
    %v4299 = vunpack.c.l.b16 %v4224
    %v4300 = vunpack.c.h.b16 %v4224
    %v4301 = vunpack.c.l.b16 %v4225
    %v4302 = vunpack.c.l.b16 %v4226
    %v4303 = vunpack.c.h.b16 %v4226
    %v4304 = vunpack.c.l.b16 %v4227
    %v4305 = vunpack.c.l.b16 %v4228
    %v4306 = vunpack.c.h.b16 %v4228
    %v4307 = vunpack.c.l.b16 %v4229
    %v4308 = vunpack.c.l.b16 %v4230
    %v4309 = vunpack.c.h.b16 %v4230
    %v4310 = vunpack.c.l.b16 %v4231
    %v4311 = vunpack.c.l.b16 %v4232
    %v4312 = vunpack.c.h.b16 %v4232
    %v4313 = vunpack.c.l.b16 %v4233
    %v4314 = vpack.c.b16 %v4269, %v4266
    %v4315 = vpack.c.b16 %v4270, %v4267
    %v4316 = vpack.c.b16 %v4271, %v4268
    %v4317 = vpack.c.b16 %v4275, %v4272
    %v4318 = vpack.c.b16 %v4276, %v4273
    %v4319 = vpack.c.b16 %v4277, %v4274
    %v4320 = vpack.c.b16 %v4281, %v4278
    %v4321 = vpack.c.b16 %v4282, %v4279
    %v4322 = vpack.c.b16 %v4283, %v4280
    %v4323 = vpack.c.b16 %v4287, %v4284
    %v4324 = vpack.c.b16 %v4288, %v4285
    %v4325 = vpack.c.b16 %v4289, %v4286
    %v4326 = vpack.c.b16 %v4293, %v4290
    %v4327 = vpack.c.b16 %v4294, %v4291
    %v4328 = vpack.c.b16 %v4295, %v4292
    %v4329 = vpack.c.b16 %v4299, %v4296
    %v4330 = vpack.c.b16 %v4300, %v4297
    %v4331 = vpack.c.b16 %v4301, %v4298
    %v4332 = vpack.c.b16 %v4305, %v4302
    %v4333 = vpack.c.b16 %v4306, %v4303
    %v4334 = vpack.c.b16 %v4307, %v4304
    %v4335 = vpack.c.b16 %v4311, %v4308
    %v4336 = vpack.c.b16 %v4312, %v4309
    %v4337 = vpack.c.b16 %v4313, %v4310
    %4362 = vmatprep.subr.bf16.mxu0 %v4336
    %4363 = vmatpush1.bf16.msra.mxu0 %v4335
    %4364 = vmatprep.subr.bf16.mxu0 %v4333
    %4365 = vmatpush1.bf16.msra.mxu0 %v4332
    %4366 = vmatprep.subr.bf16.mxu0 %v4330
    %4367 = vmatpush1.bf16.msra.mxu0 %v4329
    %4368 = vmatprep.subr.bf16.mxu0 %v4327
    %4369 = vmatpush1.bf16.msra.mxu0 %v4326
    %4370 = vmatprep.subr.bf16.mxu0 %v4324
    %4371 = vmatpush1.bf16.msra.mxu0 %v4323
    %4372 = vmatprep.subr.bf16.mxu0 %v4321
    %4373 = vmatpush1.bf16.msra.mxu0 %v4320
    %4374 = vmatprep.subr.bf16.mxu0 %v4318
    %4375 = vmatpush1.bf16.msra.mxu0 %v4317
    %4376 = vmatprep.subr.bf16.mxu0 %v4315
    %4377 = vmatpush1.bf16.msra.mxu0 %v4314
    %4378 = vmatprep.subr.bf16.mxu0 0
    %4379 = vmatpush2.bf16.msra.mxu0 0
    %4380 = vmatprep.subr.bf16.mxu0 0
    %4381 = vmatpush2.bf16.msra.mxu0 0
    %4382 = vmatprep.subr.bf16.mxu0 0
    %4383 = vmatpush2.bf16.msra.mxu0 0
    %4384 = vmatprep.subr.bf16.mxu0 0
    %4385 = vmatpush2.bf16.msra.mxu0 0
    %4386 = vmatprep.subr.bf16.mxu0 0
    %4387 = vmatpush2.bf16.msra.mxu0 0
    %4388 = vmatprep.subr.bf16.mxu0 0
    %4389 = vmatpush2.bf16.msra.mxu0 0
    %4390 = vmatprep.subr.bf16.mxu0 0
    %4391 = vmatpush2.bf16.msra.mxu0 0
    %4392 = vmatprep.subr.bf16.mxu0 0
    %4393 = vmatpush2.bf16.msra.mxu0 0
    %4394 = vmatprep.mubr.bf16.mxu0 0
    %4395 = vmatmul.mubr.bf16.gmra.mxu0 %v4186
    %v4396 = vpop.f32.mrf.mxu0
    %v4397 = vadd.f32 0.0, %v4396
    %v4398 = vpop.f32.mrf.mxu0
    %v4399 = vadd.f32 0.0, %v4398
    %v4400 = vpop.f32.mrf.mxu0
    %v4401 = vadd.f32 0.0, %v4400
    %v4402 = vpop.f32.mrf.mxu0
    %v4403 = vadd.f32 0.0, %v4402
    %4404 = vdwg.mxu0
    %4405 = vmatprep.subr.bf16.mxu0 0
    %4406 = vmatpush1.bf16.msra.mxu0 %v4337
    %4407 = vmatprep.subr.bf16.mxu0 0
    %4408 = vmatpush1.bf16.msra.mxu0 %v4334
    %4409 = vmatprep.subr.bf16.mxu0 0
    %4410 = vmatpush1.bf16.msra.mxu0 %v4331
    %4411 = vmatprep.subr.bf16.mxu0 0
    %4412 = vmatpush1.bf16.msra.mxu0 %v4328
    %4413 = vmatprep.subr.bf16.mxu0 0
    %4414 = vmatpush1.bf16.msra.mxu0 %v4325
    %4415 = vmatprep.subr.bf16.mxu0 0
    %4416 = vmatpush1.bf16.msra.mxu0 %v4322
    %4417 = vmatprep.subr.bf16.mxu0 0
    %4418 = vmatpush1.bf16.msra.mxu0 %v4319
    %4419 = vmatprep.subr.bf16.mxu0 0
    %4420 = vmatpush1.bf16.msra.mxu0 %v4316
    %4421 = vmatprep.subr.bf16.mxu0 0
    %4422 = vmatpush2.bf16.msra.mxu0 0
    %4423 = vmatprep.subr.bf16.mxu0 0
    %4424 = vmatpush2.bf16.msra.mxu0 0
    %4425 = vmatprep.subr.bf16.mxu0 0
    %4426 = vmatpush2.bf16.msra.mxu0 0
    %4427 = vmatprep.subr.bf16.mxu0 0
    %4428 = vmatpush2.bf16.msra.mxu0 0
    %4429 = vmatprep.subr.bf16.mxu0 0
    %4430 = vmatpush2.bf16.msra.mxu0 0
    %4431 = vmatprep.subr.bf16.mxu0 0
    %4432 = vmatpush2.bf16.msra.mxu0 0
    %4433 = vmatprep.subr.bf16.mxu0 0
    %4434 = vmatpush2.bf16.msra.mxu0 0
    %4435 = vmatprep.subr.bf16.mxu0 0
    %4436 = vmatpush2.bf16.msra.mxu0 0
    %4437 = vmatprep.mubr.bf16.mxu0 0
    %4438 = vmatmul.mubr.bf16.gmra.mxu0 %v4186
    %v4439 = vpop.f32.mrf.mxu0
    %v4440 = vadd.f32 0.0, %v4439
    %v4441 = vpop.f32.mrf.mxu0
    %v4442 = vpop.f32.mrf.mxu0
    %v4443 = vadd.f32 0.0, %v4442
    %v4444 = vpop.f32.mrf.mxu0
    %4445 = vdwg.mxu0
    %v4446 = vadd.f32 %v4196, %v4397
    %v4447 = vadd.f32 %v4199, %v4401
    %v4448 = vxor.u32 %v4446, 2147483648
    %v4449 = vxor.u32 %v4447, 2147483648
    %v4450 = vmul.f32 %v4448, 1.442695
    %v4451 = vpow.pop %v4450
    %v4452 = vmul.f32 %v4449, 1.442695
    %v4453 = vpow.pop %v4452
    %v4454 = vadd.f32 %v4451, 1.0
    %v4455 = vadd.f32 %v4453, 1.0
    %v4456 = vrcp.pop %v4454
    %v4457 = vmul.f32 1.0, %v4456
    %v4458 = vrcp.pop %v4455
    %v4459 = vmul.f32 1.0, %v4458
    %v4460 = vadd.f32 %v4197, %v4399
    %v4461 = vadd.f32 %v4200, %v4403
    %v4462 = vxor.u32 %v4460, 2147483648
    %v4463 = vxor.u32 %v4461, 2147483648
    %v4464 = vmul.f32 %v4462, 1.442695
    %v4465 = vpow.pop %v4464
    %v4466 = vmul.f32 %v4463, 1.442695
    %v4467 = vpow.pop %v4466
    %v4468 = vadd.f32 %v4465, 1.0
    %v4469 = vadd.f32 %v4467, 1.0
    %v4470 = vrcp.pop %v4468
    %v4471 = vmul.f32 1.0, %v4470
    %v4472 = vrcp.pop %v4469
    %v4473 = vmul.f32 1.0, %v4472
    %v4474 = vadd.f32 %v4440, %v4168
    %v4475 = vadd.f32 %v4443, %v4168
    %v4476 = vmul.f32 %v4457, %v4474
    %v4477 = vmul.f32 %v4459, %v4475
    %v4478 = vadd.f32 %v4198, %v4476
    %v4479 = vadd.f32 %v4201, %v4477
    %v4480 = vtanh.pop %v4478
    %v4481 = vtanh.pop %v4479
    %v4482 = vsub.f32 1.0, %v4471
    %v4483 = vsub.f32 1.0, %v4473
    %v4484 = vmul.f32 %v4482, %v4480
    %v4485 = vmul.f32 %v4483, %v4481
    %v4486 = vmul.f32 %v4471, %v4184
    %v4487 = vmul.f32 %v4473, %v4185
    %v4488 = vadd.f32 %v4484, %v4486
    %v4489 = vadd.f32 %v4485, %v4487
    %v4490 = vpack.c.bf16 %v4489, %v4488
    %v4492 = vunpack.c.l.b16 %v4490
    %v4493 = vunpack.c.h.b16 %v4490
    %v4494 = vpack.c.b16 %v4492, %v4492
    %v4495 = vpack.c.b16 %v4493, %v4493
    %4498 = vst [vmem:[%s1413] sm:$0xf] %v4494
    %4499 = vst [vmem:[%s1413 + $0x4] sm:$0xf] %v4495
    %v4500 = vld [vmem:[%s1418] sm:$0xff]
    %v4501 = vld [vmem:[%s1418 + $0x8] sm:$0xff]
    %v4502 = vld [vmem:[%s1418 + $0x10] sm:$0xff]
    %v4503 = vld [vmem:[%s1418 + $0x18] sm:$0xff]
    %v4504 = vld [vmem:[%s1418 + $0x20] sm:$0xff]
    %v4505 = vld [vmem:[%s1418 + $0x28] sm:$0xff]
    %v4506 = vld [vmem:[%s11] sm:$0xff]
    %v4507 = vld [vmem:[%s11 + $0x8] sm:$0xf]
    %v4508 = vld [vmem:[%s11 + $0xc] sm:$0xff]
    %v4509 = vld [vmem:[%s11 + $0x14] sm:$0xf]
    %v4510 = vld [vmem:[%s11 + $0x18] sm:$0xff]
    %v4511 = vld [vmem:[%s11 + $0x20] sm:$0xf]
    %v4512 = vld [vmem:[%s11 + $0x24] sm:$0xff]
    %v4513 = vld [vmem:[%s11 + $0x2c] sm:$0xf]
    %v4514 = vld [vmem:[%s11 + $0x30] sm:$0xff]
    %v4515 = vld [vmem:[%s11 + $0x38] sm:$0xf]
    %v4516 = vld [vmem:[%s11 + $0x3c] sm:$0xff]
    %v4517 = vld [vmem:[%s11 + $0x44] sm:$0xf]
    %v4518 = vld [vmem:[%s11 + $0x48] sm:$0xff]
    %v4519 = vld [vmem:[%s11 + $0x50] sm:$0xf]
    %v4520 = vld [vmem:[%s11 + $0x54] sm:$0xff]
    %v4521 = vld [vmem:[%s11 + $0x5c] sm:$0xf]
    %v4522 = vld [vmem:[%s11 + $0x60] sm:$0xff]
    %v4523 = vld [vmem:[%s11 + $0x68] sm:$0xf]
    %v4524 = vld [vmem:[%s11 + $0x6c] sm:$0xff]
    %v4525 = vld [vmem:[%s11 + $0x74] sm:$0xf]
    %v4526 = vld [vmem:[%s11 + $0x78] sm:$0xff]
    %v4527 = vld [vmem:[%s11 + $0x80] sm:$0xf]
    %v4528 = vld [vmem:[%s11 + $0x84] sm:$0xff]
    %v4529 = vld [vmem:[%s11 + $0x8c] sm:$0xf]
    %v4530 = vld [vmem:[%s11 + $0x90] sm:$0xff]
    %v4531 = vld [vmem:[%s11 + $0x98] sm:$0xf]
    %v4532 = vld [vmem:[%s11 + $0x9c] sm:$0xff]
    %v4533 = vld [vmem:[%s11 + $0xa4] sm:$0xf]
    %v4534 = vld [vmem:[%s11 + $0xa8] sm:$0xff]
    %v4535 = vld [vmem:[%s11 + $0xb0] sm:$0xf]
    %v4536 = vld [vmem:[%s11 + $0xb4] sm:$0xff]
    %v4537 = vld [vmem:[%s11 + $0xbc] sm:$0xf]
    %v4570 = vunpack.c.l.b16 %v4506
    %v4571 = vunpack.c.h.b16 %v4506
    %v4572 = vunpack.c.l.b16 %v4507
    %v4573 = vunpack.c.l.b16 %v4508
    %v4574 = vunpack.c.h.b16 %v4508
    %v4575 = vunpack.c.l.b16 %v4509
    %v4576 = vunpack.c.l.b16 %v4510
    %v4577 = vunpack.c.h.b16 %v4510
    %v4578 = vunpack.c.l.b16 %v4511
    %v4579 = vunpack.c.l.b16 %v4512
    %v4580 = vunpack.c.h.b16 %v4512
    %v4581 = vunpack.c.l.b16 %v4513
    %v4582 = vunpack.c.l.b16 %v4514
    %v4583 = vunpack.c.h.b16 %v4514
    %v4584 = vunpack.c.l.b16 %v4515
    %v4585 = vunpack.c.l.b16 %v4516
    %v4586 = vunpack.c.h.b16 %v4516
    %v4587 = vunpack.c.l.b16 %v4517
    %v4588 = vunpack.c.l.b16 %v4518
    %v4589 = vunpack.c.h.b16 %v4518
    %v4590 = vunpack.c.l.b16 %v4519
    %v4591 = vunpack.c.l.b16 %v4520
    %v4592 = vunpack.c.h.b16 %v4520
    %v4593 = vunpack.c.l.b16 %v4521
    %v4594 = vunpack.c.l.b16 %v4522
    %v4595 = vunpack.c.h.b16 %v4522
    %v4596 = vunpack.c.l.b16 %v4523
    %v4597 = vunpack.c.l.b16 %v4524
    %v4598 = vunpack.c.h.b16 %v4524
    %v4599 = vunpack.c.l.b16 %v4525
    %v4600 = vunpack.c.l.b16 %v4526
    %v4601 = vunpack.c.h.b16 %v4526
    %v4602 = vunpack.c.l.b16 %v4527
    %v4603 = vunpack.c.l.b16 %v4528
    %v4604 = vunpack.c.h.b16 %v4528
    %v4605 = vunpack.c.l.b16 %v4529
    %v4606 = vunpack.c.l.b16 %v4530
    %v4607 = vunpack.c.h.b16 %v4530
    %v4608 = vunpack.c.l.b16 %v4531
    %v4609 = vunpack.c.l.b16 %v4532
    %v4610 = vunpack.c.h.b16 %v4532
    %v4611 = vunpack.c.l.b16 %v4533
    %v4612 = vunpack.c.l.b16 %v4534
    %v4613 = vunpack.c.h.b16 %v4534
    %v4614 = vunpack.c.l.b16 %v4535
    %v4615 = vunpack.c.l.b16 %v4536
    %v4616 = vunpack.c.h.b16 %v4536
    %v4617 = vunpack.c.l.b16 %v4537
    %v4618 = vpack.c.b16 %v4573, %v4570
    %v4619 = vpack.c.b16 %v4574, %v4571
    %v4620 = vpack.c.b16 %v4575, %v4572
    %v4621 = vpack.c.b16 %v4579, %v4576
    %v4622 = vpack.c.b16 %v4580, %v4577
    %v4623 = vpack.c.b16 %v4581, %v4578
    %v4624 = vpack.c.b16 %v4585, %v4582
    %v4625 = vpack.c.b16 %v4586, %v4583
    %v4626 = vpack.c.b16 %v4587, %v4584
    %v4627 = vpack.c.b16 %v4591, %v4588
    %v4628 = vpack.c.b16 %v4592, %v4589
    %v4629 = vpack.c.b16 %v4593, %v4590
    %v4630 = vpack.c.b16 %v4597, %v4594
    %v4631 = vpack.c.b16 %v4598, %v4595
    %v4632 = vpack.c.b16 %v4599, %v4596
    %v4633 = vpack.c.b16 %v4603, %v4600
    %v4634 = vpack.c.b16 %v4604, %v4601
    %v4635 = vpack.c.b16 %v4605, %v4602
    %v4636 = vpack.c.b16 %v4609, %v4606
    %v4637 = vpack.c.b16 %v4610, %v4607
    %v4638 = vpack.c.b16 %v4611, %v4608
    %v4639 = vpack.c.b16 %v4615, %v4612
    %v4640 = vpack.c.b16 %v4616, %v4613
    %v4641 = vpack.c.b16 %v4617, %v4614
    %4666 = vmatprep.subr.bf16.mxu0 %v4640
    %4667 = vmatpush1.bf16.msra.mxu0 %v4639
    %4668 = vmatprep.subr.bf16.mxu0 %v4637
    %4669 = vmatpush1.bf16.msra.mxu0 %v4636
    %4670 = vmatprep.subr.bf16.mxu0 %v4634
    %4671 = vmatpush1.bf16.msra.mxu0 %v4633
    %4672 = vmatprep.subr.bf16.mxu0 %v4631
    %4673 = vmatpush1.bf16.msra.mxu0 %v4630
    %4674 = vmatprep.subr.bf16.mxu0 %v4628
    %4675 = vmatpush1.bf16.msra.mxu0 %v4627
    %4676 = vmatprep.subr.bf16.mxu0 %v4625
    %4677 = vmatpush1.bf16.msra.mxu0 %v4624
    %4678 = vmatprep.subr.bf16.mxu0 %v4622
    %4679 = vmatpush1.bf16.msra.mxu0 %v4621
    %4680 = vmatprep.subr.bf16.mxu0 %v4619
    %4681 = vmatpush1.bf16.msra.mxu0 %v4618
    %4682 = vmatprep.subr.bf16.mxu0 0
    %4683 = vmatpush2.bf16.msra.mxu0 0
    %4684 = vmatprep.subr.bf16.mxu0 0
    %4685 = vmatpush2.bf16.msra.mxu0 0
    %4686 = vmatprep.subr.bf16.mxu0 0
    %4687 = vmatpush2.bf16.msra.mxu0 0
    %4688 = vmatprep.subr.bf16.mxu0 0
    %4689 = vmatpush2.bf16.msra.mxu0 0
    %4690 = vmatprep.subr.bf16.mxu0 0
    %4691 = vmatpush2.bf16.msra.mxu0 0
    %4692 = vmatprep.subr.bf16.mxu0 0
    %4693 = vmatpush2.bf16.msra.mxu0 0
    %4694 = vmatprep.subr.bf16.mxu0 0
    %4695 = vmatpush2.bf16.msra.mxu0 0
    %4696 = vmatprep.subr.bf16.mxu0 0
    %4697 = vmatpush2.bf16.msra.mxu0 0
    %4698 = vmatprep.mubr.bf16.mxu0 0
    %4699 = vmatmul.mubr.bf16.gmra.mxu0 %v4490
    %v4700 = vpop.f32.mrf.mxu0
    %v4701 = vadd.f32 0.0, %v4700
    %v4702 = vpop.f32.mrf.mxu0
    %v4703 = vadd.f32 0.0, %v4702
    %v4704 = vpop.f32.mrf.mxu0
    %v4705 = vadd.f32 0.0, %v4704
    %v4706 = vpop.f32.mrf.mxu0
    %v4707 = vadd.f32 0.0, %v4706
    %4708 = vdwg.mxu0
    %4709 = vmatprep.subr.bf16.mxu0 0
    %4710 = vmatpush1.bf16.msra.mxu0 %v4641
    %4711 = vmatprep.subr.bf16.mxu0 0
    %4712 = vmatpush1.bf16.msra.mxu0 %v4638
    %4713 = vmatprep.subr.bf16.mxu0 0
    %4714 = vmatpush1.bf16.msra.mxu0 %v4635
    %4715 = vmatprep.subr.bf16.mxu0 0
    %4716 = vmatpush1.bf16.msra.mxu0 %v4632
    %4717 = vmatprep.subr.bf16.mxu0 0
    %4718 = vmatpush1.bf16.msra.mxu0 %v4629
    %4719 = vmatprep.subr.bf16.mxu0 0
    %4720 = vmatpush1.bf16.msra.mxu0 %v4626
    %4721 = vmatprep.subr.bf16.mxu0 0
    %4722 = vmatpush1.bf16.msra.mxu0 %v4623
    %4723 = vmatprep.subr.bf16.mxu0 0
    %4724 = vmatpush1.bf16.msra.mxu0 %v4620
    %4725 = vmatprep.subr.bf16.mxu0 0
    %4726 = vmatpush2.bf16.msra.mxu0 0
    %4727 = vmatprep.subr.bf16.mxu0 0
    %4728 = vmatpush2.bf16.msra.mxu0 0
    %4729 = vmatprep.subr.bf16.mxu0 0
    %4730 = vmatpush2.bf16.msra.mxu0 0
    %4731 = vmatprep.subr.bf16.mxu0 0
    %4732 = vmatpush2.bf16.msra.mxu0 0
    %4733 = vmatprep.subr.bf16.mxu0 0
    %4734 = vmatpush2.bf16.msra.mxu0 0
    %4735 = vmatprep.subr.bf16.mxu0 0
    %4736 = vmatpush2.bf16.msra.mxu0 0
    %4737 = vmatprep.subr.bf16.mxu0 0
    %4738 = vmatpush2.bf16.msra.mxu0 0
    %4739 = vmatprep.subr.bf16.mxu0 0
    %4740 = vmatpush2.bf16.msra.mxu0 0
    %4741 = vmatprep.mubr.bf16.mxu0 0
    %4742 = vmatmul.mubr.bf16.gmra.mxu0 %v4490
    %v4743 = vpop.f32.mrf.mxu0
    %v4744 = vadd.f32 0.0, %v4743
    %v4745 = vpop.f32.mrf.mxu0
    %v4746 = vpop.f32.mrf.mxu0
    %v4747 = vadd.f32 0.0, %v4746
    %v4748 = vpop.f32.mrf.mxu0
    %4749 = vdwg.mxu0
    %v4750 = vadd.f32 %v4500, %v4701
    %v4751 = vadd.f32 %v4503, %v4705
    %v4752 = vxor.u32 %v4750, 2147483648
    %v4753 = vxor.u32 %v4751, 2147483648
    %v4754 = vmul.f32 %v4752, 1.442695
    %v4755 = vpow.pop %v4754
    %v4756 = vmul.f32 %v4753, 1.442695
    %v4757 = vpow.pop %v4756
    %v4758 = vadd.f32 %v4755, 1.0
    %v4759 = vadd.f32 %v4757, 1.0
    %v4760 = vrcp.pop %v4758
    %v4761 = vmul.f32 1.0, %v4760
    %v4762 = vrcp.pop %v4759
    %v4763 = vmul.f32 1.0, %v4762
    %v4764 = vadd.f32 %v4501, %v4703
    %v4765 = vadd.f32 %v4504, %v4707
    %v4766 = vxor.u32 %v4764, 2147483648
    %v4767 = vxor.u32 %v4765, 2147483648
    %v4768 = vmul.f32 %v4766, 1.442695
    %v4769 = vpow.pop %v4768
    %v4770 = vmul.f32 %v4767, 1.442695
    %v4771 = vpow.pop %v4770
    %v4772 = vadd.f32 %v4769, 1.0
    %v4773 = vadd.f32 %v4771, 1.0
    %v4774 = vrcp.pop %v4772
    %v4775 = vmul.f32 1.0, %v4774
    %v4776 = vrcp.pop %v4773
    %v4777 = vmul.f32 1.0, %v4776
    %v4778 = vadd.f32 %v4744, %v4168
    %v4779 = vadd.f32 %v4747, %v4168
    %v4780 = vmul.f32 %v4761, %v4778
    %v4781 = vmul.f32 %v4763, %v4779
    %v4782 = vadd.f32 %v4502, %v4780
    %v4783 = vadd.f32 %v4505, %v4781
    %v4784 = vtanh.pop %v4782
    %v4785 = vtanh.pop %v4783
    %v4786 = vsub.f32 1.0, %v4775
    %v4787 = vsub.f32 1.0, %v4777
    %v4788 = vmul.f32 %v4786, %v4784
    %v4789 = vmul.f32 %v4787, %v4785
    %v4790 = vmul.f32 %v4775, %v4488
    %v4791 = vmul.f32 %v4777, %v4489
    %v4792 = vadd.f32 %v4788, %v4790
    %v4793 = vadd.f32 %v4789, %v4791
    %v4794 = vpack.c.bf16 %v4793, %v4792
    %v4796 = vunpack.c.l.b16 %v4794
    %v4797 = vunpack.c.h.b16 %v4794
    %v4798 = vpack.c.b16 %v4796, %v4796
    %v4799 = vpack.c.b16 %v4797, %v4797
    %4802 = vst [vmem:[%s1721] sm:$0xf] %v4798
    %4803 = vst [vmem:[%s1721 + $0x4] sm:$0xf] %v4799
    %v4804 = vld [vmem:[%s1726] sm:$0xff]
    %v4805 = vld [vmem:[%s1726 + $0x8] sm:$0xff]
    %v4806 = vld [vmem:[%s1726 + $0x10] sm:$0xff]
    %v4807 = vld [vmem:[%s1726 + $0x18] sm:$0xff]
    %v4808 = vld [vmem:[%s1726 + $0x20] sm:$0xff]
    %v4809 = vld [vmem:[%s1726 + $0x28] sm:$0xff]
    %v4810 = vld [vmem:[%s11] sm:$0xff]
    %v4811 = vld [vmem:[%s11 + $0x8] sm:$0xf]
    %v4812 = vld [vmem:[%s11 + $0xc] sm:$0xff]
    %v4813 = vld [vmem:[%s11 + $0x14] sm:$0xf]
    %v4814 = vld [vmem:[%s11 + $0x18] sm:$0xff]
    %v4815 = vld [vmem:[%s11 + $0x20] sm:$0xf]
    %v4816 = vld [vmem:[%s11 + $0x24] sm:$0xff]
    %v4817 = vld [vmem:[%s11 + $0x2c] sm:$0xf]
    %v4818 = vld [vmem:[%s11 + $0x30] sm:$0xff]
    %v4819 = vld [vmem:[%s11 + $0x38] sm:$0xf]
    %v4820 = vld [vmem:[%s11 + $0x3c] sm:$0xff]
    %v4821 = vld [vmem:[%s11 + $0x44] sm:$0xf]
    %v4822 = vld [vmem:[%s11 + $0x48] sm:$0xff]
    %v4823 = vld [vmem:[%s11 + $0x50] sm:$0xf]
    %v4824 = vld [vmem:[%s11 + $0x54] sm:$0xff]
    %v4825 = vld [vmem:[%s11 + $0x5c] sm:$0xf]
    %v4826 = vld [vmem:[%s11 + $0x60] sm:$0xff]
    %v4827 = vld [vmem:[%s11 + $0x68] sm:$0xf]
    %v4828 = vld [vmem:[%s11 + $0x6c] sm:$0xff]
    %v4829 = vld [vmem:[%s11 + $0x74] sm:$0xf]
    %v4830 = vld [vmem:[%s11 + $0x78] sm:$0xff]
    %v4831 = vld [vmem:[%s11 + $0x80] sm:$0xf]
    %v4832 = vld [vmem:[%s11 + $0x84] sm:$0xff]
    %v4833 = vld [vmem:[%s11 + $0x8c] sm:$0xf]
    %v4834 = vld [vmem:[%s11 + $0x90] sm:$0xff]
    %v4835 = vld [vmem:[%s11 + $0x98] sm:$0xf]
    %v4836 = vld [vmem:[%s11 + $0x9c] sm:$0xff]
    %v4837 = vld [vmem:[%s11 + $0xa4] sm:$0xf]
    %v4838 = vld [vmem:[%s11 + $0xa8] sm:$0xff]
    %v4839 = vld [vmem:[%s11 + $0xb0] sm:$0xf]
    %v4840 = vld [vmem:[%s11 + $0xb4] sm:$0xff]
    %v4841 = vld [vmem:[%s11 + $0xbc] sm:$0xf]
    %v4874 = vunpack.c.l.b16 %v4810
    %v4875 = vunpack.c.h.b16 %v4810
    %v4876 = vunpack.c.l.b16 %v4811
    %v4877 = vunpack.c.l.b16 %v4812
    %v4878 = vunpack.c.h.b16 %v4812
    %v4879 = vunpack.c.l.b16 %v4813
    %v4880 = vunpack.c.l.b16 %v4814
    %v4881 = vunpack.c.h.b16 %v4814
    %v4882 = vunpack.c.l.b16 %v4815
    %v4883 = vunpack.c.l.b16 %v4816
    %v4884 = vunpack.c.h.b16 %v4816
    %v4885 = vunpack.c.l.b16 %v4817
    %v4886 = vunpack.c.l.b16 %v4818
    %v4887 = vunpack.c.h.b16 %v4818
    %v4888 = vunpack.c.l.b16 %v4819
    %v4889 = vunpack.c.l.b16 %v4820
    %v4890 = vunpack.c.h.b16 %v4820
    %v4891 = vunpack.c.l.b16 %v4821
    %v4892 = vunpack.c.l.b16 %v4822
    %v4893 = vunpack.c.h.b16 %v4822
    %v4894 = vunpack.c.l.b16 %v4823
    %v4895 = vunpack.c.l.b16 %v4824
    %v4896 = vunpack.c.h.b16 %v4824
    %v4897 = vunpack.c.l.b16 %v4825
    %v4898 = vunpack.c.l.b16 %v4826
    %v4899 = vunpack.c.h.b16 %v4826
    %v4900 = vunpack.c.l.b16 %v4827
    %v4901 = vunpack.c.l.b16 %v4828
    %v4902 = vunpack.c.h.b16 %v4828
    %v4903 = vunpack.c.l.b16 %v4829
    %v4904 = vunpack.c.l.b16 %v4830
    %v4905 = vunpack.c.h.b16 %v4830
    %v4906 = vunpack.c.l.b16 %v4831
    %v4907 = vunpack.c.l.b16 %v4832
    %v4908 = vunpack.c.h.b16 %v4832
    %v4909 = vunpack.c.l.b16 %v4833
    %v4910 = vunpack.c.l.b16 %v4834
    %v4911 = vunpack.c.h.b16 %v4834
    %v4912 = vunpack.c.l.b16 %v4835
    %v4913 = vunpack.c.l.b16 %v4836
    %v4914 = vunpack.c.h.b16 %v4836
    %v4915 = vunpack.c.l.b16 %v4837
    %v4916 = vunpack.c.l.b16 %v4838
    %v4917 = vunpack.c.h.b16 %v4838
    %v4918 = vunpack.c.l.b16 %v4839
    %v4919 = vunpack.c.l.b16 %v4840
    %v4920 = vunpack.c.h.b16 %v4840
    %v4921 = vunpack.c.l.b16 %v4841
    %v4922 = vpack.c.b16 %v4877, %v4874
    %v4923 = vpack.c.b16 %v4878, %v4875
    %v4924 = vpack.c.b16 %v4879, %v4876
    %v4925 = vpack.c.b16 %v4883, %v4880
    %v4926 = vpack.c.b16 %v4884, %v4881
    %v4927 = vpack.c.b16 %v4885, %v4882
    %v4928 = vpack.c.b16 %v4889, %v4886
    %v4929 = vpack.c.b16 %v4890, %v4887
    %v4930 = vpack.c.b16 %v4891, %v4888
    %v4931 = vpack.c.b16 %v4895, %v4892
    %v4932 = vpack.c.b16 %v4896, %v4893
    %v4933 = vpack.c.b16 %v4897, %v4894
    %v4934 = vpack.c.b16 %v4901, %v4898
    %v4935 = vpack.c.b16 %v4902, %v4899
    %v4936 = vpack.c.b16 %v4903, %v4900
    %v4937 = vpack.c.b16 %v4907, %v4904
    %v4938 = vpack.c.b16 %v4908, %v4905
    %v4939 = vpack.c.b16 %v4909, %v4906
    %v4940 = vpack.c.b16 %v4913, %v4910
    %v4941 = vpack.c.b16 %v4914, %v4911
    %v4942 = vpack.c.b16 %v4915, %v4912
    %v4943 = vpack.c.b16 %v4919, %v4916
    %v4944 = vpack.c.b16 %v4920, %v4917
    %v4945 = vpack.c.b16 %v4921, %v4918
    %4970 = vmatprep.subr.bf16.mxu0 %v4944
    %4971 = vmatpush1.bf16.msra.mxu0 %v4943
    %4972 = vmatprep.subr.bf16.mxu0 %v4941
    %4973 = vmatpush1.bf16.msra.mxu0 %v4940
    %4974 = vmatprep.subr.bf16.mxu0 %v4938
    %4975 = vmatpush1.bf16.msra.mxu0 %v4937
    %4976 = vmatprep.subr.bf16.mxu0 %v4935
    %4977 = vmatpush1.bf16.msra.mxu0 %v4934
    %4978 = vmatprep.subr.bf16.mxu0 %v4932
    %4979 = vmatpush1.bf16.msra.mxu0 %v4931
    %4980 = vmatprep.subr.bf16.mxu0 %v4929
    %4981 = vmatpush1.bf16.msra.mxu0 %v4928
    %4982 = vmatprep.subr.bf16.mxu0 %v4926
    %4983 = vmatpush1.bf16.msra.mxu0 %v4925
    %4984 = vmatprep.subr.bf16.mxu0 %v4923
    %4985 = vmatpush1.bf16.msra.mxu0 %v4922
    %4986 = vmatprep.subr.bf16.mxu0 0
    %4987 = vmatpush2.bf16.msra.mxu0 0
    %4988 = vmatprep.subr.bf16.mxu0 0
    %4989 = vmatpush2.bf16.msra.mxu0 0
    %4990 = vmatprep.subr.bf16.mxu0 0
    %4991 = vmatpush2.bf16.msra.mxu0 0
    %4992 = vmatprep.subr.bf16.mxu0 0
    %4993 = vmatpush2.bf16.msra.mxu0 0
    %4994 = vmatprep.subr.bf16.mxu0 0
    %4995 = vmatpush2.bf16.msra.mxu0 0
    %4996 = vmatprep.subr.bf16.mxu0 0
    %4997 = vmatpush2.bf16.msra.mxu0 0
    %4998 = vmatprep.subr.bf16.mxu0 0
    %4999 = vmatpush2.bf16.msra.mxu0 0
    %5000 = vmatprep.subr.bf16.mxu0 0
    %5001 = vmatpush2.bf16.msra.mxu0 0
    %5002 = vmatprep.mubr.bf16.mxu0 0
    %5003 = vmatmul.mubr.bf16.gmra.mxu0 %v4794
    %v5004 = vpop.f32.mrf.mxu0
    %v5005 = vadd.f32 0.0, %v5004
    %v5006 = vpop.f32.mrf.mxu0
    %v5007 = vadd.f32 0.0, %v5006
    %v5008 = vpop.f32.mrf.mxu0
    %v5009 = vadd.f32 0.0, %v5008
    %v5010 = vpop.f32.mrf.mxu0
    %v5011 = vadd.f32 0.0, %v5010
    %5012 = vdwg.mxu0
    %5013 = vmatprep.subr.bf16.mxu0 0
    %5014 = vmatpush1.bf16.msra.mxu0 %v4945
    %5015 = vmatprep.subr.bf16.mxu0 0
    %5016 = vmatpush1.bf16.msra.mxu0 %v4942
    %5017 = vmatprep.subr.bf16.mxu0 0
    %5018 = vmatpush1.bf16.msra.mxu0 %v4939
    %5019 = vmatprep.subr.bf16.mxu0 0
    %5020 = vmatpush1.bf16.msra.mxu0 %v4936
    %5021 = vmatprep.subr.bf16.mxu0 0
    %5022 = vmatpush1.bf16.msra.mxu0 %v4933
    %5023 = vmatprep.subr.bf16.mxu0 0
    %5024 = vmatpush1.bf16.msra.mxu0 %v4930
    %5025 = vmatprep.subr.bf16.mxu0 0
    %5026 = vmatpush1.bf16.msra.mxu0 %v4927
    %5027 = vmatprep.subr.bf16.mxu0 0
    %5028 = vmatpush1.bf16.msra.mxu0 %v4924
    %5029 = vmatprep.subr.bf16.mxu0 0
    %5030 = vmatpush2.bf16.msra.mxu0 0
    %5031 = vmatprep.subr.bf16.mxu0 0
    %5032 = vmatpush2.bf16.msra.mxu0 0
    %5033 = vmatprep.subr.bf16.mxu0 0
    %5034 = vmatpush2.bf16.msra.mxu0 0
    %5035 = vmatprep.subr.bf16.mxu0 0
    %5036 = vmatpush2.bf16.msra.mxu0 0
    %5037 = vmatprep.subr.bf16.mxu0 0
    %5038 = vmatpush2.bf16.msra.mxu0 0
    %5039 = vmatprep.subr.bf16.mxu0 0
    %5040 = vmatpush2.bf16.msra.mxu0 0
    %5041 = vmatprep.subr.bf16.mxu0 0
    %5042 = vmatpush2.bf16.msra.mxu0 0
    %5043 = vmatprep.subr.bf16.mxu0 0
    %5044 = vmatpush2.bf16.msra.mxu0 0
    %5045 = vmatprep.mubr.bf16.mxu0 0
    %5046 = vmatmul.mubr.bf16.gmra.mxu0 %v4794
    %v5047 = vpop.f32.mrf.mxu0
    %v5048 = vadd.f32 0.0, %v5047
    %v5049 = vpop.f32.mrf.mxu0
    %v5050 = vpop.f32.mrf.mxu0
    %v5051 = vadd.f32 0.0, %v5050
    %v5052 = vpop.f32.mrf.mxu0
    %5053 = vdwg.mxu0
    %v5054 = vadd.f32 %v4804, %v5005
    %v5055 = vadd.f32 %v4807, %v5009
    %v5056 = vxor.u32 %v5054, 2147483648
    %v5057 = vxor.u32 %v5055, 2147483648
    %v5058 = vmul.f32 %v5056, 1.442695
    %v5059 = vpow.pop %v5058
    %v5060 = vmul.f32 %v5057, 1.442695
    %v5061 = vpow.pop %v5060
    %v5062 = vadd.f32 %v5059, 1.0
    %v5063 = vadd.f32 %v5061, 1.0
    %v5064 = vrcp.pop %v5062
    %v5065 = vmul.f32 1.0, %v5064
    %v5066 = vrcp.pop %v5063
    %v5067 = vmul.f32 1.0, %v5066
    %v5068 = vadd.f32 %v4805, %v5007
    %v5069 = vadd.f32 %v4808, %v5011
    %v5070 = vxor.u32 %v5068, 2147483648
    %v5071 = vxor.u32 %v5069, 2147483648
    %v5072 = vmul.f32 %v5070, 1.442695
    %v5073 = vpow.pop %v5072
    %v5074 = vmul.f32 %v5071, 1.442695
    %v5075 = vpow.pop %v5074
    %v5076 = vadd.f32 %v5073, 1.0
    %v5077 = vadd.f32 %v5075, 1.0
    %v5078 = vrcp.pop %v5076
    %v5079 = vmul.f32 1.0, %v5078
    %v5080 = vrcp.pop %v5077
    %v5081 = vmul.f32 1.0, %v5080
    %v5082 = vadd.f32 %v5048, %v4168
    %v5083 = vadd.f32 %v5051, %v4168
    %v5084 = vmul.f32 %v5065, %v5082
    %v5085 = vmul.f32 %v5067, %v5083
    %v5086 = vadd.f32 %v4806, %v5084
    %v5087 = vadd.f32 %v4809, %v5085
    %v5088 = vtanh.pop %v5086
    %v5089 = vtanh.pop %v5087
    %v5090 = vsub.f32 1.0, %v5079
    %v5091 = vsub.f32 1.0, %v5081
    %v5092 = vmul.f32 %v5090, %v5088
    %v5093 = vmul.f32 %v5091, %v5089
    %v5094 = vmul.f32 %v5079, %v4792
    %v5095 = vmul.f32 %v5081, %v4793
    %v5096 = vadd.f32 %v5092, %v5094
    %v5097 = vadd.f32 %v5093, %v5095
    %v5098 = vpack.c.bf16 %v5097, %v5096
    %v5100 = vunpack.c.l.b16 %v5098
    %v5101 = vunpack.c.h.b16 %v5098
    %v5102 = vpack.c.b16 %v5100, %v5100
    %v5103 = vpack.c.b16 %v5101, %v5101
    %5106 = vst [vmem:[%s2029] sm:$0xf] %v5102
    %5107 = vst [vmem:[%s2029 + $0x4] sm:$0xf] %v5103
    %v5108 = vld [vmem:[%s2034] sm:$0xff]
    %v5109 = vld [vmem:[%s2034 + $0x8] sm:$0xff]
    %v5110 = vld [vmem:[%s2034 + $0x10] sm:$0xff]
    %v5111 = vld [vmem:[%s2034 + $0x18] sm:$0xff]
    %v5112 = vld [vmem:[%s2034 + $0x20] sm:$0xff]
    %v5113 = vld [vmem:[%s2034 + $0x28] sm:$0xff]
    %v5114 = vld [vmem:[%s11] sm:$0xff]
    %v5115 = vld [vmem:[%s11 + $0x8] sm:$0xf]
    %v5116 = vld [vmem:[%s11 + $0xc] sm:$0xff]
    %v5117 = vld [vmem:[%s11 + $0x14] sm:$0xf]
    %v5118 = vld [vmem:[%s11 + $0x18] sm:$0xff]
    %v5119 = vld [vmem:[%s11 + $0x20] sm:$0xf]
    %v5120 = vld [vmem:[%s11 + $0x24] sm:$0xff]
    %v5121 = vld [vmem:[%s11 + $0x2c] sm:$0xf]
    %v5122 = vld [vmem:[%s11 + $0x30] sm:$0xff]
    %v5123 = vld [vmem:[%s11 + $0x38] sm:$0xf]
    %v5124 = vld [vmem:[%s11 + $0x3c] sm:$0xff]
    %v5125 = vld [vmem:[%s11 + $0x44] sm:$0xf]
    %v5126 = vld [vmem:[%s11 + $0x48] sm:$0xff]
    %v5127 = vld [vmem:[%s11 + $0x50] sm:$0xf]
    %v5128 = vld [vmem:[%s11 + $0x54] sm:$0xff]
    %v5129 = vld [vmem:[%s11 + $0x5c] sm:$0xf]
    %v5130 = vld [vmem:[%s11 + $0x60] sm:$0xff]
    %v5131 = vld [vmem:[%s11 + $0x68] sm:$0xf]
    %v5132 = vld [vmem:[%s11 + $0x6c] sm:$0xff]
    %v5133 = vld [vmem:[%s11 + $0x74] sm:$0xf]
    %v5134 = vld [vmem:[%s11 + $0x78] sm:$0xff]
    %v5135 = vld [vmem:[%s11 + $0x80] sm:$0xf]
    %v5136 = vld [vmem:[%s11 + $0x84] sm:$0xff]
    %v5137 = vld [vmem:[%s11 + $0x8c] sm:$0xf]
    %v5138 = vld [vmem:[%s11 + $0x90] sm:$0xff]
    %v5139 = vld [vmem:[%s11 + $0x98] sm:$0xf]
    %v5140 = vld [vmem:[%s11 + $0x9c] sm:$0xff]
    %v5141 = vld [vmem:[%s11 + $0xa4] sm:$0xf]
    %v5142 = vld [vmem:[%s11 + $0xa8] sm:$0xff]
    %v5143 = vld [vmem:[%s11 + $0xb0] sm:$0xf]
    %v5144 = vld [vmem:[%s11 + $0xb4] sm:$0xff]
    %v5145 = vld [vmem:[%s11 + $0xbc] sm:$0xf]
    %v5178 = vunpack.c.l.b16 %v5114
    %v5179 = vunpack.c.h.b16 %v5114
    %v5180 = vunpack.c.l.b16 %v5115
    %v5181 = vunpack.c.l.b16 %v5116
    %v5182 = vunpack.c.h.b16 %v5116
    %v5183 = vunpack.c.l.b16 %v5117
    %v5184 = vunpack.c.l.b16 %v5118
    %v5185 = vunpack.c.h.b16 %v5118
    %v5186 = vunpack.c.l.b16 %v5119
    %v5187 = vunpack.c.l.b16 %v5120
    %v5188 = vunpack.c.h.b16 %v5120
    %v5189 = vunpack.c.l.b16 %v5121
    %v5190 = vunpack.c.l.b16 %v5122
    %v5191 = vunpack.c.h.b16 %v5122
    %v5192 = vunpack.c.l.b16 %v5123
    %v5193 = vunpack.c.l.b16 %v5124
    %v5194 = vunpack.c.h.b16 %v5124
    %v5195 = vunpack.c.l.b16 %v5125
    %v5196 = vunpack.c.l.b16 %v5126
    %v5197 = vunpack.c.h.b16 %v5126
    %v5198 = vunpack.c.l.b16 %v5127
    %v5199 = vunpack.c.l.b16 %v5128
    %v5200 = vunpack.c.h.b16 %v5128
    %v5201 = vunpack.c.l.b16 %v5129
    %v5202 = vunpack.c.l.b16 %v5130
    %v5203 = vunpack.c.h.b16 %v5130
    %v5204 = vunpack.c.l.b16 %v5131
    %v5205 = vunpack.c.l.b16 %v5132
    %v5206 = vunpack.c.h.b16 %v5132
    %v5207 = vunpack.c.l.b16 %v5133
    %v5208 = vunpack.c.l.b16 %v5134
    %v5209 = vunpack.c.h.b16 %v5134
    %v5210 = vunpack.c.l.b16 %v5135
    %v5211 = vunpack.c.l.b16 %v5136
    %v5212 = vunpack.c.h.b16 %v5136
    %v5213 = vunpack.c.l.b16 %v5137
    %v5214 = vunpack.c.l.b16 %v5138
    %v5215 = vunpack.c.h.b16 %v5138
    %v5216 = vunpack.c.l.b16 %v5139
    %v5217 = vunpack.c.l.b16 %v5140
    %v5218 = vunpack.c.h.b16 %v5140
    %v5219 = vunpack.c.l.b16 %v5141
    %v5220 = vunpack.c.l.b16 %v5142
    %v5221 = vunpack.c.h.b16 %v5142
    %v5222 = vunpack.c.l.b16 %v5143
    %v5223 = vunpack.c.l.b16 %v5144
    %v5224 = vunpack.c.h.b16 %v5144
    %v5225 = vunpack.c.l.b16 %v5145
    %v5226 = vpack.c.b16 %v5181, %v5178
    %v5227 = vpack.c.b16 %v5182, %v5179
    %v5228 = vpack.c.b16 %v5183, %v5180
    %v5229 = vpack.c.b16 %v5187, %v5184
    %v5230 = vpack.c.b16 %v5188, %v5185
    %v5231 = vpack.c.b16 %v5189, %v5186
    %v5232 = vpack.c.b16 %v5193, %v5190
    %v5233 = vpack.c.b16 %v5194, %v5191
    %v5234 = vpack.c.b16 %v5195, %v5192
    %v5235 = vpack.c.b16 %v5199, %v5196
    %v5236 = vpack.c.b16 %v5200, %v5197
    %v5237 = vpack.c.b16 %v5201, %v5198
    %v5238 = vpack.c.b16 %v5205, %v5202
    %v5239 = vpack.c.b16 %v5206, %v5203
    %v5240 = vpack.c.b16 %v5207, %v5204
    %v5241 = vpack.c.b16 %v5211, %v5208
    %v5242 = vpack.c.b16 %v5212, %v5209
    %v5243 = vpack.c.b16 %v5213, %v5210
    %v5244 = vpack.c.b16 %v5217, %v5214
    %v5245 = vpack.c.b16 %v5218, %v5215
    %v5246 = vpack.c.b16 %v5219, %v5216
    %v5247 = vpack.c.b16 %v5223, %v5220
    %v5248 = vpack.c.b16 %v5224, %v5221
    %v5249 = vpack.c.b16 %v5225, %v5222
    %5274 = vmatprep.subr.bf16.mxu0 %v5248
    %5275 = vmatpush1.bf16.msra.mxu0 %v5247
    %5276 = vmatprep.subr.bf16.mxu0 %v5245
    %5277 = vmatpush1.bf16.msra.mxu0 %v5244
    %5278 = vmatprep.subr.bf16.mxu0 %v5242
    %5279 = vmatpush1.bf16.msra.mxu0 %v5241
    %5280 = vmatprep.subr.bf16.mxu0 %v5239
    %5281 = vmatpush1.bf16.msra.mxu0 %v5238
    %5282 = vmatprep.subr.bf16.mxu0 %v5236
    %5283 = vmatpush1.bf16.msra.mxu0 %v5235
    %5284 = vmatprep.subr.bf16.mxu0 %v5233
    %5285 = vmatpush1.bf16.msra.mxu0 %v5232
    %5286 = vmatprep.subr.bf16.mxu0 %v5230
    %5287 = vmatpush1.bf16.msra.mxu0 %v5229
    %5288 = vmatprep.subr.bf16.mxu0 %v5227
    %5289 = vmatpush1.bf16.msra.mxu0 %v5226
    %5290 = vmatprep.subr.bf16.mxu0 0
    %5291 = vmatpush2.bf16.msra.mxu0 0
    %5292 = vmatprep.subr.bf16.mxu0 0
    %5293 = vmatpush2.bf16.msra.mxu0 0
    %5294 = vmatprep.subr.bf16.mxu0 0
    %5295 = vmatpush2.bf16.msra.mxu0 0
    %5296 = vmatprep.subr.bf16.mxu0 0
    %5297 = vmatpush2.bf16.msra.mxu0 0
    %5298 = vmatprep.subr.bf16.mxu0 0
    %5299 = vmatpush2.bf16.msra.mxu0 0
    %5300 = vmatprep.subr.bf16.mxu0 0
    %5301 = vmatpush2.bf16.msra.mxu0 0
    %5302 = vmatprep.subr.bf16.mxu0 0
    %5303 = vmatpush2.bf16.msra.mxu0 0
    %5304 = vmatprep.subr.bf16.mxu0 0
    %5305 = vmatpush2.bf16.msra.mxu0 0
    %5306 = vmatprep.mubr.bf16.mxu0 0
    %5307 = vmatmul.mubr.bf16.gmra.mxu0 %v5098
    %v5308 = vpop.f32.mrf.mxu0
    %v5309 = vadd.f32 0.0, %v5308
    %v5310 = vpop.f32.mrf.mxu0
    %v5311 = vadd.f32 0.0, %v5310
    %v5312 = vpop.f32.mrf.mxu0
    %v5313 = vadd.f32 0.0, %v5312
    %v5314 = vpop.f32.mrf.mxu0
    %v5315 = vadd.f32 0.0, %v5314
    %5316 = vdwg.mxu0
    %5317 = vmatprep.subr.bf16.mxu0 0
    %5318 = vmatpush1.bf16.msra.mxu0 %v5249
    %5319 = vmatprep.subr.bf16.mxu0 0
    %5320 = vmatpush1.bf16.msra.mxu0 %v5246
    %5321 = vmatprep.subr.bf16.mxu0 0
    %5322 = vmatpush1.bf16.msra.mxu0 %v5243
    %5323 = vmatprep.subr.bf16.mxu0 0
    %5324 = vmatpush1.bf16.msra.mxu0 %v5240
    %5325 = vmatprep.subr.bf16.mxu0 0
    %5326 = vmatpush1.bf16.msra.mxu0 %v5237
    %5327 = vmatprep.subr.bf16.mxu0 0
    %5328 = vmatpush1.bf16.msra.mxu0 %v5234
    %5329 = vmatprep.subr.bf16.mxu0 0
    %5330 = vmatpush1.bf16.msra.mxu0 %v5231
    %5331 = vmatprep.subr.bf16.mxu0 0
    %5332 = vmatpush1.bf16.msra.mxu0 %v5228
    %5333 = vmatprep.subr.bf16.mxu0 0
    %5334 = vmatpush2.bf16.msra.mxu0 0
    %5335 = vmatprep.subr.bf16.mxu0 0
    %5336 = vmatpush2.bf16.msra.mxu0 0
    %5337 = vmatprep.subr.bf16.mxu0 0
    %5338 = vmatpush2.bf16.msra.mxu0 0
    %5339 = vmatprep.subr.bf16.mxu0 0
    %5340 = vmatpush2.bf16.msra.mxu0 0
    %5341 = vmatprep.subr.bf16.mxu0 0
    %5342 = vmatpush2.bf16.msra.mxu0 0
    %5343 = vmatprep.subr.bf16.mxu0 0
    %5344 = vmatpush2.bf16.msra.mxu0 0
    %5345 = vmatprep.subr.bf16.mxu0 0
    %5346 = vmatpush2.bf16.msra.mxu0 0
    %5347 = vmatprep.subr.bf16.mxu0 0
    %5348 = vmatpush2.bf16.msra.mxu0 0
    %5349 = vmatprep.mubr.bf16.mxu0 0
    %5350 = vmatmul.mubr.bf16.gmra.mxu0 %v5098
    %v5351 = vpop.f32.mrf.mxu0
    %v5352 = vadd.f32 0.0, %v5351
    %v5353 = vpop.f32.mrf.mxu0
    %v5354 = vpop.f32.mrf.mxu0
    %v5355 = vadd.f32 0.0, %v5354
    %v5356 = vpop.f32.mrf.mxu0
    %5357 = vdwg.mxu0
    %v5358 = vadd.f32 %v5108, %v5309
    %v5359 = vadd.f32 %v5111, %v5313
    %v5360 = vxor.u32 %v5358, 2147483648
    %v5361 = vxor.u32 %v5359, 2147483648
    %v5362 = vmul.f32 %v5360, 1.442695
    %v5363 = vpow.pop %v5362
    %v5364 = vmul.f32 %v5361, 1.442695
    %v5365 = vpow.pop %v5364
    %v5366 = vadd.f32 %v5363, 1.0
    %v5367 = vadd.f32 %v5365, 1.0
    %v5368 = vrcp.pop %v5366
    %v5369 = vmul.f32 1.0, %v5368
    %v5370 = vrcp.pop %v5367
    %v5371 = vmul.f32 1.0, %v5370
    %v5372 = vadd.f32 %v5109, %v5311
    %v5373 = vadd.f32 %v5112, %v5315
    %v5374 = vxor.u32 %v5372, 2147483648
    %v5375 = vxor.u32 %v5373, 2147483648
    %v5376 = vmul.f32 %v5374, 1.442695
    %v5377 = vpow.pop %v5376
    %v5378 = vmul.f32 %v5375, 1.442695
    %v5379 = vpow.pop %v5378
    %v5380 = vadd.f32 %v5377, 1.0
    %v5381 = vadd.f32 %v5379, 1.0
    %v5382 = vrcp.pop %v5380
    %v5383 = vmul.f32 1.0, %v5382
    %v5384 = vrcp.pop %v5381
    %v5385 = vmul.f32 1.0, %v5384
    %v5386 = vadd.f32 %v5352, %v4168
    %v5387 = vadd.f32 %v5355, %v4168
    %v5388 = vmul.f32 %v5369, %v5386
    %v5389 = vmul.f32 %v5371, %v5387
    %v5390 = vadd.f32 %v5110, %v5388
    %v5391 = vadd.f32 %v5113, %v5389
    %v5392 = vtanh.pop %v5390
    %v5393 = vtanh.pop %v5391
    %v5394 = vsub.f32 1.0, %v5383
    %v5395 = vsub.f32 1.0, %v5385
    %v5396 = vmul.f32 %v5394, %v5392
    %v5397 = vmul.f32 %v5395, %v5393
    %v5398 = vmul.f32 %v5383, %v5096
    %v5399 = vmul.f32 %v5385, %v5097
    %v5400 = vadd.f32 %v5396, %v5398
    %v5401 = vadd.f32 %v5397, %v5399
    %v5402 = vpack.c.bf16 %v5401, %v5400
    %v5404 = vunpack.c.l.b16 %v5402
    %v5405 = vunpack.c.h.b16 %v5402
    %v5406 = vpack.c.b16 %v5404, %v5404
    %v5407 = vpack.c.b16 %v5405, %v5405
    %5410 = vst [vmem:[%s2337] sm:$0xf] %v5406
    %5411 = vst [vmem:[%s2337 + $0x4] sm:$0xf] %v5407
    %v5412 = vld [vmem:[%s2342] sm:$0xff]
    %v5413 = vld [vmem:[%s2342 + $0x8] sm:$0xff]
    %v5414 = vld [vmem:[%s2342 + $0x10] sm:$0xff]
    %v5415 = vld [vmem:[%s2342 + $0x18] sm:$0xff]
    %v5416 = vld [vmem:[%s2342 + $0x20] sm:$0xff]
    %v5417 = vld [vmem:[%s2342 + $0x28] sm:$0xff]
    %v5418 = vld [vmem:[%s11] sm:$0xff]
    %v5419 = vld [vmem:[%s11 + $0x8] sm:$0xf]
    %v5420 = vld [vmem:[%s11 + $0xc] sm:$0xff]
    %v5421 = vld [vmem:[%s11 + $0x14] sm:$0xf]
    %v5422 = vld [vmem:[%s11 + $0x18] sm:$0xff]
    %v5423 = vld [vmem:[%s11 + $0x20] sm:$0xf]
    %v5424 = vld [vmem:[%s11 + $0x24] sm:$0xff]
    %v5425 = vld [vmem:[%s11 + $0x2c] sm:$0xf]
    %v5426 = vld [vmem:[%s11 + $0x30] sm:$0xff]
    %v5427 = vld [vmem:[%s11 + $0x38] sm:$0xf]
    %v5428 = vld [vmem:[%s11 + $0x3c] sm:$0xff]
    %v5429 = vld [vmem:[%s11 + $0x44] sm:$0xf]
    %v5430 = vld [vmem:[%s11 + $0x48] sm:$0xff]
    %v5431 = vld [vmem:[%s11 + $0x50] sm:$0xf]
    %v5432 = vld [vmem:[%s11 + $0x54] sm:$0xff]
    %v5433 = vld [vmem:[%s11 + $0x5c] sm:$0xf]
    %v5434 = vld [vmem:[%s11 + $0x60] sm:$0xff]
    %v5435 = vld [vmem:[%s11 + $0x68] sm:$0xf]
    %v5436 = vld [vmem:[%s11 + $0x6c] sm:$0xff]
    %v5437 = vld [vmem:[%s11 + $0x74] sm:$0xf]
    %v5438 = vld [vmem:[%s11 + $0x78] sm:$0xff]
    %v5439 = vld [vmem:[%s11 + $0x80] sm:$0xf]
    %v5440 = vld [vmem:[%s11 + $0x84] sm:$0xff]
    %v5441 = vld [vmem:[%s11 + $0x8c] sm:$0xf]
    %v5442 = vld [vmem:[%s11 + $0x90] sm:$0xff]
    %v5443 = vld [vmem:[%s11 + $0x98] sm:$0xf]
    %v5444 = vld [vmem:[%s11 + $0x9c] sm:$0xff]
    %v5445 = vld [vmem:[%s11 + $0xa4] sm:$0xf]
    %v5446 = vld [vmem:[%s11 + $0xa8] sm:$0xff]
    %v5447 = vld [vmem:[%s11 + $0xb0] sm:$0xf]
    %v5448 = vld [vmem:[%s11 + $0xb4] sm:$0xff]
    %v5449 = vld [vmem:[%s11 + $0xbc] sm:$0xf]
    %v5482 = vunpack.c.l.b16 %v5418
    %v5483 = vunpack.c.h.b16 %v5418
    %v5484 = vunpack.c.l.b16 %v5419
    %v5485 = vunpack.c.l.b16 %v5420
    %v5486 = vunpack.c.h.b16 %v5420
    %v5487 = vunpack.c.l.b16 %v5421
    %v5488 = vunpack.c.l.b16 %v5422
    %v5489 = vunpack.c.h.b16 %v5422
    %v5490 = vunpack.c.l.b16 %v5423
    %v5491 = vunpack.c.l.b16 %v5424
    %v5492 = vunpack.c.h.b16 %v5424
    %v5493 = vunpack.c.l.b16 %v5425
    %v5494 = vunpack.c.l.b16 %v5426
    %v5495 = vunpack.c.h.b16 %v5426
    %v5496 = vunpack.c.l.b16 %v5427
    %v5497 = vunpack.c.l.b16 %v5428
    %v5498 = vunpack.c.h.b16 %v5428
    %v5499 = vunpack.c.l.b16 %v5429
    %v5500 = vunpack.c.l.b16 %v5430
    %v5501 = vunpack.c.h.b16 %v5430
    %v5502 = vunpack.c.l.b16 %v5431
    %v5503 = vunpack.c.l.b16 %v5432
    %v5504 = vunpack.c.h.b16 %v5432
    %v5505 = vunpack.c.l.b16 %v5433
    %v5506 = vunpack.c.l.b16 %v5434
    %v5507 = vunpack.c.h.b16 %v5434
    %v5508 = vunpack.c.l.b16 %v5435
    %v5509 = vunpack.c.l.b16 %v5436
    %v5510 = vunpack.c.h.b16 %v5436
    %v5511 = vunpack.c.l.b16 %v5437
    %v5512 = vunpack.c.l.b16 %v5438
    %v5513 = vunpack.c.h.b16 %v5438
    %v5514 = vunpack.c.l.b16 %v5439
    %v5515 = vunpack.c.l.b16 %v5440
    %v5516 = vunpack.c.h.b16 %v5440
    %v5517 = vunpack.c.l.b16 %v5441
    %v5518 = vunpack.c.l.b16 %v5442
    %v5519 = vunpack.c.h.b16 %v5442
    %v5520 = vunpack.c.l.b16 %v5443
    %v5521 = vunpack.c.l.b16 %v5444
    %v5522 = vunpack.c.h.b16 %v5444
    %v5523 = vunpack.c.l.b16 %v5445
    %v5524 = vunpack.c.l.b16 %v5446
    %v5525 = vunpack.c.h.b16 %v5446
    %v5526 = vunpack.c.l.b16 %v5447
    %v5527 = vunpack.c.l.b16 %v5448
    %v5528 = vunpack.c.h.b16 %v5448
    %v5529 = vunpack.c.l.b16 %v5449
    %v5530 = vpack.c.b16 %v5485, %v5482
    %v5531 = vpack.c.b16 %v5486, %v5483
    %v5532 = vpack.c.b16 %v5487, %v5484
    %v5533 = vpack.c.b16 %v5491, %v5488
    %v5534 = vpack.c.b16 %v5492, %v5489
    %v5535 = vpack.c.b16 %v5493, %v5490
    %v5536 = vpack.c.b16 %v5497, %v5494
    %v5537 = vpack.c.b16 %v5498, %v5495
    %v5538 = vpack.c.b16 %v5499, %v5496
    %v5539 = vpack.c.b16 %v5503, %v5500
    %v5540 = vpack.c.b16 %v5504, %v5501
    %v5541 = vpack.c.b16 %v5505, %v5502
    %v5542 = vpack.c.b16 %v5509, %v5506
    %v5543 = vpack.c.b16 %v5510, %v5507
    %v5544 = vpack.c.b16 %v5511, %v5508
    %v5545 = vpack.c.b16 %v5515, %v5512
    %v5546 = vpack.c.b16 %v5516, %v5513
    %v5547 = vpack.c.b16 %v5517, %v5514
    %v5548 = vpack.c.b16 %v5521, %v5518
    %v5549 = vpack.c.b16 %v5522, %v5519
    %v5550 = vpack.c.b16 %v5523, %v5520
    %v5551 = vpack.c.b16 %v5527, %v5524
    %v5552 = vpack.c.b16 %v5528, %v5525
    %v5553 = vpack.c.b16 %v5529, %v5526
    %5578 = vmatprep.subr.bf16.mxu0 %v5552
    %5579 = vmatpush1.bf16.msra.mxu0 %v5551
    %5580 = vmatprep.subr.bf16.mxu0 %v5549
    %5581 = vmatpush1.bf16.msra.mxu0 %v5548
    %5582 = vmatprep.subr.bf16.mxu0 %v5546
    %5583 = vmatpush1.bf16.msra.mxu0 %v5545
    %5584 = vmatprep.subr.bf16.mxu0 %v5543
    %5585 = vmatpush1.bf16.msra.mxu0 %v5542
    %5586 = vmatprep.subr.bf16.mxu0 %v5540
    %5587 = vmatpush1.bf16.msra.mxu0 %v5539
    %5588 = vmatprep.subr.bf16.mxu0 %v5537
    %5589 = vmatpush1.bf16.msra.mxu0 %v5536
    %5590 = vmatprep.subr.bf16.mxu0 %v5534
    %5591 = vmatpush1.bf16.msra.mxu0 %v5533
    %5592 = vmatprep.subr.bf16.mxu0 %v5531
    %5593 = vmatpush1.bf16.msra.mxu0 %v5530
    %5594 = vmatprep.subr.bf16.mxu0 0
    %5595 = vmatpush2.bf16.msra.mxu0 0
    %5596 = vmatprep.subr.bf16.mxu0 0
    %5597 = vmatpush2.bf16.msra.mxu0 0
    %5598 = vmatprep.subr.bf16.mxu0 0
    %5599 = vmatpush2.bf16.msra.mxu0 0
    %5600 = vmatprep.subr.bf16.mxu0 0
    %5601 = vmatpush2.bf16.msra.mxu0 0
    %5602 = vmatprep.subr.bf16.mxu0 0
    %5603 = vmatpush2.bf16.msra.mxu0 0
    %5604 = vmatprep.subr.bf16.mxu0 0
    %5605 = vmatpush2.bf16.msra.mxu0 0
    %5606 = vmatprep.subr.bf16.mxu0 0
    %5607 = vmatpush2.bf16.msra.mxu0 0
    %5608 = vmatprep.subr.bf16.mxu0 0
    %5609 = vmatpush2.bf16.msra.mxu0 0
    %5610 = vmatprep.mubr.bf16.mxu0 0
    %5611 = vmatmul.mubr.bf16.gmra.mxu0 %v5402
    %v5612 = vpop.f32.mrf.mxu0
    %v5613 = vadd.f32 0.0, %v5612
    %v5614 = vpop.f32.mrf.mxu0
    %v5615 = vadd.f32 0.0, %v5614
    %v5616 = vpop.f32.mrf.mxu0
    %v5617 = vadd.f32 0.0, %v5616
    %v5618 = vpop.f32.mrf.mxu0
    %v5619 = vadd.f32 0.0, %v5618
    %5620 = vdwg.mxu0
    %5621 = vmatprep.subr.bf16.mxu0 0
    %5622 = vmatpush1.bf16.msra.mxu0 %v5553
    %5623 = vmatprep.subr.bf16.mxu0 0
    %5624 = vmatpush1.bf16.msra.mxu0 %v5550
    %5625 = vmatprep.subr.bf16.mxu0 0
    %5626 = vmatpush1.bf16.msra.mxu0 %v5547
    %5627 = vmatprep.subr.bf16.mxu0 0
    %5628 = vmatpush1.bf16.msra.mxu0 %v5544
    %5629 = vmatprep.subr.bf16.mxu0 0
    %5630 = vmatpush1.bf16.msra.mxu0 %v5541
    %5631 = vmatprep.subr.bf16.mxu0 0
    %5632 = vmatpush1.bf16.msra.mxu0 %v5538
    %5633 = vmatprep.subr.bf16.mxu0 0
    %5634 = vmatpush1.bf16.msra.mxu0 %v5535
    %5635 = vmatprep.subr.bf16.mxu0 0
    %5636 = vmatpush1.bf16.msra.mxu0 %v5532
    %5637 = vmatprep.subr.bf16.mxu0 0
    %5638 = vmatpush2.bf16.msra.mxu0 0
    %5639 = vmatprep.subr.bf16.mxu0 0
    %5640 = vmatpush2.bf16.msra.mxu0 0
    %5641 = vmatprep.subr.bf16.mxu0 0
    %5642 = vmatpush2.bf16.msra.mxu0 0
    %5643 = vmatprep.subr.bf16.mxu0 0
    %5644 = vmatpush2.bf16.msra.mxu0 0
    %5645 = vmatprep.subr.bf16.mxu0 0
    %5646 = vmatpush2.bf16.msra.mxu0 0
    %5647 = vmatprep.subr.bf16.mxu0 0
    %5648 = vmatpush2.bf16.msra.mxu0 0
    %5649 = vmatprep.subr.bf16.mxu0 0
    %5650 = vmatpush2.bf16.msra.mxu0 0
    %5651 = vmatprep.subr.bf16.mxu0 0
    %5652 = vmatpush2.bf16.msra.mxu0 0
    %5653 = vmatprep.mubr.bf16.mxu0 0
    %5654 = vmatmul.mubr.bf16.gmra.mxu0 %v5402
    %v5655 = vpop.f32.mrf.mxu0
    %v5656 = vadd.f32 0.0, %v5655
    %v5657 = vpop.f32.mrf.mxu0
    %v5658 = vpop.f32.mrf.mxu0
    %v5659 = vadd.f32 0.0, %v5658
    %v5660 = vpop.f32.mrf.mxu0
    %5661 = vdwg.mxu0
    %v5662 = vadd.f32 %v5412, %v5613
    %v5663 = vadd.f32 %v5415, %v5617
    %v5664 = vxor.u32 %v5662, 2147483648
    %v5665 = vxor.u32 %v5663, 2147483648
    %v5666 = vmul.f32 %v5664, 1.442695
    %v5667 = vpow.pop %v5666
    %v5668 = vmul.f32 %v5665, 1.442695
    %v5669 = vpow.pop %v5668
    %v5670 = vadd.f32 %v5667, 1.0
    %v5671 = vadd.f32 %v5669, 1.0
    %v5672 = vrcp.pop %v5670
    %v5673 = vmul.f32 1.0, %v5672
    %v5674 = vrcp.pop %v5671
    %v5675 = vmul.f32 1.0, %v5674
    %v5676 = vadd.f32 %v5413, %v5615
    %v5677 = vadd.f32 %v5416, %v5619
    %v5678 = vxor.u32 %v5676, 2147483648
    %v5679 = vxor.u32 %v5677, 2147483648
    %v5680 = vmul.f32 %v5678, 1.442695
    %v5681 = vpow.pop %v5680
    %v5682 = vmul.f32 %v5679, 1.442695
    %v5683 = vpow.pop %v5682
    %v5684 = vadd.f32 %v5681, 1.0
    %v5685 = vadd.f32 %v5683, 1.0
    %v5686 = vrcp.pop %v5684
    %v5687 = vmul.f32 1.0, %v5686
    %v5688 = vrcp.pop %v5685
    %v5689 = vmul.f32 1.0, %v5688
    %v5690 = vadd.f32 %v5656, %v4168
    %v5691 = vadd.f32 %v5659, %v4168
    %v5692 = vmul.f32 %v5673, %v5690
    %v5693 = vmul.f32 %v5675, %v5691
    %v5694 = vadd.f32 %v5414, %v5692
    %v5695 = vadd.f32 %v5417, %v5693
    %v5696 = vtanh.pop %v5694
    %v5697 = vtanh.pop %v5695
    %v5698 = vsub.f32 1.0, %v5687
    %v5699 = vsub.f32 1.0, %v5689
    %v5700 = vmul.f32 %v5698, %v5696
    %v5701 = vmul.f32 %v5699, %v5697
    %v5702 = vmul.f32 %v5687, %v5400
    %v5703 = vmul.f32 %v5689, %v5401
    %v5704 = vadd.f32 %v5700, %v5702
    %v5705 = vadd.f32 %v5701, %v5703
    %v5706 = vpack.c.bf16 %v5705, %v5704
    %v5708 = vunpack.c.l.b16 %v5706
    %v5709 = vunpack.c.h.b16 %v5706
    %v5710 = vpack.c.b16 %v5708, %v5708
    %v5711 = vpack.c.b16 %v5709, %v5709
    %5714 = vst [vmem:[%s2645] sm:$0xf] %v5710
    %5715 = vst [vmem:[%s2645 + $0x4] sm:$0xf] %v5711
    %v5716 = vld [vmem:[%s2650] sm:$0xff]
    %v5717 = vld [vmem:[%s2650 + $0x8] sm:$0xff]
    %v5718 = vld [vmem:[%s2650 + $0x10] sm:$0xff]
    %v5719 = vld [vmem:[%s2650 + $0x18] sm:$0xff]
    %v5720 = vld [vmem:[%s2650 + $0x20] sm:$0xff]
    %v5721 = vld [vmem:[%s2650 + $0x28] sm:$0xff]
    %v5722 = vld [vmem:[%s11] sm:$0xff]
    %v5723 = vld [vmem:[%s11 + $0x8] sm:$0xf]
    %v5724 = vld [vmem:[%s11 + $0xc] sm:$0xff]
    %v5725 = vld [vmem:[%s11 + $0x14] sm:$0xf]
    %v5726 = vld [vmem:[%s11 + $0x18] sm:$0xff]
    %v5727 = vld [vmem:[%s11 + $0x20] sm:$0xf]
    %v5728 = vld [vmem:[%s11 + $0x24] sm:$0xff]
    %v5729 = vld [vmem:[%s11 + $0x2c] sm:$0xf]
    %v5730 = vld [vmem:[%s11 + $0x30] sm:$0xff]
    %v5731 = vld [vmem:[%s11 + $0x38] sm:$0xf]
    %v5732 = vld [vmem:[%s11 + $0x3c] sm:$0xff]
    %v5733 = vld [vmem:[%s11 + $0x44] sm:$0xf]
    %v5734 = vld [vmem:[%s11 + $0x48] sm:$0xff]
    %v5735 = vld [vmem:[%s11 + $0x50] sm:$0xf]
    %v5736 = vld [vmem:[%s11 + $0x54] sm:$0xff]
    %v5737 = vld [vmem:[%s11 + $0x5c] sm:$0xf]
    %v5738 = vld [vmem:[%s11 + $0x60] sm:$0xff]
    %v5739 = vld [vmem:[%s11 + $0x68] sm:$0xf]
    %v5740 = vld [vmem:[%s11 + $0x6c] sm:$0xff]
    %v5741 = vld [vmem:[%s11 + $0x74] sm:$0xf]
    %v5742 = vld [vmem:[%s11 + $0x78] sm:$0xff]
    %v5743 = vld [vmem:[%s11 + $0x80] sm:$0xf]
    %v5744 = vld [vmem:[%s11 + $0x84] sm:$0xff]
    %v5745 = vld [vmem:[%s11 + $0x8c] sm:$0xf]
    %v5746 = vld [vmem:[%s11 + $0x90] sm:$0xff]
    %v5747 = vld [vmem:[%s11 + $0x98] sm:$0xf]
    %v5748 = vld [vmem:[%s11 + $0x9c] sm:$0xff]
    %v5749 = vld [vmem:[%s11 + $0xa4] sm:$0xf]
    %v5750 = vld [vmem:[%s11 + $0xa8] sm:$0xff]
    %v5751 = vld [vmem:[%s11 + $0xb0] sm:$0xf]
    %v5752 = vld [vmem:[%s11 + $0xb4] sm:$0xff]
    %v5753 = vld [vmem:[%s11 + $0xbc] sm:$0xf]
    %v5786 = vunpack.c.l.b16 %v5722
    %v5787 = vunpack.c.h.b16 %v5722
    %v5788 = vunpack.c.l.b16 %v5723
    %v5789 = vunpack.c.l.b16 %v5724
    %v5790 = vunpack.c.h.b16 %v5724
    %v5791 = vunpack.c.l.b16 %v5725
    %v5792 = vunpack.c.l.b16 %v5726
    %v5793 = vunpack.c.h.b16 %v5726
    %v5794 = vunpack.c.l.b16 %v5727
    %v5795 = vunpack.c.l.b16 %v5728
    %v5796 = vunpack.c.h.b16 %v5728
    %v5797 = vunpack.c.l.b16 %v5729
    %v5798 = vunpack.c.l.b16 %v5730
    %v5799 = vunpack.c.h.b16 %v5730
    %v5800 = vunpack.c.l.b16 %v5731
    %v5801 = vunpack.c.l.b16 %v5732
    %v5802 = vunpack.c.h.b16 %v5732
    %v5803 = vunpack.c.l.b16 %v5733
    %v5804 = vunpack.c.l.b16 %v5734
    %v5805 = vunpack.c.h.b16 %v5734
    %v5806 = vunpack.c.l.b16 %v5735
    %v5807 = vunpack.c.l.b16 %v5736
    %v5808 = vunpack.c.h.b16 %v5736
    %v5809 = vunpack.c.l.b16 %v5737
    %v5810 = vunpack.c.l.b16 %v5738
    %v5811 = vunpack.c.h.b16 %v5738
    %v5812 = vunpack.c.l.b16 %v5739
    %v5813 = vunpack.c.l.b16 %v5740
    %v5814 = vunpack.c.h.b16 %v5740
    %v5815 = vunpack.c.l.b16 %v5741
    %v5816 = vunpack.c.l.b16 %v5742
    %v5817 = vunpack.c.h.b16 %v5742
    %v5818 = vunpack.c.l.b16 %v5743
    %v5819 = vunpack.c.l.b16 %v5744
    %v5820 = vunpack.c.h.b16 %v5744
    %v5821 = vunpack.c.l.b16 %v5745
    %v5822 = vunpack.c.l.b16 %v5746
    %v5823 = vunpack.c.h.b16 %v5746
    %v5824 = vunpack.c.l.b16 %v5747
    %v5825 = vunpack.c.l.b16 %v5748
    %v5826 = vunpack.c.h.b16 %v5748
    %v5827 = vunpack.c.l.b16 %v5749
    %v5828 = vunpack.c.l.b16 %v5750
    %v5829 = vunpack.c.h.b16 %v5750
    %v5830 = vunpack.c.l.b16 %v5751
    %v5831 = vunpack.c.l.b16 %v5752
    %v5832 = vunpack.c.h.b16 %v5752
    %v5833 = vunpack.c.l.b16 %v5753
    %v5834 = vpack.c.b16 %v5789, %v5786
    %v5835 = vpack.c.b16 %v5790, %v5787
    %v5836 = vpack.c.b16 %v5791, %v5788
    %v5837 = vpack.c.b16 %v5795, %v5792
    %v5838 = vpack.c.b16 %v5796, %v5793
    %v5839 = vpack.c.b16 %v5797, %v5794
    %v5840 = vpack.c.b16 %v5801, %v5798
    %v5841 = vpack.c.b16 %v5802, %v5799
    %v5842 = vpack.c.b16 %v5803, %v5800
    %v5843 = vpack.c.b16 %v5807, %v5804
    %v5844 = vpack.c.b16 %v5808, %v5805
    %v5845 = vpack.c.b16 %v5809, %v5806
    %v5846 = vpack.c.b16 %v5813, %v5810
    %v5847 = vpack.c.b16 %v5814, %v5811
    %v5848 = vpack.c.b16 %v5815, %v5812
    %v5849 = vpack.c.b16 %v5819, %v5816
    %v5850 = vpack.c.b16 %v5820, %v5817
    %v5851 = vpack.c.b16 %v5821, %v5818
    %v5852 = vpack.c.b16 %v5825, %v5822
    %v5853 = vpack.c.b16 %v5826, %v5823
    %v5854 = vpack.c.b16 %v5827, %v5824
    %v5855 = vpack.c.b16 %v5831, %v5828
    %v5856 = vpack.c.b16 %v5832, %v5829
    %v5857 = vpack.c.b16 %v5833, %v5830
    %5882 = vmatprep.subr.bf16.mxu0 %v5856
    %5883 = vmatpush1.bf16.msra.mxu0 %v5855
    %5884 = vmatprep.subr.bf16.mxu0 %v5853
    %5885 = vmatpush1.bf16.msra.mxu0 %v5852
    %5886 = vmatprep.subr.bf16.mxu0 %v5850
    %5887 = vmatpush1.bf16.msra.mxu0 %v5849
    %5888 = vmatprep.subr.bf16.mxu0 %v5847
    %5889 = vmatpush1.bf16.msra.mxu0 %v5846
    %5890 = vmatprep.subr.bf16.mxu0 %v5844
    %5891 = vmatpush1.bf16.msra.mxu0 %v5843
    %5892 = vmatprep.subr.bf16.mxu0 %v5841
    %5893 = vmatpush1.bf16.msra.mxu0 %v5840
    %5894 = vmatprep.subr.bf16.mxu0 %v5838
    %5895 = vmatpush1.bf16.msra.mxu0 %v5837
    %5896 = vmatprep.subr.bf16.mxu0 %v5835
    %5897 = vmatpush1.bf16.msra.mxu0 %v5834
    %5898 = vmatprep.subr.bf16.mxu0 0
    %5899 = vmatpush2.bf16.msra.mxu0 0
    %5900 = vmatprep.subr.bf16.mxu0 0
    %5901 = vmatpush2.bf16.msra.mxu0 0
    %5902 = vmatprep.subr.bf16.mxu0 0
    %5903 = vmatpush2.bf16.msra.mxu0 0
    %5904 = vmatprep.subr.bf16.mxu0 0
    %5905 = vmatpush2.bf16.msra.mxu0 0
    %5906 = vmatprep.subr.bf16.mxu0 0
    %5907 = vmatpush2.bf16.msra.mxu0 0
    %5908 = vmatprep.subr.bf16.mxu0 0
    %5909 = vmatpush2.bf16.msra.mxu0 0
    %5910 = vmatprep.subr.bf16.mxu0 0
    %5911 = vmatpush2.bf16.msra.mxu0 0
    %5912 = vmatprep.subr.bf16.mxu0 0
    %5913 = vmatpush2.bf16.msra.mxu0 0
    %5914 = vmatprep.mubr.bf16.mxu0 0
    %5915 = vmatmul.mubr.bf16.gmra.mxu0 %v5706
    %v5916 = vpop.f32.mrf.mxu0
    %v5917 = vadd.f32 0.0, %v5916
    %v5918 = vpop.f32.mrf.mxu0
    %v5919 = vadd.f32 0.0, %v5918
    %v5920 = vpop.f32.mrf.mxu0
    %v5921 = vadd.f32 0.0, %v5920
    %v5922 = vpop.f32.mrf.mxu0
    %v5923 = vadd.f32 0.0, %v5922
    %5924 = vdwg.mxu0
    %5925 = vmatprep.subr.bf16.mxu0 0
    %5926 = vmatpush1.bf16.msra.mxu0 %v5857
    %5927 = vmatprep.subr.bf16.mxu0 0
    %5928 = vmatpush1.bf16.msra.mxu0 %v5854
    %5929 = vmatprep.subr.bf16.mxu0 0
    %5930 = vmatpush1.bf16.msra.mxu0 %v5851
    %5931 = vmatprep.subr.bf16.mxu0 0
    %5932 = vmatpush1.bf16.msra.mxu0 %v5848
    %5933 = vmatprep.subr.bf16.mxu0 0
    %5934 = vmatpush1.bf16.msra.mxu0 %v5845
    %5935 = vmatprep.subr.bf16.mxu0 0
    %5936 = vmatpush1.bf16.msra.mxu0 %v5842
    %5937 = vmatprep.subr.bf16.mxu0 0
    %5938 = vmatpush1.bf16.msra.mxu0 %v5839
    %5939 = vmatprep.subr.bf16.mxu0 0
    %5940 = vmatpush1.bf16.msra.mxu0 %v5836
    %5941 = vmatprep.subr.bf16.mxu0 0
    %5942 = vmatpush2.bf16.msra.mxu0 0
    %5943 = vmatprep.subr.bf16.mxu0 0
    %5944 = vmatpush2.bf16.msra.mxu0 0
    %5945 = vmatprep.subr.bf16.mxu0 0
    %5946 = vmatpush2.bf16.msra.mxu0 0
    %5947 = vmatprep.subr.bf16.mxu0 0
    %5948 = vmatpush2.bf16.msra.mxu0 0
    %5949 = vmatprep.subr.bf16.mxu0 0
    %5950 = vmatpush2.bf16.msra.mxu0 0
    %5951 = vmatprep.subr.bf16.mxu0 0
    %5952 = vmatpush2.bf16.msra.mxu0 0
    %5953 = vmatprep.subr.bf16.mxu0 0
    %5954 = vmatpush2.bf16.msra.mxu0 0
    %5955 = vmatprep.subr.bf16.mxu0 0
    %5956 = vmatpush2.bf16.msra.mxu0 0
    %5957 = vmatprep.mubr.bf16.mxu0 0
    %5958 = vmatmul.mubr.bf16.gmra.mxu0 %v5706
    %v5959 = vpop.f32.mrf.mxu0
    %v5960 = vadd.f32 0.0, %v5959
    %v5961 = vpop.f32.mrf.mxu0
    %v5962 = vpop.f32.mrf.mxu0
    %v5963 = vadd.f32 0.0, %v5962
    %v5964 = vpop.f32.mrf.mxu0
    %5965 = vdwg.mxu0
    %v5966 = vadd.f32 %v5716, %v5917
    %v5967 = vadd.f32 %v5719, %v5921
    %v5968 = vxor.u32 %v5966, 2147483648
    %v5969 = vxor.u32 %v5967, 2147483648
    %v5970 = vmul.f32 %v5968, 1.442695
    %v5971 = vpow.pop %v5970
    %v5972 = vmul.f32 %v5969, 1.442695
    %v5973 = vpow.pop %v5972
    %v5974 = vadd.f32 %v5971, 1.0
    %v5975 = vadd.f32 %v5973, 1.0
    %v5976 = vrcp.pop %v5974
    %v5977 = vmul.f32 1.0, %v5976
    %v5978 = vrcp.pop %v5975
    %v5979 = vmul.f32 1.0, %v5978
    %v5980 = vadd.f32 %v5717, %v5919
    %v5981 = vadd.f32 %v5720, %v5923
    %v5982 = vxor.u32 %v5980, 2147483648
    %v5983 = vxor.u32 %v5981, 2147483648
    %v5984 = vmul.f32 %v5982, 1.442695
    %v5985 = vpow.pop %v5984
    %v5986 = vmul.f32 %v5983, 1.442695
    %v5987 = vpow.pop %v5986
    %v5988 = vadd.f32 %v5985, 1.0
    %v5989 = vadd.f32 %v5987, 1.0
    %v5990 = vrcp.pop %v5988
    %v5991 = vmul.f32 1.0, %v5990
    %v5992 = vrcp.pop %v5989
    %v5993 = vmul.f32 1.0, %v5992
    %v5994 = vadd.f32 %v5960, %v4168
    %v5995 = vadd.f32 %v5963, %v4168
    %v5996 = vmul.f32 %v5977, %v5994
    %v5997 = vmul.f32 %v5979, %v5995
    %v5998 = vadd.f32 %v5718, %v5996
    %v5999 = vadd.f32 %v5721, %v5997
    %v6000 = vtanh.pop %v5998
    %v6001 = vtanh.pop %v5999
    %v6002 = vsub.f32 1.0, %v5991
    %v6003 = vsub.f32 1.0, %v5993
    %v6004 = vmul.f32 %v6002, %v6000
    %v6005 = vmul.f32 %v6003, %v6001
    %v6006 = vmul.f32 %v5991, %v5704
    %v6007 = vmul.f32 %v5993, %v5705
    %v6008 = vadd.f32 %v6004, %v6006
    %v6009 = vadd.f32 %v6005, %v6007
    %v6010 = vpack.c.bf16 %v6009, %v6008
    %v6012 = vunpack.c.l.b16 %v6010
    %v6013 = vunpack.c.h.b16 %v6010
    %v6014 = vpack.c.b16 %v6012, %v6012
    %v6015 = vpack.c.b16 %v6013, %v6013
    %6018 = vst [vmem:[%s2953] sm:$0xf] %v6014
    %6019 = vst [vmem:[%s2953 + $0x4] sm:$0xf] %v6015
    %v6020 = vld [vmem:[%s2958] sm:$0xff]
    %v6021 = vld [vmem:[%s2958 + $0x8] sm:$0xff]
    %v6022 = vld [vmem:[%s2958 + $0x10] sm:$0xff]
    %v6023 = vld [vmem:[%s2958 + $0x18] sm:$0xff]
    %v6024 = vld [vmem:[%s2958 + $0x20] sm:$0xff]
    %v6025 = vld [vmem:[%s2958 + $0x28] sm:$0xff]
    %v6026 = vld [vmem:[%s11] sm:$0xff]
    %v6027 = vld [vmem:[%s11 + $0x8] sm:$0xf]
    %v6028 = vld [vmem:[%s11 + $0xc] sm:$0xff]
    %v6029 = vld [vmem:[%s11 + $0x14] sm:$0xf]
    %v6030 = vld [vmem:[%s11 + $0x18] sm:$0xff]
    %v6031 = vld [vmem:[%s11 + $0x20] sm:$0xf]
    %v6032 = vld [vmem:[%s11 + $0x24] sm:$0xff]
    %v6033 = vld [vmem:[%s11 + $0x2c] sm:$0xf]
    %v6034 = vld [vmem:[%s11 + $0x30] sm:$0xff]
    %v6035 = vld [vmem:[%s11 + $0x38] sm:$0xf]
    %v6036 = vld [vmem:[%s11 + $0x3c] sm:$0xff]
    %v6037 = vld [vmem:[%s11 + $0x44] sm:$0xf]
    %v6038 = vld [vmem:[%s11 + $0x48] sm:$0xff]
    %v6039 = vld [vmem:[%s11 + $0x50] sm:$0xf]
    %v6040 = vld [vmem:[%s11 + $0x54] sm:$0xff]
    %v6041 = vld [vmem:[%s11 + $0x5c] sm:$0xf]
    %v6042 = vld [vmem:[%s11 + $0x60] sm:$0xff]
    %v6043 = vld [vmem:[%s11 + $0x68] sm:$0xf]
    %v6044 = vld [vmem:[%s11 + $0x6c] sm:$0xff]
    %v6045 = vld [vmem:[%s11 + $0x74] sm:$0xf]
    %v6046 = vld [vmem:[%s11 + $0x78] sm:$0xff]
    %v6047 = vld [vmem:[%s11 + $0x80] sm:$0xf]
    %v6048 = vld [vmem:[%s11 + $0x84] sm:$0xff]
    %v6049 = vld [vmem:[%s11 + $0x8c] sm:$0xf]
    %v6050 = vld [vmem:[%s11 + $0x90] sm:$0xff]
    %v6051 = vld [vmem:[%s11 + $0x98] sm:$0xf]
    %v6052 = vld [vmem:[%s11 + $0x9c] sm:$0xff]
    %v6053 = vld [vmem:[%s11 + $0xa4] sm:$0xf]
    %v6054 = vld [vmem:[%s11 + $0xa8] sm:$0xff]
    %v6055 = vld [vmem:[%s11 + $0xb0] sm:$0xf]
    %v6056 = vld [vmem:[%s11 + $0xb4] sm:$0xff]
    %v6057 = vld [vmem:[%s11 + $0xbc] sm:$0xf]
    %v6090 = vunpack.c.l.b16 %v6026
    %v6091 = vunpack.c.h.b16 %v6026
    %v6092 = vunpack.c.l.b16 %v6027
    %v6093 = vunpack.c.l.b16 %v6028
    %v6094 = vunpack.c.h.b16 %v6028
    %v6095 = vunpack.c.l.b16 %v6029
    %v6096 = vunpack.c.l.b16 %v6030
    %v6097 = vunpack.c.h.b16 %v6030
    %v6098 = vunpack.c.l.b16 %v6031
    %v6099 = vunpack.c.l.b16 %v6032
    %v6100 = vunpack.c.h.b16 %v6032
    %v6101 = vunpack.c.l.b16 %v6033
    %v6102 = vunpack.c.l.b16 %v6034
    %v6103 = vunpack.c.h.b16 %v6034
    %v6104 = vunpack.c.l.b16 %v6035
    %v6105 = vunpack.c.l.b16 %v6036
    %v6106 = vunpack.c.h.b16 %v6036
    %v6107 = vunpack.c.l.b16 %v6037
    %v6108 = vunpack.c.l.b16 %v6038
    %v6109 = vunpack.c.h.b16 %v6038
    %v6110 = vunpack.c.l.b16 %v6039
    %v6111 = vunpack.c.l.b16 %v6040
    %v6112 = vunpack.c.h.b16 %v6040
    %v6113 = vunpack.c.l.b16 %v6041
    %v6114 = vunpack.c.l.b16 %v6042
    %v6115 = vunpack.c.h.b16 %v6042
    %v6116 = vunpack.c.l.b16 %v6043
    %v6117 = vunpack.c.l.b16 %v6044
    %v6118 = vunpack.c.h.b16 %v6044
    %v6119 = vunpack.c.l.b16 %v6045
    %v6120 = vunpack.c.l.b16 %v6046
    %v6121 = vunpack.c.h.b16 %v6046
    %v6122 = vunpack.c.l.b16 %v6047
    %v6123 = vunpack.c.l.b16 %v6048
    %v6124 = vunpack.c.h.b16 %v6048
    %v6125 = vunpack.c.l.b16 %v6049
    %v6126 = vunpack.c.l.b16 %v6050
    %v6127 = vunpack.c.h.b16 %v6050
    %v6128 = vunpack.c.l.b16 %v6051
    %v6129 = vunpack.c.l.b16 %v6052
    %v6130 = vunpack.c.h.b16 %v6052
    %v6131 = vunpack.c.l.b16 %v6053
    %v6132 = vunpack.c.l.b16 %v6054
    %v6133 = vunpack.c.h.b16 %v6054
    %v6134 = vunpack.c.l.b16 %v6055
    %v6135 = vunpack.c.l.b16 %v6056
    %v6136 = vunpack.c.h.b16 %v6056
    %v6137 = vunpack.c.l.b16 %v6057
    %v6138 = vpack.c.b16 %v6093, %v6090
    %v6139 = vpack.c.b16 %v6094, %v6091
    %v6140 = vpack.c.b16 %v6095, %v6092
    %v6141 = vpack.c.b16 %v6099, %v6096
    %v6142 = vpack.c.b16 %v6100, %v6097
    %v6143 = vpack.c.b16 %v6101, %v6098
    %v6144 = vpack.c.b16 %v6105, %v6102
    %v6145 = vpack.c.b16 %v6106, %v6103
    %v6146 = vpack.c.b16 %v6107, %v6104
    %v6147 = vpack.c.b16 %v6111, %v6108
    %v6148 = vpack.c.b16 %v6112, %v6109
    %v6149 = vpack.c.b16 %v6113, %v6110
    %v6150 = vpack.c.b16 %v6117, %v6114
    %v6151 = vpack.c.b16 %v6118, %v6115
    %v6152 = vpack.c.b16 %v6119, %v6116
    %v6153 = vpack.c.b16 %v6123, %v6120
    %v6154 = vpack.c.b16 %v6124, %v6121
    %v6155 = vpack.c.b16 %v6125, %v6122
    %v6156 = vpack.c.b16 %v6129, %v6126
    %v6157 = vpack.c.b16 %v6130, %v6127
    %v6158 = vpack.c.b16 %v6131, %v6128
    %v6159 = vpack.c.b16 %v6135, %v6132
    %v6160 = vpack.c.b16 %v6136, %v6133
    %v6161 = vpack.c.b16 %v6137, %v6134
    %6186 = vmatprep.subr.bf16.mxu0 %v6160
    %6187 = vmatpush1.bf16.msra.mxu0 %v6159
    %6188 = vmatprep.subr.bf16.mxu0 %v6157
    %6189 = vmatpush1.bf16.msra.mxu0 %v6156
    %6190 = vmatprep.subr.bf16.mxu0 %v6154
    %6191 = vmatpush1.bf16.msra.mxu0 %v6153
    %6192 = vmatprep.subr.bf16.mxu0 %v6151
    %6193 = vmatpush1.bf16.msra.mxu0 %v6150
    %6194 = vmatprep.subr.bf16.mxu0 %v6148
    %6195 = vmatpush1.bf16.msra.mxu0 %v6147
    %6196 = vmatprep.subr.bf16.mxu0 %v6145
    %6197 = vmatpush1.bf16.msra.mxu0 %v6144
    %6198 = vmatprep.subr.bf16.mxu0 %v6142
    %6199 = vmatpush1.bf16.msra.mxu0 %v6141
    %6200 = vmatprep.subr.bf16.mxu0 %v6139
    %6201 = vmatpush1.bf16.msra.mxu0 %v6138
    %6202 = vmatprep.subr.bf16.mxu0 0
    %6203 = vmatpush2.bf16.msra.mxu0 0
    %6204 = vmatprep.subr.bf16.mxu0 0
    %6205 = vmatpush2.bf16.msra.mxu0 0
    %6206 = vmatprep.subr.bf16.mxu0 0
    %6207 = vmatpush2.bf16.msra.mxu0 0
    %6208 = vmatprep.subr.bf16.mxu0 0
    %6209 = vmatpush2.bf16.msra.mxu0 0
    %6210 = vmatprep.subr.bf16.mxu0 0
    %6211 = vmatpush2.bf16.msra.mxu0 0
    %6212 = vmatprep.subr.bf16.mxu0 0
    %6213 = vmatpush2.bf16.msra.mxu0 0
    %6214 = vmatprep.subr.bf16.mxu0 0
    %6215 = vmatpush2.bf16.msra.mxu0 0
    %6216 = vmatprep.subr.bf16.mxu0 0
    %6217 = vmatpush2.bf16.msra.mxu0 0
    %6218 = vmatprep.mubr.bf16.mxu0 0
    %6219 = vmatmul.mubr.bf16.gmra.mxu0 %v6010
    %v6220 = vpop.f32.mrf.mxu0
    %v6221 = vadd.f32 0.0, %v6220
    %v6222 = vpop.f32.mrf.mxu0
    %v6223 = vadd.f32 0.0, %v6222
    %v6224 = vpop.f32.mrf.mxu0
    %v6225 = vadd.f32 0.0, %v6224
    %v6226 = vpop.f32.mrf.mxu0
    %v6227 = vadd.f32 0.0, %v6226
    %6228 = vdwg.mxu0
    %6229 = vmatprep.subr.bf16.mxu0 0
    %6230 = vmatpush1.bf16.msra.mxu0 %v6161
    %6231 = vmatprep.subr.bf16.mxu0 0
    %6232 = vmatpush1.bf16.msra.mxu0 %v6158
    %6233 = vmatprep.subr.bf16.mxu0 0
    %6234 = vmatpush1.bf16.msra.mxu0 %v6155
    %6235 = vmatprep.subr.bf16.mxu0 0
    %6236 = vmatpush1.bf16.msra.mxu0 %v6152
    %6237 = vmatprep.subr.bf16.mxu0 0
    %6238 = vmatpush1.bf16.msra.mxu0 %v6149
    %6239 = vmatprep.subr.bf16.mxu0 0
    %6240 = vmatpush1.bf16.msra.mxu0 %v6146
    %6241 = vmatprep.subr.bf16.mxu0 0
    %6242 = vmatpush1.bf16.msra.mxu0 %v6143
    %6243 = vmatprep.subr.bf16.mxu0 0
    %6244 = vmatpush1.bf16.msra.mxu0 %v6140
    %6245 = vmatprep.subr.bf16.mxu0 0
    %6246 = vmatpush2.bf16.msra.mxu0 0
    %6247 = vmatprep.subr.bf16.mxu0 0
    %6248 = vmatpush2.bf16.msra.mxu0 0
    %6249 = vmatprep.subr.bf16.mxu0 0
    %6250 = vmatpush2.bf16.msra.mxu0 0
    %6251 = vmatprep.subr.bf16.mxu0 0
    %6252 = vmatpush2.bf16.msra.mxu0 0
    %6253 = vmatprep.subr.bf16.mxu0 0
    %6254 = vmatpush2.bf16.msra.mxu0 0
    %6255 = vmatprep.subr.bf16.mxu0 0
    %6256 = vmatpush2.bf16.msra.mxu0 0
    %6257 = vmatprep.subr.bf16.mxu0 0
    %6258 = vmatpush2.bf16.msra.mxu0 0
    %6259 = vmatprep.subr.bf16.mxu0 0
    %6260 = vmatpush2.bf16.msra.mxu0 0
    %6261 = vmatprep.mubr.bf16.mxu0 0
    %6262 = vmatmul.mubr.bf16.gmra.mxu0 %v6010
    %v6263 = vpop.f32.mrf.mxu0
    %v6264 = vadd.f32 0.0, %v6263
    %v6265 = vpop.f32.mrf.mxu0
    %v6266 = vpop.f32.mrf.mxu0
    %v6267 = vadd.f32 0.0, %v6266
    %v6268 = vpop.f32.mrf.mxu0
    %6269 = vdwg.mxu0
    %v6270 = vadd.f32 %v6020, %v6221
    %v6271 = vadd.f32 %v6023, %v6225
    %v6272 = vxor.u32 %v6270, 2147483648
    %v6273 = vxor.u32 %v6271, 2147483648
    %v6274 = vmul.f32 %v6272, 1.442695
    %v6275 = vpow.pop %v6274
    %v6276 = vmul.f32 %v6273, 1.442695
    %v6277 = vpow.pop %v6276
    %v6278 = vadd.f32 %v6275, 1.0
    %v6279 = vadd.f32 %v6277, 1.0
    %v6280 = vrcp.pop %v6278
    %v6281 = vmul.f32 1.0, %v6280
    %v6282 = vrcp.pop %v6279
    %v6283 = vmul.f32 1.0, %v6282
    %v6284 = vadd.f32 %v6021, %v6223
    %v6285 = vadd.f32 %v6024, %v6227
    %v6286 = vxor.u32 %v6284, 2147483648
    %v6287 = vxor.u32 %v6285, 2147483648
    %v6288 = vmul.f32 %v6286, 1.442695
    %v6289 = vpow.pop %v6288
    %v6290 = vmul.f32 %v6287, 1.442695
    %v6291 = vpow.pop %v6290
    %v6292 = vadd.f32 %v6289, 1.0
    %v6293 = vadd.f32 %v6291, 1.0
    %v6294 = vrcp.pop %v6292
    %v6295 = vmul.f32 1.0, %v6294
    %v6296 = vrcp.pop %v6293
    %v6297 = vmul.f32 1.0, %v6296
    %v6298 = vadd.f32 %v6264, %v4168
    %v6299 = vadd.f32 %v6267, %v4168
    %v6300 = vmul.f32 %v6281, %v6298
    %v6301 = vmul.f32 %v6283, %v6299
    %v6302 = vadd.f32 %v6022, %v6300
    %v6303 = vadd.f32 %v6025, %v6301
    %v6304 = vtanh.pop %v6302
    %v6305 = vtanh.pop %v6303
    %v6306 = vsub.f32 1.0, %v6295
    %v6307 = vsub.f32 1.0, %v6297
    %v6308 = vmul.f32 %v6306, %v6304
    %v6309 = vmul.f32 %v6307, %v6305
    %v6310 = vmul.f32 %v6295, %v6008
    %v6311 = vmul.f32 %v6297, %v6009
    %v6312 = vadd.f32 %v6308, %v6310
    %v6313 = vadd.f32 %v6309, %v6311
    %v6314 = vpack.c.bf16 %v6313, %v6312
    %v6316 = vunpack.c.l.b16 %v6314
    %v6317 = vunpack.c.h.b16 %v6314
    %v6318 = vpack.c.b16 %v6316, %v6316
    %v6319 = vpack.c.b16 %v6317, %v6317
    %6322 = vst [vmem:[%s3261] sm:$0xf] %v6318
    %6323 = vst [vmem:[%s3261 + $0x4] sm:$0xf] %v6319
    %s6324 = scalar_lea.vmem %s15, 16
    %6325 = vst [vmem:[%s6324] sm:$0xff] %v6312
    %6326 = vst [vmem:[%s6324 + $0x8] sm:$0xff] %v6313
    %v6327 = vld [vmem:[%s12] sm:$0xf]
    %v6328 = vld [vmem:[%s12 + $0x4] sm:$0xf]
    %v6329 = vld [vmem:[%s12 + $0x8] sm:$0xf]
    %v6330 = vld [vmem:[%s12 + $0xc] sm:$0xf]
    %v6331 = vld [vmem:[%s12 + $0x10] sm:$0xf]
    %v6332 = vld [vmem:[%s12 + $0x14] sm:$0xf]
    %v6333 = vld [vmem:[%s12 + $0x18] sm:$0xf]
    %v6334 = vld [vmem:[%s12 + $0x1c] sm:$0xf]
    %v6335 = vld [vmem:[%s12 + $0x20] sm:$0xf]
    %v6336 = vld [vmem:[%s12 + $0x24] sm:$0xf]
    %v6337 = vld [vmem:[%s12 + $0x28] sm:$0xf]
    %v6338 = vld [vmem:[%s12 + $0x2c] sm:$0xf]
    %v6339 = vld [vmem:[%s12 + $0x30] sm:$0xf]
    %v6340 = vld [vmem:[%s12 + $0x34] sm:$0xf]
    %v6341 = vld [vmem:[%s12 + $0x38] sm:$0xf]
    %v6342 = vld [vmem:[%s12 + $0x3c] sm:$0xf]
    %v6343 = vld [vmem:[%s13] sm:$0x1]
    %v6345 = vlaneseq
    %v6346 = vshrl.u32 %v6345, 7
    %v6347 = vsub.s32 0, %v6346
    %v6348 = vrot.slane %v6343, %v6347
    %v6366 = vunpack.c.l.b16 %v6327
    %v6367 = vunpack.c.l.b16 %v6328
    %v6368 = vunpack.c.l.b16 %v6329
    %v6369 = vunpack.c.l.b16 %v6330
    %v6370 = vunpack.c.l.b16 %v6331
    %v6371 = vunpack.c.l.b16 %v6332
    %v6372 = vunpack.c.l.b16 %v6333
    %v6373 = vunpack.c.l.b16 %v6334
    %v6374 = vunpack.c.l.b16 %v6335
    %v6375 = vunpack.c.l.b16 %v6336
    %v6376 = vunpack.c.l.b16 %v6337
    %v6377 = vunpack.c.l.b16 %v6338
    %v6378 = vunpack.c.l.b16 %v6339
    %v6379 = vunpack.c.l.b16 %v6340
    %v6380 = vunpack.c.l.b16 %v6341
    %v6381 = vunpack.c.l.b16 %v6342
    %v6382 = vpack.c.b16 %v6367, %v6366
    %v6383 = vpack.c.b16 %v6369, %v6368
    %v6384 = vpack.c.b16 %v6371, %v6370
    %v6385 = vpack.c.b16 %v6373, %v6372
    %v6386 = vpack.c.b16 %v6375, %v6374
    %v6387 = vpack.c.b16 %v6377, %v6376
    %v6388 = vpack.c.b16 %v6379, %v6378
    %v6389 = vpack.c.b16 %v6381, %v6380
    %6398 = vmatprep.subr.bf16.mxu0 0
    %6399 = vmatpush1.bf16.msra.mxu0 %v6389
    %6400 = vmatprep.subr.bf16.mxu0 0
    %6401 = vmatpush1.bf16.msra.mxu0 %v6388
    %6402 = vmatprep.subr.bf16.mxu0 0
    %6403 = vmatpush1.bf16.msra.mxu0 %v6387
    %6404 = vmatprep.subr.bf16.mxu0 0
    %6405 = vmatpush1.bf16.msra.mxu0 %v6386
    %6406 = vmatprep.subr.bf16.mxu0 0
    %6407 = vmatpush1.bf16.msra.mxu0 %v6385
    %6408 = vmatprep.subr.bf16.mxu0 0
    %6409 = vmatpush1.bf16.msra.mxu0 %v6384
    %6410 = vmatprep.subr.bf16.mxu0 0
    %6411 = vmatpush1.bf16.msra.mxu0 %v6383
    %6412 = vmatprep.subr.bf16.mxu0 0
    %6413 = vmatpush1.bf16.msra.mxu0 %v6382
    %6414 = vmatprep.subr.bf16.mxu0 0
    %6415 = vmatpush2.bf16.msra.mxu0 0
    %6416 = vmatprep.subr.bf16.mxu0 0
    %6417 = vmatpush2.bf16.msra.mxu0 0
    %6418 = vmatprep.subr.bf16.mxu0 0
    %6419 = vmatpush2.bf16.msra.mxu0 0
    %6420 = vmatprep.subr.bf16.mxu0 0
    %6421 = vmatpush2.bf16.msra.mxu0 0
    %6422 = vmatprep.subr.bf16.mxu0 0
    %6423 = vmatpush2.bf16.msra.mxu0 0
    %6424 = vmatprep.subr.bf16.mxu0 0
    %6425 = vmatpush2.bf16.msra.mxu0 0
    %6426 = vmatprep.subr.bf16.mxu0 0
    %6427 = vmatpush2.bf16.msra.mxu0 0
    %6428 = vmatprep.subr.bf16.mxu0 0
    %6429 = vmatpush2.bf16.msra.mxu0 0
    %6430 = vmatprep.mubr.bf16.mxu0 0
    %6431 = vmatmul.mubr.bf16.gmra.mxu0 %v6314
    %v6432 = vpop.f32.mrf.mxu0
    %v6433 = vadd.f32 %v6348, %v6432
    %v6434 = vpop.f32.mrf.mxu0
    %v6435 = vpop.f32.mrf.mxu0
    %v6436 = vadd.f32 %v6348, %v6435
    %v6437 = vpop.f32.mrf.mxu0
    %6438 = vdwg.mxu0
    %v6439 = vmax.f32 %v6433, 0.0
    %v6440 = vmax.f32 %v6436, 0.0
    %s6441 = scalar_lea.vmem %s16, 16
    %6442 = vst [vmem:[%s6441] sm:$0xff] %v6439
    %6443 = vst [vmem:[%s6441 + $0x8] sm:$0xff] %v6440
    // Predicated region
    $region70: #{rql_compensating_forward.2} parent=1 // pred_check
      _
    $region71: #{rql_compensating_forward.2} parent=1 // pred_check_branch
      %6445 = sbr.rel (0) target = $region73
    $region72: #{rql_compensating_forward.2} parent=1 // pred_region
      _
    $region73: #{rql_compensating_forward.2} parent=1 // pred_fallthru
      _
    // Predicated region
    $region74: #{rql_compensating_forward.2} parent=1 // pred_check
      _
    $region75: #{rql_compensating_forward.2} parent=1 // pred_check_branch
      %6447 = sbr.rel (0) target = $region77
    $region76: #{rql_compensating_forward.2} parent=1 // pred_region
      _
    $region77: #{rql_compensating_forward.2} parent=1 // pred_fallthru
      _
    // Predicated region
    $region78: #{rql_compensating_forward.2} parent=1 // pred_check
      _
    $region79: #{rql_compensating_forward.2} parent=1 // pred_check_branch
      %6449 = sbr.rel (0) target = $region81
    $region80: #{rql_compensating_forward.2} parent=1 // pred_region
      _
    $region81: #{rql_compensating_forward.2} parent=1 // pred_fallthru
      _
    // Predicated region
    $region82: #{rql_compensating_forward.2} parent=1 // pred_check
      _
    $region83: #{rql_compensating_forward.2} parent=1 // pred_check_branch
      %6451 = sbr.rel (0) target = $region85
    $region84: #{rql_compensating_forward.2} parent=1 // pred_region
      _
    $region85: #{rql_compensating_forward.2} parent=1 // pred_fallthru
      _
    // Predicated region
    $region86: #{rql_compensating_forward.2} parent=1 // pred_check
      _
    $region87: #{rql_compensating_forward.2} parent=1 // pred_check_branch
      %6453 = sbr.rel (0) target = $region89
    $region88: #{rql_compensating_forward.2} parent=1 // pred_region
      _
    $region89: #{rql_compensating_forward.2} parent=1 // pred_fallthru
      _
    // Predicated region
    $region90: #{rql_compensating_forward.2} parent=1 // pred_check
      _
    $region91: #{rql_compensating_forward.2} parent=1 // pred_check_branch
      %6455 = sbr.rel (0) target = $region93
    $region92: #{rql_compensating_forward.2} parent=1 // pred_region
      _
    $region93: #{rql_compensating_forward.2} parent=1 // pred_fallthru
      _
    %6456 = vsyncpa [#allocation4], 1
    %6457 = vsyncpa [#allocation6], 1

</llo_original>
